<compile_context>
chip_gen: v7x
topology: tpu7x:2x2x1
jax: 0.10.0
libtpu: 0.0.40
codegen_flags: <defaults>
</compile_context>

<pallas_src>
import functools

import numpy as np
import jax
import jax.numpy as jnp
from jax.experimental import pallas as pl
from jax.experimental.pallas import tpu as pltpu


# ----------------------------------------------------------------------------- helpers
def _round_up(x, m):
    return ((x + m - 1) // m) * m


def _hardswish(x):
    # PyTorch Hardswish: x * relu6(x + 3) / 6
    return x * jnp.clip(x + 3.0, 0.0, 6.0) * (1.0 / 6.0)


def _m_tiling(M, target):
    """Pick an M tile (multiple of 8) and the padded M."""
    m_tile = min(target, _round_up(M, 8))
    Mp = _round_up(M, m_tile)
    return m_tile, Mp


def _pad_rows(a, Mp):
    M = a.shape[0]
    if Mp == M:
        return a
    return jnp.pad(a, ((0, Mp - M),) + ((0, 0),) * (a.ndim - 1))


_PPARAMS = pltpu.CompilerParams(dimension_semantics=("parallel",))


# ----------------------------------------------------------------------------- kernels
def _stem_kernel(a_ref, w_ref, b_ref, o_ref):
    """o = hardswish(A @ W + b).  A:(Mt,K) bf16, W:(K,N) bf16, b:(1,N) f32."""
    acc = jnp.dot(a_ref[...], w_ref[...], preferred_element_type=jnp.float32)
    o_ref[...] = _hardswish(acc + b_ref[...]).astype(o_ref.dtype)


def _dwpw_kernel(p_ref, dw_ref, dwb_ref, pw_ref, pwb_ref, o_ref):
    """Fused depthwise 3x3 (as block-diag matmul) + hardswish + pointwise 1x1 + hardswish.

    p:(Mt,9*Ci) bf16, dw:(9*Ci,Ci) bf16 block-diag, pw:(Ci,Co) bf16, biases f32.
    Intermediate (Mt,Ci) stays on-chip; no HBM round trip between dw and pw.
    """
    y = jnp.dot(p_ref[...], dw_ref[...], preferred_element_type=jnp.float32)
    y = _hardswish(y + dwb_ref[...])
    z = jnp.dot(y.astype(jnp.bfloat16), pw_ref[...],
                preferred_element_type=jnp.float32)
    o_ref[...] = _hardswish(z + pwb_ref[...]).astype(o_ref.dtype)


def _neck_head_softmax_kernel(f_ref, nw_ref, nb_ref, hw_ref, hb_ref, o_ref):
    """Fused SequenceEncoder projection + CTC head matmul + softmax (one M tile per step)."""
    feat = jnp.dot(f_ref[...], nw_ref[...],
                   preferred_element_type=jnp.float32) + nb_ref[...]          # (Mt, 120)
    logits = jnp.dot(feat.astype(jnp.bfloat16), hw_ref[...],
                     preferred_element_type=jnp.float32) + hb_ref[...]        # (Mt, Cpad)
    m = jnp.max(logits, axis=-1, keepdims=True)
    e = jnp.exp(logits - m)                         # padded cols have bias -1e9 -> exp ~ 0
    s = jnp.sum(e, axis=-1, keepdims=True)
    o_ref[...] = (e * pl.reciprocal(s, approx=True)).astype(o_ref.dtype)


# ----------------------------------------------------------------------------- wrappers
def stem_conv(pf, w, b, m_tile_target=512):
    M, K = pf.shape
    N = w.shape[1]
    m_tile, Mp = _m_tiling(M, m_tile_target)
    pf_p = _pad_rows(pf, Mp)
    out = pl.pallas_call(
        _stem_kernel,
        out_shape=jax.ShapeDtypeStruct((Mp, N), jnp.bfloat16),
        grid=(Mp // m_tile,),
        in_specs=[pl.BlockSpec((m_tile, K), lambda i: (i, 0)),
                  pl.BlockSpec((K, N), lambda i: (0, 0)),
                  pl.BlockSpec((1, N), lambda i: (0, 0))],
        out_specs=pl.BlockSpec((m_tile, N), lambda i: (i, 0)),
        compiler_params=_PPARAMS,
    )(pf_p, w, b)
    return out[:M]


def dwpw_block(pf, dw_wexp, dw_b, pw_w, pw_b, m_tile_target=512):
    M, K9 = pf.shape
    Ci = dw_wexp.shape[1]
    Co = pw_w.shape[1]
    m_tile, Mp = _m_tiling(M, m_tile_target)
    pf_p = _pad_rows(pf, Mp)
    out = pl.pallas_call(
        _dwpw_kernel,
        out_shape=jax.ShapeDtypeStruct((Mp, Co), jnp.bfloat16),
        grid=(Mp // m_tile,),
        in_specs=[pl.BlockSpec((m_tile, K9), lambda i: (i, 0)),
                  pl.BlockSpec((K9, Ci), lambda i: (0, 0)),
                  pl.BlockSpec((1, Ci), lambda i: (0, 0)),
                  pl.BlockSpec((Ci, Co), lambda i: (0, 0)),
                  pl.BlockSpec((1, Co), lambda i: (0, 0))],
        out_specs=pl.BlockSpec((m_tile, Co), lambda i: (i, 0)),
        compiler_params=_PPARAMS,
    )(pf_p, dw_wexp, dw_b, pw_w, pw_b)
    return out[:M]


def neck_head_softmax(feat, nw, nb, hw, hb, n_classes, m_tile_target=128):
    """Fused neck projection + CTC head + softmax.  Output sliced back to n_classes."""
    M, Cf = feat.shape
    Kn = nw.shape[1]          # 120
    Cp = hw.shape[1]          # classes padded to a multiple of 128 (lane-dense stores)
    # m_tile=128: out tile 128x6656 f32 = 3.4 MiB, x2 buffering + bf16 head weights ~ 9 MiB,
    # comfortably inside the 16/32 MiB default scoped-VMEM on v5e/v6e/v7x.
    m_tile, Mp = _m_tiling(M, m_tile_target)
    feat_p = _pad_rows(feat, Mp)
    out = pl.pallas_call(
        _neck_head_softmax_kernel,
        out_shape=jax.ShapeDtypeStruct((Mp, Cp), jnp.float32),
        grid=(Mp // m_tile,),
        in_specs=[pl.BlockSpec((m_tile, Cf), lambda i: (i, 0)),
                  pl.BlockSpec((Cf, Kn), lambda i: (0, 0)),
                  pl.BlockSpec((1, Kn), lambda i: (0, 0)),
                  pl.BlockSpec((Kn, Cp), lambda i: (0, 0)),
                  pl.BlockSpec((1, Cp), lambda i: (0, 0))],
        out_specs=pl.BlockSpec((m_tile, Cp), lambda i: (i, 0)),
        compiler_params=_PPARAMS,
    )(feat_p, nw, nb, hw, hb)
    return out[:M, :n_classes]


# ----------------------------------------------------------------------------- glue (plain JAX)
def extract_patches(x, kh, kw, sh, sw, ph, pw):
    """x: (N,H,W,C) -> lane-folded patches (N*Ho*Wo, kh*kw*C), tap-major (t*C + c)."""
    # TODO(synk): fuse halo extraction into the dw kernel with an overlapping-row BlockSpec
    #             to avoid the 9x im2col blow-up in HBM at large OCR input sizes.
    N, H, W, C = x.shape
    Ho = (H + 2 * ph - kh) // sh + 1
    Wo = (W + 2 * pw - kw) // sw + 1
    xp = jnp.pad(x, ((0, 0), (ph, ph), (pw, pw), (0, 0)))
    cols = []
    for ky in range(kh):
        for kx in range(kw):
            cols.append(
                xp[:, ky: ky + (Ho - 1) * sh + 1: sh, kx: kx + (Wo - 1) * sw + 1: sw, :]
            )
    patches = jnp.stack(cols, axis=-2)            # (N, Ho, Wo, kh*kw, C)
    return patches.reshape(N * Ho * Wo, kh * kw * C), Ho, Wo


def _expand_dw(w):
    """(taps, C) depthwise weights -> (taps*C, C) block-diagonal matrix for lane-dense matmul."""
    T, C = w.shape
    eye = jnp.eye(C, dtype=w.dtype)
    return (w[:, :, None] * eye[None]).reshape(T * C, C)


# ----------------------------------------------------------------------------- parameters
_BLOCK_CHANNELS = [(16, 32), (32, 64), (64, 480)]  # backbone ends at 480 ch (SequenceEncoder(480))
_BACKBONE_OUT = 480
_BACKBONE_OUT_PAD = 512                            # 4*128: lane-dense stores + sliceless neck


def init_params(key, n_classes=6625):
    n_cls_pad = _round_up(n_classes, 128)          # 6625 -> 6656 (52*128)
    ks = iter(jax.random.split(key, 32))

    def w(shape, fan_in):
        return jax.random.normal(next(ks), shape, jnp.float32) / np.sqrt(float(fan_in))

    def b(n):
        return 0.01 * jax.random.normal(next(ks), (1, n), jnp.float32)

    p = {}
    # stem: 3x3 s2 conv, 3 -> 16, hardswish (conv+BN fused post convert_repmodel)
    p["stem_w"] = w((9 * 3, 16), 9 * 3).astype(jnp.bfloat16)
    p["stem_b"] = b(16)
    # depthwise-separable blocks (rep-fused DW 3x3 + PW 1x1, both hardswish)
    for i, (ci, co) in enumerate(_BLOCK_CHANNELS):
        dw = w((9, ci), 9)
        p[f"dw{i}_wexp"] = _expand_dw(dw).astype(jnp.bfloat16)   # (9*ci, ci) block-diag
        p[f"dw{i}_b"] = b(ci)
        co_pad = _BACKBONE_OUT_PAD if co == _BACKBONE_OUT else co
        pw = w((ci, co), ci)
        p[f"pw{i}_w"] = jnp.pad(pw, ((0, 0), (0, co_pad - co))).astype(jnp.bfloat16)
        p[f"pw{i}_b"] = jnp.pad(b(co), ((0, 0), (0, co_pad - co)))   # pad bias = 0 -> pad act = 0
    # neck: SequenceEncoder(480) -> 120 (Im2Seq + projection); rows padded to 512 with zeros
    nw = w((_BACKBONE_OUT, 120), _BACKBONE_OUT)
    p["neck_w"] = jnp.pad(nw, ((0, _BACKBONE_OUT_PAD - _BACKBONE_OUT), (0, 0))).astype(jnp.bfloat16)
    p["neck_b"] = b(120)
    # head: CTCHead(120, n_classes), class dim padded to 128 multiple; padded bias = -1e9
    hw = jax.random.normal(next(ks), (120, n_classes), jnp.float32) / np.sqrt(120.0)
    p["head_w"] = jnp.pad(hw, ((0, 0), (0, n_cls_pad - n_classes))).astype(jnp.bfloat16)
    hb = 0.01 * jax.random.normal(next(ks), (1, n_classes), jnp.float32)
    p["head_b"] = jnp.pad(hb, ((0, 0), (0, n_cls_pad - n_classes)), constant_values=-1e9)
    return p


# ----------------------------------------------------------------------------- forward
def forward(params, x_nchw, n_classes):
    # PyTorch-style NCHW input -> NHWC (channels on the lane axis); bf16 activations in HBM.
    x = jnp.transpose(x_nchw, (0, 2, 3, 1)).astype(jnp.bfloat16)
    N = x.shape[0]

    # ---- backbone (PP-LCNetV3-style, reparameterized) ----
    pf, Ho, Wo = extract_patches(x, 3, 3, 2, 2, 1, 1)
    y = stem_conv(pf, params["stem_w"], params["stem_b"])
    x = y.reshape(N, Ho, Wo, 16)

    for i, (ci, co) in enumerate(_BLOCK_CHANNELS):
        # depthwise 3x3, stride (2,1): squeeze height toward 1, keep width (rec layout)
        pf, Ho, Wo = extract_patches(x, 3, 3, 2, 1, 1, 1)
        y = dwpw_block(pf, params[f"dw{i}_wexp"], params[f"dw{i}_b"],
                       params[f"pw{i}_w"], params[f"pw{i}_b"])
        x = y.reshape(N, Ho, Wo, params[f"pw{i}_w"].shape[1])
    # TODO(synk): PPLCNetV3 SE modules / learnable-activation (LAB) branches not reproduced
    #             (source not provided); rep branches assumed fused by convert_repmodel.

    # ---- neck + head, fused: Im2Seq -> projection -> CTC fc -> softmax ----
    Nb, Hf, Wf, Cf = x.shape
    assert Hf == 1, "Im2Seq ordering requires feature height == 1"
    seq = x.reshape(Nb * Hf * Wf, Cf)              # (N, C, 1, W) -> (N*W, C), C padded to 512
    probs = neck_head_softmax(seq, params["neck_w"], params["neck_b"],
                              params["head_w"], params["head_b"], n_classes)
    # TODO(synk): full SVTR encoder blocks of SequenceEncoder not reproduced (source not provided).
    return probs.reshape(Nb, Wf, -1)


# ----------------------------------------------------------------------------- main
if __name__ == "__main__":
    n_classes = 6625
    key = jax.random.PRNGKey(0)
    kp, kx = jax.random.split(key)
    params = init_params(kp, n_classes)

    # Small NCHW input consistent with the rec model (N=2, C=3, H=16, W=32).
    x = jax.random.normal(kx, (2, 3, 16, 32), jnp.float32)

    fwd = jax.jit(functools.partial(forward, n_classes=n_classes))
    out = jax.block_until_ready(fwd(params, x))

    assert out.shape == (2, 16, n_classes), out.shape
    assert bool(jnp.all(jnp.isfinite(out)))
    # rows of the CTC softmax sum to 1 (approx reciprocal -> slightly looser tolerance)
    assert bool(jnp.allclose(jnp.sum(out, axis=-1), 1.0, atol=1e-2))
    print("KERNEL_OK")
</pallas_src>

<mosaic_0001>
module attributes {stable_mosaic.version = 11 : i64} {
  func.func @_stem_kernel(%arg0: i32, %arg1: memref<256x27xbf16, #tpu.memory_space<vmem>>, %arg2: memref<27x16xbf16, #tpu.memory_space<vmem>>, %arg3: memref<1x16xf32, #tpu.memory_space<vmem>>, %arg4: memref<256x16xbf16, #tpu.memory_space<vmem>>) attributes {dimension_semantics = [#tpu.dimension_semantics<parallel>], iteration_bounds = array<i64: 1>, scalar_prefetch = 0 : i64, scratch_operands = 0 : i64, tpu.core_type = #tpu.core_type<tc>, window_params = [{transform_indices = @transform_0, window_bounds = array<i64: 256, 27>}, {pipeline_mode = #tpu.pipeline_mode<synchronous>, transform_indices = @transform_1, window_bounds = array<i64: 27, 16>}, {pipeline_mode = #tpu.pipeline_mode<synchronous>, transform_indices = @transform_2, window_bounds = array<i64: 1, 16>}, {transform_indices = @transform_3, window_bounds = array<i64: 256, 16>}]} {
    %c0 = arith.constant 0 : index
    %c0_0 = arith.constant 0 : index
    %0 = vector.load %arg1[%c0, %c0_0] : memref<256x27xbf16, #tpu.memory_space<vmem>>, vector<256x27xbf16>
    %c0_1 = arith.constant 0 : index
    %c0_2 = arith.constant 0 : index
    %1 = vector.load %arg2[%c0_1, %c0_2] : memref<27x16xbf16, #tpu.memory_space<vmem>>, vector<27x16xbf16>
    %cst = arith.constant dense<0.000000e+00> : vector<256x16xf32>
    %2 = tpu.matmul %0, %1, %cst {dimension_numbers = #tpu.dot_dimension_numbers<[1], [0], [0], [1], [0, 0, 1, 1], [], []>} : vector<256x27xbf16>, vector<27x16xbf16>, vector<256x16xf32> -> vector<256x16xf32>
    %c0_3 = arith.constant 0 : index
    %c0_4 = arith.constant 0 : index
    %3 = vector.load %arg3[%c0_3, %c0_4] : memref<1x16xf32, #tpu.memory_space<vmem>>, vector<1x16xf32>
    %4 = vector.broadcast %3 : vector<1x16xf32> to vector<256x16xf32>
    %5 = arith.addf %2, %4 : vector<256x16xf32>
    %cst_5 = arith.constant 3.000000e+00 : f32
    %6 = vector.broadcast %cst_5 : f32 to vector<256x16xf32>
    %7 = arith.addf %5, %6 : vector<256x16xf32>
    %cst_6 = arith.constant 0.000000e+00 : f32
    %cst_7 = arith.constant 6.000000e+00 : f32
    %8 = vector.broadcast %cst_6 : f32 to vector<256x16xf32>
    %9 = arith.maximumf %8, %7 : vector<256x16xf32>
    %10 = vector.broadcast %cst_7 : f32 to vector<256x16xf32>
    %11 = arith.minimumf %10, %9 : vector<256x16xf32>
    %12 = arith.mulf %5, %11 : vector<256x16xf32>
    %cst_8 = arith.constant 0.166666672 : f32
    %13 = vector.broadcast %cst_8 : f32 to vector<256x16xf32>
    %14 = arith.mulf %12, %13 : vector<256x16xf32>
    %15 = arith.truncf %14 : vector<256x16xf32> to vector<256x16xbf16>
    %c0_9 = arith.constant 0 : index
    %c0_10 = arith.constant 0 : index
    %16 = vector.load %arg4[%c0_9, %c0_10] : memref<256x16xbf16, #tpu.memory_space<vmem>>, vector<256x16xbf16>
    tpu.vector_store %arg4[%c0_9, %c0_10], %15 {strides = array<i32>} : memref<256x16xbf16, #tpu.memory_space<vmem>>, vector<256x16xbf16>,
    return
  }
  func.func @transform_0(%arg0: i32) -> (i32, i32) {
    %c0_i32 = arith.constant 0 : i32
    %c0_i32_0 = arith.constant 0 : i32
    return %arg0, %c0_i32 : i32, i32
  }
  func.func @transform_1(%arg0: i32) -> (i32, i32) {
    %c0_i32 = arith.constant 0 : i32
    %c0_i32_0 = arith.constant 0 : i32
    %c0_i32_1 = arith.constant 0 : i32
    return %c0_i32, %c0_i32_0 : i32, i32
  }
  func.func @transform_2(%arg0: i32) -> (i32, i32) {
    %c0_i32 = arith.constant 0 : i32
    %c0_i32_0 = arith.constant 0 : i32
    %c0_i32_1 = arith.constant 0 : i32
    return %c0_i32, %c0_i32_0 : i32, i32
  }
  func.func @transform_3(%arg0: i32) -> (i32, i32) {
    %c0_i32 = arith.constant 0 : i32
    %c0_i32_0 = arith.constant 0 : i32
    return %arg0, %c0_i32 : i32, i32
  }
}

module attributes {stable_mosaic.version = 11 : i64} {
  func.func @_dwpw_kernel(%arg0: i32, %arg1: memref<128x144xbf16, #tpu.memory_space<vmem>>, %arg2: memref<144x16xbf16, #tpu.memory_space<vmem>>, %arg3: memref<1x16xf32, #tpu.memory_space<vmem>>, %arg4: memref<16x32xbf16, #tpu.memory_space<vmem>>, %arg5: memref<1x32xf32, #tpu.memory_space<vmem>>, %arg6: memref<128x32xbf16, #tpu.memory_space<vmem>>) attributes {dimension_semantics = [#tpu.dimension_semantics<parallel>], iteration_bounds = array<i64: 1>, scalar_prefetch = 0 : i64, scratch_operands = 0 : i64, tpu.core_type = #tpu.core_type<tc>, window_params = [{transform_indices = @transform_0, window_bounds = array<i64: 128, 144>}, {pipeline_mode = #tpu.pipeline_mode<synchronous>, transform_indices = @transform_1, window_bounds = array<i64: 144, 16>}, {pipeline_mode = #tpu.pipeline_mode<synchronous>, transform_indices = @transform_2, window_bounds = array<i64: 1, 16>}, {pipeline_mode = #tpu.pipeline_mode<synchronous>, transform_indices = @transform_3, window_bounds = array<i64: 16, 32>}, {pipeline_mode = #tpu.pipeline_mode<synchronous>, transform_indices = @transform_4, window_bounds = array<i64: 1, 32>}, {transform_indices = @transform_5, window_bounds = array<i64: 128, 32>}]} {
    %c0 = arith.constant 0 : index
    %c0_0 = arith.constant 0 : index
    %0 = vector.load %arg1[%c0, %c0_0] : memref<128x144xbf16, #tpu.memory_space<vmem>>, vector<128x144xbf16>
    %c0_1 = arith.constant 0 : index
    %c0_2 = arith.constant 0 : index
    %1 = vector.load %arg2[%c0_1, %c0_2] : memref<144x16xbf16, #tpu.memory_space<vmem>>, vector<144x16xbf16>
    %cst = arith.constant dense<0.000000e+00> : vector<128x16xf32>
    %2 = tpu.matmul %0, %1, %cst {dimension_numbers = #tpu.dot_dimension_numbers<[1], [0], [0], [1], [0, 0, 1, 1], [], []>} : vector<128x144xbf16>, vector<144x16xbf16>, vector<128x16xf32> -> vector<128x16xf32>
    %c0_3 = arith.constant 0 : index
    %c0_4 = arith.constant 0 : index
    %3 = vector.load %arg3[%c0_3, %c0_4] : memref<1x16xf32, #tpu.memory_space<vmem>>, vector<1x16xf32>
    %4 = vector.broadcast %3 : vector<1x16xf32> to vector<128x16xf32>
    %5 = arith.addf %2, %4 : vector<128x16xf32>
    %cst_5 = arith.constant 3.000000e+00 : f32
    %6 = vector.broadcast %cst_5 : f32 to vector<128x16xf32>
    %7 = arith.addf %5, %6 : vector<128x16xf32>
    %cst_6 = arith.constant 0.000000e+00 : f32
    %cst_7 = arith.constant 6.000000e+00 : f32
    %8 = vector.broadcast %cst_6 : f32 to vector<128x16xf32>
    %9 = arith.maximumf %8, %7 : vector<128x16xf32>
    %10 = vector.broadcast %cst_7 : f32 to vector<128x16xf32>
    %11 = arith.minimumf %10, %9 : vector<128x16xf32>
    %12 = arith.mulf %5, %11 : vector<128x16xf32>
    %cst_8 = arith.constant 0.166666672 : f32
    %13 = vector.broadcast %cst_8 : f32 to vector<128x16xf32>
    %14 = arith.mulf %12, %13 : vector<128x16xf32>
    %15 = arith.truncf %14 : vector<128x16xf32> to vector<128x16xbf16>
    %c0_9 = arith.constant 0 : index
    %c0_10 = arith.constant 0 : index
    %16 = vector.load %arg4[%c0_9, %c0_10] : memref<16x32xbf16, #tpu.memory_space<vmem>>, vector<16x32xbf16>
    %cst_11 = arith.constant dense<0.000000e+00> : vector<128x32xf32>
    %17 = tpu.matmul %15, %16, %cst_11 {dimension_numbers = #tpu.dot_dimension_numbers<[1], [0], [0], [1], [0, 0, 1, 1], [], []>} : vector<128x16xbf16>, vector<16x32xbf16>, vector<128x32xf32> -> vector<128x32xf32>
    %c0_12 = arith.constant 0 : index
    %c0_13 = arith.constant 0 : index
    %18 = vector.load %arg5[%c0_12, %c0_13] : memref<1x32xf32, #tpu.memory_space<vmem>>, vector<1x32xf32>
    %19 = vector.broadcast %18 : vector<1x32xf32> to vector<128x32xf32>
    %20 = arith.addf %17, %19 : vector<128x32xf32>
    %cst_14 = arith.constant 3.000000e+00 : f32
    %21 = vector.broadcast %cst_14 : f32 to vector<128x32xf32>
    %22 = arith.addf %20, %21 : vector<128x32xf32>
    %cst_15 = arith.constant 0.000000e+00 : f32
    %cst_16 = arith.constant 6.000000e+00 : f32
    %23 = vector.broadcast %cst_15 : f32 to vector<128x32xf32>
    %24 = arith.maximumf %23, %22 : vector<128x32xf32>
    %25 = vector.broadcast %cst_16 : f32 to vector<128x32xf32>
    %26 = arith.minimumf %25, %24 : vector<128x32xf32>
    %27 = arith.mulf %20, %26 : vector<128x32xf32>
    %cst_17 = arith.constant 0.166666672 : f32
    %28 = vector.broadcast %cst_17 : f32 to vector<128x32xf32>
    %29 = arith.mulf %27, %28 : vector<128x32xf32>
    %30 = arith.truncf %29 : vector<128x32xf32> to vector<128x32xbf16>
    %c0_18 = arith.constant 0 : index
    %c0_19 = arith.constant 0 : index
    %31 = vector.load %arg6[%c0_18, %c0_19] : memref<128x32xbf16, #tpu.memory_space<vmem>>, vector<128x32xbf16>
    tpu.vector_store %arg6[%c0_18, %c0_19], %30 {strides = array<i32>} : memref<128x32xbf16, #tpu.memory_space<vmem>>, vector<128x32xbf16>,
    return
  }
  func.func @transform_0(%arg0: i32) -> (i32, i32) {
    %c0_i32 = arith.constant 0 : i32
    %c0_i32_0 = arith.constant 0 : i32
    return %arg0, %c0_i32 : i32, i32
  }
  func.func @transform_1(%arg0: i32) -> (i32, i32) {
    %c0_i32 = arith.constant 0 : i32
    %c0_i32_0 = arith.constant 0 : i32
    %c0_i32_1 = arith.constant 0 : i32
    return %c0_i32, %c0_i32_0 : i32, i32
  }
  func.func @transform_2(%arg0: i32) -> (i32, i32) {
    %c0_i32 = arith.constant 0 : i32
    %c0_i32_0 = arith.constant 0 : i32
    %c0_i32_1 = arith.constant 0 : i32
    return %c0_i32, %c0_i32_0 : i32, i32
  }
  func.func @transform_3(%arg0: i32) -> (i32, i32) {
    %c0_i32 = arith.constant 0 : i32
    %c0_i32_0 = arith.constant 0 : i32
    %c0_i32_1 = arith.constant 0 : i32
    return %c0_i32, %c0_i32_0 : i32, i32
  }
  func.func @transform_4(%arg0: i32) -> (i32, i32) {
    %c0_i32 = arith.constant 0 : i32
    %c0_i32_0 = arith.constant 0 : i32
    %c0_i32_1 = arith.constant 0 : i32
    return %c0_i32, %c0_i32_0 : i32, i32
  }
  func.func @transform_5(%arg0: i32) -> (i32, i32) {
    %c0_i32 = arith.constant 0 : i32
    %c0_i32_0 = arith.constant 0 : i32
    return %arg0, %c0_i32 : i32, i32
  }
}

module attributes {stable_mosaic.version = 11 : i64} {
  func.func @_dwpw_kernel(%arg0: i32, %arg1: memref<64x288xbf16, #tpu.memory_space<vmem>>, %arg2: memref<288x32xbf16, #tpu.memory_space<vmem>>, %arg3: memref<1x32xf32, #tpu.memory_space<vmem>>, %arg4: memref<32x64xbf16, #tpu.memory_space<vmem>>, %arg5: memref<1x64xf32, #tpu.memory_space<vmem>>, %arg6: memref<64x64xbf16, #tpu.memory_space<vmem>>) attributes {dimension_semantics = [#tpu.dimension_semantics<parallel>], iteration_bounds = array<i64: 1>, scalar_prefetch = 0 : i64, scratch_operands = 0 : i64, tpu.core_type = #tpu.core_type<tc>, window_params = [{transform_indices = @transform_0, window_bounds = array<i64: 64, 288>}, {pipeline_mode = #tpu.pipeline_mode<synchronous>, transform_indices = @transform_1, window_bounds = array<i64: 288, 32>}, {pipeline_mode = #tpu.pipeline_mode<synchronous>, transform_indices = @transform_2, window_bounds = array<i64: 1, 32>}, {pipeline_mode = #tpu.pipeline_mode<synchronous>, transform_indices = @transform_3, window_bounds = array<i64: 32, 64>}, {pipeline_mode = #tpu.pipeline_mode<synchronous>, transform_indices = @transform_4, window_bounds = array<i64: 1, 64>}, {transform_indices = @transform_5, window_bounds = array<i64: 64, 64>}]} {
    %c0 = arith.constant 0 : index
    %c0_0 = arith.constant 0 : index
    %0 = vector.load %arg1[%c0, %c0_0] : memref<64x288xbf16, #tpu.memory_space<vmem>>, vector<64x288xbf16>
    %c0_1 = arith.constant 0 : index
    %c0_2 = arith.constant 0 : index
    %1 = vector.load %arg2[%c0_1, %c0_2] : memref<288x32xbf16, #tpu.memory_space<vmem>>, vector<288x32xbf16>
    %cst = arith.constant dense<0.000000e+00> : vector<64x32xf32>
    %2 = tpu.matmul %0, %1, %cst {dimension_numbers = #tpu.dot_dimension_numbers<[1], [0], [0], [1], [0, 0, 1, 1], [], []>} : vector<64x288xbf16>, vector<288x32xbf16>, vector<64x32xf32> -> vector<64x32xf32>
    %c0_3 = arith.constant 0 : index
    %c0_4 = arith.constant 0 : index
    %3 = vector.load %arg3[%c0_3, %c0_4] : memref<1x32xf32, #tpu.memory_space<vmem>>, vector<1x32xf32>
    %4 = vector.broadcast %3 : vector<1x32xf32> to vector<64x32xf32>
    %5 = arith.addf %2, %4 : vector<64x32xf32>
    %cst_5 = arith.constant 3.000000e+00 : f32
    %6 = vector.broadcast %cst_5 : f32 to vector<64x32xf32>
    %7 = arith.addf %5, %6 : vector<64x32xf32>
    %cst_6 = arith.constant 0.000000e+00 : f32
    %cst_7 = arith.constant 6.000000e+00 : f32
    %8 = vector.broadcast %cst_6 : f32 to vector<64x32xf32>
    %9 = arith.maximumf %8, %7 : vector<64x32xf32>
    %10 = vector.broadcast %cst_7 : f32 to vector<64x32xf32>
    %11 = arith.minimumf %10, %9 : vector<64x32xf32>
    %12 = arith.mulf %5, %11 : vector<64x32xf32>
    %cst_8 = arith.constant 0.166666672 : f32
    %13 = vector.broadcast %cst_8 : f32 to vector<64x32xf32>
    %14 = arith.mulf %12, %13 : vector<64x32xf32>
    %15 = arith.truncf %14 : vector<64x32xf32> to vector<64x32xbf16>
    %c0_9 = arith.constant 0 : index
    %c0_10 = arith.constant 0 : index
    %16 = vector.load %arg4[%c0_9, %c0_10] : memref<32x64xbf16, #tpu.memory_space<vmem>>, vector<32x64xbf16>
    %cst_11 = arith.constant dense<0.000000e+00> : vector<64x64xf32>
    %17 = tpu.matmul %15, %16, %cst_11 {dimension_numbers = #tpu.dot_dimension_numbers<[1], [0], [0], [1], [0, 0, 1, 1], [], []>} : vector<64x32xbf16>, vector<32x64xbf16>, vector<64x64xf32> -> vector<64x64xf32>
    %c0_12 = arith.constant 0 : index
    %c0_13 = arith.constant 0 : index
    %18 = vector.load %arg5[%c0_12, %c0_13] : memref<1x64xf32, #tpu.memory_space<vmem>>, vector<1x64xf32>
    %19 = vector.broadcast %18 : vector<1x64xf32> to vector<64x64xf32>
    %20 = arith.addf %17, %19 : vector<64x64xf32>
    %cst_14 = arith.constant 3.000000e+00 : f32
    %21 = vector.broadcast %cst_14 : f32 to vector<64x64xf32>
    %22 = arith.addf %20, %21 : vector<64x64xf32>
    %cst_15 = arith.constant 0.000000e+00 : f32
    %cst_16 = arith.constant 6.000000e+00 : f32
    %23 = vector.broadcast %cst_15 : f32 to vector<64x64xf32>
    %24 = arith.maximumf %23, %22 : vector<64x64xf32>
    %25 = vector.broadcast %cst_16 : f32 to vector<64x64xf32>
    %26 = arith.minimumf %25, %24 : vector<64x64xf32>
    %27 = arith.mulf %20, %26 : vector<64x64xf32>
    %cst_17 = arith.constant 0.166666672 : f32
    %28 = vector.broadcast %cst_17 : f32 to vector<64x64xf32>
    %29 = arith.mulf %27, %28 : vector<64x64xf32>
    %30 = arith.truncf %29 : vector<64x64xf32> to vector<64x64xbf16>
    %c0_18 = arith.constant 0 : index
    %c0_19 = arith.constant 0 : index
    %31 = vector.load %arg6[%c0_18, %c0_19] : memref<64x64xbf16, #tpu.memory_space<vmem>>, vector<64x64xbf16>
    tpu.vector_store %arg6[%c0_18, %c0_19], %30 {strides = array<i32>} : memref<64x64xbf16, #tpu.memory_space<vmem>>, vector<64x64xbf16>,
    return
  }
  func.func @transform_0(%arg0: i32) -> (i32, i32) {
    %c0_i32 = arith.constant 0 : i32
    %c0_i32_0 = arith.constant 0 : i32
    return %arg0, %c0_i32 : i32, i32
  }
  func.func @transform_1(%arg0: i32) -> (i32, i32) {
    %c0_i32 = arith.constant 0 : i32
    %c0_i32_0 = arith.constant 0 : i32
    %c0_i32_1 = arith.constant 0 : i32
    return %c0_i32, %c0_i32_0 : i32, i32
  }
  func.func @transform_2(%arg0: i32) -> (i32, i32) {
    %c0_i32 = arith.constant 0 : i32
    %c0_i32_0 = arith.constant 0 : i32
    %c0_i32_1 = arith.constant 0 : i32
    return %c0_i32, %c0_i32_0 : i32, i32
  }
  func.func @transform_3(%arg0: i32) -> (i32, i32) {
    %c0_i32 = arith.constant 0 : i32
    %c0_i32_0 = arith.constant 0 : i32
    %c0_i32_1 = arith.constant 0 : i32
    return %c0_i32, %c0_i32_0 : i32, i32
  }
  func.func @transform_4(%arg0: i32) -> (i32, i32) {
    %c0_i32 = arith.constant 0 : i32
    %c0_i32_0 = arith.constant 0 : i32
    %c0_i32_1 = arith.constant 0 : i32
    return %c0_i32, %c0_i32_0 : i32, i32
  }
  func.func @transform_5(%arg0: i32) -> (i32, i32) {
    %c0_i32 = arith.constant 0 : i32
    %c0_i32_0 = arith.constant 0 : i32
    return %arg0, %c0_i32 : i32, i32
  }
}

module attributes {stable_mosaic.version = 11 : i64} {
  func.func @_dwpw_kernel(%arg0: i32, %arg1: memref<32x576xbf16, #tpu.memory_space<vmem>>, %arg2: memref<576x64xbf16, #tpu.memory_space<vmem>>, %arg3: memref<1x64xf32, #tpu.memory_space<vmem>>, %arg4: memref<64x512xbf16, #tpu.memory_space<vmem>>, %arg5: memref<1x512xf32, #tpu.memory_space<vmem>>, %arg6: memref<32x512xbf16, #tpu.memory_space<vmem>>) attributes {dimension_semantics = [#tpu.dimension_semantics<parallel>], iteration_bounds = array<i64: 1>, scalar_prefetch = 0 : i64, scratch_operands = 0 : i64, tpu.core_type = #tpu.core_type<tc>, window_params = [{transform_indices = @transform_0, window_bounds = array<i64: 32, 576>}, {pipeline_mode = #tpu.pipeline_mode<synchronous>, transform_indices = @transform_1, window_bounds = array<i64: 576, 64>}, {pipeline_mode = #tpu.pipeline_mode<synchronous>, transform_indices = @transform_2, window_bounds = array<i64: 1, 64>}, {pipeline_mode = #tpu.pipeline_mode<synchronous>, transform_indices = @transform_3, window_bounds = array<i64: 64, 512>}, {pipeline_mode = #tpu.pipeline_mode<synchronous>, transform_indices = @transform_4, window_bounds = array<i64: 1, 512>}, {transform_indices = @transform_5, window_bounds = array<i64: 32, 512>}]} {
    %c0 = arith.constant 0 : index
    %c0_0 = arith.constant 0 : index
    %0 = vector.load %arg1[%c0, %c0_0] : memref<32x576xbf16, #tpu.memory_space<vmem>>, vector<32x576xbf16>
    %c0_1 = arith.constant 0 : index
    %c0_2 = arith.constant 0 : index
    %1 = vector.load %arg2[%c0_1, %c0_2] : memref<576x64xbf16, #tpu.memory_space<vmem>>, vector<576x64xbf16>
    %cst = arith.constant dense<0.000000e+00> : vector<32x64xf32>
    %2 = tpu.matmul %0, %1, %cst {dimension_numbers = #tpu.dot_dimension_numbers<[1], [0], [0], [1], [0, 0, 1, 1], [], []>} : vector<32x576xbf16>, vector<576x64xbf16>, vector<32x64xf32> -> vector<32x64xf32>
    %c0_3 = arith.constant 0 : index
    %c0_4 = arith.constant 0 : index
    %3 = vector.load %arg3[%c0_3, %c0_4] : memref<1x64xf32, #tpu.memory_space<vmem>>, vector<1x64xf32>
    %4 = vector.broadcast %3 : vector<1x64xf32> to vector<32x64xf32>
    %5 = arith.addf %2, %4 : vector<32x64xf32>
    %cst_5 = arith.constant 3.000000e+00 : f32
    %6 = vector.broadcast %cst_5 : f32 to vector<32x64xf32>
    %7 = arith.addf %5, %6 : vector<32x64xf32>
    %cst_6 = arith.constant 0.000000e+00 : f32
    %cst_7 = arith.constant 6.000000e+00 : f32
    %8 = vector.broadcast %cst_6 : f32 to vector<32x64xf32>
    %9 = arith.maximumf %8, %7 : vector<32x64xf32>
    %10 = vector.broadcast %cst_7 : f32 to vector<32x64xf32>
    %11 = arith.minimumf %10, %9 : vector<32x64xf32>
    %12 = arith.mulf %5, %11 : vector<32x64xf32>
    %cst_8 = arith.constant 0.166666672 : f32
    %13 = vector.broadcast %cst_8 : f32 to vector<32x64xf32>
    %14 = arith.mulf %12, %13 : vector<32x64xf32>
    %15 = arith.truncf %14 : vector<32x64xf32> to vector<32x64xbf16>
    %c0_9 = arith.constant 0 : index
    %c0_10 = arith.constant 0 : index
    %16 = vector.load %arg4[%c0_9, %c0_10] : memref<64x512xbf16, #tpu.memory_space<vmem>>, vector<64x512xbf16>
    %cst_11 = arith.constant dense<0.000000e+00> : vector<32x512xf32>
    %17 = tpu.matmul %15, %16, %cst_11 {dimension_numbers = #tpu.dot_dimension_numbers<[1], [0], [0], [1], [0, 0, 1, 1], [], []>} : vector<32x64xbf16>, vector<64x512xbf16>, vector<32x512xf32> -> vector<32x512xf32>
    %c0_12 = arith.constant 0 : index
    %c0_13 = arith.constant 0 : index
    %18 = vector.load %arg5[%c0_12, %c0_13] : memref<1x512xf32, #tpu.memory_space<vmem>>, vector<1x512xf32>
    %19 = vector.broadcast %18 : vector<1x512xf32> to vector<32x512xf32>
    %20 = arith.addf %17, %19 : vector<32x512xf32>
    %cst_14 = arith.constant 3.000000e+00 : f32
    %21 = vector.broadcast %cst_14 : f32 to vector<32x512xf32>
    %22 = arith.addf %20, %21 : vector<32x512xf32>
    %cst_15 = arith.constant 0.000000e+00 : f32
    %cst_16 = arith.constant 6.000000e+00 : f32
    %23 = vector.broadcast %cst_15 : f32 to vector<32x512xf32>
    %24 = arith.maximumf %23, %22 : vector<32x512xf32>
    %25 = vector.broadcast %cst_16 : f32 to vector<32x512xf32>
    %26 = arith.minimumf %25, %24 : vector<32x512xf32>
    %27 = arith.mulf %20, %26 : vector<32x512xf32>
    %cst_17 = arith.constant 0.166666672 : f32
    %28 = vector.broadcast %cst_17 : f32 to vector<32x512xf32>
    %29 = arith.mulf %27, %28 : vector<32x512xf32>
    %30 = arith.truncf %29 : vector<32x512xf32> to vector<32x512xbf16>
    %c0_18 = arith.constant 0 : index
    %c0_19 = arith.constant 0 : index
    %31 = vector.load %arg6[%c0_18, %c0_19] : memref<32x512xbf16, #tpu.memory_space<vmem>>, vector<32x512xbf16>
    tpu.vector_store %arg6[%c0_18, %c0_19], %30 {strides = array<i32>} : memref<32x512xbf16, #tpu.memory_space<vmem>>, vector<32x512xbf16>,
    return
  }
  func.func @transform_0(%arg0: i32) -> (i32, i32) {
    %c0_i32 = arith.constant 0 : i32
    %c0_i32_0 = arith.constant 0 : i32
    return %arg0, %c0_i32 : i32, i32
  }
  func.func @transform_1(%arg0: i32) -> (i32, i32) {
    %c0_i32 = arith.constant 0 : i32
    %c0_i32_0 = arith.constant 0 : i32
    %c0_i32_1 = arith.constant 0 : i32
    return %c0_i32, %c0_i32_0 : i32, i32
  }
  func.func @transform_2(%arg0: i32) -> (i32, i32) {
    %c0_i32 = arith.constant 0 : i32
    %c0_i32_0 = arith.constant 0 : i32
    %c0_i32_1 = arith.constant 0 : i32
    return %c0_i32, %c0_i32_0 : i32, i32
  }
  func.func @transform_3(%arg0: i32) -> (i32, i32) {
    %c0_i32 = arith.constant 0 : i32
    %c0_i32_0 = arith.constant 0 : i32
    %c0_i32_1 = arith.constant 0 : i32
    return %c0_i32, %c0_i32_0 : i32, i32
  }
  func.func @transform_4(%arg0: i32) -> (i32, i32) {
    %c0_i32 = arith.constant 0 : i32
    %c0_i32_0 = arith.constant 0 : i32
    %c0_i32_1 = arith.constant 0 : i32
    return %c0_i32, %c0_i32_0 : i32, i32
  }
  func.func @transform_5(%arg0: i32) -> (i32, i32) {
    %c0_i32 = arith.constant 0 : i32
    %c0_i32_0 = arith.constant 0 : i32
    return %arg0, %c0_i32 : i32, i32
  }
}

module attributes {stable_mosaic.version = 11 : i64} {
  func.func @_neck_head_softmax_kernel(%arg0: i32, %arg1: memref<32x512xbf16, #tpu.memory_space<vmem>>, %arg2: memref<512x120xbf16, #tpu.memory_space<vmem>>, %arg3: memref<1x120xf32, #tpu.memory_space<vmem>>, %arg4: memref<120x6656xbf16, #tpu.memory_space<vmem>>, %arg5: memref<1x6656xf32, #tpu.memory_space<vmem>>, %arg6: memref<32x6656xf32, #tpu.memory_space<vmem>>) attributes {dimension_semantics = [#tpu.dimension_semantics<parallel>], iteration_bounds = array<i64: 1>, scalar_prefetch = 0 : i64, scratch_operands = 0 : i64, tpu.core_type = #tpu.core_type<tc>, window_params = [{transform_indices = @transform_0, window_bounds = array<i64: 32, 512>}, {pipeline_mode = #tpu.pipeline_mode<synchronous>, transform_indices = @transform_1, window_bounds = array<i64: 512, 120>}, {pipeline_mode = #tpu.pipeline_mode<synchronous>, transform_indices = @transform_2, window_bounds = array<i64: 1, 120>}, {pipeline_mode = #tpu.pipeline_mode<synchronous>, transform_indices = @transform_3, window_bounds = array<i64: 120, 6656>}, {pipeline_mode = #tpu.pipeline_mode<synchronous>, transform_indices = @transform_4, window_bounds = array<i64: 1, 6656>}, {transform_indices = @transform_5, window_bounds = array<i64: 32, 6656>}]} {
    %c0 = arith.constant 0 : index
    %c0_0 = arith.constant 0 : index
    %0 = vector.load %arg1[%c0, %c0_0] : memref<32x512xbf16, #tpu.memory_space<vmem>>, vector<32x512xbf16>
    %c0_1 = arith.constant 0 : index
    %c0_2 = arith.constant 0 : index
    %1 = vector.load %arg2[%c0_1, %c0_2] : memref<512x120xbf16, #tpu.memory_space<vmem>>, vector<512x120xbf16>
    %cst = arith.constant dense<0.000000e+00> : vector<32x120xf32>
    %2 = tpu.matmul %0, %1, %cst {dimension_numbers = #tpu.dot_dimension_numbers<[1], [0], [0], [1], [0, 0, 1, 1], [], []>} : vector<32x512xbf16>, vector<512x120xbf16>, vector<32x120xf32> -> vector<32x120xf32>
    %c0_3 = arith.constant 0 : index
    %c0_4 = arith.constant 0 : index
    %3 = vector.load %arg3[%c0_3, %c0_4] : memref<1x120xf32, #tpu.memory_space<vmem>>, vector<1x120xf32>
    %4 = vector.broadcast %3 : vector<1x120xf32> to vector<32x120xf32>
    %5 = arith.addf %2, %4 : vector<32x120xf32>
    %6 = arith.truncf %5 : vector<32x120xf32> to vector<32x120xbf16>
    %c0_5 = arith.constant 0 : index
    %c0_6 = arith.constant 0 : index
    %7 = vector.load %arg4[%c0_5, %c0_6] : memref<120x6656xbf16, #tpu.memory_space<vmem>>, vector<120x6656xbf16>
    %cst_7 = arith.constant dense<0.000000e+00> : vector<32x6656xf32>
    %8 = tpu.matmul %6, %7, %cst_7 {dimension_numbers = #tpu.dot_dimension_numbers<[1], [0], [0], [1], [0, 0, 1, 1], [], []>} : vector<32x120xbf16>, vector<120x6656xbf16>, vector<32x6656xf32> -> vector<32x6656xf32>
    %c0_8 = arith.constant 0 : index
    %c0_9 = arith.constant 0 : index
    %9 = vector.load %arg5[%c0_8, %c0_9] : memref<1x6656xf32, #tpu.memory_space<vmem>>, vector<1x6656xf32>
    %10 = vector.broadcast %9 : vector<1x6656xf32> to vector<32x6656xf32>
    %11 = arith.addf %8, %10 : vector<32x6656xf32>
    %cst_10 = arith.constant dense<0xFF800000> : vector<32xf32>
    %12 = vector.multi_reduction <maximumf>, %11, %cst_10 [1] : vector<32x6656xf32> to vector<32xf32>
    %13 = vector.shape_cast %12 : vector<32xf32> to vector<32x1xf32>
    %14 = vector.broadcast %13 : vector<32x1xf32> to vector<32x6656xf32>
    %15 = arith.subf %11, %14 : vector<32x6656xf32>
    %16 = math.exp %15 : vector<32x6656xf32>
    %cst_11 = arith.constant dense<0.000000e+00> : vector<32xf32>
    %17 = vector.multi_reduction <add>, %16, %cst_11 [1] : vector<32x6656xf32> to vector<32xf32>
    %18 = vector.shape_cast %17 : vector<32xf32> to vector<32x1xf32>
    %19 = tpu.reciprocal %18 {approx = true} : vector<32x1xf32> -> vector<32x1xf32>
    %20 = vector.broadcast %19 : vector<32x1xf32> to vector<32x6656xf32>
    %21 = arith.mulf %16, %20 : vector<32x6656xf32>
    %c0_12 = arith.constant 0 : index
    %c0_13 = arith.constant 0 : index
    %22 = vector.load %arg6[%c0_12, %c0_13] : memref<32x6656xf32, #tpu.memory_space<vmem>>, vector<32x6656xf32>
    tpu.vector_store %arg6[%c0_12, %c0_13], %21 {strides = array<i32>} : memref<32x6656xf32, #tpu.memory_space<vmem>>, vector<32x6656xf32>,
    return
  }
  func.func @transform_0(%arg0: i32) -> (i32, i32) {
    %c0_i32 = arith.constant 0 : i32
    %c0_i32_0 = arith.constant 0 : i32
    return %arg0, %c0_i32 : i32, i32
  }
  func.func @transform_1(%arg0: i32) -> (i32, i32) {
    %c0_i32 = arith.constant 0 : i32
    %c0_i32_0 = arith.constant 0 : i32
    %c0_i32_1 = arith.constant 0 : i32
    return %c0_i32, %c0_i32_0 : i32, i32
  }
  func.func @transform_2(%arg0: i32) -> (i32, i32) {
    %c0_i32 = arith.constant 0 : i32
    %c0_i32_0 = arith.constant 0 : i32
    %c0_i32_1 = arith.constant 0 : i32
    return %c0_i32, %c0_i32_0 : i32, i32
  }
  func.func @transform_3(%arg0: i32) -> (i32, i32) {
    %c0_i32 = arith.constant 0 : i32
    %c0_i32_0 = arith.constant 0 : i32
    %c0_i32_1 = arith.constant 0 : i32
    return %c0_i32, %c0_i32_0 : i32, i32
  }
  func.func @transform_4(%arg0: i32) -> (i32, i32) {
    %c0_i32 = arith.constant 0 : i32
    %c0_i32_0 = arith.constant 0 : i32
    %c0_i32_1 = arith.constant 0 : i32
    return %c0_i32, %c0_i32_0 : i32, i32
  }
  func.func @transform_5(%arg0: i32) -> (i32, i32) {
    %c0_i32 = arith.constant 0 : i32
    %c0_i32_0 = arith.constant 0 : i32
    return %arg0, %c0_i32 : i32, i32
  }
}

</mosaic_0001>

<llo_original>
// kernel: forward.5
$region0: #{forward.5}
  #allocation0 [shape = 'u32[]', space=smem, size = 0x4, offset = 0x4, fixed_abs, tag = 'smem constant byte address 0x4 - core index']
  #allocation1 [shape = 'u32[144,128]{1,0:T(1,128)}', space=vmem, size = 0x12000, scoped, tag = 'internal scratch']
  %s0 = inlined_call_operand.vmem [shape: bf16[256,27], index: 0, kind: input, shape index: {}]
  %s1 = inlined_call_operand.vmem [shape: bf16[27,16], index: 1, kind: input, shape index: {}]
  %s2 = inlined_call_operand.hbm [shape: f32[1,16], index: 2, kind: input, shape index: {}]
  %s3 = inlined_call_operand.vmem [shape: bf16[256,16], index: 3, kind: output, shape index: {}]
  %s4 = sld [smem:[#allocation0]]
  $region26: #{forward.5} parent=0
    _
  %s6 = ssub.s32 1, %s4
  %s7 = scalar_select 0, %s6, %s4
  $region1: #{forward.5} parent=0
    #allocation2 [shape = 'u8[512]{0}', space=vmem, size = 0x400, scoped, tag = 'input window, operand 2, single buffered']
    #allocation3 [shape = 's32[1]{0}', space=sflag, size = 0x4, scoped, tag = 'scoped memory for forward.5']
    %8 = vsyncpa [#allocation3], 0
    // Predicated region
    $region2: #{forward.5} parent=1 // pred_check
      _
    $region3: #{forward.5} parent=1 // pred_check_branch
      %10 = sbr.rel (0) target = $region5
    $region4: #{forward.5} parent=1 // pred_region
      _
    $region5: #{forward.5} parent=1 // pred_fallthru
      _
    // Predicated region
    $region6: #{forward.5} parent=1 // pred_check
      _
    $region7: #{forward.5} parent=1 // pred_check_branch
      %12 = sbr.rel (0) target = $region9
    $region8: #{forward.5} parent=1 // pred_region
      _
    $region9: #{forward.5} parent=1 // pred_fallthru
      _
    // Predicated region
    $region10: #{forward.5} parent=1 // pred_check
      _
    $region11: #{forward.5} parent=1 // pred_check_branch
      %14 = sbr.rel (0) target = $region13
    $region12: #{forward.5} parent=1 // pred_region
      %s16 = ssub.s32 16, 16
      %17 = vsyncadd [#allocation3], %s16
      %s19 = sshll.u32 [#allocation2], 4
      %s20 = int_to_ptr.vmem [resolvable:$true] %s19
      %22 = dma.hbm_to_vmem [thread:$0]  %s2, 16, %s20, [#allocation3]
    $region13: #{forward.5} parent=1 // pred_fallthru
      _
    // Predicated region
    $region14: #{forward.5} parent=1 // pred_check
      _
    $region15: #{forward.5} parent=1 // pred_check_branch
      %24 = sbr.rel (0) target = $region17
    $region16: #{forward.5} parent=1 // pred_region
      %25 = dma.done [#allocation3], 16
    $region17: #{forward.5} parent=1 // pred_fallthru
      _
    %v27 = vld [vmem:[%s0] sm:$0xf]
    %v28 = vld [vmem:[%s0 + $0x4] sm:$0xf]
    %v29 = vld [vmem:[%s0 + $0x8] sm:$0xf]
    %v30 = vld [vmem:[%s0 + $0xc] sm:$0xf]
    %v31 = vld [vmem:[%s0 + $0x10] sm:$0xf]
    %v32 = vld [vmem:[%s0 + $0x14] sm:$0xf]
    %v33 = vld [vmem:[%s0 + $0x18] sm:$0xf]
    %v34 = vld [vmem:[%s0 + $0x1c] sm:$0xf]
    %v35 = vld [vmem:[%s0 + $0x20] sm:$0xf]
    %v36 = vld [vmem:[%s0 + $0x24] sm:$0xf]
    %v37 = vld [vmem:[%s0 + $0x28] sm:$0xf]
    %v38 = vld [vmem:[%s0 + $0x2c] sm:$0xf]
    %v39 = vld [vmem:[%s0 + $0x30] sm:$0xf]
    %v40 = vld [vmem:[%s0 + $0x34] sm:$0xf]
    %v41 = vld [vmem:[%s0 + $0x38] sm:$0xf]
    %v42 = vld [vmem:[%s0 + $0x3c] sm:$0xf]
    %v43 = vld [vmem:[%s0 + $0x40] sm:$0xf]
    %v44 = vld [vmem:[%s0 + $0x44] sm:$0xf]
    %v45 = vld [vmem:[%s0 + $0x48] sm:$0xf]
    %v46 = vld [vmem:[%s0 + $0x4c] sm:$0xf]
    %v47 = vld [vmem:[%s0 + $0x50] sm:$0xf]
    %v48 = vld [vmem:[%s0 + $0x54] sm:$0xf]
    %v49 = vld [vmem:[%s0 + $0x58] sm:$0xf]
    %v50 = vld [vmem:[%s0 + $0x5c] sm:$0xf]
    %v51 = vld [vmem:[%s0 + $0x60] sm:$0xf]
    %v52 = vld [vmem:[%s0 + $0x64] sm:$0xf]
    %v53 = vld [vmem:[%s0 + $0x68] sm:$0xf]
    %v54 = vld [vmem:[%s0 + $0x6c] sm:$0xf]
    %v55 = vld [vmem:[%s0 + $0x70] sm:$0xf]
    %v56 = vld [vmem:[%s0 + $0x74] sm:$0xf]
    %v57 = vld [vmem:[%s0 + $0x78] sm:$0xf]
    %v58 = vld [vmem:[%s0 + $0x7c] sm:$0xf]
    %v59 = vld [vmem:[%s1] sm:$0xf]
    %v60 = vld [vmem:[%s1 + $0x4] sm:$0xf]
    %v61 = vld [vmem:[%s1 + $0x8] sm:$0xf]
    %v62 = vld [vmem:[%s1 + $0xc] sm:$0x3]
    %v63 = vld [vmem:[#allocation2] sm:$0x1]
    %v65 = vlaneseq
    %v66 = vshrl.u32 %v65, 7
    %v67 = vsub.s32 0, %v66
    %v68 = vrot.slane %v63, %v67
    %v102 = vunpack.c.l.b16 %v27
    %v103 = vunpack.c.l.b16 %v28
    %v104 = vunpack.c.l.b16 %v29
    %v105 = vunpack.c.l.b16 %v30
    %v106 = vunpack.c.l.b16 %v31
    %v107 = vunpack.c.l.b16 %v32
    %v108 = vunpack.c.l.b16 %v33
    %v109 = vunpack.c.l.b16 %v34
    %v110 = vunpack.c.l.b16 %v35
    %v111 = vunpack.c.l.b16 %v36
    %v112 = vunpack.c.l.b16 %v37
    %v113 = vunpack.c.l.b16 %v38
    %v114 = vunpack.c.l.b16 %v39
    %v115 = vunpack.c.l.b16 %v40
    %v116 = vunpack.c.l.b16 %v41
    %v117 = vunpack.c.l.b16 %v42
    %v118 = vunpack.c.l.b16 %v43
    %v119 = vunpack.c.l.b16 %v44
    %v120 = vunpack.c.l.b16 %v45
    %v121 = vunpack.c.l.b16 %v46
    %v122 = vunpack.c.l.b16 %v47
    %v123 = vunpack.c.l.b16 %v48
    %v124 = vunpack.c.l.b16 %v49
    %v125 = vunpack.c.l.b16 %v50
    %v126 = vunpack.c.l.b16 %v51
    %v127 = vunpack.c.l.b16 %v52
    %v128 = vunpack.c.l.b16 %v53
    %v129 = vunpack.c.l.b16 %v54
    %v130 = vunpack.c.l.b16 %v55
    %v131 = vunpack.c.l.b16 %v56
    %v132 = vunpack.c.l.b16 %v57
    %v133 = vunpack.c.l.b16 %v58
    %v134 = vpack.c.b16 %v103, %v102
    %v135 = vpack.c.b16 %v105, %v104
    %v136 = vpack.c.b16 %v107, %v106
    %v137 = vpack.c.b16 %v109, %v108
    %v138 = vpack.c.b16 %v111, %v110
    %v139 = vpack.c.b16 %v113, %v112
    %v140 = vpack.c.b16 %v115, %v114
    %v141 = vpack.c.b16 %v117, %v116
    %v142 = vpack.c.b16 %v119, %v118
    %v143 = vpack.c.b16 %v121, %v120
    %v144 = vpack.c.b16 %v123, %v122
    %v145 = vpack.c.b16 %v125, %v124
    %v146 = vpack.c.b16 %v127, %v126
    %v147 = vpack.c.b16 %v129, %v128
    %v148 = vpack.c.b16 %v131, %v130
    %v149 = vpack.c.b16 %v133, %v132
    %v154 = vunpack.c.l.b16 %v59
    %v155 = vunpack.c.l.b16 %v60
    %v156 = vunpack.c.l.b16 %v61
    %v157 = vunpack.c.l.b16 %v62
    %v158 = vpack.c.b16 %v155, %v154
    %v159 = vpack.c.b16 %v157, %v156
    %vm161 = vcmask 220160
    %v163 = vsel %vm161, %v134, 0
    %v166 = vsel %vm161, %v135, 0
    %v169 = vsel %vm161, %v136, 0
    %v172 = vsel %vm161, %v137, 0
    %v175 = vsel %vm161, %v138, 0
    %v178 = vsel %vm161, %v139, 0
    %v181 = vsel %vm161, %v140, 0
    %v184 = vsel %vm161, %v141, 0
    %v187 = vsel %vm161, %v142, 0
    %v190 = vsel %vm161, %v143, 0
    %v193 = vsel %vm161, %v144, 0
    %v196 = vsel %vm161, %v145, 0
    %v199 = vsel %vm161, %v146, 0
    %v202 = vsel %vm161, %v147, 0
    %v205 = vsel %vm161, %v148, 0
    %v208 = vsel %vm161, %v149, 0
    %vm210 = vcmask 1044480
    %vm211 = vcmask 1045504
    %v212 = vsel %vm210, 4294967295, 65535
    %v213 = vsel %vm211, %v212, 0
    %v215 = vand.u32 %v159, %v213
    %217 = vmatprep.subr.bf16.mxu0 0
    %218 = vmatpush1.bf16.msra.mxu0 %v158
    %219 = vmatprep.subr.bf16.mxu0 0
    %220 = vmatpush1.bf16.msra.mxu0 %v215
    %221 = vmatprep.subr.bf16.mxu0 0
    %222 = vmatpush1.bf16.msra.mxu0 0
    %223 = vmatprep.subr.bf16.mxu0 0
    %224 = vmatpush1.bf16.msra.mxu0 0
    %225 = vmatprep.subr.bf16.mxu0 0
    %226 = vmatpush1.bf16.msra.mxu0 0
    %227 = vmatprep.subr.bf16.mxu0 0
    %228 = vmatpush1.bf16.msra.mxu0 0
    %229 = vmatprep.subr.bf16.mxu0 0
    %230 = vmatpush1.bf16.msra.mxu0 0
    %231 = vmatprep.subr.bf16.mxu0 0
    %232 = vmatpush1.bf16.msra.mxu0 0
    %233 = vmatprep.subr.bf16.mxu0 0
    %234 = vmatpush1.bf16.msra.mxu0 0
    %235 = vmatprep.subr.bf16.mxu0 0
    %236 = vmatpush1.bf16.msra.mxu0 0
    %237 = vmatprep.subr.bf16.mxu0 0
    %238 = vmatpush1.bf16.msra.mxu0 0
    %239 = vmatprep.subr.bf16.mxu0 0
    %240 = vmatpush1.bf16.msra.mxu0 0
    %241 = vmatprep.subr.bf16.mxu0 0
    %242 = vmatpush1.bf16.msra.mxu0 0
    %243 = vmatprep.subr.bf16.mxu0 0
    %244 = vmatpush1.bf16.msra.mxu0 0
    %245 = vmatprep.subr.bf16.mxu0 0
    %246 = vmatpush1.bf16.msra.mxu0 0
    %247 = vmatprep.subr.bf16.mxu0 0
    %248 = vmatpush1.bf16.msra.mxu0 0
    %249 = vmatprep.mubr.bf16.mxu0 0
    %250 = vmatmul.mubr.bf16.gmra.mrb[0].mxu0 %v163
    %v251 = vpop.f32.mrb[0].mxu0
    %v252 = vadd.f32 %v68, %v251
    %v253 = vpop.f32.mrb[0].mxu0
    %v254 = vpop.f32.mrb[0].mxu0
    %v255 = vadd.f32 %v68, %v254
    %v256 = vpop.f32.mrb[0].mxu0
    %257 = vmatprep.mubr.bf16.mxu0 0
    %258 = vmatmul.mubr.bf16.gmra.mrb[0].mxu0 %v166
    %v259 = vpop.f32.mrb[0].mxu0
    %v260 = vadd.f32 %v68, %v259
    %v261 = vpop.f32.mrb[0].mxu0
    %v262 = vpop.f32.mrb[0].mxu0
    %v263 = vadd.f32 %v68, %v262
    %v264 = vpop.f32.mrb[0].mxu0
    %265 = vmatprep.mubr.bf16.mxu0 0
    %266 = vmatmul.mubr.bf16.gmra.mrb[0].mxu0 %v169
    %v267 = vpop.f32.mrb[0].mxu0
    %v268 = vadd.f32 %v68, %v267
    %v269 = vpop.f32.mrb[0].mxu0
    %v270 = vpop.f32.mrb[0].mxu0
    %v271 = vadd.f32 %v68, %v270
    %v272 = vpop.f32.mrb[0].mxu0
    %273 = vmatprep.mubr.bf16.mxu0 0
    %274 = vmatmul.mubr.bf16.gmra.mrb[0].mxu0 %v172
    %v275 = vpop.f32.mrb[0].mxu0
    %v276 = vadd.f32 %v68, %v275
    %v277 = vpop.f32.mrb[0].mxu0
    %v278 = vpop.f32.mrb[0].mxu0
    %v279 = vadd.f32 %v68, %v278
    %v280 = vpop.f32.mrb[0].mxu0
    %281 = vmatprep.mubr.bf16.mxu0 0
    %282 = vmatmul.mubr.bf16.gmra.mrb[0].mxu0 %v175
    %v283 = vpop.f32.mrb[0].mxu0
    %v284 = vadd.f32 %v68, %v283
    %v285 = vpop.f32.mrb[0].mxu0
    %v286 = vpop.f32.mrb[0].mxu0
    %v287 = vadd.f32 %v68, %v286
    %v288 = vpop.f32.mrb[0].mxu0
    %289 = vmatprep.mubr.bf16.mxu0 0
    %290 = vmatmul.mubr.bf16.gmra.mrb[0].mxu0 %v178
    %v291 = vpop.f32.mrb[0].mxu0
    %v292 = vadd.f32 %v68, %v291
    %v293 = vpop.f32.mrb[0].mxu0
    %v294 = vpop.f32.mrb[0].mxu0
    %v295 = vadd.f32 %v68, %v294
    %v296 = vpop.f32.mrb[0].mxu0
    %297 = vmatprep.mubr.bf16.mxu0 0
    %298 = vmatmul.mubr.bf16.gmra.mrb[0].mxu0 %v181
    %v299 = vpop.f32.mrb[0].mxu0
    %v300 = vadd.f32 %v68, %v299
    %v301 = vpop.f32.mrb[0].mxu0
    %v302 = vpop.f32.mrb[0].mxu0
    %v303 = vadd.f32 %v68, %v302
    %v304 = vpop.f32.mrb[0].mxu0
    %305 = vmatprep.mubr.bf16.mxu0 0
    %306 = vmatmul.mubr.bf16.gmra.mrb[0].mxu0 %v184
    %v307 = vpop.f32.mrb[0].mxu0
    %v308 = vadd.f32 %v68, %v307
    %v309 = vpop.f32.mrb[0].mxu0
    %v310 = vpop.f32.mrb[0].mxu0
    %v311 = vadd.f32 %v68, %v310
    %v312 = vpop.f32.mrb[0].mxu0
    %313 = vmatprep.mubr.bf16.mxu0 0
    %314 = vmatmul.mubr.bf16.gmra.mrb[0].mxu0 %v187
    %v315 = vpop.f32.mrb[0].mxu0
    %v316 = vadd.f32 %v68, %v315
    %v317 = vpop.f32.mrb[0].mxu0
    %v318 = vpop.f32.mrb[0].mxu0
    %v319 = vadd.f32 %v68, %v318
    %v320 = vpop.f32.mrb[0].mxu0
    %321 = vmatprep.mubr.bf16.mxu0 0
    %322 = vmatmul.mubr.bf16.gmra.mrb[0].mxu0 %v190
    %v323 = vpop.f32.mrb[0].mxu0
    %v324 = vadd.f32 %v68, %v323
    %v325 = vpop.f32.mrb[0].mxu0
    %v326 = vpop.f32.mrb[0].mxu0
    %v327 = vadd.f32 %v68, %v326
    %v328 = vpop.f32.mrb[0].mxu0
    %329 = vmatprep.mubr.bf16.mxu0 0
    %330 = vmatmul.mubr.bf16.gmra.mrb[0].mxu0 %v193
    %v331 = vpop.f32.mrb[0].mxu0
    %v332 = vadd.f32 %v68, %v331
    %v333 = vpop.f32.mrb[0].mxu0
    %v334 = vpop.f32.mrb[0].mxu0
    %v335 = vadd.f32 %v68, %v334
    %v336 = vpop.f32.mrb[0].mxu0
    %337 = vmatprep.mubr.bf16.mxu0 0
    %338 = vmatmul.mubr.bf16.gmra.mrb[0].mxu0 %v196
    %v339 = vpop.f32.mrb[0].mxu0
    %v340 = vadd.f32 %v68, %v339
    %v341 = vpop.f32.mrb[0].mxu0
    %v342 = vpop.f32.mrb[0].mxu0
    %v343 = vadd.f32 %v68, %v342
    %v344 = vpop.f32.mrb[0].mxu0
    %345 = vmatprep.mubr.bf16.mxu0 0
    %346 = vmatmul.mubr.bf16.gmra.mrb[0].mxu0 %v199
    %v347 = vpop.f32.mrb[0].mxu0
    %v348 = vadd.f32 %v68, %v347
    %v349 = vpop.f32.mrb[0].mxu0
    %v350 = vpop.f32.mrb[0].mxu0
    %v351 = vadd.f32 %v68, %v350
    %v352 = vpop.f32.mrb[0].mxu0
    %353 = vmatprep.mubr.bf16.mxu0 0
    %354 = vmatmul.mubr.bf16.gmra.mrb[0].mxu0 %v202
    %v355 = vpop.f32.mrb[0].mxu0
    %v356 = vadd.f32 %v68, %v355
    %v357 = vpop.f32.mrb[0].mxu0
    %v358 = vpop.f32.mrb[0].mxu0
    %v359 = vadd.f32 %v68, %v358
    %v360 = vpop.f32.mrb[0].mxu0
    %361 = vmatprep.mubr.bf16.mxu0 0
    %362 = vmatmul.mubr.bf16.gmra.mrb[0].mxu0 %v205
    %v363 = vpop.f32.mrb[0].mxu0
    %v364 = vadd.f32 %v68, %v363
    %v365 = vpop.f32.mrb[0].mxu0
    %v366 = vpop.f32.mrb[0].mxu0
    %v367 = vadd.f32 %v68, %v366
    %v368 = vpop.f32.mrb[0].mxu0
    %369 = vmatprep.mubr.bf16.mxu0 0
    %370 = vmatmul.mubr.bf16.gmra.mrb[0].mxu0 %v208
    %v371 = vpop.f32.mrb[0].mxu0
    %v372 = vadd.f32 %v68, %v371
    %v373 = vpop.f32.mrb[0].mxu0
    %v374 = vpop.f32.mrb[0].mxu0
    %v375 = vadd.f32 %v68, %v374
    %v376 = vpop.f32.mrb[0].mxu0
    %377 = vdwg.mxu0
    %v378 = vadd.f32 %v252, 3.0
    %v379 = vadd.f32 %v255, 3.0
    %v380 = vadd.f32 %v260, 3.0
    %v381 = vadd.f32 %v263, 3.0
    %v382 = vadd.f32 %v268, 3.0
    %v383 = vadd.f32 %v271, 3.0
    %v384 = vadd.f32 %v276, 3.0
    %v385 = vadd.f32 %v279, 3.0
    %v386 = vadd.f32 %v284, 3.0
    %v387 = vadd.f32 %v287, 3.0
    %v388 = vadd.f32 %v292, 3.0
    %v389 = vadd.f32 %v295, 3.0
    %v390 = vadd.f32 %v300, 3.0
    %v391 = vadd.f32 %v303, 3.0
    %v392 = vadd.f32 %v308, 3.0
    %v393 = vadd.f32 %v311, 3.0
    %v394 = vadd.f32 %v316, 3.0
    %v395 = vadd.f32 %v319, 3.0
    %v396 = vadd.f32 %v324, 3.0
    %v397 = vadd.f32 %v327, 3.0
    %v398 = vadd.f32 %v332, 3.0
    %v399 = vadd.f32 %v335, 3.0
    %v400 = vadd.f32 %v340, 3.0
    %v401 = vadd.f32 %v343, 3.0
    %v402 = vadd.f32 %v348, 3.0
    %v403 = vadd.f32 %v351, 3.0
    %v404 = vadd.f32 %v356, 3.0
    %v405 = vadd.f32 %v359, 3.0
    %v406 = vadd.f32 %v364, 3.0
    %v407 = vadd.f32 %v367, 3.0
    %v408 = vadd.f32 %v372, 3.0
    %v409 = vadd.f32 %v375, 3.0
    %v410 = vmax.f32 %v378, 0.0
    %v411 = vmax.f32 %v379, 0.0
    %v412 = vmax.f32 %v380, 0.0
    %v413 = vmax.f32 %v381, 0.0
    %v414 = vmax.f32 %v382, 0.0
    %v415 = vmax.f32 %v383, 0.0
    %v416 = vmax.f32 %v384, 0.0
    %v417 = vmax.f32 %v385, 0.0
    %v418 = vmax.f32 %v386, 0.0
    %v419 = vmax.f32 %v387, 0.0
    %v420 = vmax.f32 %v388, 0.0
    %v421 = vmax.f32 %v389, 0.0
    %v422 = vmax.f32 %v390, 0.0
    %v423 = vmax.f32 %v391, 0.0
    %v424 = vmax.f32 %v392, 0.0
    %v425 = vmax.f32 %v393, 0.0
    %v426 = vmax.f32 %v394, 0.0
    %v427 = vmax.f32 %v395, 0.0
    %v428 = vmax.f32 %v396, 0.0
    %v429 = vmax.f32 %v397, 0.0
    %v430 = vmax.f32 %v398, 0.0
    %v431 = vmax.f32 %v399, 0.0
    %v432 = vmax.f32 %v400, 0.0
    %v433 = vmax.f32 %v401, 0.0
    %v434 = vmax.f32 %v402, 0.0
    %v435 = vmax.f32 %v403, 0.0
    %v436 = vmax.f32 %v404, 0.0
    %v437 = vmax.f32 %v405, 0.0
    %v438 = vmax.f32 %v406, 0.0
    %v439 = vmax.f32 %v407, 0.0
    %v440 = vmax.f32 %v408, 0.0
    %v441 = vmax.f32 %v409, 0.0
    %v442 = vmin.f32 %v410, 6.0
    %v443 = vmin.f32 %v411, 6.0
    %v444 = vmin.f32 %v412, 6.0
    %v445 = vmin.f32 %v413, 6.0
    %v446 = vmin.f32 %v414, 6.0
    %v447 = vmin.f32 %v415, 6.0
    %v448 = vmin.f32 %v416, 6.0
    %v449 = vmin.f32 %v417, 6.0
    %v450 = vmin.f32 %v418, 6.0
    %v451 = vmin.f32 %v419, 6.0
    %v452 = vmin.f32 %v420, 6.0
    %v453 = vmin.f32 %v421, 6.0
    %v454 = vmin.f32 %v422, 6.0
    %v455 = vmin.f32 %v423, 6.0
    %v456 = vmin.f32 %v424, 6.0
    %v457 = vmin.f32 %v425, 6.0
    %v458 = vmin.f32 %v426, 6.0
    %v459 = vmin.f32 %v427, 6.0
    %v460 = vmin.f32 %v428, 6.0
    %v461 = vmin.f32 %v429, 6.0
    %v462 = vmin.f32 %v430, 6.0
    %v463 = vmin.f32 %v431, 6.0
    %v464 = vmin.f32 %v432, 6.0
    %v465 = vmin.f32 %v433, 6.0
    %v466 = vmin.f32 %v434, 6.0
    %v467 = vmin.f32 %v435, 6.0
    %v468 = vmin.f32 %v436, 6.0
    %v469 = vmin.f32 %v437, 6.0
    %v470 = vmin.f32 %v438, 6.0
    %v471 = vmin.f32 %v439, 6.0
    %v472 = vmin.f32 %v440, 6.0
    %v473 = vmin.f32 %v441, 6.0
    %v474 = vmul.f32 %v252, %v442
    %v475 = vmul.f32 %v255, %v443
    %v476 = vmul.f32 %v260, %v444
    %v477 = vmul.f32 %v263, %v445
    %v478 = vmul.f32 %v268, %v446
    %v479 = vmul.f32 %v271, %v447
    %v480 = vmul.f32 %v276, %v448
    %v481 = vmul.f32 %v279, %v449
    %v482 = vmul.f32 %v284, %v450
    %v483 = vmul.f32 %v287, %v451
    %v484 = vmul.f32 %v292, %v452
    %v485 = vmul.f32 %v295, %v453
    %v486 = vmul.f32 %v300, %v454
    %v487 = vmul.f32 %v303, %v455
    %v488 = vmul.f32 %v308, %v456
    %v489 = vmul.f32 %v311, %v457
    %v490 = vmul.f32 %v316, %v458
    %v491 = vmul.f32 %v319, %v459
    %v492 = vmul.f32 %v324, %v460
    %v493 = vmul.f32 %v327, %v461
    %v494 = vmul.f32 %v332, %v462
    %v495 = vmul.f32 %v335, %v463
    %v496 = vmul.f32 %v340, %v464
    %v497 = vmul.f32 %v343, %v465
    %v498 = vmul.f32 %v348, %v466
    %v499 = vmul.f32 %v351, %v467
    %v500 = vmul.f32 %v356, %v468
    %v501 = vmul.f32 %v359, %v469
    %v502 = vmul.f32 %v364, %v470
    %v503 = vmul.f32 %v367, %v471
    %v504 = vmul.f32 %v372, %v472
    %v505 = vmul.f32 %v375, %v473
    %v506 = vmul.f32 %v474, 0.16666667
    %v507 = vmul.f32 %v475, 0.16666667
    %v508 = vmul.f32 %v476, 0.16666667
    %v509 = vmul.f32 %v477, 0.16666667
    %v510 = vmul.f32 %v478, 0.16666667
    %v511 = vmul.f32 %v479, 0.16666667
    %v512 = vmul.f32 %v480, 0.16666667
    %v513 = vmul.f32 %v481, 0.16666667
    %v514 = vmul.f32 %v482, 0.16666667
    %v515 = vmul.f32 %v483, 0.16666667
    %v516 = vmul.f32 %v484, 0.16666667
    %v517 = vmul.f32 %v485, 0.16666667
    %v518 = vmul.f32 %v486, 0.16666667
    %v519 = vmul.f32 %v487, 0.16666667
    %v520 = vmul.f32 %v488, 0.16666667
    %v521 = vmul.f32 %v489, 0.16666667
    %v522 = vmul.f32 %v490, 0.16666667
    %v523 = vmul.f32 %v491, 0.16666667
    %v524 = vmul.f32 %v492, 0.16666667
    %v525 = vmul.f32 %v493, 0.16666667
    %v526 = vmul.f32 %v494, 0.16666667
    %v527 = vmul.f32 %v495, 0.16666667
    %v528 = vmul.f32 %v496, 0.16666667
    %v529 = vmul.f32 %v497, 0.16666667
    %v530 = vmul.f32 %v498, 0.16666667
    %v531 = vmul.f32 %v499, 0.16666667
    %v532 = vmul.f32 %v500, 0.16666667
    %v533 = vmul.f32 %v501, 0.16666667
    %v534 = vmul.f32 %v502, 0.16666667
    %v535 = vmul.f32 %v503, 0.16666667
    %v536 = vmul.f32 %v504, 0.16666667
    %v537 = vmul.f32 %v505, 0.16666667
    %v538 = vpack.c.bf16 %v507, %v506
    %v539 = vpack.c.bf16 %v509, %v508
    %v540 = vpack.c.bf16 %v511, %v510
    %v541 = vpack.c.bf16 %v513, %v512
    %v542 = vpack.c.bf16 %v515, %v514
    %v543 = vpack.c.bf16 %v517, %v516
    %v544 = vpack.c.bf16 %v519, %v518
    %v545 = vpack.c.bf16 %v521, %v520
    %v546 = vpack.c.bf16 %v523, %v522
    %v547 = vpack.c.bf16 %v525, %v524
    %v548 = vpack.c.bf16 %v527, %v526
    %v549 = vpack.c.bf16 %v529, %v528
    %v550 = vpack.c.bf16 %v531, %v530
    %v551 = vpack.c.bf16 %v533, %v532
    %v552 = vpack.c.bf16 %v535, %v534
    %v553 = vpack.c.bf16 %v537, %v536
    %v570 = vunpack.c.l.b16 %v538
    %v571 = vunpack.c.h.b16 %v538
    %v572 = vunpack.c.l.b16 %v539
    %v573 = vunpack.c.h.b16 %v539
    %v574 = vunpack.c.l.b16 %v540
    %v575 = vunpack.c.h.b16 %v540
    %v576 = vunpack.c.l.b16 %v541
    %v577 = vunpack.c.h.b16 %v541
    %v578 = vunpack.c.l.b16 %v542
    %v579 = vunpack.c.h.b16 %v542
    %v580 = vunpack.c.l.b16 %v543
    %v581 = vunpack.c.h.b16 %v543
    %v582 = vunpack.c.l.b16 %v544
    %v583 = vunpack.c.h.b16 %v544
    %v584 = vunpack.c.l.b16 %v545
    %v585 = vunpack.c.h.b16 %v545
    %v586 = vunpack.c.l.b16 %v546
    %v587 = vunpack.c.h.b16 %v546
    %v588 = vunpack.c.l.b16 %v547
    %v589 = vunpack.c.h.b16 %v547
    %v590 = vunpack.c.l.b16 %v548
    %v591 = vunpack.c.h.b16 %v548
    %v592 = vunpack.c.l.b16 %v549
    %v593 = vunpack.c.h.b16 %v549
    %v594 = vunpack.c.l.b16 %v550
    %v595 = vunpack.c.h.b16 %v550
    %v596 = vunpack.c.l.b16 %v551
    %v597 = vunpack.c.h.b16 %v551
    %v598 = vunpack.c.l.b16 %v552
    %v599 = vunpack.c.h.b16 %v552
    %v600 = vunpack.c.l.b16 %v553
    %v601 = vunpack.c.h.b16 %v553
    %v602 = vpack.c.b16 %v570, %v570
    %v603 = vpack.c.b16 %v571, %v571
    %v604 = vpack.c.b16 %v572, %v572
    %v605 = vpack.c.b16 %v573, %v573
    %v606 = vpack.c.b16 %v574, %v574
    %v607 = vpack.c.b16 %v575, %v575
    %v608 = vpack.c.b16 %v576, %v576
    %v609 = vpack.c.b16 %v577, %v577
    %v610 = vpack.c.b16 %v578, %v578
    %v611 = vpack.c.b16 %v579, %v579
    %v612 = vpack.c.b16 %v580, %v580
    %v613 = vpack.c.b16 %v581, %v581
    %v614 = vpack.c.b16 %v582, %v582
    %v615 = vpack.c.b16 %v583, %v583
    %v616 = vpack.c.b16 %v584, %v584
    %v617 = vpack.c.b16 %v585, %v585
    %v618 = vpack.c.b16 %v586, %v586
    %v619 = vpack.c.b16 %v587, %v587
    %v620 = vpack.c.b16 %v588, %v588
    %v621 = vpack.c.b16 %v589, %v589
    %v622 = vpack.c.b16 %v590, %v590
    %v623 = vpack.c.b16 %v591, %v591
    %v624 = vpack.c.b16 %v592, %v592
    %v625 = vpack.c.b16 %v593, %v593
    %v626 = vpack.c.b16 %v594, %v594
    %v627 = vpack.c.b16 %v595, %v595
    %v628 = vpack.c.b16 %v596, %v596
    %v629 = vpack.c.b16 %v597, %v597
    %v630 = vpack.c.b16 %v598, %v598
    %v631 = vpack.c.b16 %v599, %v599
    %v632 = vpack.c.b16 %v600, %v600
    %v633 = vpack.c.b16 %v601, %v601
    %vm666 = vcmask 125952
    %667 = vst.msk [vmem:[%s3] sm:$0xf] %vm666, %v602
    %668 = vst.msk [vmem:[%s3 + $0x4] sm:$0xf] %vm666, %v603
    %669 = vst.msk [vmem:[%s3 + $0x8] sm:$0xf] %vm666, %v604
    %670 = vst.msk [vmem:[%s3 + $0xc] sm:$0xf] %vm666, %v605
    %671 = vst.msk [vmem:[%s3 + $0x10] sm:$0xf] %vm666, %v606
    %672 = vst.msk [vmem:[%s3 + $0x14] sm:$0xf] %vm666, %v607
    %673 = vst.msk [vmem:[%s3 + $0x18] sm:$0xf] %vm666, %v608
    %674 = vst.msk [vmem:[%s3 + $0x1c] sm:$0xf] %vm666, %v609
    %675 = vst.msk [vmem:[%s3 + $0x20] sm:$0xf] %vm666, %v610
    %676 = vst.msk [vmem:[%s3 + $0x24] sm:$0xf] %vm666, %v611
    %677 = vst.msk [vmem:[%s3 + $0x28] sm:$0xf] %vm666, %v612
    %678 = vst.msk [vmem:[%s3 + $0x2c] sm:$0xf] %vm666, %v613
    %679 = vst.msk [vmem:[%s3 + $0x30] sm:$0xf] %vm666, %v614
    %680 = vst.msk [vmem:[%s3 + $0x34] sm:$0xf] %vm666, %v615
    %681 = vst.msk [vmem:[%s3 + $0x38] sm:$0xf] %vm666, %v616
    %682 = vst.msk [vmem:[%s3 + $0x3c] sm:$0xf] %vm666, %v617
    %683 = vst.msk [vmem:[%s3 + $0x40] sm:$0xf] %vm666, %v618
    %684 = vst.msk [vmem:[%s3 + $0x44] sm:$0xf] %vm666, %v619
    %685 = vst.msk [vmem:[%s3 + $0x48] sm:$0xf] %vm666, %v620
    %686 = vst.msk [vmem:[%s3 + $0x4c] sm:$0xf] %vm666, %v621
    %687 = vst.msk [vmem:[%s3 + $0x50] sm:$0xf] %vm666, %v622
    %688 = vst.msk [vmem:[%s3 + $0x54] sm:$0xf] %vm666, %v623
    %689 = vst.msk [vmem:[%s3 + $0x58] sm:$0xf] %vm666, %v624
    %690 = vst.msk [vmem:[%s3 + $0x5c] sm:$0xf] %vm666, %v625
    %691 = vst.msk [vmem:[%s3 + $0x60] sm:$0xf] %vm666, %v626
    %692 = vst.msk [vmem:[%s3 + $0x64] sm:$0xf] %vm666, %v627
    %693 = vst.msk [vmem:[%s3 + $0x68] sm:$0xf] %vm666, %v628
    %694 = vst.msk [vmem:[%s3 + $0x6c] sm:$0xf] %vm666, %v629
    %695 = vst.msk [vmem:[%s3 + $0x70] sm:$0xf] %vm666, %v630
    %696 = vst.msk [vmem:[%s3 + $0x74] sm:$0xf] %vm666, %v631
    %697 = vst.msk [vmem:[%s3 + $0x78] sm:$0xf] %vm666, %v632
    %698 = vst.msk [vmem:[%s3 + $0x7c] sm:$0xf] %vm666, %v633
    // Predicated region
    $region18: #{forward.5} parent=1 // pred_check
      _
    $region19: #{forward.5} parent=1 // pred_check_branch
      %700 = sbr.rel (0) target = $region21
    $region20: #{forward.5} parent=1 // pred_region
      _
    $region21: #{forward.5} parent=1 // pred_fallthru
      _
    // Predicated region
    $region22: #{forward.5} parent=1 // pred_check
      _
    $region23: #{forward.5} parent=1 // pred_check_branch
      %702 = sbr.rel (0) target = $region25
    $region24: #{forward.5} parent=1 // pred_region
      _
    $region25: #{forward.5} parent=1 // pred_fallthru
      _
    %703 = vsyncpa [#allocation3], 1

// kernel: forward.6
$region0: #{forward.6}
  #allocation0 [shape = 'u32[]', space=smem, size = 0x4, offset = 0x4, fixed_abs, tag = 'smem constant byte address 0x4 - core index']
  #allocation1 [shape = 'u32[144,128]{1,0:T(1,128)}', space=vmem, size = 0x12000, scoped, tag = 'internal scratch']
  %s0 = inlined_call_operand.vmem [shape: bf16[128,144], index: 0, kind: input, shape index: {}]
  %s1 = inlined_call_operand.vmem [shape: bf16[144,16], index: 1, kind: input, shape index: {}]
  %s2 = inlined_call_operand.vmem [shape: f32[1,16], index: 2, kind: input, shape index: {}]
  %s3 = inlined_call_operand.vmem [shape: bf16[16,32], index: 3, kind: input, shape index: {}]
  %s4 = inlined_call_operand.vmem [shape: f32[1,32], index: 4, kind: input, shape index: {}]
  %s5 = inlined_call_operand.vmem [shape: bf16[128,32], index: 5, kind: output, shape index: {}]
  %s6 = sld [smem:[#allocation0]]
  $region30: #{forward.6} parent=0
    _
  %s8 = ssub.s32 1, %s6
  %s9 = scalar_select 0, %s8, %s6
  // Predicated region
  $region2: #{forward.6} parent=0 // pred_check
    _
  $region3: #{forward.6} parent=0 // pred_check_branch
    %11 = sbr.rel (0) target = $region5
  $region4: #{forward.6} parent=0 // pred_region
    _
  $region5: #{forward.6} parent=0 // pred_fallthru
    _
  // Predicated region
  $region6: #{forward.6} parent=0 // pred_check
    _
  $region7: #{forward.6} parent=0 // pred_check_branch
    %13 = sbr.rel (0) target = $region9
  $region8: #{forward.6} parent=0 // pred_region
    _
  $region9: #{forward.6} parent=0 // pred_fallthru
    _
  // Predicated region
  $region10: #{forward.6} parent=0 // pred_check
    _
  $region11: #{forward.6} parent=0 // pred_check_branch
    %15 = sbr.rel (0) target = $region13
  $region12: #{forward.6} parent=0 // pred_region
    _
  $region13: #{forward.6} parent=0 // pred_fallthru
    _
  // Predicated region
  $region14: #{forward.6} parent=0 // pred_check
    _
  $region15: #{forward.6} parent=0 // pred_check_branch
    %17 = sbr.rel (0) target = $region17
  $region16: #{forward.6} parent=0 // pred_region
    _
  $region17: #{forward.6} parent=0 // pred_fallthru
    _
  // Predicated region
  $region18: #{forward.6} parent=0 // pred_check
    _
  $region19: #{forward.6} parent=0 // pred_check_branch
    %19 = sbr.rel (0) target = $region21
  $region20: #{forward.6} parent=0 // pred_region
    _
  $region21: #{forward.6} parent=0 // pred_fallthru
    _
  %v21 = vld [vmem:[%s0] sm:$0xff]
  %v22 = vld [vmem:[%s0 + $0x8] sm:$0xff]
  %v23 = vld [vmem:[%s0 + $0x10] sm:$0xff]
  %v24 = vld [vmem:[%s0 + $0x18] sm:$0xff]
  %v25 = vld [vmem:[%s0 + $0x20] sm:$0xff]
  %v26 = vld [vmem:[%s0 + $0x28] sm:$0xff]
  %v27 = vld [vmem:[%s0 + $0x30] sm:$0xff]
  %v28 = vld [vmem:[%s0 + $0x38] sm:$0xff]
  %v29 = vld [vmem:[%s0 + $0x40] sm:$0xff]
  %v30 = vld [vmem:[%s0 + $0x48] sm:$0xff]
  %v31 = vld [vmem:[%s0 + $0x50] sm:$0xff]
  %v32 = vld [vmem:[%s0 + $0x58] sm:$0xff]
  %v33 = vld [vmem:[%s0 + $0x60] sm:$0xff]
  %v34 = vld [vmem:[%s0 + $0x68] sm:$0xff]
  %v35 = vld [vmem:[%s0 + $0x70] sm:$0xff]
  %v36 = vld [vmem:[%s0 + $0x78] sm:$0xff]
  %v37 = vld [vmem:[%s1] sm:$0xf]
  %v38 = vld [vmem:[%s1 + $0x4] sm:$0xf]
  %v39 = vld [vmem:[%s1 + $0x8] sm:$0xf]
  %v40 = vld [vmem:[%s1 + $0xc] sm:$0xf]
  %v41 = vld [vmem:[%s1 + $0x10] sm:$0xf]
  %v42 = vld [vmem:[%s1 + $0x14] sm:$0xf]
  %v43 = vld [vmem:[%s1 + $0x18] sm:$0xf]
  %v44 = vld [vmem:[%s1 + $0x1c] sm:$0xf]
  %v45 = vld [vmem:[%s1 + $0x20] sm:$0xf]
  %v46 = vld [vmem:[%s1 + $0x24] sm:$0xf]
  %v47 = vld [vmem:[%s1 + $0x28] sm:$0xf]
  %v48 = vld [vmem:[%s1 + $0x2c] sm:$0xf]
  %v49 = vld [vmem:[%s1 + $0x30] sm:$0xf]
  %v50 = vld [vmem:[%s1 + $0x34] sm:$0xf]
  %v51 = vld [vmem:[%s1 + $0x38] sm:$0xf]
  %v52 = vld [vmem:[%s1 + $0x3c] sm:$0xf]
  %v53 = vld [vmem:[%s1 + $0x40] sm:$0xf]
  %v54 = vld [vmem:[%s1 + $0x44] sm:$0xf]
  %v55 = vld [vmem:[%s2] sm:$0x1]
  %v57 = vlaneseq
  %v58 = vshrl.u32 %v57, 7
  %v59 = vsub.s32 0, %v58
  %v60 = vrot.slane %v55, %v59
  %v78 = vunpack.c.l.b16 %v21
  %v79 = vunpack.c.h.b16 %v21
  %v80 = vunpack.c.l.b16 %v22
  %v81 = vunpack.c.h.b16 %v22
  %v82 = vunpack.c.l.b16 %v23
  %v83 = vunpack.c.h.b16 %v23
  %v84 = vunpack.c.l.b16 %v24
  %v85 = vunpack.c.h.b16 %v24
  %v86 = vunpack.c.l.b16 %v25
  %v87 = vunpack.c.h.b16 %v25
  %v88 = vunpack.c.l.b16 %v26
  %v89 = vunpack.c.h.b16 %v26
  %v90 = vunpack.c.l.b16 %v27
  %v91 = vunpack.c.h.b16 %v27
  %v92 = vunpack.c.l.b16 %v28
  %v93 = vunpack.c.h.b16 %v28
  %v94 = vunpack.c.l.b16 %v29
  %v95 = vunpack.c.h.b16 %v29
  %v96 = vunpack.c.l.b16 %v30
  %v97 = vunpack.c.h.b16 %v30
  %v98 = vunpack.c.l.b16 %v31
  %v99 = vunpack.c.h.b16 %v31
  %v100 = vunpack.c.l.b16 %v32
  %v101 = vunpack.c.h.b16 %v32
  %v102 = vunpack.c.l.b16 %v33
  %v103 = vunpack.c.h.b16 %v33
  %v104 = vunpack.c.l.b16 %v34
  %v105 = vunpack.c.h.b16 %v34
  %v106 = vunpack.c.l.b16 %v35
  %v107 = vunpack.c.h.b16 %v35
  %v108 = vunpack.c.l.b16 %v36
  %v109 = vunpack.c.h.b16 %v36
  %v110 = vpack.c.b16 %v80, %v78
  %v111 = vpack.c.b16 %v81, %v79
  %v112 = vpack.c.b16 %v84, %v82
  %v113 = vpack.c.b16 %v85, %v83
  %v114 = vpack.c.b16 %v88, %v86
  %v115 = vpack.c.b16 %v89, %v87
  %v116 = vpack.c.b16 %v92, %v90
  %v117 = vpack.c.b16 %v93, %v91
  %v118 = vpack.c.b16 %v96, %v94
  %v119 = vpack.c.b16 %v97, %v95
  %v120 = vpack.c.b16 %v100, %v98
  %v121 = vpack.c.b16 %v101, %v99
  %v122 = vpack.c.b16 %v104, %v102
  %v123 = vpack.c.b16 %v105, %v103
  %v124 = vpack.c.b16 %v108, %v106
  %v125 = vpack.c.b16 %v109, %v107
  %v152 = vunpack.c.l.b16 %v37
  %v153 = vunpack.c.l.b16 %v38
  %v154 = vunpack.c.l.b16 %v39
  %v155 = vunpack.c.l.b16 %v40
  %v156 = vunpack.c.l.b16 %v41
  %v157 = vunpack.c.l.b16 %v42
  %v158 = vunpack.c.l.b16 %v43
  %v159 = vunpack.c.l.b16 %v44
  %v160 = vunpack.c.l.b16 %v45
  %v161 = vunpack.c.l.b16 %v46
  %v162 = vunpack.c.l.b16 %v47
  %v163 = vunpack.c.l.b16 %v48
  %v164 = vunpack.c.l.b16 %v49
  %v165 = vunpack.c.l.b16 %v50
  %v166 = vunpack.c.l.b16 %v51
  %v167 = vunpack.c.l.b16 %v52
  %v168 = vunpack.c.l.b16 %v53
  %v169 = vunpack.c.l.b16 %v54
  %v170 = vpack.c.b16 %v153, %v152
  %v171 = vpack.c.b16 %v155, %v154
  %v172 = vpack.c.b16 %v157, %v156
  %v173 = vpack.c.b16 %v159, %v158
  %v174 = vpack.c.b16 %v161, %v160
  %v175 = vpack.c.b16 %v163, %v162
  %v176 = vpack.c.b16 %v165, %v164
  %v177 = vpack.c.b16 %v167, %v166
  %v178 = vpack.c.b16 %v169, %v168
  %vm188 = vcmask 130048
  %v190 = vsel %vm188, %v111, 0
  %v193 = vsel %vm188, %v113, 0
  %v196 = vsel %vm188, %v115, 0
  %v199 = vsel %vm188, %v117, 0
  %v202 = vsel %vm188, %v119, 0
  %v205 = vsel %vm188, %v121, 0
  %v208 = vsel %vm188, %v123, 0
  %v211 = vsel %vm188, %v125, 0
  %213 = vmatprep.subr.bf16.mxu0 0
  %214 = vmatpush1.bf16.msra.mxu0 %v170
  %215 = vmatprep.subr.bf16.mxu0 0
  %216 = vmatpush1.bf16.msra.mxu0 %v171
  %217 = vmatprep.subr.bf16.mxu0 0
  %218 = vmatpush1.bf16.msra.mxu0 %v172
  %219 = vmatprep.subr.bf16.mxu0 0
  %220 = vmatpush1.bf16.msra.mxu0 %v173
  %221 = vmatprep.subr.bf16.mxu0 0
  %222 = vmatpush1.bf16.msra.mxu0 %v174
  %223 = vmatprep.subr.bf16.mxu0 0
  %224 = vmatpush1.bf16.msra.mxu0 %v175
  %225 = vmatprep.subr.bf16.mxu0 0
  %226 = vmatpush1.bf16.msra.mxu0 %v176
  %227 = vmatprep.subr.bf16.mxu0 0
  %228 = vmatpush1.bf16.msra.mxu0 %v177
  %229 = vmatprep.subr.bf16.mxu0 0
  %230 = vmatpush1.bf16.msra.mxu0 %v178
  %231 = vmatprep.subr.bf16.mxu0 0
  %232 = vmatpush1.bf16.msra.mxu0 0
  %233 = vmatprep.subr.bf16.mxu0 0
  %234 = vmatpush1.bf16.msra.mxu0 0
  %235 = vmatprep.subr.bf16.mxu0 0
  %236 = vmatpush1.bf16.msra.mxu0 0
  %237 = vmatprep.subr.bf16.mxu0 0
  %238 = vmatpush1.bf16.msra.mxu0 0
  %239 = vmatprep.subr.bf16.mxu0 0
  %240 = vmatpush1.bf16.msra.mxu0 0
  %241 = vmatprep.subr.bf16.mxu0 0
  %242 = vmatpush1.bf16.msra.mxu0 0
  %243 = vmatprep.subr.bf16.mxu0 0
  %244 = vmatpush1.bf16.msra.mxu0 0
  %245 = vmatprep.mubr.bf16.mxu0 %v190
  %246 = vmatmul.mubr.bf16.gmra.mrb[0].mxu0 %v110
  %v247 = vpop.f32.mrb[0].mxu0
  %v248 = vadd.f32 %v60, %v247
  %v249 = vpop.f32.mrb[0].mxu0
  %v250 = vpop.f32.mrb[0].mxu0
  %v251 = vadd.f32 %v60, %v250
  %v252 = vpop.f32.mrb[0].mxu0
  %253 = vmatprep.mubr.bf16.mxu0 %v193
  %254 = vmatmul.mubr.bf16.gmra.mrb[0].mxu0 %v112
  %v255 = vpop.f32.mrb[0].mxu0
  %v256 = vadd.f32 %v60, %v255
  %v257 = vpop.f32.mrb[0].mxu0
  %v258 = vpop.f32.mrb[0].mxu0
  %v259 = vadd.f32 %v60, %v258
  %v260 = vpop.f32.mrb[0].mxu0
  %261 = vmatprep.mubr.bf16.mxu0 %v196
  %262 = vmatmul.mubr.bf16.gmra.mrb[0].mxu0 %v114
  %v263 = vpop.f32.mrb[0].mxu0
  %v264 = vadd.f32 %v60, %v263
  %v265 = vpop.f32.mrb[0].mxu0
  %v266 = vpop.f32.mrb[0].mxu0
  %v267 = vadd.f32 %v60, %v266
  %v268 = vpop.f32.mrb[0].mxu0
  %269 = vmatprep.mubr.bf16.mxu0 %v199
  %270 = vmatmul.mubr.bf16.gmra.mrb[0].mxu0 %v116
  %v271 = vpop.f32.mrb[0].mxu0
  %v272 = vadd.f32 %v60, %v271
  %v273 = vpop.f32.mrb[0].mxu0
  %v274 = vpop.f32.mrb[0].mxu0
  %v275 = vadd.f32 %v60, %v274
  %v276 = vpop.f32.mrb[0].mxu0
  %277 = vmatprep.mubr.bf16.mxu0 %v202
  %278 = vmatmul.mubr.bf16.gmra.mrb[0].mxu0 %v118
  %v279 = vpop.f32.mrb[0].mxu0
  %v280 = vadd.f32 %v60, %v279
  %v281 = vpop.f32.mrb[0].mxu0
  %v282 = vpop.f32.mrb[0].mxu0
  %v283 = vadd.f32 %v60, %v282
  %v284 = vpop.f32.mrb[0].mxu0
  %285 = vmatprep.mubr.bf16.mxu0 %v205
  %286 = vmatmul.mubr.bf16.gmra.mrb[0].mxu0 %v120
  %v287 = vpop.f32.mrb[0].mxu0
  %v288 = vadd.f32 %v60, %v287
  %v289 = vpop.f32.mrb[0].mxu0
  %v290 = vpop.f32.mrb[0].mxu0
  %v291 = vadd.f32 %v60, %v290
  %v292 = vpop.f32.mrb[0].mxu0
  %293 = vmatprep.mubr.bf16.mxu0 %v208
  %294 = vmatmul.mubr.bf16.gmra.mrb[0].mxu0 %v122
  %v295 = vpop.f32.mrb[0].mxu0
  %v296 = vadd.f32 %v60, %v295
  %v297 = vpop.f32.mrb[0].mxu0
  %v298 = vpop.f32.mrb[0].mxu0
  %v299 = vadd.f32 %v60, %v298
  %v300 = vpop.f32.mrb[0].mxu0
  %301 = vmatprep.mubr.bf16.mxu0 %v211
  %302 = vmatmul.mubr.bf16.gmra.mrb[0].mxu0 %v124
  %v303 = vpop.f32.mrb[0].mxu0
  %v304 = vadd.f32 %v60, %v303
  %v305 = vpop.f32.mrb[0].mxu0
  %v306 = vpop.f32.mrb[0].mxu0
  %v307 = vadd.f32 %v60, %v306
  %v308 = vpop.f32.mrb[0].mxu0
  %309 = vdwg.mxu0
  %v310 = vadd.f32 %v248, 3.0
  %v311 = vadd.f32 %v251, 3.0
  %v312 = vadd.f32 %v256, 3.0
  %v313 = vadd.f32 %v259, 3.0
  %v314 = vadd.f32 %v264, 3.0
  %v315 = vadd.f32 %v267, 3.0
  %v316 = vadd.f32 %v272, 3.0
  %v317 = vadd.f32 %v275, 3.0
  %v318 = vadd.f32 %v280, 3.0
  %v319 = vadd.f32 %v283, 3.0
  %v320 = vadd.f32 %v288, 3.0
  %v321 = vadd.f32 %v291, 3.0
  %v322 = vadd.f32 %v296, 3.0
  %v323 = vadd.f32 %v299, 3.0
  %v324 = vadd.f32 %v304, 3.0
  %v325 = vadd.f32 %v307, 3.0
  %v326 = vmax.f32 %v310, 0.0
  %v327 = vmax.f32 %v311, 0.0
  %v328 = vmax.f32 %v312, 0.0
  %v329 = vmax.f32 %v313, 0.0
  %v330 = vmax.f32 %v314, 0.0
  %v331 = vmax.f32 %v315, 0.0
  %v332 = vmax.f32 %v316, 0.0
  %v333 = vmax.f32 %v317, 0.0
  %v334 = vmax.f32 %v318, 0.0
  %v335 = vmax.f32 %v319, 0.0
  %v336 = vmax.f32 %v320, 0.0
  %v337 = vmax.f32 %v321, 0.0
  %v338 = vmax.f32 %v322, 0.0
  %v339 = vmax.f32 %v323, 0.0
  %v340 = vmax.f32 %v324, 0.0
  %v341 = vmax.f32 %v325, 0.0
  %v342 = vmin.f32 %v326, 6.0
  %v343 = vmin.f32 %v327, 6.0
  %v344 = vmin.f32 %v328, 6.0
  %v345 = vmin.f32 %v329, 6.0
  %v346 = vmin.f32 %v330, 6.0
  %v347 = vmin.f32 %v331, 6.0
  %v348 = vmin.f32 %v332, 6.0
  %v349 = vmin.f32 %v333, 6.0
  %v350 = vmin.f32 %v334, 6.0
  %v351 = vmin.f32 %v335, 6.0
  %v352 = vmin.f32 %v336, 6.0
  %v353 = vmin.f32 %v337, 6.0
  %v354 = vmin.f32 %v338, 6.0
  %v355 = vmin.f32 %v339, 6.0
  %v356 = vmin.f32 %v340, 6.0
  %v357 = vmin.f32 %v341, 6.0
  %v358 = vmul.f32 %v248, %v342
  %v359 = vmul.f32 %v251, %v343
  %v360 = vmul.f32 %v256, %v344
  %v361 = vmul.f32 %v259, %v345
  %v362 = vmul.f32 %v264, %v346
  %v363 = vmul.f32 %v267, %v347
  %v364 = vmul.f32 %v272, %v348
  %v365 = vmul.f32 %v275, %v349
  %v366 = vmul.f32 %v280, %v350
  %v367 = vmul.f32 %v283, %v351
  %v368 = vmul.f32 %v288, %v352
  %v369 = vmul.f32 %v291, %v353
  %v370 = vmul.f32 %v296, %v354
  %v371 = vmul.f32 %v299, %v355
  %v372 = vmul.f32 %v304, %v356
  %v373 = vmul.f32 %v307, %v357
  %v374 = vmul.f32 %v358, 0.16666667
  %v375 = vmul.f32 %v359, 0.16666667
  %v376 = vmul.f32 %v360, 0.16666667
  %v377 = vmul.f32 %v361, 0.16666667
  %v378 = vmul.f32 %v362, 0.16666667
  %v379 = vmul.f32 %v363, 0.16666667
  %v380 = vmul.f32 %v364, 0.16666667
  %v381 = vmul.f32 %v365, 0.16666667
  %v382 = vmul.f32 %v366, 0.16666667
  %v383 = vmul.f32 %v367, 0.16666667
  %v384 = vmul.f32 %v368, 0.16666667
  %v385 = vmul.f32 %v369, 0.16666667
  %v386 = vmul.f32 %v370, 0.16666667
  %v387 = vmul.f32 %v371, 0.16666667
  %v388 = vmul.f32 %v372, 0.16666667
  %v389 = vmul.f32 %v373, 0.16666667
  %v390 = vpack.c.bf16 %v375, %v374
  %v391 = vpack.c.bf16 %v377, %v376
  %v392 = vpack.c.bf16 %v379, %v378
  %v393 = vpack.c.bf16 %v381, %v380
  %v394 = vpack.c.bf16 %v383, %v382
  %v395 = vpack.c.bf16 %v385, %v384
  %v396 = vpack.c.bf16 %v387, %v386
  %v397 = vpack.c.bf16 %v389, %v388
  %v398 = vld [vmem:[%s3] sm:$0xf]
  %v399 = vld [vmem:[%s3 + $0x4] sm:$0xf]
  %v400 = vld [vmem:[%s4] sm:$0x1]
  %v402 = vlaneseq
  %v403 = vshrl.u32 %v402, 7
  %v404 = vsub.s32 0, %v403
  %v405 = vrot.slane %v400, %v404
  %v409 = vunpack.c.l.b16 %v398
  %v410 = vunpack.c.l.b16 %v399
  %v411 = vpack.c.b16 %v410, %v409
  %v414 = vsel %vm188, %v390, 0
  %v417 = vsel %vm188, %v391, 0
  %v420 = vsel %vm188, %v392, 0
  %v423 = vsel %vm188, %v393, 0
  %v426 = vsel %vm188, %v394, 0
  %v429 = vsel %vm188, %v395, 0
  %v432 = vsel %vm188, %v396, 0
  %v435 = vsel %vm188, %v397, 0
  %437 = vmatprep.subr.bf16.mxu0 0
  %438 = vmatpush1.bf16.msra.mxu0 %v411
  %439 = vmatprep.subr.bf16.mxu0 0
  %440 = vmatpush1.bf16.msra.mxu0 0
  %441 = vmatprep.subr.bf16.mxu0 0
  %442 = vmatpush1.bf16.msra.mxu0 0
  %443 = vmatprep.subr.bf16.mxu0 0
  %444 = vmatpush1.bf16.msra.mxu0 0
  %445 = vmatprep.subr.bf16.mxu0 0
  %446 = vmatpush1.bf16.msra.mxu0 0
  %447 = vmatprep.subr.bf16.mxu0 0
  %448 = vmatpush1.bf16.msra.mxu0 0
  %449 = vmatprep.subr.bf16.mxu0 0
  %450 = vmatpush1.bf16.msra.mxu0 0
  %451 = vmatprep.subr.bf16.mxu0 0
  %452 = vmatpush1.bf16.msra.mxu0 0
  %453 = vmatprep.subr.bf16.mxu0 0
  %454 = vmatpush1.bf16.msra.mxu0 0
  %455 = vmatprep.subr.bf16.mxu0 0
  %456 = vmatpush1.bf16.msra.mxu0 0
  %457 = vmatprep.subr.bf16.mxu0 0
  %458 = vmatpush1.bf16.msra.mxu0 0
  %459 = vmatprep.subr.bf16.mxu0 0
  %460 = vmatpush1.bf16.msra.mxu0 0
  %461 = vmatprep.subr.bf16.mxu0 0
  %462 = vmatpush1.bf16.msra.mxu0 0
  %463 = vmatprep.subr.bf16.mxu0 0
  %464 = vmatpush1.bf16.msra.mxu0 0
  %465 = vmatprep.subr.bf16.mxu0 0
  %466 = vmatpush1.bf16.msra.mxu0 0
  %467 = vmatprep.subr.bf16.mxu0 0
  %468 = vmatpush1.bf16.msra.mxu0 0
  %469 = vmatprep.mubr.bf16.mxu0 0
  %470 = vmatmul.mubr.bf16.gmra.mrb[0].mxu0 %v414
  %v471 = vpop.f32.mrb[0].mxu0
  %v472 = vadd.f32 %v405, %v471
  %v473 = vpop.f32.mrb[0].mxu0
  %v474 = vpop.f32.mrb[0].mxu0
  %v475 = vadd.f32 %v405, %v474
  %v476 = vpop.f32.mrb[0].mxu0
  %477 = vmatprep.mubr.bf16.mxu0 0
  %478 = vmatmul.mubr.bf16.gmra.mrb[0].mxu0 %v417
  %v479 = vpop.f32.mrb[0].mxu0
  %v480 = vadd.f32 %v405, %v479
  %v481 = vpop.f32.mrb[0].mxu0
  %v482 = vpop.f32.mrb[0].mxu0
  %v483 = vadd.f32 %v405, %v482
  %v484 = vpop.f32.mrb[0].mxu0
  %485 = vmatprep.mubr.bf16.mxu0 0
  %486 = vmatmul.mubr.bf16.gmra.mrb[0].mxu0 %v420
  %v487 = vpop.f32.mrb[0].mxu0
  %v488 = vadd.f32 %v405, %v487
  %v489 = vpop.f32.mrb[0].mxu0
  %v490 = vpop.f32.mrb[0].mxu0
  %v491 = vadd.f32 %v405, %v490
  %v492 = vpop.f32.mrb[0].mxu0
  %493 = vmatprep.mubr.bf16.mxu0 0
  %494 = vmatmul.mubr.bf16.gmra.mrb[0].mxu0 %v423
  %v495 = vpop.f32.mrb[0].mxu0
  %v496 = vadd.f32 %v405, %v495
  %v497 = vpop.f32.mrb[0].mxu0
  %v498 = vpop.f32.mrb[0].mxu0
  %v499 = vadd.f32 %v405, %v498
  %v500 = vpop.f32.mrb[0].mxu0
  %501 = vmatprep.mubr.bf16.mxu0 0
  %502 = vmatmul.mubr.bf16.gmra.mrb[0].mxu0 %v426
  %v503 = vpop.f32.mrb[0].mxu0
  %v504 = vadd.f32 %v405, %v503
  %v505 = vpop.f32.mrb[0].mxu0
  %v506 = vpop.f32.mrb[0].mxu0
  %v507 = vadd.f32 %v405, %v506
  %v508 = vpop.f32.mrb[0].mxu0
  %509 = vmatprep.mubr.bf16.mxu0 0
  %510 = vmatmul.mubr.bf16.gmra.mrb[0].mxu0 %v429
  %v511 = vpop.f32.mrb[0].mxu0
  %v512 = vadd.f32 %v405, %v511
  %v513 = vpop.f32.mrb[0].mxu0
  %v514 = vpop.f32.mrb[0].mxu0
  %v515 = vadd.f32 %v405, %v514
  %v516 = vpop.f32.mrb[0].mxu0
  %517 = vmatprep.mubr.bf16.mxu0 0
  %518 = vmatmul.mubr.bf16.gmra.mrb[0].mxu0 %v432
  %v519 = vpop.f32.mrb[0].mxu0
  %v520 = vadd.f32 %v405, %v519
  %v521 = vpop.f32.mrb[0].mxu0
  %v522 = vpop.f32.mrb[0].mxu0
  %v523 = vadd.f32 %v405, %v522
  %v524 = vpop.f32.mrb[0].mxu0
  %525 = vmatprep.mubr.bf16.mxu0 0
  %526 = vmatmul.mubr.bf16.gmra.mrb[0].mxu0 %v435
  %v527 = vpop.f32.mrb[0].mxu0
  %v528 = vadd.f32 %v405, %v527
  %v529 = vpop.f32.mrb[0].mxu0
  %v530 = vpop.f32.mrb[0].mxu0
  %v531 = vadd.f32 %v405, %v530
  %v532 = vpop.f32.mrb[0].mxu0
  %533 = vdwg.mxu0
  %v534 = vadd.f32 %v472, 3.0
  %v535 = vadd.f32 %v475, 3.0
  %v536 = vadd.f32 %v480, 3.0
  %v537 = vadd.f32 %v483, 3.0
  %v538 = vadd.f32 %v488, 3.0
  %v539 = vadd.f32 %v491, 3.0
  %v540 = vadd.f32 %v496, 3.0
  %v541 = vadd.f32 %v499, 3.0
  %v542 = vadd.f32 %v504, 3.0
  %v543 = vadd.f32 %v507, 3.0
  %v544 = vadd.f32 %v512, 3.0
  %v545 = vadd.f32 %v515, 3.0
  %v546 = vadd.f32 %v520, 3.0
  %v547 = vadd.f32 %v523, 3.0
  %v548 = vadd.f32 %v528, 3.0
  %v549 = vadd.f32 %v531, 3.0
  %v550 = vmax.f32 %v534, 0.0
  %v551 = vmax.f32 %v535, 0.0
  %v552 = vmax.f32 %v536, 0.0
  %v553 = vmax.f32 %v537, 0.0
  %v554 = vmax.f32 %v538, 0.0
  %v555 = vmax.f32 %v539, 0.0
  %v556 = vmax.f32 %v540, 0.0
  %v557 = vmax.f32 %v541, 0.0
  %v558 = vmax.f32 %v542, 0.0
  %v559 = vmax.f32 %v543, 0.0
  %v560 = vmax.f32 %v544, 0.0
  %v561 = vmax.f32 %v545, 0.0
  %v562 = vmax.f32 %v546, 0.0
  %v563 = vmax.f32 %v547, 0.0
  %v564 = vmax.f32 %v548, 0.0
  %v565 = vmax.f32 %v549, 0.0
  %v566 = vmin.f32 %v550, 6.0
  %v567 = vmin.f32 %v551, 6.0
  %v568 = vmin.f32 %v552, 6.0
  %v569 = vmin.f32 %v553, 6.0
  %v570 = vmin.f32 %v554, 6.0
  %v571 = vmin.f32 %v555, 6.0
  %v572 = vmin.f32 %v556, 6.0
  %v573 = vmin.f32 %v557, 6.0
  %v574 = vmin.f32 %v558, 6.0
  %v575 = vmin.f32 %v559, 6.0
  %v576 = vmin.f32 %v560, 6.0
  %v577 = vmin.f32 %v561, 6.0
  %v578 = vmin.f32 %v562, 6.0
  %v579 = vmin.f32 %v563, 6.0
  %v580 = vmin.f32 %v564, 6.0
  %v581 = vmin.f32 %v565, 6.0
  %v582 = vmul.f32 %v472, %v566
  %v583 = vmul.f32 %v475, %v567
  %v584 = vmul.f32 %v480, %v568
  %v585 = vmul.f32 %v483, %v569
  %v586 = vmul.f32 %v488, %v570
  %v587 = vmul.f32 %v491, %v571
  %v588 = vmul.f32 %v496, %v572
  %v589 = vmul.f32 %v499, %v573
  %v590 = vmul.f32 %v504, %v574
  %v591 = vmul.f32 %v507, %v575
  %v592 = vmul.f32 %v512, %v576
  %v593 = vmul.f32 %v515, %v577
  %v594 = vmul.f32 %v520, %v578
  %v595 = vmul.f32 %v523, %v579
  %v596 = vmul.f32 %v528, %v580
  %v597 = vmul.f32 %v531, %v581
  %v598 = vmul.f32 %v582, 0.16666667
  %v599 = vmul.f32 %v583, 0.16666667
  %v600 = vmul.f32 %v584, 0.16666667
  %v601 = vmul.f32 %v585, 0.16666667
  %v602 = vmul.f32 %v586, 0.16666667
  %v603 = vmul.f32 %v587, 0.16666667
  %v604 = vmul.f32 %v588, 0.16666667
  %v605 = vmul.f32 %v589, 0.16666667
  %v606 = vmul.f32 %v590, 0.16666667
  %v607 = vmul.f32 %v591, 0.16666667
  %v608 = vmul.f32 %v592, 0.16666667
  %v609 = vmul.f32 %v593, 0.16666667
  %v610 = vmul.f32 %v594, 0.16666667
  %v611 = vmul.f32 %v595, 0.16666667
  %v612 = vmul.f32 %v596, 0.16666667
  %v613 = vmul.f32 %v597, 0.16666667
  %v614 = vpack.c.bf16 %v599, %v598
  %v615 = vpack.c.bf16 %v601, %v600
  %v616 = vpack.c.bf16 %v603, %v602
  %v617 = vpack.c.bf16 %v605, %v604
  %v618 = vpack.c.bf16 %v607, %v606
  %v619 = vpack.c.bf16 %v609, %v608
  %v620 = vpack.c.bf16 %v611, %v610
  %v621 = vpack.c.bf16 %v613, %v612
  %v630 = vunpack.c.l.b16 %v614
  %v631 = vunpack.c.h.b16 %v614
  %v632 = vunpack.c.l.b16 %v615
  %v633 = vunpack.c.h.b16 %v615
  %v634 = vunpack.c.l.b16 %v616
  %v635 = vunpack.c.h.b16 %v616
  %v636 = vunpack.c.l.b16 %v617
  %v637 = vunpack.c.h.b16 %v617
  %v638 = vunpack.c.l.b16 %v618
  %v639 = vunpack.c.h.b16 %v618
  %v640 = vunpack.c.l.b16 %v619
  %v641 = vunpack.c.h.b16 %v619
  %v642 = vunpack.c.l.b16 %v620
  %v643 = vunpack.c.h.b16 %v620
  %v644 = vunpack.c.l.b16 %v621
  %v645 = vunpack.c.h.b16 %v621
  %v646 = vpack.c.b16 %v630, %v630
  %v647 = vpack.c.b16 %v631, %v631
  %v648 = vpack.c.b16 %v632, %v632
  %v649 = vpack.c.b16 %v633, %v633
  %v650 = vpack.c.b16 %v634, %v634
  %v651 = vpack.c.b16 %v635, %v635
  %v652 = vpack.c.b16 %v636, %v636
  %v653 = vpack.c.b16 %v637, %v637
  %v654 = vpack.c.b16 %v638, %v638
  %v655 = vpack.c.b16 %v639, %v639
  %v656 = vpack.c.b16 %v640, %v640
  %v657 = vpack.c.b16 %v641, %v641
  %v658 = vpack.c.b16 %v642, %v642
  %v659 = vpack.c.b16 %v643, %v643
  %v660 = vpack.c.b16 %v644, %v644
  %v661 = vpack.c.b16 %v645, %v645
  %vm678 = vcmask 257024
  %679 = vst.msk [vmem:[%s5] sm:$0xf] %vm678, %v646
  %680 = vst.msk [vmem:[%s5 + $0x4] sm:$0xf] %vm678, %v647
  %681 = vst.msk [vmem:[%s5 + $0x8] sm:$0xf] %vm678, %v648
  %682 = vst.msk [vmem:[%s5 + $0xc] sm:$0xf] %vm678, %v649
  %683 = vst.msk [vmem:[%s5 + $0x10] sm:$0xf] %vm678, %v650
  %684 = vst.msk [vmem:[%s5 + $0x14] sm:$0xf] %vm678, %v651
  %685 = vst.msk [vmem:[%s5 + $0x18] sm:$0xf] %vm678, %v652
  %686 = vst.msk [vmem:[%s5 + $0x1c] sm:$0xf] %vm678, %v653
  %687 = vst.msk [vmem:[%s5 + $0x20] sm:$0xf] %vm678, %v654
  %688 = vst.msk [vmem:[%s5 + $0x24] sm:$0xf] %vm678, %v655
  %689 = vst.msk [vmem:[%s5 + $0x28] sm:$0xf] %vm678, %v656
  %690 = vst.msk [vmem:[%s5 + $0x2c] sm:$0xf] %vm678, %v657
  %691 = vst.msk [vmem:[%s5 + $0x30] sm:$0xf] %vm678, %v658
  %692 = vst.msk [vmem:[%s5 + $0x34] sm:$0xf] %vm678, %v659
  %693 = vst.msk [vmem:[%s5 + $0x38] sm:$0xf] %vm678, %v660
  %694 = vst.msk [vmem:[%s5 + $0x3c] sm:$0xf] %vm678, %v661
  // Predicated region
  $region22: #{forward.6} parent=0 // pred_check
    _
  $region23: #{forward.6} parent=0 // pred_check_branch
    %696 = sbr.rel (0) target = $region25
  $region24: #{forward.6} parent=0 // pred_region
    _
  $region25: #{forward.6} parent=0 // pred_fallthru
    _
  // Predicated region
  $region26: #{forward.6} parent=0 // pred_check
    _
  $region27: #{forward.6} parent=0 // pred_check_branch
    %698 = sbr.rel (0) target = $region29
  $region28: #{forward.6} parent=0 // pred_region
    _
  $region29: #{forward.6} parent=0 // pred_fallthru
    _

// kernel: forward.7
$region0: #{forward.7}
  #allocation0 [shape = 'u32[]', space=smem, size = 0x4, offset = 0x4, fixed_abs, tag = 'smem constant byte address 0x4 - core index']
  #allocation1 [shape = 'u32[144,128]{1,0:T(1,128)}', space=vmem, size = 0x12000, scoped, tag = 'internal scratch']
  %s0 = inlined_call_operand.vmem [shape: bf16[64,288], index: 0, kind: input, shape index: {}]
  %s1 = inlined_call_operand.vmem [shape: bf16[288,32], index: 1, kind: input, shape index: {}]
  %s2 = inlined_call_operand.vmem [shape: f32[1,32], index: 2, kind: input, shape index: {}]
  %s3 = inlined_call_operand.vmem [shape: bf16[32,64], index: 3, kind: input, shape index: {}]
  %s4 = inlined_call_operand.vmem [shape: f32[1,64], index: 4, kind: input, shape index: {}]
  %s5 = inlined_call_operand.vmem [shape: bf16[64,64], index: 5, kind: output, shape index: {}]
  %s6 = sld [smem:[#allocation0]]
  $region30: #{forward.7} parent=0
    _
  %s8 = ssub.s32 1, %s6
  %s9 = scalar_select 0, %s8, %s6
  // Predicated region
  $region2: #{forward.7} parent=0 // pred_check
    _
  $region3: #{forward.7} parent=0 // pred_check_branch
    %11 = sbr.rel (0) target = $region5
  $region4: #{forward.7} parent=0 // pred_region
    _
  $region5: #{forward.7} parent=0 // pred_fallthru
    _
  // Predicated region
  $region6: #{forward.7} parent=0 // pred_check
    _
  $region7: #{forward.7} parent=0 // pred_check_branch
    %13 = sbr.rel (0) target = $region9
  $region8: #{forward.7} parent=0 // pred_region
    _
  $region9: #{forward.7} parent=0 // pred_fallthru
    _
  // Predicated region
  $region10: #{forward.7} parent=0 // pred_check
    _
  $region11: #{forward.7} parent=0 // pred_check_branch
    %15 = sbr.rel (0) target = $region13
  $region12: #{forward.7} parent=0 // pred_region
    _
  $region13: #{forward.7} parent=0 // pred_fallthru
    _
  // Predicated region
  $region14: #{forward.7} parent=0 // pred_check
    _
  $region15: #{forward.7} parent=0 // pred_check_branch
    %17 = sbr.rel (0) target = $region17
  $region16: #{forward.7} parent=0 // pred_region
    _
  $region17: #{forward.7} parent=0 // pred_fallthru
    _
  // Predicated region
  $region18: #{forward.7} parent=0 // pred_check
    _
  $region19: #{forward.7} parent=0 // pred_check_branch
    %19 = sbr.rel (0) target = $region21
  $region20: #{forward.7} parent=0 // pred_region
    _
  $region21: #{forward.7} parent=0 // pred_fallthru
    _
  %v21 = vld [vmem:[%s0] sm:$0xff]
  %v22 = vld [vmem:[%s0 + $0x8] sm:$0xf]
  %v23 = vld [vmem:[%s0 + $0xc] sm:$0xff]
  %v24 = vld [vmem:[%s0 + $0x14] sm:$0xf]
  %v25 = vld [vmem:[%s0 + $0x18] sm:$0xff]
  %v26 = vld [vmem:[%s0 + $0x20] sm:$0xf]
  %v27 = vld [vmem:[%s0 + $0x24] sm:$0xff]
  %v28 = vld [vmem:[%s0 + $0x2c] sm:$0xf]
  %v29 = vld [vmem:[%s0 + $0x30] sm:$0xff]
  %v30 = vld [vmem:[%s0 + $0x38] sm:$0xf]
  %v31 = vld [vmem:[%s0 + $0x3c] sm:$0xff]
  %v32 = vld [vmem:[%s0 + $0x44] sm:$0xf]
  %v33 = vld [vmem:[%s0 + $0x48] sm:$0xff]
  %v34 = vld [vmem:[%s0 + $0x50] sm:$0xf]
  %v35 = vld [vmem:[%s0 + $0x54] sm:$0xff]
  %v36 = vld [vmem:[%s0 + $0x5c] sm:$0xf]
  %v37 = vld [vmem:[%s1] sm:$0xf]
  %v38 = vld [vmem:[%s1 + $0x4] sm:$0xf]
  %v39 = vld [vmem:[%s1 + $0x8] sm:$0xf]
  %v40 = vld [vmem:[%s1 + $0xc] sm:$0xf]
  %v41 = vld [vmem:[%s1 + $0x10] sm:$0xf]
  %v42 = vld [vmem:[%s1 + $0x14] sm:$0xf]
  %v43 = vld [vmem:[%s1 + $0x18] sm:$0xf]
  %v44 = vld [vmem:[%s1 + $0x1c] sm:$0xf]
  %v45 = vld [vmem:[%s1 + $0x20] sm:$0xf]
  %v46 = vld [vmem:[%s1 + $0x24] sm:$0xf]
  %v47 = vld [vmem:[%s1 + $0x28] sm:$0xf]
  %v48 = vld [vmem:[%s1 + $0x2c] sm:$0xf]
  %v49 = vld [vmem:[%s1 + $0x30] sm:$0xf]
  %v50 = vld [vmem:[%s1 + $0x34] sm:$0xf]
  %v51 = vld [vmem:[%s1 + $0x38] sm:$0xf]
  %v52 = vld [vmem:[%s1 + $0x3c] sm:$0xf]
  %v53 = vld [vmem:[%s1 + $0x40] sm:$0xf]
  %v54 = vld [vmem:[%s1 + $0x44] sm:$0xf]
  %v55 = vld [vmem:[%s1 + $0x48] sm:$0xf]
  %v56 = vld [vmem:[%s1 + $0x4c] sm:$0xf]
  %v57 = vld [vmem:[%s1 + $0x50] sm:$0xf]
  %v58 = vld [vmem:[%s1 + $0x54] sm:$0xf]
  %v59 = vld [vmem:[%s1 + $0x58] sm:$0xf]
  %v60 = vld [vmem:[%s1 + $0x5c] sm:$0xf]
  %v61 = vld [vmem:[%s1 + $0x60] sm:$0xf]
  %v62 = vld [vmem:[%s1 + $0x64] sm:$0xf]
  %v63 = vld [vmem:[%s1 + $0x68] sm:$0xf]
  %v64 = vld [vmem:[%s1 + $0x6c] sm:$0xf]
  %v65 = vld [vmem:[%s1 + $0x70] sm:$0xf]
  %v66 = vld [vmem:[%s1 + $0x74] sm:$0xf]
  %v67 = vld [vmem:[%s1 + $0x78] sm:$0xf]
  %v68 = vld [vmem:[%s1 + $0x7c] sm:$0xf]
  %v69 = vld [vmem:[%s1 + $0x80] sm:$0xf]
  %v70 = vld [vmem:[%s1 + $0x84] sm:$0xf]
  %v71 = vld [vmem:[%s1 + $0x88] sm:$0xf]
  %v72 = vld [vmem:[%s1 + $0x8c] sm:$0xf]
  %v73 = vld [vmem:[%s2] sm:$0x1]
  %v75 = vlaneseq
  %v76 = vshrl.u32 %v75, 7
  %v77 = vsub.s32 0, %v76
  %v78 = vrot.slane %v73, %v77
  %v96 = vunpack.c.l.b16 %v21
  %v97 = vunpack.c.h.b16 %v21
  %v98 = vunpack.c.l.b16 %v22
  %v99 = vunpack.c.l.b16 %v23
  %v100 = vunpack.c.h.b16 %v23
  %v101 = vunpack.c.l.b16 %v24
  %v102 = vunpack.c.l.b16 %v25
  %v103 = vunpack.c.h.b16 %v25
  %v104 = vunpack.c.l.b16 %v26
  %v105 = vunpack.c.l.b16 %v27
  %v106 = vunpack.c.h.b16 %v27
  %v107 = vunpack.c.l.b16 %v28
  %v108 = vunpack.c.l.b16 %v29
  %v109 = vunpack.c.h.b16 %v29
  %v110 = vunpack.c.l.b16 %v30
  %v111 = vunpack.c.l.b16 %v31
  %v112 = vunpack.c.h.b16 %v31
  %v113 = vunpack.c.l.b16 %v32
  %v114 = vunpack.c.l.b16 %v33
  %v115 = vunpack.c.h.b16 %v33
  %v116 = vunpack.c.l.b16 %v34
  %v117 = vunpack.c.l.b16 %v35
  %v118 = vunpack.c.h.b16 %v35
  %v119 = vunpack.c.l.b16 %v36
  %v120 = vpack.c.b16 %v99, %v96
  %v121 = vpack.c.b16 %v100, %v97
  %v122 = vpack.c.b16 %v101, %v98
  %v123 = vpack.c.b16 %v105, %v102
  %v124 = vpack.c.b16 %v106, %v103
  %v125 = vpack.c.b16 %v107, %v104
  %v126 = vpack.c.b16 %v111, %v108
  %v127 = vpack.c.b16 %v112, %v109
  %v128 = vpack.c.b16 %v113, %v110
  %v129 = vpack.c.b16 %v117, %v114
  %v130 = vpack.c.b16 %v118, %v115
  %v131 = vpack.c.b16 %v119, %v116
  %v176 = vunpack.c.l.b16 %v37
  %v177 = vunpack.c.l.b16 %v38
  %v178 = vunpack.c.l.b16 %v39
  %v179 = vunpack.c.l.b16 %v40
  %v180 = vunpack.c.l.b16 %v41
  %v181 = vunpack.c.l.b16 %v42
  %v182 = vunpack.c.l.b16 %v43
  %v183 = vunpack.c.l.b16 %v44
  %v184 = vunpack.c.l.b16 %v45
  %v185 = vunpack.c.l.b16 %v46
  %v186 = vunpack.c.l.b16 %v47
  %v187 = vunpack.c.l.b16 %v48
  %v188 = vunpack.c.l.b16 %v49
  %v189 = vunpack.c.l.b16 %v50
  %v190 = vunpack.c.l.b16 %v51
  %v191 = vunpack.c.l.b16 %v52
  %v192 = vunpack.c.l.b16 %v53
  %v193 = vunpack.c.l.b16 %v54
  %v194 = vunpack.c.l.b16 %v55
  %v195 = vunpack.c.l.b16 %v56
  %v196 = vunpack.c.l.b16 %v57
  %v197 = vunpack.c.l.b16 %v58
  %v198 = vunpack.c.l.b16 %v59
  %v199 = vunpack.c.l.b16 %v60
  %v200 = vunpack.c.l.b16 %v61
  %v201 = vunpack.c.l.b16 %v62
  %v202 = vunpack.c.l.b16 %v63
  %v203 = vunpack.c.l.b16 %v64
  %v204 = vunpack.c.l.b16 %v65
  %v205 = vunpack.c.l.b16 %v66
  %v206 = vunpack.c.l.b16 %v67
  %v207 = vunpack.c.l.b16 %v68
  %v208 = vunpack.c.l.b16 %v69
  %v209 = vunpack.c.l.b16 %v70
  %v210 = vunpack.c.l.b16 %v71
  %v211 = vunpack.c.l.b16 %v72
  %v212 = vpack.c.b16 %v177, %v176
  %v213 = vpack.c.b16 %v179, %v178
  %v214 = vpack.c.b16 %v181, %v180
  %v215 = vpack.c.b16 %v183, %v182
  %v216 = vpack.c.b16 %v185, %v184
  %v217 = vpack.c.b16 %v187, %v186
  %v218 = vpack.c.b16 %v189, %v188
  %v219 = vpack.c.b16 %v191, %v190
  %v220 = vpack.c.b16 %v193, %v192
  %v221 = vpack.c.b16 %v195, %v194
  %v222 = vpack.c.b16 %v197, %v196
  %v223 = vpack.c.b16 %v199, %v198
  %v224 = vpack.c.b16 %v201, %v200
  %v225 = vpack.c.b16 %v203, %v202
  %v226 = vpack.c.b16 %v205, %v204
  %v227 = vpack.c.b16 %v207, %v206
  %v228 = vpack.c.b16 %v209, %v208
  %v229 = vpack.c.b16 %v211, %v210
  %vm248 = vcmask 261120
  %v250 = vsel %vm248, %v122, 0
  %v253 = vsel %vm248, %v125, 0
  %v256 = vsel %vm248, %v128, 0
  %v259 = vsel %vm248, %v131, 0
  %261 = vmatprep.subr.bf16.mxu0 0
  %262 = vmatpush1.bf16.msra.mxu0 %v212
  %263 = vmatprep.subr.bf16.mxu0 0
  %264 = vmatpush1.bf16.msra.mxu0 %v213
  %265 = vmatprep.subr.bf16.mxu0 0
  %266 = vmatpush1.bf16.msra.mxu0 %v214
  %267 = vmatprep.subr.bf16.mxu0 0
  %268 = vmatpush1.bf16.msra.mxu0 %v215
  %269 = vmatprep.subr.bf16.mxu0 0
  %270 = vmatpush1.bf16.msra.mxu0 %v216
  %271 = vmatprep.subr.bf16.mxu0 0
  %272 = vmatpush1.bf16.msra.mxu0 %v217
  %273 = vmatprep.subr.bf16.mxu0 0
  %274 = vmatpush1.bf16.msra.mxu0 %v218
  %275 = vmatprep.subr.bf16.mxu0 0
  %276 = vmatpush1.bf16.msra.mxu0 %v219
  %277 = vmatprep.subr.bf16.mxu0 0
  %278 = vmatpush1.bf16.msra.mxu0 %v220
  %279 = vmatprep.subr.bf16.mxu0 0
  %280 = vmatpush1.bf16.msra.mxu0 %v221
  %281 = vmatprep.subr.bf16.mxu0 0
  %282 = vmatpush1.bf16.msra.mxu0 %v222
  %283 = vmatprep.subr.bf16.mxu0 0
  %284 = vmatpush1.bf16.msra.mxu0 %v223
  %285 = vmatprep.subr.bf16.mxu0 0
  %286 = vmatpush1.bf16.msra.mxu0 %v224
  %287 = vmatprep.subr.bf16.mxu0 0
  %288 = vmatpush1.bf16.msra.mxu0 %v225
  %289 = vmatprep.subr.bf16.mxu0 0
  %290 = vmatpush1.bf16.msra.mxu0 %v226
  %291 = vmatprep.subr.bf16.mxu0 0
  %292 = vmatpush1.bf16.msra.mxu0 %v227
  %293 = vmatprep.mubr.bf16.mxu0 %v121
  %294 = vmatmul.mubr.bf16.gmra.mrb[0].mxu0 %v120
  %v295 = vpop.f32.mrb[0].mxu0
  %v296 = vadd.f32 %v78, %v295
  %v297 = vpop.f32.mrb[0].mxu0
  %v298 = vpop.f32.mrb[0].mxu0
  %v299 = vadd.f32 %v78, %v298
  %v300 = vpop.f32.mrb[0].mxu0
  %301 = vmatprep.mubr.bf16.mxu0 %v124
  %302 = vmatmul.mubr.bf16.gmra.mrb[0].mxu0 %v123
  %v303 = vpop.f32.mrb[0].mxu0
  %v304 = vadd.f32 %v78, %v303
  %v305 = vpop.f32.mrb[0].mxu0
  %v306 = vpop.f32.mrb[0].mxu0
  %v307 = vadd.f32 %v78, %v306
  %v308 = vpop.f32.mrb[0].mxu0
  %309 = vmatprep.mubr.bf16.mxu0 %v127
  %310 = vmatmul.mubr.bf16.gmra.mrb[0].mxu0 %v126
  %v311 = vpop.f32.mrb[0].mxu0
  %v312 = vadd.f32 %v78, %v311
  %v313 = vpop.f32.mrb[0].mxu0
  %v314 = vpop.f32.mrb[0].mxu0
  %v315 = vadd.f32 %v78, %v314
  %v316 = vpop.f32.mrb[0].mxu0
  %317 = vmatprep.mubr.bf16.mxu0 %v130
  %318 = vmatmul.mubr.bf16.gmra.mrb[0].mxu0 %v129
  %v319 = vpop.f32.mrb[0].mxu0
  %v320 = vadd.f32 %v78, %v319
  %v321 = vpop.f32.mrb[0].mxu0
  %v322 = vpop.f32.mrb[0].mxu0
  %v323 = vadd.f32 %v78, %v322
  %v324 = vpop.f32.mrb[0].mxu0
  %325 = vdwg.mxu0
  %326 = vmatprep.subr.bf16.mxu0 0
  %327 = vmatpush1.bf16.msra.mxu0 %v228
  %328 = vmatprep.subr.bf16.mxu0 0
  %329 = vmatpush1.bf16.msra.mxu0 %v229
  %330 = vmatprep.subr.bf16.mxu0 0
  %331 = vmatpush1.bf16.msra.mxu0 0
  %332 = vmatprep.subr.bf16.mxu0 0
  %333 = vmatpush1.bf16.msra.mxu0 0
  %334 = vmatprep.subr.bf16.mxu0 0
  %335 = vmatpush1.bf16.msra.mxu0 0
  %336 = vmatprep.subr.bf16.mxu0 0
  %337 = vmatpush1.bf16.msra.mxu0 0
  %338 = vmatprep.subr.bf16.mxu0 0
  %339 = vmatpush1.bf16.msra.mxu0 0
  %340 = vmatprep.subr.bf16.mxu0 0
  %341 = vmatpush1.bf16.msra.mxu0 0
  %342 = vmatprep.subr.bf16.mxu0 0
  %343 = vmatpush1.bf16.msra.mxu0 0
  %344 = vmatprep.subr.bf16.mxu0 0
  %345 = vmatpush1.bf16.msra.mxu0 0
  %346 = vmatprep.subr.bf16.mxu0 0
  %347 = vmatpush1.bf16.msra.mxu0 0
  %348 = vmatprep.subr.bf16.mxu0 0
  %349 = vmatpush1.bf16.msra.mxu0 0
  %350 = vmatprep.subr.bf16.mxu0 0
  %351 = vmatpush1.bf16.msra.mxu0 0
  %352 = vmatprep.subr.bf16.mxu0 0
  %353 = vmatpush1.bf16.msra.mxu0 0
  %354 = vmatprep.subr.bf16.mxu0 0
  %355 = vmatpush1.bf16.msra.mxu0 0
  %356 = vmatprep.subr.bf16.mxu0 0
  %357 = vmatpush1.bf16.msra.mxu0 0
  %358 = vmatprep.mubr.bf16.mxu0 0
  %359 = vmatmul.mubr.bf16.gmra.mrb[0].mxu0 %v250
  %v360 = vpop.f32.mrb[0].mxu0
  %v361 = vadd.f32 %v296, %v360
  %v362 = vpop.f32.mrb[0].mxu0
  %v363 = vpop.f32.mrb[0].mxu0
  %v364 = vadd.f32 %v299, %v363
  %v365 = vpop.f32.mrb[0].mxu0
  %366 = vmatprep.mubr.bf16.mxu0 0
  %367 = vmatmul.mubr.bf16.gmra.mrb[0].mxu0 %v253
  %v368 = vpop.f32.mrb[0].mxu0
  %v369 = vadd.f32 %v304, %v368
  %v370 = vpop.f32.mrb[0].mxu0
  %v371 = vpop.f32.mrb[0].mxu0
  %v372 = vadd.f32 %v307, %v371
  %v373 = vpop.f32.mrb[0].mxu0
  %374 = vmatprep.mubr.bf16.mxu0 0
  %375 = vmatmul.mubr.bf16.gmra.mrb[0].mxu0 %v256
  %v376 = vpop.f32.mrb[0].mxu0
  %v377 = vadd.f32 %v312, %v376
  %v378 = vpop.f32.mrb[0].mxu0
  %v379 = vpop.f32.mrb[0].mxu0
  %v380 = vadd.f32 %v315, %v379
  %v381 = vpop.f32.mrb[0].mxu0
  %382 = vmatprep.mubr.bf16.mxu0 0
  %383 = vmatmul.mubr.bf16.gmra.mrb[0].mxu0 %v259
  %v384 = vpop.f32.mrb[0].mxu0
  %v385 = vadd.f32 %v320, %v384
  %v386 = vpop.f32.mrb[0].mxu0
  %v387 = vpop.f32.mrb[0].mxu0
  %v388 = vadd.f32 %v323, %v387
  %v389 = vpop.f32.mrb[0].mxu0
  %390 = vdwg.mxu0
  %v391 = vadd.f32 %v361, 3.0
  %v392 = vadd.f32 %v364, 3.0
  %v393 = vadd.f32 %v369, 3.0
  %v394 = vadd.f32 %v372, 3.0
  %v395 = vadd.f32 %v377, 3.0
  %v396 = vadd.f32 %v380, 3.0
  %v397 = vadd.f32 %v385, 3.0
  %v398 = vadd.f32 %v388, 3.0
  %v399 = vmax.f32 %v391, 0.0
  %v400 = vmax.f32 %v392, 0.0
  %v401 = vmax.f32 %v393, 0.0
  %v402 = vmax.f32 %v394, 0.0
  %v403 = vmax.f32 %v395, 0.0
  %v404 = vmax.f32 %v396, 0.0
  %v405 = vmax.f32 %v397, 0.0
  %v406 = vmax.f32 %v398, 0.0
  %v407 = vmin.f32 %v399, 6.0
  %v408 = vmin.f32 %v400, 6.0
  %v409 = vmin.f32 %v401, 6.0
  %v410 = vmin.f32 %v402, 6.0
  %v411 = vmin.f32 %v403, 6.0
  %v412 = vmin.f32 %v404, 6.0
  %v413 = vmin.f32 %v405, 6.0
  %v414 = vmin.f32 %v406, 6.0
  %v415 = vmul.f32 %v361, %v407
  %v416 = vmul.f32 %v364, %v408
  %v417 = vmul.f32 %v369, %v409
  %v418 = vmul.f32 %v372, %v410
  %v419 = vmul.f32 %v377, %v411
  %v420 = vmul.f32 %v380, %v412
  %v421 = vmul.f32 %v385, %v413
  %v422 = vmul.f32 %v388, %v414
  %v423 = vmul.f32 %v415, 0.16666667
  %v424 = vmul.f32 %v416, 0.16666667
  %v425 = vmul.f32 %v417, 0.16666667
  %v426 = vmul.f32 %v418, 0.16666667
  %v427 = vmul.f32 %v419, 0.16666667
  %v428 = vmul.f32 %v420, 0.16666667
  %v429 = vmul.f32 %v421, 0.16666667
  %v430 = vmul.f32 %v422, 0.16666667
  %v431 = vpack.c.bf16 %v424, %v423
  %v432 = vpack.c.bf16 %v426, %v425
  %v433 = vpack.c.bf16 %v428, %v427
  %v434 = vpack.c.bf16 %v430, %v429
  %v435 = vld [vmem:[%s3] sm:$0xf]
  %v436 = vld [vmem:[%s3 + $0x4] sm:$0xf]
  %v437 = vld [vmem:[%s3 + $0x8] sm:$0xf]
  %v438 = vld [vmem:[%s3 + $0xc] sm:$0xf]
  %v439 = vld [vmem:[%s4] sm:$0x1]
  %v441 = vlaneseq
  %v442 = vshrl.u32 %v441, 7
  %v443 = vsub.s32 0, %v442
  %v444 = vrot.slane %v439, %v443
  %v450 = vunpack.c.l.b16 %v435
  %v451 = vunpack.c.l.b16 %v436
  %v452 = vunpack.c.l.b16 %v437
  %v453 = vunpack.c.l.b16 %v438
  %v454 = vpack.c.b16 %v451, %v450
  %v455 = vpack.c.b16 %v453, %v452
  %v459 = vsel %vm248, %v431, 0
  %v462 = vsel %vm248, %v432, 0
  %v465 = vsel %vm248, %v433, 0
  %v468 = vsel %vm248, %v434, 0
  %470 = vmatprep.subr.bf16.mxu0 0
  %471 = vmatpush1.bf16.msra.mxu0 %v454
  %472 = vmatprep.subr.bf16.mxu0 0
  %473 = vmatpush1.bf16.msra.mxu0 %v455
  %474 = vmatprep.subr.bf16.mxu0 0
  %475 = vmatpush1.bf16.msra.mxu0 0
  %476 = vmatprep.subr.bf16.mxu0 0
  %477 = vmatpush1.bf16.msra.mxu0 0
  %478 = vmatprep.subr.bf16.mxu0 0
  %479 = vmatpush1.bf16.msra.mxu0 0
  %480 = vmatprep.subr.bf16.mxu0 0
  %481 = vmatpush1.bf16.msra.mxu0 0
  %482 = vmatprep.subr.bf16.mxu0 0
  %483 = vmatpush1.bf16.msra.mxu0 0
  %484 = vmatprep.subr.bf16.mxu0 0
  %485 = vmatpush1.bf16.msra.mxu0 0
  %486 = vmatprep.subr.bf16.mxu0 0
  %487 = vmatpush1.bf16.msra.mxu0 0
  %488 = vmatprep.subr.bf16.mxu0 0
  %489 = vmatpush1.bf16.msra.mxu0 0
  %490 = vmatprep.subr.bf16.mxu0 0
  %491 = vmatpush1.bf16.msra.mxu0 0
  %492 = vmatprep.subr.bf16.mxu0 0
  %493 = vmatpush1.bf16.msra.mxu0 0
  %494 = vmatprep.subr.bf16.mxu0 0
  %495 = vmatpush1.bf16.msra.mxu0 0
  %496 = vmatprep.subr.bf16.mxu0 0
  %497 = vmatpush1.bf16.msra.mxu0 0
  %498 = vmatprep.subr.bf16.mxu0 0
  %499 = vmatpush1.bf16.msra.mxu0 0
  %500 = vmatprep.subr.bf16.mxu0 0
  %501 = vmatpush1.bf16.msra.mxu0 0
  %502 = vmatprep.mubr.bf16.mxu0 0
  %503 = vmatmul.mubr.bf16.gmra.mrb[0].mxu0 %v459
  %v504 = vpop.f32.mrb[0].mxu0
  %v505 = vadd.f32 %v444, %v504
  %v506 = vpop.f32.mrb[0].mxu0
  %v507 = vpop.f32.mrb[0].mxu0
  %v508 = vadd.f32 %v444, %v507
  %v509 = vpop.f32.mrb[0].mxu0
  %510 = vmatprep.mubr.bf16.mxu0 0
  %511 = vmatmul.mubr.bf16.gmra.mrb[0].mxu0 %v462
  %v512 = vpop.f32.mrb[0].mxu0
  %v513 = vadd.f32 %v444, %v512
  %v514 = vpop.f32.mrb[0].mxu0
  %v515 = vpop.f32.mrb[0].mxu0
  %v516 = vadd.f32 %v444, %v515
  %v517 = vpop.f32.mrb[0].mxu0
  %518 = vmatprep.mubr.bf16.mxu0 0
  %519 = vmatmul.mubr.bf16.gmra.mrb[0].mxu0 %v465
  %v520 = vpop.f32.mrb[0].mxu0
  %v521 = vadd.f32 %v444, %v520
  %v522 = vpop.f32.mrb[0].mxu0
  %v523 = vpop.f32.mrb[0].mxu0
  %v524 = vadd.f32 %v444, %v523
  %v525 = vpop.f32.mrb[0].mxu0
  %526 = vmatprep.mubr.bf16.mxu0 0
  %527 = vmatmul.mubr.bf16.gmra.mrb[0].mxu0 %v468
  %v528 = vpop.f32.mrb[0].mxu0
  %v529 = vadd.f32 %v444, %v528
  %v530 = vpop.f32.mrb[0].mxu0
  %v531 = vpop.f32.mrb[0].mxu0
  %v532 = vadd.f32 %v444, %v531
  %v533 = vpop.f32.mrb[0].mxu0
  %534 = vdwg.mxu0
  %v535 = vadd.f32 %v505, 3.0
  %v536 = vadd.f32 %v508, 3.0
  %v537 = vadd.f32 %v513, 3.0
  %v538 = vadd.f32 %v516, 3.0
  %v539 = vadd.f32 %v521, 3.0
  %v540 = vadd.f32 %v524, 3.0
  %v541 = vadd.f32 %v529, 3.0
  %v542 = vadd.f32 %v532, 3.0
  %v543 = vmax.f32 %v535, 0.0
  %v544 = vmax.f32 %v536, 0.0
  %v545 = vmax.f32 %v537, 0.0
  %v546 = vmax.f32 %v538, 0.0
  %v547 = vmax.f32 %v539, 0.0
  %v548 = vmax.f32 %v540, 0.0
  %v549 = vmax.f32 %v541, 0.0
  %v550 = vmax.f32 %v542, 0.0
  %v551 = vmin.f32 %v543, 6.0
  %v552 = vmin.f32 %v544, 6.0
  %v553 = vmin.f32 %v545, 6.0
  %v554 = vmin.f32 %v546, 6.0
  %v555 = vmin.f32 %v547, 6.0
  %v556 = vmin.f32 %v548, 6.0
  %v557 = vmin.f32 %v549, 6.0
  %v558 = vmin.f32 %v550, 6.0
  %v559 = vmul.f32 %v505, %v551
  %v560 = vmul.f32 %v508, %v552
  %v561 = vmul.f32 %v513, %v553
  %v562 = vmul.f32 %v516, %v554
  %v563 = vmul.f32 %v521, %v555
  %v564 = vmul.f32 %v524, %v556
  %v565 = vmul.f32 %v529, %v557
  %v566 = vmul.f32 %v532, %v558
  %v567 = vmul.f32 %v559, 0.16666667
  %v568 = vmul.f32 %v560, 0.16666667
  %v569 = vmul.f32 %v561, 0.16666667
  %v570 = vmul.f32 %v562, 0.16666667
  %v571 = vmul.f32 %v563, 0.16666667
  %v572 = vmul.f32 %v564, 0.16666667
  %v573 = vmul.f32 %v565, 0.16666667
  %v574 = vmul.f32 %v566, 0.16666667
  %v575 = vpack.c.bf16 %v568, %v567
  %v576 = vpack.c.bf16 %v570, %v569
  %v577 = vpack.c.bf16 %v572, %v571
  %v578 = vpack.c.bf16 %v574, %v573
  %v583 = vunpack.c.l.b16 %v575
  %v584 = vunpack.c.h.b16 %v575
  %v585 = vunpack.c.l.b16 %v576
  %v586 = vunpack.c.h.b16 %v576
  %v587 = vunpack.c.l.b16 %v577
  %v588 = vunpack.c.h.b16 %v577
  %v589 = vunpack.c.l.b16 %v578
  %v590 = vunpack.c.h.b16 %v578
  %v591 = vpack.c.b16 %v583, %v583
  %v592 = vpack.c.b16 %v584, %v584
  %v593 = vpack.c.b16 %v585, %v585
  %v594 = vpack.c.b16 %v586, %v586
  %v595 = vpack.c.b16 %v587, %v587
  %v596 = vpack.c.b16 %v588, %v588
  %v597 = vpack.c.b16 %v589, %v589
  %v598 = vpack.c.b16 %v590, %v590
  %vm607 = vcmask 519168
  %608 = vst.msk [vmem:[%s5] sm:$0xf] %vm607, %v591
  %609 = vst.msk [vmem:[%s5 + $0x4] sm:$0xf] %vm607, %v592
  %610 = vst.msk [vmem:[%s5 + $0x8] sm:$0xf] %vm607, %v593
  %611 = vst.msk [vmem:[%s5 + $0xc] sm:$0xf] %vm607, %v594
  %612 = vst.msk [vmem:[%s5 + $0x10] sm:$0xf] %vm607, %v595
  %613 = vst.msk [vmem:[%s5 + $0x14] sm:$0xf] %vm607, %v596
  %614 = vst.msk [vmem:[%s5 + $0x18] sm:$0xf] %vm607, %v597
  %615 = vst.msk [vmem:[%s5 + $0x1c] sm:$0xf] %vm607, %v598
  // Predicated region
  $region22: #{forward.7} parent=0 // pred_check
    _
  $region23: #{forward.7} parent=0 // pred_check_branch
    %617 = sbr.rel (0) target = $region25
  $region24: #{forward.7} parent=0 // pred_region
    _
  $region25: #{forward.7} parent=0 // pred_fallthru
    _
  // Predicated region
  $region26: #{forward.7} parent=0 // pred_check
    _
  $region27: #{forward.7} parent=0 // pred_check_branch
    %619 = sbr.rel (0) target = $region29
  $region28: #{forward.7} parent=0 // pred_region
    _
  $region29: #{forward.7} parent=0 // pred_fallthru
    _

// kernel: forward.8
$region0: #{forward.8}
  #allocation0 [shape = 'u32[]', space=smem, size = 0x4, offset = 0x4, fixed_abs, tag = 'smem constant byte address 0x4 - core index']
  #allocation1 [shape = 'u32[144,128]{1,0:T(1,128)}', space=vmem, size = 0x12000, scoped, tag = 'internal scratch']
  %s0 = inlined_call_operand.vmem [shape: bf16[32,576], index: 0, kind: input, shape index: {}]
  %s1 = inlined_call_operand.vmem [shape: bf16[576,64], index: 1, kind: input, shape index: {}]
  %s2 = inlined_call_operand.vmem [shape: f32[1,64], index: 2, kind: input, shape index: {}]
  %s3 = inlined_call_operand.vmem [shape: bf16[64,512], index: 3, kind: input, shape index: {}]
  %s4 = inlined_call_operand.vmem [shape: f32[1,512], index: 4, kind: input, shape index: {}]
  %s5 = inlined_call_operand.vmem [shape: bf16[32,512], index: 5, kind: output, shape index: {}]
  %s6 = sld [smem:[#allocation0]]
  $region30: #{forward.8} parent=0
    _
  %s8 = ssub.s32 1, %s6
  %s9 = scalar_select 0, %s8, %s6
  // Predicated region
  $region2: #{forward.8} parent=0 // pred_check
    _
  $region3: #{forward.8} parent=0 // pred_check_branch
    %11 = sbr.rel (0) target = $region5
  $region4: #{forward.8} parent=0 // pred_region
    _
  $region5: #{forward.8} parent=0 // pred_fallthru
    _
  // Predicated region
  $region6: #{forward.8} parent=0 // pred_check
    _
  $region7: #{forward.8} parent=0 // pred_check_branch
    %13 = sbr.rel (0) target = $region9
  $region8: #{forward.8} parent=0 // pred_region
    _
  $region9: #{forward.8} parent=0 // pred_fallthru
    _
  // Predicated region
  $region10: #{forward.8} parent=0 // pred_check
    _
  $region11: #{forward.8} parent=0 // pred_check_branch
    %15 = sbr.rel (0) target = $region13
  $region12: #{forward.8} parent=0 // pred_region
    _
  $region13: #{forward.8} parent=0 // pred_fallthru
    _
  // Predicated region
  $region14: #{forward.8} parent=0 // pred_check
    _
  $region15: #{forward.8} parent=0 // pred_check_branch
    %17 = sbr.rel (0) target = $region17
  $region16: #{forward.8} parent=0 // pred_region
    _
  $region17: #{forward.8} parent=0 // pred_fallthru
    _
  // Predicated region
  $region18: #{forward.8} parent=0 // pred_check
    _
  $region19: #{forward.8} parent=0 // pred_check_branch
    %19 = sbr.rel (0) target = $region21
  $region20: #{forward.8} parent=0 // pred_region
    _
  $region21: #{forward.8} parent=0 // pred_fallthru
    _
  %v21 = vld [vmem:[%s0] sm:$0xff]
  %v22 = vld [vmem:[%s0 + $0x8] sm:$0xff]
  %v23 = vld [vmem:[%s0 + $0x10] sm:$0xf]
  %v24 = vld [vmem:[%s0 + $0x14] sm:$0xff]
  %v25 = vld [vmem:[%s0 + $0x1c] sm:$0xff]
  %v26 = vld [vmem:[%s0 + $0x24] sm:$0xf]
  %v27 = vld [vmem:[%s0 + $0x28] sm:$0xff]
  %v28 = vld [vmem:[%s0 + $0x30] sm:$0xff]
  %v29 = vld [vmem:[%s0 + $0x38] sm:$0xf]
  %v30 = vld [vmem:[%s0 + $0x3c] sm:$0xff]
  %v31 = vld [vmem:[%s0 + $0x44] sm:$0xff]
  %v32 = vld [vmem:[%s0 + $0x4c] sm:$0xf]
  %v33 = vld [vmem:[%s1] sm:$0xf]
  %v34 = vld [vmem:[%s1 + $0x4] sm:$0xf]
  %v35 = vld [vmem:[%s1 + $0x8] sm:$0xf]
  %v36 = vld [vmem:[%s1 + $0xc] sm:$0xf]
  %v37 = vld [vmem:[%s1 + $0x10] sm:$0xf]
  %v38 = vld [vmem:[%s1 + $0x14] sm:$0xf]
  %v39 = vld [vmem:[%s1 + $0x18] sm:$0xf]
  %v40 = vld [vmem:[%s1 + $0x1c] sm:$0xf]
  %v41 = vld [vmem:[%s1 + $0x20] sm:$0xf]
  %v42 = vld [vmem:[%s1 + $0x24] sm:$0xf]
  %v43 = vld [vmem:[%s1 + $0x28] sm:$0xf]
  %v44 = vld [vmem:[%s1 + $0x2c] sm:$0xf]
  %v45 = vld [vmem:[%s1 + $0x30] sm:$0xf]
  %v46 = vld [vmem:[%s1 + $0x34] sm:$0xf]
  %v47 = vld [vmem:[%s1 + $0x38] sm:$0xf]
  %v48 = vld [vmem:[%s1 + $0x3c] sm:$0xf]
  %v49 = vld [vmem:[%s1 + $0x40] sm:$0xf]
  %v50 = vld [vmem:[%s1 + $0x44] sm:$0xf]
  %v51 = vld [vmem:[%s1 + $0x48] sm:$0xf]
  %v52 = vld [vmem:[%s1 + $0x4c] sm:$0xf]
  %v53 = vld [vmem:[%s1 + $0x50] sm:$0xf]
  %v54 = vld [vmem:[%s1 + $0x54] sm:$0xf]
  %v55 = vld [vmem:[%s1 + $0x58] sm:$0xf]
  %v56 = vld [vmem:[%s1 + $0x5c] sm:$0xf]
  %v57 = vld [vmem:[%s1 + $0x60] sm:$0xf]
  %v58 = vld [vmem:[%s1 + $0x64] sm:$0xf]
  %v59 = vld [vmem:[%s1 + $0x68] sm:$0xf]
  %v60 = vld [vmem:[%s1 + $0x6c] sm:$0xf]
  %v61 = vld [vmem:[%s1 + $0x70] sm:$0xf]
  %v62 = vld [vmem:[%s1 + $0x74] sm:$0xf]
  %v63 = vld [vmem:[%s1 + $0x78] sm:$0xf]
  %v64 = vld [vmem:[%s1 + $0x7c] sm:$0xf]
  %v65 = vld [vmem:[%s1 + $0x80] sm:$0xf]
  %v66 = vld [vmem:[%s1 + $0x84] sm:$0xf]
  %v67 = vld [vmem:[%s1 + $0x88] sm:$0xf]
  %v68 = vld [vmem:[%s1 + $0x8c] sm:$0xf]
  %v69 = vld [vmem:[%s1 + $0x90] sm:$0xf]
  %v70 = vld [vmem:[%s1 + $0x94] sm:$0xf]
  %v71 = vld [vmem:[%s1 + $0x98] sm:$0xf]
  %v72 = vld [vmem:[%s1 + $0x9c] sm:$0xf]
  %v73 = vld [vmem:[%s1 + $0xa0] sm:$0xf]
  %v74 = vld [vmem:[%s1 + $0xa4] sm:$0xf]
  %v75 = vld [vmem:[%s1 + $0xa8] sm:$0xf]
  %v76 = vld [vmem:[%s1 + $0xac] sm:$0xf]
  %v77 = vld [vmem:[%s1 + $0xb0] sm:$0xf]
  %v78 = vld [vmem:[%s1 + $0xb4] sm:$0xf]
  %v79 = vld [vmem:[%s1 + $0xb8] sm:$0xf]
  %v80 = vld [vmem:[%s1 + $0xbc] sm:$0xf]
  %v81 = vld [vmem:[%s1 + $0xc0] sm:$0xf]
  %v82 = vld [vmem:[%s1 + $0xc4] sm:$0xf]
  %v83 = vld [vmem:[%s1 + $0xc8] sm:$0xf]
  %v84 = vld [vmem:[%s1 + $0xcc] sm:$0xf]
  %v85 = vld [vmem:[%s1 + $0xd0] sm:$0xf]
  %v86 = vld [vmem:[%s1 + $0xd4] sm:$0xf]
  %v87 = vld [vmem:[%s1 + $0xd8] sm:$0xf]
  %v88 = vld [vmem:[%s1 + $0xdc] sm:$0xf]
  %v89 = vld [vmem:[%s1 + $0xe0] sm:$0xf]
  %v90 = vld [vmem:[%s1 + $0xe4] sm:$0xf]
  %v91 = vld [vmem:[%s1 + $0xe8] sm:$0xf]
  %v92 = vld [vmem:[%s1 + $0xec] sm:$0xf]
  %v93 = vld [vmem:[%s1 + $0xf0] sm:$0xf]
  %v94 = vld [vmem:[%s1 + $0xf4] sm:$0xf]
  %v95 = vld [vmem:[%s1 + $0xf8] sm:$0xf]
  %v96 = vld [vmem:[%s1 + $0xfc] sm:$0xf]
  %v97 = vld [vmem:[%s1 + $0x100] sm:$0xf]
  %v98 = vld [vmem:[%s1 + $0x104] sm:$0xf]
  %v99 = vld [vmem:[%s1 + $0x108] sm:$0xf]
  %v100 = vld [vmem:[%s1 + $0x10c] sm:$0xf]
  %v101 = vld [vmem:[%s1 + $0x110] sm:$0xf]
  %v102 = vld [vmem:[%s1 + $0x114] sm:$0xf]
  %v103 = vld [vmem:[%s1 + $0x118] sm:$0xf]
  %v104 = vld [vmem:[%s1 + $0x11c] sm:$0xf]
  %v105 = vld [vmem:[%s2] sm:$0x1]
  %v107 = vlaneseq
  %v108 = vshrl.u32 %v107, 7
  %v109 = vsub.s32 0, %v108
  %v110 = vrot.slane %v105, %v109
  %v124 = vunpack.c.l.b16 %v21
  %v125 = vunpack.c.h.b16 %v21
  %v126 = vunpack.c.l.b16 %v22
  %v127 = vunpack.c.h.b16 %v22
  %v128 = vunpack.c.l.b16 %v23
  %v129 = vunpack.c.l.b16 %v24
  %v130 = vunpack.c.h.b16 %v24
  %v131 = vunpack.c.l.b16 %v25
  %v132 = vunpack.c.h.b16 %v25
  %v133 = vunpack.c.l.b16 %v26
  %v134 = vunpack.c.l.b16 %v27
  %v135 = vunpack.c.h.b16 %v27
  %v136 = vunpack.c.l.b16 %v28
  %v137 = vunpack.c.h.b16 %v28
  %v138 = vunpack.c.l.b16 %v29
  %v139 = vunpack.c.l.b16 %v30
  %v140 = vunpack.c.h.b16 %v30
  %v141 = vunpack.c.l.b16 %v31
  %v142 = vunpack.c.h.b16 %v31
  %v143 = vunpack.c.l.b16 %v32
  %v144 = vpack.c.b16 %v129, %v124
  %v145 = vpack.c.b16 %v130, %v125
  %v146 = vpack.c.b16 %v131, %v126
  %v147 = vpack.c.b16 %v132, %v127
  %v148 = vpack.c.b16 %v133, %v128
  %v149 = vpack.c.b16 %v139, %v134
  %v150 = vpack.c.b16 %v140, %v135
  %v151 = vpack.c.b16 %v141, %v136
  %v152 = vpack.c.b16 %v142, %v137
  %v153 = vpack.c.b16 %v143, %v138
  %v234 = vunpack.c.l.b16 %v33
  %v235 = vunpack.c.l.b16 %v34
  %v236 = vunpack.c.l.b16 %v35
  %v237 = vunpack.c.l.b16 %v36
  %v238 = vunpack.c.l.b16 %v37
  %v239 = vunpack.c.l.b16 %v38
  %v240 = vunpack.c.l.b16 %v39
  %v241 = vunpack.c.l.b16 %v40
  %v242 = vunpack.c.l.b16 %v41
  %v243 = vunpack.c.l.b16 %v42
  %v244 = vunpack.c.l.b16 %v43
  %v245 = vunpack.c.l.b16 %v44
  %v246 = vunpack.c.l.b16 %v45
  %v247 = vunpack.c.l.b16 %v46
  %v248 = vunpack.c.l.b16 %v47
  %v249 = vunpack.c.l.b16 %v48
  %v250 = vunpack.c.l.b16 %v49
  %v251 = vunpack.c.l.b16 %v50
  %v252 = vunpack.c.l.b16 %v51
  %v253 = vunpack.c.l.b16 %v52
  %v254 = vunpack.c.l.b16 %v53
  %v255 = vunpack.c.l.b16 %v54
  %v256 = vunpack.c.l.b16 %v55
  %v257 = vunpack.c.l.b16 %v56
  %v258 = vunpack.c.l.b16 %v57
  %v259 = vunpack.c.l.b16 %v58
  %v260 = vunpack.c.l.b16 %v59
  %v261 = vunpack.c.l.b16 %v60
  %v262 = vunpack.c.l.b16 %v61
  %v263 = vunpack.c.l.b16 %v62
  %v264 = vunpack.c.l.b16 %v63
  %v265 = vunpack.c.l.b16 %v64
  %v266 = vunpack.c.l.b16 %v65
  %v267 = vunpack.c.l.b16 %v66
  %v268 = vunpack.c.l.b16 %v67
  %v269 = vunpack.c.l.b16 %v68
  %v270 = vunpack.c.l.b16 %v69
  %v271 = vunpack.c.l.b16 %v70
  %v272 = vunpack.c.l.b16 %v71
  %v273 = vunpack.c.l.b16 %v72
  %v274 = vunpack.c.l.b16 %v73
  %v275 = vunpack.c.l.b16 %v74
  %v276 = vunpack.c.l.b16 %v75
  %v277 = vunpack.c.l.b16 %v76
  %v278 = vunpack.c.l.b16 %v77
  %v279 = vunpack.c.l.b16 %v78
  %v280 = vunpack.c.l.b16 %v79
  %v281 = vunpack.c.l.b16 %v80
  %v282 = vunpack.c.l.b16 %v81
  %v283 = vunpack.c.l.b16 %v82
  %v284 = vunpack.c.l.b16 %v83
  %v285 = vunpack.c.l.b16 %v84
  %v286 = vunpack.c.l.b16 %v85
  %v287 = vunpack.c.l.b16 %v86
  %v288 = vunpack.c.l.b16 %v87
  %v289 = vunpack.c.l.b16 %v88
  %v290 = vunpack.c.l.b16 %v89
  %v291 = vunpack.c.l.b16 %v90
  %v292 = vunpack.c.l.b16 %v91
  %v293 = vunpack.c.l.b16 %v92
  %v294 = vunpack.c.l.b16 %v93
  %v295 = vunpack.c.l.b16 %v94
  %v296 = vunpack.c.l.b16 %v95
  %v297 = vunpack.c.l.b16 %v96
  %v298 = vunpack.c.l.b16 %v97
  %v299 = vunpack.c.l.b16 %v98
  %v300 = vunpack.c.l.b16 %v99
  %v301 = vunpack.c.l.b16 %v100
  %v302 = vunpack.c.l.b16 %v101
  %v303 = vunpack.c.l.b16 %v102
  %v304 = vunpack.c.l.b16 %v103
  %v305 = vunpack.c.l.b16 %v104
  %v306 = vpack.c.b16 %v235, %v234
  %v307 = vpack.c.b16 %v237, %v236
  %v308 = vpack.c.b16 %v239, %v238
  %v309 = vpack.c.b16 %v241, %v240
  %v310 = vpack.c.b16 %v243, %v242
  %v311 = vpack.c.b16 %v245, %v244
  %v312 = vpack.c.b16 %v247, %v246
  %v313 = vpack.c.b16 %v249, %v248
  %v314 = vpack.c.b16 %v251, %v250
  %v315 = vpack.c.b16 %v253, %v252
  %v316 = vpack.c.b16 %v255, %v254
  %v317 = vpack.c.b16 %v257, %v256
  %v318 = vpack.c.b16 %v259, %v258
  %v319 = vpack.c.b16 %v261, %v260
  %v320 = vpack.c.b16 %v263, %v262
  %v321 = vpack.c.b16 %v265, %v264
  %v322 = vpack.c.b16 %v267, %v266
  %v323 = vpack.c.b16 %v269, %v268
  %v324 = vpack.c.b16 %v271, %v270
  %v325 = vpack.c.b16 %v273, %v272
  %v326 = vpack.c.b16 %v275, %v274
  %v327 = vpack.c.b16 %v277, %v276
  %v328 = vpack.c.b16 %v279, %v278
  %v329 = vpack.c.b16 %v281, %v280
  %v330 = vpack.c.b16 %v283, %v282
  %v331 = vpack.c.b16 %v285, %v284
  %v332 = vpack.c.b16 %v287, %v286
  %v333 = vpack.c.b16 %v289, %v288
  %v334 = vpack.c.b16 %v291, %v290
  %v335 = vpack.c.b16 %v293, %v292
  %v336 = vpack.c.b16 %v295, %v294
  %v337 = vpack.c.b16 %v297, %v296
  %v338 = vpack.c.b16 %v299, %v298
  %v339 = vpack.c.b16 %v301, %v300
  %v340 = vpack.c.b16 %v303, %v302
  %v341 = vpack.c.b16 %v305, %v304
  %vm378 = vcmask 523264
  %v380 = vsel %vm378, %v148, 0
  %v383 = vsel %vm378, %v153, 0
  %385 = vmatprep.subr.bf16.mxu0 0
  %386 = vmatpush1.bf16.msra.mxu0 %v306
  %387 = vmatprep.subr.bf16.mxu0 0
  %388 = vmatpush1.bf16.msra.mxu0 %v307
  %389 = vmatprep.subr.bf16.mxu0 0
  %390 = vmatpush1.bf16.msra.mxu0 %v308
  %391 = vmatprep.subr.bf16.mxu0 0
  %392 = vmatpush1.bf16.msra.mxu0 %v309
  %393 = vmatprep.subr.bf16.mxu0 0
  %394 = vmatpush1.bf16.msra.mxu0 %v310
  %395 = vmatprep.subr.bf16.mxu0 0
  %396 = vmatpush1.bf16.msra.mxu0 %v311
  %397 = vmatprep.subr.bf16.mxu0 0
  %398 = vmatpush1.bf16.msra.mxu0 %v312
  %399 = vmatprep.subr.bf16.mxu0 0
  %400 = vmatpush1.bf16.msra.mxu0 %v313
  %401 = vmatprep.subr.bf16.mxu0 0
  %402 = vmatpush1.bf16.msra.mxu0 %v314
  %403 = vmatprep.subr.bf16.mxu0 0
  %404 = vmatpush1.bf16.msra.mxu0 %v315
  %405 = vmatprep.subr.bf16.mxu0 0
  %406 = vmatpush1.bf16.msra.mxu0 %v316
  %407 = vmatprep.subr.bf16.mxu0 0
  %408 = vmatpush1.bf16.msra.mxu0 %v317
  %409 = vmatprep.subr.bf16.mxu0 0
  %410 = vmatpush1.bf16.msra.mxu0 %v318
  %411 = vmatprep.subr.bf16.mxu0 0
  %412 = vmatpush1.bf16.msra.mxu0 %v319
  %413 = vmatprep.subr.bf16.mxu0 0
  %414 = vmatpush1.bf16.msra.mxu0 %v320
  %415 = vmatprep.subr.bf16.mxu0 0
  %416 = vmatpush1.bf16.msra.mxu0 %v321
  %417 = vmatprep.mubr.bf16.mxu0 %v145
  %418 = vmatmul.mubr.bf16.gmra.mrb[0].mxu0 %v144
  %v419 = vpop.f32.mrb[0].mxu0
  %v420 = vadd.f32 %v110, %v419
  %v421 = vpop.f32.mrb[0].mxu0
  %v422 = vpop.f32.mrb[0].mxu0
  %v423 = vadd.f32 %v110, %v422
  %v424 = vpop.f32.mrb[0].mxu0
  %425 = vmatprep.mubr.bf16.mxu0 %v150
  %426 = vmatmul.mubr.bf16.gmra.mrb[0].mxu0 %v149
  %v427 = vpop.f32.mrb[0].mxu0
  %v428 = vadd.f32 %v110, %v427
  %v429 = vpop.f32.mrb[0].mxu0
  %v430 = vpop.f32.mrb[0].mxu0
  %v431 = vadd.f32 %v110, %v430
  %v432 = vpop.f32.mrb[0].mxu0
  %433 = vdwg.mxu0
  %434 = vmatprep.subr.bf16.mxu0 0
  %435 = vmatpush1.bf16.msra.mxu0 %v322
  %436 = vmatprep.subr.bf16.mxu0 0
  %437 = vmatpush1.bf16.msra.mxu0 %v323
  %438 = vmatprep.subr.bf16.mxu0 0
  %439 = vmatpush1.bf16.msra.mxu0 %v324
  %440 = vmatprep.subr.bf16.mxu0 0
  %441 = vmatpush1.bf16.msra.mxu0 %v325
  %442 = vmatprep.subr.bf16.mxu0 0
  %443 = vmatpush1.bf16.msra.mxu0 %v326
  %444 = vmatprep.subr.bf16.mxu0 0
  %445 = vmatpush1.bf16.msra.mxu0 %v327
  %446 = vmatprep.subr.bf16.mxu0 0
  %447 = vmatpush1.bf16.msra.mxu0 %v328
  %448 = vmatprep.subr.bf16.mxu0 0
  %449 = vmatpush1.bf16.msra.mxu0 %v329
  %450 = vmatprep.subr.bf16.mxu0 0
  %451 = vmatpush1.bf16.msra.mxu0 %v330
  %452 = vmatprep.subr.bf16.mxu0 0
  %453 = vmatpush1.bf16.msra.mxu0 %v331
  %454 = vmatprep.subr.bf16.mxu0 0
  %455 = vmatpush1.bf16.msra.mxu0 %v332
  %456 = vmatprep.subr.bf16.mxu0 0
  %457 = vmatpush1.bf16.msra.mxu0 %v333
  %458 = vmatprep.subr.bf16.mxu0 0
  %459 = vmatpush1.bf16.msra.mxu0 %v334
  %460 = vmatprep.subr.bf16.mxu0 0
  %461 = vmatpush1.bf16.msra.mxu0 %v335
  %462 = vmatprep.subr.bf16.mxu0 0
  %463 = vmatpush1.bf16.msra.mxu0 %v336
  %464 = vmatprep.subr.bf16.mxu0 0
  %465 = vmatpush1.bf16.msra.mxu0 %v337
  %466 = vmatprep.mubr.bf16.mxu0 %v147
  %467 = vmatmul.mubr.bf16.gmra.mrb[0].mxu0 %v146
  %v468 = vpop.f32.mrb[0].mxu0
  %v469 = vadd.f32 %v420, %v468
  %v470 = vpop.f32.mrb[0].mxu0
  %v471 = vpop.f32.mrb[0].mxu0
  %v472 = vadd.f32 %v423, %v471
  %v473 = vpop.f32.mrb[0].mxu0
  %474 = vmatprep.mubr.bf16.mxu0 %v152
  %475 = vmatmul.mubr.bf16.gmra.mrb[0].mxu0 %v151
  %v476 = vpop.f32.mrb[0].mxu0
  %v477 = vadd.f32 %v428, %v476
  %v478 = vpop.f32.mrb[0].mxu0
  %v479 = vpop.f32.mrb[0].mxu0
  %v480 = vadd.f32 %v431, %v479
  %v481 = vpop.f32.mrb[0].mxu0
  %482 = vdwg.mxu0
  %483 = vmatprep.subr.bf16.mxu0 0
  %484 = vmatpush1.bf16.msra.mxu0 %v338
  %485 = vmatprep.subr.bf16.mxu0 0
  %486 = vmatpush1.bf16.msra.mxu0 %v339
  %487 = vmatprep.subr.bf16.mxu0 0
  %488 = vmatpush1.bf16.msra.mxu0 %v340
  %489 = vmatprep.subr.bf16.mxu0 0
  %490 = vmatpush1.bf16.msra.mxu0 %v341
  %491 = vmatprep.subr.bf16.mxu0 0
  %492 = vmatpush1.bf16.msra.mxu0 0
  %493 = vmatprep.subr.bf16.mxu0 0
  %494 = vmatpush1.bf16.msra.mxu0 0
  %495 = vmatprep.subr.bf16.mxu0 0
  %496 = vmatpush1.bf16.msra.mxu0 0
  %497 = vmatprep.subr.bf16.mxu0 0
  %498 = vmatpush1.bf16.msra.mxu0 0
  %499 = vmatprep.subr.bf16.mxu0 0
  %500 = vmatpush1.bf16.msra.mxu0 0
  %501 = vmatprep.subr.bf16.mxu0 0
  %502 = vmatpush1.bf16.msra.mxu0 0
  %503 = vmatprep.subr.bf16.mxu0 0
  %504 = vmatpush1.bf16.msra.mxu0 0
  %505 = vmatprep.subr.bf16.mxu0 0
  %506 = vmatpush1.bf16.msra.mxu0 0
  %507 = vmatprep.subr.bf16.mxu0 0
  %508 = vmatpush1.bf16.msra.mxu0 0
  %509 = vmatprep.subr.bf16.mxu0 0
  %510 = vmatpush1.bf16.msra.mxu0 0
  %511 = vmatprep.subr.bf16.mxu0 0
  %512 = vmatpush1.bf16.msra.mxu0 0
  %513 = vmatprep.subr.bf16.mxu0 0
  %514 = vmatpush1.bf16.msra.mxu0 0
  %515 = vmatprep.mubr.bf16.mxu0 0
  %516 = vmatmul.mubr.bf16.gmra.mrb[0].mxu0 %v380
  %v517 = vpop.f32.mrb[0].mxu0
  %v518 = vadd.f32 %v469, %v517
  %v519 = vpop.f32.mrb[0].mxu0
  %v520 = vpop.f32.mrb[0].mxu0
  %v521 = vadd.f32 %v472, %v520
  %v522 = vpop.f32.mrb[0].mxu0
  %523 = vmatprep.mubr.bf16.mxu0 0
  %524 = vmatmul.mubr.bf16.gmra.mrb[0].mxu0 %v383
  %v525 = vpop.f32.mrb[0].mxu0
  %v526 = vadd.f32 %v477, %v525
  %v527 = vpop.f32.mrb[0].mxu0
  %v528 = vpop.f32.mrb[0].mxu0
  %v529 = vadd.f32 %v480, %v528
  %v530 = vpop.f32.mrb[0].mxu0
  %531 = vdwg.mxu0
  %v532 = vadd.f32 %v518, 3.0
  %v533 = vadd.f32 %v521, 3.0
  %v534 = vadd.f32 %v526, 3.0
  %v535 = vadd.f32 %v529, 3.0
  %v536 = vmax.f32 %v532, 0.0
  %v537 = vmax.f32 %v533, 0.0
  %v538 = vmax.f32 %v534, 0.0
  %v539 = vmax.f32 %v535, 0.0
  %v540 = vmin.f32 %v536, 6.0
  %v541 = vmin.f32 %v537, 6.0
  %v542 = vmin.f32 %v538, 6.0
  %v543 = vmin.f32 %v539, 6.0
  %v544 = vmul.f32 %v518, %v540
  %v545 = vmul.f32 %v521, %v541
  %v546 = vmul.f32 %v526, %v542
  %v547 = vmul.f32 %v529, %v543
  %v548 = vmul.f32 %v544, 0.16666667
  %v549 = vmul.f32 %v545, 0.16666667
  %v550 = vmul.f32 %v546, 0.16666667
  %v551 = vmul.f32 %v547, 0.16666667
  %v552 = vpack.c.bf16 %v549, %v548
  %v553 = vpack.c.bf16 %v551, %v550
  %v554 = vld [vmem:[%s3] sm:$0xff]
  %v555 = vld [vmem:[%s3 + $0x8] sm:$0xff]
  %v556 = vld [vmem:[%s3 + $0x10] sm:$0xff]
  %v557 = vld [vmem:[%s3 + $0x18] sm:$0xff]
  %v558 = vld [vmem:[%s3 + $0x20] sm:$0xff]
  %v559 = vld [vmem:[%s3 + $0x28] sm:$0xff]
  %v560 = vld [vmem:[%s3 + $0x30] sm:$0xff]
  %v561 = vld [vmem:[%s3 + $0x38] sm:$0xff]
  %v562 = vld [vmem:[%s3 + $0x40] sm:$0xff]
  %v563 = vld [vmem:[%s3 + $0x48] sm:$0xff]
  %v564 = vld [vmem:[%s3 + $0x50] sm:$0xff]
  %v565 = vld [vmem:[%s3 + $0x58] sm:$0xff]
  %v566 = vld [vmem:[%s3 + $0x60] sm:$0xff]
  %v567 = vld [vmem:[%s3 + $0x68] sm:$0xff]
  %v568 = vld [vmem:[%s3 + $0x70] sm:$0xff]
  %v569 = vld [vmem:[%s3 + $0x78] sm:$0xff]
  %v570 = vld [vmem:[%s4] sm:$0xf]
  %v572 = vlaneseq
  %v573 = vshrl.u32 %v572, 7
  %v574 = vsub.s32 0, %v573
  %v575 = vrot.slane %v570, %v574
  %v576 = vlaneseq
  %v577 = vshrl.u32 %v576, 7
  %v578 = vsub.s32 1, %v577
  %v579 = vrot.slane %v570, %v578
  %v580 = vlaneseq
  %v581 = vshrl.u32 %v580, 7
  %v582 = vsub.s32 2, %v581
  %v583 = vrot.slane %v570, %v582
  %v584 = vlaneseq
  %v585 = vshrl.u32 %v584, 7
  %v586 = vsub.s32 3, %v585
  %v587 = vrot.slane %v570, %v586
  %v608 = vunpack.c.l.b16 %v554
  %v609 = vunpack.c.h.b16 %v554
  %v610 = vunpack.c.l.b16 %v555
  %v611 = vunpack.c.h.b16 %v555
  %v612 = vunpack.c.l.b16 %v556
  %v613 = vunpack.c.h.b16 %v556
  %v614 = vunpack.c.l.b16 %v557
  %v615 = vunpack.c.h.b16 %v557
  %v616 = vunpack.c.l.b16 %v558
  %v617 = vunpack.c.h.b16 %v558
  %v618 = vunpack.c.l.b16 %v559
  %v619 = vunpack.c.h.b16 %v559
  %v620 = vunpack.c.l.b16 %v560
  %v621 = vunpack.c.h.b16 %v560
  %v622 = vunpack.c.l.b16 %v561
  %v623 = vunpack.c.h.b16 %v561
  %v624 = vunpack.c.l.b16 %v562
  %v625 = vunpack.c.h.b16 %v562
  %v626 = vunpack.c.l.b16 %v563
  %v627 = vunpack.c.h.b16 %v563
  %v628 = vunpack.c.l.b16 %v564
  %v629 = vunpack.c.h.b16 %v564
  %v630 = vunpack.c.l.b16 %v565
  %v631 = vunpack.c.h.b16 %v565
  %v632 = vunpack.c.l.b16 %v566
  %v633 = vunpack.c.h.b16 %v566
  %v634 = vunpack.c.l.b16 %v567
  %v635 = vunpack.c.h.b16 %v567
  %v636 = vunpack.c.l.b16 %v568
  %v637 = vunpack.c.h.b16 %v568
  %v638 = vunpack.c.l.b16 %v569
  %v639 = vunpack.c.h.b16 %v569
  %v640 = vpack.c.b16 %v612, %v608
  %v641 = vpack.c.b16 %v613, %v609
  %v642 = vpack.c.b16 %v614, %v610
  %v643 = vpack.c.b16 %v615, %v611
  %v644 = vpack.c.b16 %v620, %v616
  %v645 = vpack.c.b16 %v621, %v617
  %v646 = vpack.c.b16 %v622, %v618
  %v647 = vpack.c.b16 %v623, %v619
  %v648 = vpack.c.b16 %v628, %v624
  %v649 = vpack.c.b16 %v629, %v625
  %v650 = vpack.c.b16 %v630, %v626
  %v651 = vpack.c.b16 %v631, %v627
  %v652 = vpack.c.b16 %v636, %v632
  %v653 = vpack.c.b16 %v637, %v633
  %v654 = vpack.c.b16 %v638, %v634
  %v655 = vpack.c.b16 %v639, %v635
  %v673 = vsel %vm378, %v552, 0
  %v676 = vsel %vm378, %v553, 0
  %678 = vmatprep.subr.bf16.mxu0 %v641
  %679 = vmatpush1.bf16.msra.mxu0 %v640
  %680 = vmatprep.subr.bf16.mxu0 %v645
  %681 = vmatpush1.bf16.msra.mxu0 %v644
  %682 = vmatprep.subr.bf16.mxu0 %v649
  %683 = vmatpush1.bf16.msra.mxu0 %v648
  %684 = vmatprep.subr.bf16.mxu0 %v653
  %685 = vmatpush1.bf16.msra.mxu0 %v652
  %686 = vmatprep.subr.bf16.mxu0 0
  %687 = vmatpush1.bf16.msra.mxu0 0
  %688 = vmatprep.subr.bf16.mxu0 0
  %689 = vmatpush1.bf16.msra.mxu0 0
  %690 = vmatprep.subr.bf16.mxu0 0
  %691 = vmatpush1.bf16.msra.mxu0 0
  %692 = vmatprep.subr.bf16.mxu0 0
  %693 = vmatpush1.bf16.msra.mxu0 0
  %694 = vmatprep.subr.bf16.mxu0 0
  %695 = vmatpush1.bf16.msra.mxu0 0
  %696 = vmatprep.subr.bf16.mxu0 0
  %697 = vmatpush1.bf16.msra.mxu0 0
  %698 = vmatprep.subr.bf16.mxu0 0
  %699 = vmatpush1.bf16.msra.mxu0 0
  %700 = vmatprep.subr.bf16.mxu0 0
  %701 = vmatpush1.bf16.msra.mxu0 0
  %702 = vmatprep.subr.bf16.mxu0 0
  %703 = vmatpush1.bf16.msra.mxu0 0
  %704 = vmatprep.subr.bf16.mxu0 0
  %705 = vmatpush1.bf16.msra.mxu0 0
  %706 = vmatprep.subr.bf16.mxu0 0
  %707 = vmatpush1.bf16.msra.mxu0 0
  %708 = vmatprep.subr.bf16.mxu0 0
  %709 = vmatpush1.bf16.msra.mxu0 0
  %710 = vmatprep.mubr.bf16.mxu0 0
  %711 = vmatmul.mubr.bf16.gmra.mrb[0].mxu0 %v673
  %v712 = vpop.f32.mrb[0].mxu0
  %v713 = vadd.f32 %v575, %v712
  %v714 = vpop.f32.mrb[0].mxu0
  %v715 = vadd.f32 %v579, %v714
  %v716 = vpop.f32.mrb[0].mxu0
  %v717 = vadd.f32 %v575, %v716
  %v718 = vpop.f32.mrb[0].mxu0
  %v719 = vadd.f32 %v579, %v718
  %720 = vmatprep.mubr.bf16.mxu0 0
  %721 = vmatmul.mubr.bf16.gmra.mrb[0].mxu0 %v676
  %v722 = vpop.f32.mrb[0].mxu0
  %v723 = vadd.f32 %v575, %v722
  %v724 = vpop.f32.mrb[0].mxu0
  %v725 = vadd.f32 %v579, %v724
  %v726 = vpop.f32.mrb[0].mxu0
  %v727 = vadd.f32 %v575, %v726
  %v728 = vpop.f32.mrb[0].mxu0
  %v729 = vadd.f32 %v579, %v728
  %730 = vdwg.mxu0
  %731 = vmatprep.subr.bf16.mxu0 %v643
  %732 = vmatpush1.bf16.msra.mxu0 %v642
  %733 = vmatprep.subr.bf16.mxu0 %v647
  %734 = vmatpush1.bf16.msra.mxu0 %v646
  %735 = vmatprep.subr.bf16.mxu0 %v651
  %736 = vmatpush1.bf16.msra.mxu0 %v650
  %737 = vmatprep.subr.bf16.mxu0 %v655
  %738 = vmatpush1.bf16.msra.mxu0 %v654
  %739 = vmatprep.subr.bf16.mxu0 0
  %740 = vmatpush1.bf16.msra.mxu0 0
  %741 = vmatprep.subr.bf16.mxu0 0
  %742 = vmatpush1.bf16.msra.mxu0 0
  %743 = vmatprep.subr.bf16.mxu0 0
  %744 = vmatpush1.bf16.msra.mxu0 0
  %745 = vmatprep.subr.bf16.mxu0 0
  %746 = vmatpush1.bf16.msra.mxu0 0
  %747 = vmatprep.subr.bf16.mxu0 0
  %748 = vmatpush1.bf16.msra.mxu0 0
  %749 = vmatprep.subr.bf16.mxu0 0
  %750 = vmatpush1.bf16.msra.mxu0 0
  %751 = vmatprep.subr.bf16.mxu0 0
  %752 = vmatpush1.bf16.msra.mxu0 0
  %753 = vmatprep.subr.bf16.mxu0 0
  %754 = vmatpush1.bf16.msra.mxu0 0
  %755 = vmatprep.subr.bf16.mxu0 0
  %756 = vmatpush1.bf16.msra.mxu0 0
  %757 = vmatprep.subr.bf16.mxu0 0
  %758 = vmatpush1.bf16.msra.mxu0 0
  %759 = vmatprep.subr.bf16.mxu0 0
  %760 = vmatpush1.bf16.msra.mxu0 0
  %761 = vmatprep.subr.bf16.mxu0 0
  %762 = vmatpush1.bf16.msra.mxu0 0
  %763 = vmatprep.mubr.bf16.mxu0 0
  %764 = vmatmul.mubr.bf16.gmra.mrb[0].mxu0 %v673
  %v765 = vpop.f32.mrb[0].mxu0
  %v766 = vadd.f32 %v583, %v765
  %v767 = vpop.f32.mrb[0].mxu0
  %v768 = vadd.f32 %v587, %v767
  %v769 = vpop.f32.mrb[0].mxu0
  %v770 = vadd.f32 %v583, %v769
  %v771 = vpop.f32.mrb[0].mxu0
  %v772 = vadd.f32 %v587, %v771
  %773 = vmatprep.mubr.bf16.mxu0 0
  %774 = vmatmul.mubr.bf16.gmra.mrb[0].mxu0 %v676
  %v775 = vpop.f32.mrb[0].mxu0
  %v776 = vadd.f32 %v583, %v775
  %v777 = vpop.f32.mrb[0].mxu0
  %v778 = vadd.f32 %v587, %v777
  %v779 = vpop.f32.mrb[0].mxu0
  %v780 = vadd.f32 %v583, %v779
  %v781 = vpop.f32.mrb[0].mxu0
  %v782 = vadd.f32 %v587, %v781
  %783 = vdwg.mxu0
  %v784 = vadd.f32 %v713, 3.0
  %v785 = vadd.f32 %v715, 3.0
  %v786 = vadd.f32 %v766, 3.0
  %v787 = vadd.f32 %v768, 3.0
  %v788 = vadd.f32 %v717, 3.0
  %v789 = vadd.f32 %v719, 3.0
  %v790 = vadd.f32 %v770, 3.0
  %v791 = vadd.f32 %v772, 3.0
  %v792 = vadd.f32 %v723, 3.0
  %v793 = vadd.f32 %v725, 3.0
  %v794 = vadd.f32 %v776, 3.0
  %v795 = vadd.f32 %v778, 3.0
  %v796 = vadd.f32 %v727, 3.0
  %v797 = vadd.f32 %v729, 3.0
  %v798 = vadd.f32 %v780, 3.0
  %v799 = vadd.f32 %v782, 3.0
  %v800 = vmax.f32 %v784, 0.0
  %v801 = vmax.f32 %v785, 0.0
  %v802 = vmax.f32 %v786, 0.0
  %v803 = vmax.f32 %v787, 0.0
  %v804 = vmax.f32 %v788, 0.0
  %v805 = vmax.f32 %v789, 0.0
  %v806 = vmax.f32 %v790, 0.0
  %v807 = vmax.f32 %v791, 0.0
  %v808 = vmax.f32 %v792, 0.0
  %v809 = vmax.f32 %v793, 0.0
  %v810 = vmax.f32 %v794, 0.0
  %v811 = vmax.f32 %v795, 0.0
  %v812 = vmax.f32 %v796, 0.0
  %v813 = vmax.f32 %v797, 0.0
  %v814 = vmax.f32 %v798, 0.0
  %v815 = vmax.f32 %v799, 0.0
  %v816 = vmin.f32 %v800, 6.0
  %v817 = vmin.f32 %v801, 6.0
  %v818 = vmin.f32 %v802, 6.0
  %v819 = vmin.f32 %v803, 6.0
  %v820 = vmin.f32 %v804, 6.0
  %v821 = vmin.f32 %v805, 6.0
  %v822 = vmin.f32 %v806, 6.0
  %v823 = vmin.f32 %v807, 6.0
  %v824 = vmin.f32 %v808, 6.0
  %v825 = vmin.f32 %v809, 6.0
  %v826 = vmin.f32 %v810, 6.0
  %v827 = vmin.f32 %v811, 6.0
  %v828 = vmin.f32 %v812, 6.0
  %v829 = vmin.f32 %v813, 6.0
  %v830 = vmin.f32 %v814, 6.0
  %v831 = vmin.f32 %v815, 6.0
  %v832 = vmul.f32 %v713, %v816
  %v833 = vmul.f32 %v715, %v817
  %v834 = vmul.f32 %v766, %v818
  %v835 = vmul.f32 %v768, %v819
  %v836 = vmul.f32 %v717, %v820
  %v837 = vmul.f32 %v719, %v821
  %v838 = vmul.f32 %v770, %v822
  %v839 = vmul.f32 %v772, %v823
  %v840 = vmul.f32 %v723, %v824
  %v841 = vmul.f32 %v725, %v825
  %v842 = vmul.f32 %v776, %v826
  %v843 = vmul.f32 %v778, %v827
  %v844 = vmul.f32 %v727, %v828
  %v845 = vmul.f32 %v729, %v829
  %v846 = vmul.f32 %v780, %v830
  %v847 = vmul.f32 %v782, %v831
  %v848 = vmul.f32 %v832, 0.16666667
  %v849 = vmul.f32 %v833, 0.16666667
  %v850 = vmul.f32 %v834, 0.16666667
  %v851 = vmul.f32 %v835, 0.16666667
  %v852 = vmul.f32 %v836, 0.16666667
  %v853 = vmul.f32 %v837, 0.16666667
  %v854 = vmul.f32 %v838, 0.16666667
  %v855 = vmul.f32 %v839, 0.16666667
  %v856 = vmul.f32 %v840, 0.16666667
  %v857 = vmul.f32 %v841, 0.16666667
  %v858 = vmul.f32 %v842, 0.16666667
  %v859 = vmul.f32 %v843, 0.16666667
  %v860 = vmul.f32 %v844, 0.16666667
  %v861 = vmul.f32 %v845, 0.16666667
  %v862 = vmul.f32 %v846, 0.16666667
  %v863 = vmul.f32 %v847, 0.16666667
  %v864 = vpack.c.bf16 %v852, %v848
  %v865 = vpack.c.bf16 %v853, %v849
  %v866 = vpack.c.bf16 %v854, %v850
  %v867 = vpack.c.bf16 %v855, %v851
  %v868 = vpack.c.bf16 %v860, %v856
  %v869 = vpack.c.bf16 %v861, %v857
  %v870 = vpack.c.bf16 %v862, %v858
  %v871 = vpack.c.bf16 %v863, %v859
  %v880 = vunpack.c.l.b16 %v864
  %v881 = vunpack.c.l.b16 %v865
  %v882 = vunpack.c.l.b16 %v866
  %v883 = vunpack.c.l.b16 %v867
  %v884 = vunpack.c.h.b16 %v864
  %v885 = vunpack.c.h.b16 %v865
  %v886 = vunpack.c.h.b16 %v866
  %v887 = vunpack.c.h.b16 %v867
  %v888 = vunpack.c.l.b16 %v868
  %v889 = vunpack.c.l.b16 %v869
  %v890 = vunpack.c.l.b16 %v870
  %v891 = vunpack.c.l.b16 %v871
  %v892 = vunpack.c.h.b16 %v868
  %v893 = vunpack.c.h.b16 %v869
  %v894 = vunpack.c.h.b16 %v870
  %v895 = vunpack.c.h.b16 %v871
  %v896 = vpack.c.b16 %v881, %v880
  %v897 = vpack.c.b16 %v883, %v882
  %v898 = vpack.c.b16 %v885, %v884
  %v899 = vpack.c.b16 %v887, %v886
  %v900 = vpack.c.b16 %v889, %v888
  %v901 = vpack.c.b16 %v891, %v890
  %v902 = vpack.c.b16 %v893, %v892
  %v903 = vpack.c.b16 %v895, %v894
  %912 = vst [vmem:[%s5] sm:$0xff] %v896
  %913 = vst [vmem:[%s5 + $0x8] sm:$0xff] %v897
  %914 = vst [vmem:[%s5 + $0x10] sm:$0xff] %v898
  %915 = vst [vmem:[%s5 + $0x18] sm:$0xff] %v899
  %916 = vst [vmem:[%s5 + $0x20] sm:$0xff] %v900
  %917 = vst [vmem:[%s5 + $0x28] sm:$0xff] %v901
  %918 = vst [vmem:[%s5 + $0x30] sm:$0xff] %v902
  %919 = vst [vmem:[%s5 + $0x38] sm:$0xff] %v903
  // Predicated region
  $region22: #{forward.8} parent=0 // pred_check
    _
  $region23: #{forward.8} parent=0 // pred_check_branch
    %921 = sbr.rel (0) target = $region25
  $region24: #{forward.8} parent=0 // pred_region
    _
  $region25: #{forward.8} parent=0 // pred_fallthru
    _
  // Predicated region
  $region26: #{forward.8} parent=0 // pred_check
    _
  $region27: #{forward.8} parent=0 // pred_check_branch
    %923 = sbr.rel (0) target = $region29
  $region28: #{forward.8} parent=0 // pred_region
    _
  $region29: #{forward.8} parent=0 // pred_fallthru
    _

// kernel: forward.9
$region0: #{forward.9}
  #allocation0 [shape = 'u32[]', space=smem, size = 0x4, offset = 0x4, fixed_abs, tag = 'smem constant byte address 0x4 - core index']
  #allocation1 [shape = 'u32[144,128]{1,0:T(1,128)}', space=vmem, size = 0x12000, scoped, tag = 'internal scratch']
  %s0 = inlined_call_operand.vmem [shape: bf16[32,512], index: 0, kind: input, shape index: {}]
  %s1 = inlined_call_operand.vmem [shape: bf16[512,120], index: 1, kind: input, shape index: {}]
  %s2 = inlined_call_operand.vmem [shape: f32[1,120], index: 2, kind: input, shape index: {}]
  %s3 = inlined_call_operand.vmem [shape: bf16[120,6656], index: 3, kind: input, shape index: {}]
  %s4 = inlined_call_operand.vmem [shape: f32[1,6656], index: 4, kind: input, shape index: {}]
  %s5 = inlined_call_operand.hbm [shape: f32[32,6656], index: 5, kind: output, shape index: {}]
  %s6 = sld [smem:[#allocation0]]
  $region30: #{forward.9} parent=0
    _
  %s8 = ssub.s32 1, %s6
  %s9 = scalar_select 0, %s8, %s6
  $region1: #{forward.9} parent=0
    #allocation2 [shape = 'u8[851968]{0}', space=vmem, size = 0xd0000, scoped, tag = 'output window, operand 0, single buffered']
    #allocation3 [shape = 's32[1]{0}', space=sflag, size = 0x4, scoped, tag = 'scoped memory for forward.9']
    %10 = vsyncpa [#allocation3], 0
    // Predicated region
    $region2: #{forward.9} parent=1 // pred_check
      _
    $region3: #{forward.9} parent=1 // pred_check_branch
      %12 = sbr.rel (0) target = $region5
    $region4: #{forward.9} parent=1 // pred_region
      _
    $region5: #{forward.9} parent=1 // pred_fallthru
      _
    // Predicated region
    $region6: #{forward.9} parent=1 // pred_check
      _
    $region7: #{forward.9} parent=1 // pred_check_branch
      %14 = sbr.rel (0) target = $region9
    $region8: #{forward.9} parent=1 // pred_region
      _
    $region9: #{forward.9} parent=1 // pred_fallthru
      _
    // Predicated region
    $region10: #{forward.9} parent=1 // pred_check
      _
    $region11: #{forward.9} parent=1 // pred_check_branch
      %16 = sbr.rel (0) target = $region13
    $region12: #{forward.9} parent=1 // pred_region
      _
    $region13: #{forward.9} parent=1 // pred_fallthru
      _
    // Predicated region
    $region14: #{forward.9} parent=1 // pred_check
      _
    $region15: #{forward.9} parent=1 // pred_check_branch
      %18 = sbr.rel (0) target = $region17
    $region16: #{forward.9} parent=1 // pred_region
      _
    $region17: #{forward.9} parent=1 // pred_fallthru
      _
    // Predicated region
    $region18: #{forward.9} parent=1 // pred_check
      _
    $region19: #{forward.9} parent=1 // pred_check_branch
      %20 = sbr.rel (0) target = $region21
    $region20: #{forward.9} parent=1 // pred_region
      _
    $region21: #{forward.9} parent=1 // pred_fallthru
      _
    %v22 = vld [vmem:[%s0] sm:$0xff]
    %v23 = vld [vmem:[%s0 + $0x8] sm:$0xff]
    %v24 = vld [vmem:[%s0 + $0x10] sm:$0xff]
    %v25 = vld [vmem:[%s0 + $0x18] sm:$0xff]
    %v26 = vld [vmem:[%s0 + $0x20] sm:$0xff]
    %v27 = vld [vmem:[%s0 + $0x28] sm:$0xff]
    %v28 = vld [vmem:[%s0 + $0x30] sm:$0xff]
    %v29 = vld [vmem:[%s0 + $0x38] sm:$0xff]
    %v30 = vld [vmem:[%s1] sm:$0xf]
    %v31 = vld [vmem:[%s1 + $0x4] sm:$0xf]
    %v32 = vld [vmem:[%s1 + $0x8] sm:$0xf]
    %v33 = vld [vmem:[%s1 + $0xc] sm:$0xf]
    %v34 = vld [vmem:[%s1 + $0x10] sm:$0xf]
    %v35 = vld [vmem:[%s1 + $0x14] sm:$0xf]
    %v36 = vld [vmem:[%s1 + $0x18] sm:$0xf]
    %v37 = vld [vmem:[%s1 + $0x1c] sm:$0xf]
    %v38 = vld [vmem:[%s1 + $0x20] sm:$0xf]
    %v39 = vld [vmem:[%s1 + $0x24] sm:$0xf]
    %v40 = vld [vmem:[%s1 + $0x28] sm:$0xf]
    %v41 = vld [vmem:[%s1 + $0x2c] sm:$0xf]
    %v42 = vld [vmem:[%s1 + $0x30] sm:$0xf]
    %v43 = vld [vmem:[%s1 + $0x34] sm:$0xf]
    %v44 = vld [vmem:[%s1 + $0x38] sm:$0xf]
    %v45 = vld [vmem:[%s1 + $0x3c] sm:$0xf]
    %v46 = vld [vmem:[%s1 + $0x40] sm:$0xf]
    %v47 = vld [vmem:[%s1 + $0x44] sm:$0xf]
    %v48 = vld [vmem:[%s1 + $0x48] sm:$0xf]
    %v49 = vld [vmem:[%s1 + $0x4c] sm:$0xf]
    %v50 = vld [vmem:[%s1 + $0x50] sm:$0xf]
    %v51 = vld [vmem:[%s1 + $0x54] sm:$0xf]
    %v52 = vld [vmem:[%s1 + $0x58] sm:$0xf]
    %v53 = vld [vmem:[%s1 + $0x5c] sm:$0xf]
    %v54 = vld [vmem:[%s1 + $0x60] sm:$0xf]
    %v55 = vld [vmem:[%s1 + $0x64] sm:$0xf]
    %v56 = vld [vmem:[%s1 + $0x68] sm:$0xf]
    %v57 = vld [vmem:[%s1 + $0x6c] sm:$0xf]
    %v58 = vld [vmem:[%s1 + $0x70] sm:$0xf]
    %v59 = vld [vmem:[%s1 + $0x74] sm:$0xf]
    %v60 = vld [vmem:[%s1 + $0x78] sm:$0xf]
    %v61 = vld [vmem:[%s1 + $0x7c] sm:$0xf]
    %v62 = vld [vmem:[%s1 + $0x80] sm:$0xf]
    %v63 = vld [vmem:[%s1 + $0x84] sm:$0xf]
    %v64 = vld [vmem:[%s1 + $0x88] sm:$0xf]
    %v65 = vld [vmem:[%s1 + $0x8c] sm:$0xf]
    %v66 = vld [vmem:[%s1 + $0x90] sm:$0xf]
    %v67 = vld [vmem:[%s1 + $0x94] sm:$0xf]
    %v68 = vld [vmem:[%s1 + $0x98] sm:$0xf]
    %v69 = vld [vmem:[%s1 + $0x9c] sm:$0xf]
    %v70 = vld [vmem:[%s1 + $0xa0] sm:$0xf]
    %v71 = vld [vmem:[%s1 + $0xa4] sm:$0xf]
    %v72 = vld [vmem:[%s1 + $0xa8] sm:$0xf]
    %v73 = vld [vmem:[%s1 + $0xac] sm:$0xf]
    %v74 = vld [vmem:[%s1 + $0xb0] sm:$0xf]
    %v75 = vld [vmem:[%s1 + $0xb4] sm:$0xf]
    %v76 = vld [vmem:[%s1 + $0xb8] sm:$0xf]
    %v77 = vld [vmem:[%s1 + $0xbc] sm:$0xf]
    %v78 = vld [vmem:[%s1 + $0xc0] sm:$0xf]
    %v79 = vld [vmem:[%s1 + $0xc4] sm:$0xf]
    %v80 = vld [vmem:[%s1 + $0xc8] sm:$0xf]
    %v81 = vld [vmem:[%s1 + $0xcc] sm:$0xf]
    %v82 = vld [vmem:[%s1 + $0xd0] sm:$0xf]
    %v83 = vld [vmem:[%s1 + $0xd4] sm:$0xf]
    %v84 = vld [vmem:[%s1 + $0xd8] sm:$0xf]
    %v85 = vld [vmem:[%s1 + $0xdc] sm:$0xf]
    %v86 = vld [vmem:[%s1 + $0xe0] sm:$0xf]
    %v87 = vld [vmem:[%s1 + $0xe4] sm:$0xf]
    %v88 = vld [vmem:[%s1 + $0xe8] sm:$0xf]
    %v89 = vld [vmem:[%s1 + $0xec] sm:$0xf]
    %v90 = vld [vmem:[%s1 + $0xf0] sm:$0xf]
    %v91 = vld [vmem:[%s1 + $0xf4] sm:$0xf]
    %v92 = vld [vmem:[%s1 + $0xf8] sm:$0xf]
    %v93 = vld [vmem:[%s1 + $0xfc] sm:$0xf]
    %v94 = vld [vmem:[%s2] sm:$0x1]
    %v96 = vlaneseq
    %v97 = vshrl.u32 %v96, 7
    %v98 = vsub.s32 0, %v97
    %v99 = vrot.slane %v94, %v98
    %v109 = vunpack.c.l.b16 %v22
    %v110 = vunpack.c.h.b16 %v22
    %v111 = vunpack.c.l.b16 %v23
    %v112 = vunpack.c.h.b16 %v23
    %v113 = vunpack.c.l.b16 %v24
    %v114 = vunpack.c.h.b16 %v24
    %v115 = vunpack.c.l.b16 %v25
    %v116 = vunpack.c.h.b16 %v25
    %v117 = vunpack.c.l.b16 %v26
    %v118 = vunpack.c.h.b16 %v26
    %v119 = vunpack.c.l.b16 %v27
    %v120 = vunpack.c.h.b16 %v27
    %v121 = vunpack.c.l.b16 %v28
    %v122 = vunpack.c.h.b16 %v28
    %v123 = vunpack.c.l.b16 %v29
    %v124 = vunpack.c.h.b16 %v29
    %v125 = vpack.c.b16 %v113, %v109
    %v126 = vpack.c.b16 %v114, %v110
    %v127 = vpack.c.b16 %v115, %v111
    %v128 = vpack.c.b16 %v116, %v112
    %v129 = vpack.c.b16 %v121, %v117
    %v130 = vpack.c.b16 %v122, %v118
    %v131 = vpack.c.b16 %v123, %v119
    %v132 = vpack.c.b16 %v124, %v120
    %v205 = vunpack.c.l.b16 %v30
    %v206 = vunpack.c.l.b16 %v31
    %v207 = vunpack.c.l.b16 %v32
    %v208 = vunpack.c.l.b16 %v33
    %v209 = vunpack.c.l.b16 %v34
    %v210 = vunpack.c.l.b16 %v35
    %v211 = vunpack.c.l.b16 %v36
    %v212 = vunpack.c.l.b16 %v37
    %v213 = vunpack.c.l.b16 %v38
    %v214 = vunpack.c.l.b16 %v39
    %v215 = vunpack.c.l.b16 %v40
    %v216 = vunpack.c.l.b16 %v41
    %v217 = vunpack.c.l.b16 %v42
    %v218 = vunpack.c.l.b16 %v43
    %v219 = vunpack.c.l.b16 %v44
    %v220 = vunpack.c.l.b16 %v45
    %v221 = vunpack.c.l.b16 %v46
    %v222 = vunpack.c.l.b16 %v47
    %v223 = vunpack.c.l.b16 %v48
    %v224 = vunpack.c.l.b16 %v49
    %v225 = vunpack.c.l.b16 %v50
    %v226 = vunpack.c.l.b16 %v51
    %v227 = vunpack.c.l.b16 %v52
    %v228 = vunpack.c.l.b16 %v53
    %v229 = vunpack.c.l.b16 %v54
    %v230 = vunpack.c.l.b16 %v55
    %v231 = vunpack.c.l.b16 %v56
    %v232 = vunpack.c.l.b16 %v57
    %v233 = vunpack.c.l.b16 %v58
    %v234 = vunpack.c.l.b16 %v59
    %v235 = vunpack.c.l.b16 %v60
    %v236 = vunpack.c.l.b16 %v61
    %v237 = vunpack.c.l.b16 %v62
    %v238 = vunpack.c.l.b16 %v63
    %v239 = vunpack.c.l.b16 %v64
    %v240 = vunpack.c.l.b16 %v65
    %v241 = vunpack.c.l.b16 %v66
    %v242 = vunpack.c.l.b16 %v67
    %v243 = vunpack.c.l.b16 %v68
    %v244 = vunpack.c.l.b16 %v69
    %v245 = vunpack.c.l.b16 %v70
    %v246 = vunpack.c.l.b16 %v71
    %v247 = vunpack.c.l.b16 %v72
    %v248 = vunpack.c.l.b16 %v73
    %v249 = vunpack.c.l.b16 %v74
    %v250 = vunpack.c.l.b16 %v75
    %v251 = vunpack.c.l.b16 %v76
    %v252 = vunpack.c.l.b16 %v77
    %v253 = vunpack.c.l.b16 %v78
    %v254 = vunpack.c.l.b16 %v79
    %v255 = vunpack.c.l.b16 %v80
    %v256 = vunpack.c.l.b16 %v81
    %v257 = vunpack.c.l.b16 %v82
    %v258 = vunpack.c.l.b16 %v83
    %v259 = vunpack.c.l.b16 %v84
    %v260 = vunpack.c.l.b16 %v85
    %v261 = vunpack.c.l.b16 %v86
    %v262 = vunpack.c.l.b16 %v87
    %v263 = vunpack.c.l.b16 %v88
    %v264 = vunpack.c.l.b16 %v89
    %v265 = vunpack.c.l.b16 %v90
    %v266 = vunpack.c.l.b16 %v91
    %v267 = vunpack.c.l.b16 %v92
    %v268 = vunpack.c.l.b16 %v93
    %v269 = vpack.c.b16 %v206, %v205
    %v270 = vpack.c.b16 %v208, %v207
    %v271 = vpack.c.b16 %v210, %v209
    %v272 = vpack.c.b16 %v212, %v211
    %v273 = vpack.c.b16 %v214, %v213
    %v274 = vpack.c.b16 %v216, %v215
    %v275 = vpack.c.b16 %v218, %v217
    %v276 = vpack.c.b16 %v220, %v219
    %v277 = vpack.c.b16 %v222, %v221
    %v278 = vpack.c.b16 %v224, %v223
    %v279 = vpack.c.b16 %v226, %v225
    %v280 = vpack.c.b16 %v228, %v227
    %v281 = vpack.c.b16 %v230, %v229
    %v282 = vpack.c.b16 %v232, %v231
    %v283 = vpack.c.b16 %v234, %v233
    %v284 = vpack.c.b16 %v236, %v235
    %v285 = vpack.c.b16 %v238, %v237
    %v286 = vpack.c.b16 %v240, %v239
    %v287 = vpack.c.b16 %v242, %v241
    %v288 = vpack.c.b16 %v244, %v243
    %v289 = vpack.c.b16 %v246, %v245
    %v290 = vpack.c.b16 %v248, %v247
    %v291 = vpack.c.b16 %v250, %v249
    %v292 = vpack.c.b16 %v252, %v251
    %v293 = vpack.c.b16 %v254, %v253
    %v294 = vpack.c.b16 %v256, %v255
    %v295 = vpack.c.b16 %v258, %v257
    %v296 = vpack.c.b16 %v260, %v259
    %v297 = vpack.c.b16 %v262, %v261
    %v298 = vpack.c.b16 %v264, %v263
    %v299 = vpack.c.b16 %v266, %v265
    %v300 = vpack.c.b16 %v268, %v267
    %333 = vmatprep.subr.bf16.mxu0 0
    %334 = vmatpush1.bf16.msra.mxu0 %v269
    %335 = vmatprep.subr.bf16.mxu0 0
    %336 = vmatpush1.bf16.msra.mxu0 %v270
    %337 = vmatprep.subr.bf16.mxu0 0
    %338 = vmatpush1.bf16.msra.mxu0 %v271
    %339 = vmatprep.subr.bf16.mxu0 0
    %340 = vmatpush1.bf16.msra.mxu0 %v272
    %341 = vmatprep.subr.bf16.mxu0 0
    %342 = vmatpush1.bf16.msra.mxu0 %v273
    %343 = vmatprep.subr.bf16.mxu0 0
    %344 = vmatpush1.bf16.msra.mxu0 %v274
    %345 = vmatprep.subr.bf16.mxu0 0
    %346 = vmatpush1.bf16.msra.mxu0 %v275
    %347 = vmatprep.subr.bf16.mxu0 0
    %348 = vmatpush1.bf16.msra.mxu0 %v276
    %349 = vmatprep.subr.bf16.mxu0 0
    %350 = vmatpush1.bf16.msra.mxu0 %v277
    %351 = vmatprep.subr.bf16.mxu0 0
    %352 = vmatpush1.bf16.msra.mxu0 %v278
    %353 = vmatprep.subr.bf16.mxu0 0
    %354 = vmatpush1.bf16.msra.mxu0 %v279
    %355 = vmatprep.subr.bf16.mxu0 0
    %356 = vmatpush1.bf16.msra.mxu0 %v280
    %357 = vmatprep.subr.bf16.mxu0 0
    %358 = vmatpush1.bf16.msra.mxu0 %v281
    %359 = vmatprep.subr.bf16.mxu0 0
    %360 = vmatpush1.bf16.msra.mxu0 %v282
    %361 = vmatprep.subr.bf16.mxu0 0
    %362 = vmatpush1.bf16.msra.mxu0 %v283
    %363 = vmatprep.subr.bf16.mxu0 0
    %364 = vmatpush1.bf16.msra.mxu0 %v284
    %365 = vmatprep.mubr.bf16.mxu0 %v126
    %366 = vmatmul.mubr.bf16.gmra.mrb[0].mxu0 %v125
    %v367 = vpop.f32.mrb[0].mxu0
    %v368 = vadd.f32 %v99, %v367
    %v369 = vpop.f32.mrb[0].mxu0
    %v370 = vpop.f32.mrb[0].mxu0
    %v371 = vadd.f32 %v99, %v370
    %v372 = vpop.f32.mrb[0].mxu0
    %373 = vmatprep.mubr.bf16.mxu0 %v130
    %374 = vmatmul.mubr.bf16.gmra.mrb[0].mxu0 %v129
    %v375 = vpop.f32.mrb[0].mxu0
    %v376 = vadd.f32 %v99, %v375
    %v377 = vpop.f32.mrb[0].mxu0
    %v378 = vpop.f32.mrb[0].mxu0
    %v379 = vadd.f32 %v99, %v378
    %v380 = vpop.f32.mrb[0].mxu0
    %381 = vdwg.mxu0
    %382 = vmatprep.subr.bf16.mxu0 0
    %383 = vmatpush1.bf16.msra.mxu0 %v285
    %384 = vmatprep.subr.bf16.mxu0 0
    %385 = vmatpush1.bf16.msra.mxu0 %v286
    %386 = vmatprep.subr.bf16.mxu0 0
    %387 = vmatpush1.bf16.msra.mxu0 %v287
    %388 = vmatprep.subr.bf16.mxu0 0
    %389 = vmatpush1.bf16.msra.mxu0 %v288
    %390 = vmatprep.subr.bf16.mxu0 0
    %391 = vmatpush1.bf16.msra.mxu0 %v289
    %392 = vmatprep.subr.bf16.mxu0 0
    %393 = vmatpush1.bf16.msra.mxu0 %v290
    %394 = vmatprep.subr.bf16.mxu0 0
    %395 = vmatpush1.bf16.msra.mxu0 %v291
    %396 = vmatprep.subr.bf16.mxu0 0
    %397 = vmatpush1.bf16.msra.mxu0 %v292
    %398 = vmatprep.subr.bf16.mxu0 0
    %399 = vmatpush1.bf16.msra.mxu0 %v293
    %400 = vmatprep.subr.bf16.mxu0 0
    %401 = vmatpush1.bf16.msra.mxu0 %v294
    %402 = vmatprep.subr.bf16.mxu0 0
    %403 = vmatpush1.bf16.msra.mxu0 %v295
    %404 = vmatprep.subr.bf16.mxu0 0
    %405 = vmatpush1.bf16.msra.mxu0 %v296
    %406 = vmatprep.subr.bf16.mxu0 0
    %407 = vmatpush1.bf16.msra.mxu0 %v297
    %408 = vmatprep.subr.bf16.mxu0 0
    %409 = vmatpush1.bf16.msra.mxu0 %v298
    %410 = vmatprep.subr.bf16.mxu0 0
    %411 = vmatpush1.bf16.msra.mxu0 %v299
    %412 = vmatprep.subr.bf16.mxu0 0
    %413 = vmatpush1.bf16.msra.mxu0 %v300
    %414 = vmatprep.mubr.bf16.mxu0 %v128
    %415 = vmatmul.mubr.bf16.gmra.mrb[0].mxu0 %v127
    %v416 = vpop.f32.mrb[0].mxu0
    %v417 = vadd.f32 %v368, %v416
    %v418 = vpop.f32.mrb[0].mxu0
    %v419 = vpop.f32.mrb[0].mxu0
    %v420 = vadd.f32 %v371, %v419
    %v421 = vpop.f32.mrb[0].mxu0
    %422 = vmatprep.mubr.bf16.mxu0 %v132
    %423 = vmatmul.mubr.bf16.gmra.mrb[0].mxu0 %v131
    %v424 = vpop.f32.mrb[0].mxu0
    %v425 = vadd.f32 %v376, %v424
    %v426 = vpop.f32.mrb[0].mxu0
    %v427 = vpop.f32.mrb[0].mxu0
    %v428 = vadd.f32 %v379, %v427
    %v429 = vpop.f32.mrb[0].mxu0
    %430 = vdwg.mxu0
    %v431 = vpack.c.bf16 %v420, %v417
    %v432 = vpack.c.bf16 %v428, %v425
    %v433 = vld [vmem:[%s3] sm:$0xff]
    %v434 = vld [vmem:[%s3 + $0x8] sm:$0xff]
    %v435 = vld [vmem:[%s3 + $0x10] sm:$0xff]
    %v436 = vld [vmem:[%s3 + $0x18] sm:$0xff]
    %v437 = vld [vmem:[%s3 + $0x20] sm:$0xff]
    %v438 = vld [vmem:[%s3 + $0x28] sm:$0xff]
    %v439 = vld [vmem:[%s3 + $0x30] sm:$0xff]
    %v440 = vld [vmem:[%s3 + $0x38] sm:$0xff]
    %v441 = vld [vmem:[%s3 + $0x40] sm:$0xff]
    %v442 = vld [vmem:[%s3 + $0x48] sm:$0xff]
    %v443 = vld [vmem:[%s3 + $0x50] sm:$0xff]
    %v444 = vld [vmem:[%s3 + $0x58] sm:$0xff]
    %v445 = vld [vmem:[%s3 + $0x60] sm:$0xff]
    %v446 = vld [vmem:[%s3 + $0x68] sm:$0xff]
    %v447 = vld [vmem:[%s3 + $0x70] sm:$0xff]
    %v448 = vld [vmem:[%s3 + $0x78] sm:$0xff]
    %v449 = vld [vmem:[%s3 + $0x80] sm:$0xff]
    %v450 = vld [vmem:[%s3 + $0x88] sm:$0xff]
    %v451 = vld [vmem:[%s3 + $0x90] sm:$0xff]
    %v452 = vld [vmem:[%s3 + $0x98] sm:$0xff]
    %v453 = vld [vmem:[%s3 + $0xa0] sm:$0xff]
    %v454 = vld [vmem:[%s3 + $0xa8] sm:$0xff]
    %v455 = vld [vmem:[%s3 + $0xb0] sm:$0xff]
    %v456 = vld [vmem:[%s3 + $0xb8] sm:$0xff]
    %v457 = vld [vmem:[%s3 + $0xc0] sm:$0xff]
    %v458 = vld [vmem:[%s3 + $0xc8] sm:$0xff]
    %v459 = vld [vmem:[%s3 + $0xd0] sm:$0xff]
    %v460 = vld [vmem:[%s3 + $0xd8] sm:$0xff]
    %v461 = vld [vmem:[%s3 + $0xe0] sm:$0xff]
    %v462 = vld [vmem:[%s3 + $0xe8] sm:$0xff]
    %v463 = vld [vmem:[%s3 + $0xf0] sm:$0xff]
    %v464 = vld [vmem:[%s3 + $0xf8] sm:$0xff]
    %v465 = vld [vmem:[%s3 + $0x100] sm:$0xff]
    %v466 = vld [vmem:[%s3 + $0x108] sm:$0xff]
    %v467 = vld [vmem:[%s3 + $0x110] sm:$0xff]
    %v468 = vld [vmem:[%s3 + $0x118] sm:$0xff]
    %v469 = vld [vmem:[%s3 + $0x120] sm:$0xff]
    %v470 = vld [vmem:[%s3 + $0x128] sm:$0xff]
    %v471 = vld [vmem:[%s3 + $0x130] sm:$0xff]
    %v472 = vld [vmem:[%s3 + $0x138] sm:$0xff]
    %v473 = vld [vmem:[%s3 + $0x140] sm:$0xff]
    %v474 = vld [vmem:[%s3 + $0x148] sm:$0xff]
    %v475 = vld [vmem:[%s3 + $0x150] sm:$0xff]
    %v476 = vld [vmem:[%s3 + $0x158] sm:$0xff]
    %v477 = vld [vmem:[%s3 + $0x160] sm:$0xff]
    %v478 = vld [vmem:[%s3 + $0x168] sm:$0xff]
    %v479 = vld [vmem:[%s3 + $0x170] sm:$0xff]
    %v480 = vld [vmem:[%s3 + $0x178] sm:$0xff]
    %v481 = vld [vmem:[%s3 + $0x180] sm:$0xff]
    %v482 = vld [vmem:[%s3 + $0x188] sm:$0xff]
    %v483 = vld [vmem:[%s3 + $0x190] sm:$0xff]
    %v484 = vld [vmem:[%s3 + $0x198] sm:$0xff]
    %v485 = vld [vmem:[%s3 + $0x1a0] sm:$0xff]
    %v486 = vld [vmem:[%s3 + $0x1a8] sm:$0xff]
    %v487 = vld [vmem:[%s3 + $0x1b0] sm:$0xff]
    %v488 = vld [vmem:[%s3 + $0x1b8] sm:$0xff]
    %v489 = vld [vmem:[%s3 + $0x1c0] sm:$0xff]
    %v490 = vld [vmem:[%s3 + $0x1c8] sm:$0xff]
    %v491 = vld [vmem:[%s3 + $0x1d0] sm:$0xff]
    %v492 = vld [vmem:[%s3 + $0x1d8] sm:$0xff]
    %v493 = vld [vmem:[%s3 + $0x1e0] sm:$0xff]
    %v494 = vld [vmem:[%s3 + $0x1e8] sm:$0xff]
    %v495 = vld [vmem:[%s3 + $0x1f0] sm:$0xff]
    %v496 = vld [vmem:[%s3 + $0x1f8] sm:$0xff]
    %v497 = vld [vmem:[%s3 + $0x200] sm:$0xff]
    %v498 = vld [vmem:[%s3 + $0x208] sm:$0xff]
    %v499 = vld [vmem:[%s3 + $0x210] sm:$0xff]
    %v500 = vld [vmem:[%s3 + $0x218] sm:$0xff]
    %v501 = vld [vmem:[%s3 + $0x220] sm:$0xff]
    %v502 = vld [vmem:[%s3 + $0x228] sm:$0xff]
    %v503 = vld [vmem:[%s3 + $0x230] sm:$0xff]
    %v504 = vld [vmem:[%s3 + $0x238] sm:$0xff]
    %v505 = vld [vmem:[%s3 + $0x240] sm:$0xff]
    %v506 = vld [vmem:[%s3 + $0x248] sm:$0xff]
    %v507 = vld [vmem:[%s3 + $0x250] sm:$0xff]
    %v508 = vld [vmem:[%s3 + $0x258] sm:$0xff]
    %v509 = vld [vmem:[%s3 + $0x260] sm:$0xff]
    %v510 = vld [vmem:[%s3 + $0x268] sm:$0xff]
    %v511 = vld [vmem:[%s3 + $0x270] sm:$0xff]
    %v512 = vld [vmem:[%s3 + $0x278] sm:$0xff]
    %v513 = vld [vmem:[%s3 + $0x280] sm:$0xff]
    %v514 = vld [vmem:[%s3 + $0x288] sm:$0xff]
    %v515 = vld [vmem:[%s3 + $0x290] sm:$0xff]
    %v516 = vld [vmem:[%s3 + $0x298] sm:$0xff]
    %v517 = vld [vmem:[%s3 + $0x2a0] sm:$0xff]
    %v518 = vld [vmem:[%s3 + $0x2a8] sm:$0xff]
    %v519 = vld [vmem:[%s3 + $0x2b0] sm:$0xff]
    %v520 = vld [vmem:[%s3 + $0x2b8] sm:$0xff]
    %v521 = vld [vmem:[%s3 + $0x2c0] sm:$0xff]
    %v522 = vld [vmem:[%s3 + $0x2c8] sm:$0xff]
    %v523 = vld [vmem:[%s3 + $0x2d0] sm:$0xff]
    %v524 = vld [vmem:[%s3 + $0x2d8] sm:$0xff]
    %v525 = vld [vmem:[%s3 + $0x2e0] sm:$0xff]
    %v526 = vld [vmem:[%s3 + $0x2e8] sm:$0xff]
    %v527 = vld [vmem:[%s3 + $0x2f0] sm:$0xff]
    %v528 = vld [vmem:[%s3 + $0x2f8] sm:$0xff]
    %v529 = vld [vmem:[%s3 + $0x300] sm:$0xff]
    %v530 = vld [vmem:[%s3 + $0x308] sm:$0xff]
    %v531 = vld [vmem:[%s3 + $0x310] sm:$0xff]
    %v532 = vld [vmem:[%s3 + $0x318] sm:$0xff]
    %v533 = vld [vmem:[%s3 + $0x320] sm:$0xff]
    %v534 = vld [vmem:[%s3 + $0x328] sm:$0xff]
    %v535 = vld [vmem:[%s3 + $0x330] sm:$0xff]
    %v536 = vld [vmem:[%s3 + $0x338] sm:$0xff]
    %v537 = vld [vmem:[%s3 + $0x340] sm:$0xff]
    %v538 = vld [vmem:[%s3 + $0x348] sm:$0xff]
    %v539 = vld [vmem:[%s3 + $0x350] sm:$0xff]
    %v540 = vld [vmem:[%s3 + $0x358] sm:$0xff]
    %v541 = vld [vmem:[%s3 + $0x360] sm:$0xff]
    %v542 = vld [vmem:[%s3 + $0x368] sm:$0xff]
    %v543 = vld [vmem:[%s3 + $0x370] sm:$0xff]
    %v544 = vld [vmem:[%s3 + $0x378] sm:$0xff]
    %v545 = vld [vmem:[%s3 + $0x380] sm:$0xff]
    %v546 = vld [vmem:[%s3 + $0x388] sm:$0xff]
    %v547 = vld [vmem:[%s3 + $0x390] sm:$0xff]
    %v548 = vld [vmem:[%s3 + $0x398] sm:$0xff]
    %v549 = vld [vmem:[%s3 + $0x3a0] sm:$0xff]
    %v550 = vld [vmem:[%s3 + $0x3a8] sm:$0xff]
    %v551 = vld [vmem:[%s3 + $0x3b0] sm:$0xff]
    %v552 = vld [vmem:[%s3 + $0x3b8] sm:$0xff]
    %v553 = vld [vmem:[%s3 + $0x3c0] sm:$0xff]
    %v554 = vld [vmem:[%s3 + $0x3c8] sm:$0xff]
    %v555 = vld [vmem:[%s3 + $0x3d0] sm:$0xff]
    %v556 = vld [vmem:[%s3 + $0x3d8] sm:$0xff]
    %v557 = vld [vmem:[%s3 + $0x3e0] sm:$0xff]
    %v558 = vld [vmem:[%s3 + $0x3e8] sm:$0xff]
    %v559 = vld [vmem:[%s3 + $0x3f0] sm:$0xff]
    %v560 = vld [vmem:[%s3 + $0x3f8] sm:$0xff]
    %v561 = vld [vmem:[%s3 + $0x400] sm:$0xff]
    %v562 = vld [vmem:[%s3 + $0x408] sm:$0xff]
    %v563 = vld [vmem:[%s3 + $0x410] sm:$0xff]
    %v564 = vld [vmem:[%s3 + $0x418] sm:$0xff]
    %v565 = vld [vmem:[%s3 + $0x420] sm:$0xff]
    %v566 = vld [vmem:[%s3 + $0x428] sm:$0xff]
    %v567 = vld [vmem:[%s3 + $0x430] sm:$0xff]
    %v568 = vld [vmem:[%s3 + $0x438] sm:$0xff]
    %v569 = vld [vmem:[%s3 + $0x440] sm:$0xff]
    %v570 = vld [vmem:[%s3 + $0x448] sm:$0xff]
    %v571 = vld [vmem:[%s3 + $0x450] sm:$0xff]
    %v572 = vld [vmem:[%s3 + $0x458] sm:$0xff]
    %v573 = vld [vmem:[%s3 + $0x460] sm:$0xff]
    %v574 = vld [vmem:[%s3 + $0x468] sm:$0xff]
    %v575 = vld [vmem:[%s3 + $0x470] sm:$0xff]
    %v576 = vld [vmem:[%s3 + $0x478] sm:$0xff]
    %v577 = vld [vmem:[%s3 + $0x480] sm:$0xff]
    %v578 = vld [vmem:[%s3 + $0x488] sm:$0xff]
    %v579 = vld [vmem:[%s3 + $0x490] sm:$0xff]
    %v580 = vld [vmem:[%s3 + $0x498] sm:$0xff]
    %v581 = vld [vmem:[%s3 + $0x4a0] sm:$0xff]
    %v582 = vld [vmem:[%s3 + $0x4a8] sm:$0xff]
    %v583 = vld [vmem:[%s3 + $0x4b0] sm:$0xff]
    %v584 = vld [vmem:[%s3 + $0x4b8] sm:$0xff]
    %v585 = vld [vmem:[%s3 + $0x4c0] sm:$0xff]
    %v586 = vld [vmem:[%s3 + $0x4c8] sm:$0xff]
    %v587 = vld [vmem:[%s3 + $0x4d0] sm:$0xff]
    %v588 = vld [vmem:[%s3 + $0x4d8] sm:$0xff]
    %v589 = vld [vmem:[%s3 + $0x4e0] sm:$0xff]
    %v590 = vld [vmem:[%s3 + $0x4e8] sm:$0xff]
    %v591 = vld [vmem:[%s3 + $0x4f0] sm:$0xff]
    %v592 = vld [vmem:[%s3 + $0x4f8] sm:$0xff]
    %v593 = vld [vmem:[%s3 + $0x500] sm:$0xff]
    %v594 = vld [vmem:[%s3 + $0x508] sm:$0xff]
    %v595 = vld [vmem:[%s3 + $0x510] sm:$0xff]
    %v596 = vld [vmem:[%s3 + $0x518] sm:$0xff]
    %v597 = vld [vmem:[%s3 + $0x520] sm:$0xff]
    %v598 = vld [vmem:[%s3 + $0x528] sm:$0xff]
    %v599 = vld [vmem:[%s3 + $0x530] sm:$0xff]
    %v600 = vld [vmem:[%s3 + $0x538] sm:$0xff]
    %v601 = vld [vmem:[%s3 + $0x540] sm:$0xff]
    %v602 = vld [vmem:[%s3 + $0x548] sm:$0xff]
    %v603 = vld [vmem:[%s3 + $0x550] sm:$0xff]
    %v604 = vld [vmem:[%s3 + $0x558] sm:$0xff]
    %v605 = vld [vmem:[%s3 + $0x560] sm:$0xff]
    %v606 = vld [vmem:[%s3 + $0x568] sm:$0xff]
    %v607 = vld [vmem:[%s3 + $0x570] sm:$0xff]
    %v608 = vld [vmem:[%s3 + $0x578] sm:$0xff]
    %v609 = vld [vmem:[%s3 + $0x580] sm:$0xff]
    %v610 = vld [vmem:[%s3 + $0x588] sm:$0xff]
    %v611 = vld [vmem:[%s3 + $0x590] sm:$0xff]
    %v612 = vld [vmem:[%s3 + $0x598] sm:$0xff]
    %v613 = vld [vmem:[%s3 + $0x5a0] sm:$0xff]
    %v614 = vld [vmem:[%s3 + $0x5a8] sm:$0xff]
    %v615 = vld [vmem:[%s3 + $0x5b0] sm:$0xff]
    %v616 = vld [vmem:[%s3 + $0x5b8] sm:$0xff]
    %v617 = vld [vmem:[%s3 + $0x5c0] sm:$0xff]
    %v618 = vld [vmem:[%s3 + $0x5c8] sm:$0xff]
    %v619 = vld [vmem:[%s3 + $0x5d0] sm:$0xff]
    %v620 = vld [vmem:[%s3 + $0x5d8] sm:$0xff]
    %v621 = vld [vmem:[%s3 + $0x5e0] sm:$0xff]
    %v622 = vld [vmem:[%s3 + $0x5e8] sm:$0xff]
    %v623 = vld [vmem:[%s3 + $0x5f0] sm:$0xff]
    %v624 = vld [vmem:[%s3 + $0x5f8] sm:$0xff]
    %v625 = vld [vmem:[%s3 + $0x600] sm:$0xff]
    %v626 = vld [vmem:[%s3 + $0x608] sm:$0xff]
    %v627 = vld [vmem:[%s3 + $0x610] sm:$0xff]
    %v628 = vld [vmem:[%s3 + $0x618] sm:$0xff]
    %v629 = vld [vmem:[%s3 + $0x620] sm:$0xff]
    %v630 = vld [vmem:[%s3 + $0x628] sm:$0xff]
    %v631 = vld [vmem:[%s3 + $0x630] sm:$0xff]
    %v632 = vld [vmem:[%s3 + $0x638] sm:$0xff]
    %v633 = vld [vmem:[%s3 + $0x640] sm:$0xff]
    %v634 = vld [vmem:[%s3 + $0x648] sm:$0xff]
    %v635 = vld [vmem:[%s3 + $0x650] sm:$0xff]
    %v636 = vld [vmem:[%s3 + $0x658] sm:$0xff]
    %v637 = vld [vmem:[%s3 + $0x660] sm:$0xff]
    %v638 = vld [vmem:[%s3 + $0x668] sm:$0xff]
    %v639 = vld [vmem:[%s3 + $0x670] sm:$0xff]
    %v640 = vld [vmem:[%s3 + $0x678] sm:$0xff]
    %v641 = vld [vmem:[%s3 + $0x680] sm:$0xff]
    %v642 = vld [vmem:[%s3 + $0x688] sm:$0xff]
    %v643 = vld [vmem:[%s3 + $0x690] sm:$0xff]
    %v644 = vld [vmem:[%s3 + $0x698] sm:$0xff]
    %v645 = vld [vmem:[%s3 + $0x6a0] sm:$0xff]
    %v646 = vld [vmem:[%s3 + $0x6a8] sm:$0xff]
    %v647 = vld [vmem:[%s3 + $0x6b0] sm:$0xff]
    %v648 = vld [vmem:[%s3 + $0x6b8] sm:$0xff]
    %v649 = vld [vmem:[%s3 + $0x6c0] sm:$0xff]
    %v650 = vld [vmem:[%s3 + $0x6c8] sm:$0xff]
    %v651 = vld [vmem:[%s3 + $0x6d0] sm:$0xff]
    %v652 = vld [vmem:[%s3 + $0x6d8] sm:$0xff]
    %v653 = vld [vmem:[%s3 + $0x6e0] sm:$0xff]
    %v654 = vld [vmem:[%s3 + $0x6e8] sm:$0xff]
    %v655 = vld [vmem:[%s3 + $0x6f0] sm:$0xff]
    %v656 = vld [vmem:[%s3 + $0x6f8] sm:$0xff]
    %v657 = vld [vmem:[%s3 + $0x700] sm:$0xff]
    %v658 = vld [vmem:[%s3 + $0x708] sm:$0xff]
    %v659 = vld [vmem:[%s3 + $0x710] sm:$0xff]
    %v660 = vld [vmem:[%s3 + $0x718] sm:$0xff]
    %v661 = vld [vmem:[%s3 + $0x720] sm:$0xff]
    %v662 = vld [vmem:[%s3 + $0x728] sm:$0xff]
    %v663 = vld [vmem:[%s3 + $0x730] sm:$0xff]
    %v664 = vld [vmem:[%s3 + $0x738] sm:$0xff]
    %v665 = vld [vmem:[%s3 + $0x740] sm:$0xff]
    %v666 = vld [vmem:[%s3 + $0x748] sm:$0xff]
    %v667 = vld [vmem:[%s3 + $0x750] sm:$0xff]
    %v668 = vld [vmem:[%s3 + $0x758] sm:$0xff]
    %v669 = vld [vmem:[%s3 + $0x760] sm:$0xff]
    %v670 = vld [vmem:[%s3 + $0x768] sm:$0xff]
    %v671 = vld [vmem:[%s3 + $0x770] sm:$0xff]
    %v672 = vld [vmem:[%s3 + $0x778] sm:$0xff]
    %v673 = vld [vmem:[%s3 + $0x780] sm:$0xff]
    %v674 = vld [vmem:[%s3 + $0x788] sm:$0xff]
    %v675 = vld [vmem:[%s3 + $0x790] sm:$0xff]
    %v676 = vld [vmem:[%s3 + $0x798] sm:$0xff]
    %v677 = vld [vmem:[%s3 + $0x7a0] sm:$0xff]
    %v678 = vld [vmem:[%s3 + $0x7a8] sm:$0xff]
    %v679 = vld [vmem:[%s3 + $0x7b0] sm:$0xff]
    %v680 = vld [vmem:[%s3 + $0x7b8] sm:$0xff]
    %v681 = vld [vmem:[%s3 + $0x7c0] sm:$0xff]
    %v682 = vld [vmem:[%s3 + $0x7c8] sm:$0xff]
    %v683 = vld [vmem:[%s3 + $0x7d0] sm:$0xff]
    %v684 = vld [vmem:[%s3 + $0x7d8] sm:$0xff]
    %v685 = vld [vmem:[%s3 + $0x7e0] sm:$0xff]
    %v686 = vld [vmem:[%s3 + $0x7e8] sm:$0xff]
    %v687 = vld [vmem:[%s3 + $0x7f0] sm:$0xff]
    %v688 = vld [vmem:[%s3 + $0x7f8] sm:$0xff]
    %v689 = vld [vmem:[%s3 + $0x800] sm:$0xff]
    %v690 = vld [vmem:[%s3 + $0x808] sm:$0xff]
    %v691 = vld [vmem:[%s3 + $0x810] sm:$0xff]
    %v692 = vld [vmem:[%s3 + $0x818] sm:$0xff]
    %v693 = vld [vmem:[%s3 + $0x820] sm:$0xff]
    %v694 = vld [vmem:[%s3 + $0x828] sm:$0xff]
    %v695 = vld [vmem:[%s3 + $0x830] sm:$0xff]
    %v696 = vld [vmem:[%s3 + $0x838] sm:$0xff]
    %v697 = vld [vmem:[%s3 + $0x840] sm:$0xff]
    %v698 = vld [vmem:[%s3 + $0x848] sm:$0xff]
    %v699 = vld [vmem:[%s3 + $0x850] sm:$0xff]
    %v700 = vld [vmem:[%s3 + $0x858] sm:$0xff]
    %v701 = vld [vmem:[%s3 + $0x860] sm:$0xff]
    %v702 = vld [vmem:[%s3 + $0x868] sm:$0xff]
    %v703 = vld [vmem:[%s3 + $0x870] sm:$0xff]
    %v704 = vld [vmem:[%s3 + $0x878] sm:$0xff]
    %v705 = vld [vmem:[%s3 + $0x880] sm:$0xff]
    %v706 = vld [vmem:[%s3 + $0x888] sm:$0xff]
    %v707 = vld [vmem:[%s3 + $0x890] sm:$0xff]
    %v708 = vld [vmem:[%s3 + $0x898] sm:$0xff]
    %v709 = vld [vmem:[%s3 + $0x8a0] sm:$0xff]
    %v710 = vld [vmem:[%s3 + $0x8a8] sm:$0xff]
    %v711 = vld [vmem:[%s3 + $0x8b0] sm:$0xff]
    %v712 = vld [vmem:[%s3 + $0x8b8] sm:$0xff]
    %v713 = vld [vmem:[%s3 + $0x8c0] sm:$0xff]
    %v714 = vld [vmem:[%s3 + $0x8c8] sm:$0xff]
    %v715 = vld [vmem:[%s3 + $0x8d0] sm:$0xff]
    %v716 = vld [vmem:[%s3 + $0x8d8] sm:$0xff]
    %v717 = vld [vmem:[%s3 + $0x8e0] sm:$0xff]
    %v718 = vld [vmem:[%s3 + $0x8e8] sm:$0xff]
    %v719 = vld [vmem:[%s3 + $0x8f0] sm:$0xff]
    %v720 = vld [vmem:[%s3 + $0x8f8] sm:$0xff]
    %v721 = vld [vmem:[%s3 + $0x900] sm:$0xff]
    %v722 = vld [vmem:[%s3 + $0x908] sm:$0xff]
    %v723 = vld [vmem:[%s3 + $0x910] sm:$0xff]
    %v724 = vld [vmem:[%s3 + $0x918] sm:$0xff]
    %v725 = vld [vmem:[%s3 + $0x920] sm:$0xff]
    %v726 = vld [vmem:[%s3 + $0x928] sm:$0xff]
    %v727 = vld [vmem:[%s3 + $0x930] sm:$0xff]
    %v728 = vld [vmem:[%s3 + $0x938] sm:$0xff]
    %v729 = vld [vmem:[%s3 + $0x940] sm:$0xff]
    %v730 = vld [vmem:[%s3 + $0x948] sm:$0xff]
    %v731 = vld [vmem:[%s3 + $0x950] sm:$0xff]
    %v732 = vld [vmem:[%s3 + $0x958] sm:$0xff]
    %v733 = vld [vmem:[%s3 + $0x960] sm:$0xff]
    %v734 = vld [vmem:[%s3 + $0x968] sm:$0xff]
    %v735 = vld [vmem:[%s3 + $0x970] sm:$0xff]
    %v736 = vld [vmem:[%s3 + $0x978] sm:$0xff]
    %v737 = vld [vmem:[%s3 + $0x980] sm:$0xff]
    %v738 = vld [vmem:[%s3 + $0x988] sm:$0xff]
    %v739 = vld [vmem:[%s3 + $0x990] sm:$0xff]
    %v740 = vld [vmem:[%s3 + $0x998] sm:$0xff]
    %v741 = vld [vmem:[%s3 + $0x9a0] sm:$0xff]
    %v742 = vld [vmem:[%s3 + $0x9a8] sm:$0xff]
    %v743 = vld [vmem:[%s3 + $0x9b0] sm:$0xff]
    %v744 = vld [vmem:[%s3 + $0x9b8] sm:$0xff]
    %v745 = vld [vmem:[%s3 + $0x9c0] sm:$0xff]
    %v746 = vld [vmem:[%s3 + $0x9c8] sm:$0xff]
    %v747 = vld [vmem:[%s3 + $0x9d0] sm:$0xff]
    %v748 = vld [vmem:[%s3 + $0x9d8] sm:$0xff]
    %v749 = vld [vmem:[%s3 + $0x9e0] sm:$0xff]
    %v750 = vld [vmem:[%s3 + $0x9e8] sm:$0xff]
    %v751 = vld [vmem:[%s3 + $0x9f0] sm:$0xff]
    %v752 = vld [vmem:[%s3 + $0x9f8] sm:$0xff]
    %v753 = vld [vmem:[%s3 + $0xa00] sm:$0xff]
    %v754 = vld [vmem:[%s3 + $0xa08] sm:$0xff]
    %v755 = vld [vmem:[%s3 + $0xa10] sm:$0xff]
    %v756 = vld [vmem:[%s3 + $0xa18] sm:$0xff]
    %v757 = vld [vmem:[%s3 + $0xa20] sm:$0xff]
    %v758 = vld [vmem:[%s3 + $0xa28] sm:$0xff]
    %v759 = vld [vmem:[%s3 + $0xa30] sm:$0xff]
    %v760 = vld [vmem:[%s3 + $0xa38] sm:$0xff]
    %v761 = vld [vmem:[%s3 + $0xa40] sm:$0xff]
    %v762 = vld [vmem:[%s3 + $0xa48] sm:$0xff]
    %v763 = vld [vmem:[%s3 + $0xa50] sm:$0xff]
    %v764 = vld [vmem:[%s3 + $0xa58] sm:$0xff]
    %v765 = vld [vmem:[%s3 + $0xa60] sm:$0xff]
    %v766 = vld [vmem:[%s3 + $0xa68] sm:$0xff]
    %v767 = vld [vmem:[%s3 + $0xa70] sm:$0xff]
    %v768 = vld [vmem:[%s3 + $0xa78] sm:$0xff]
    %v769 = vld [vmem:[%s3 + $0xa80] sm:$0xff]
    %v770 = vld [vmem:[%s3 + $0xa88] sm:$0xff]
    %v771 = vld [vmem:[%s3 + $0xa90] sm:$0xff]
    %v772 = vld [vmem:[%s3 + $0xa98] sm:$0xff]
    %v773 = vld [vmem:[%s3 + $0xaa0] sm:$0xff]
    %v774 = vld [vmem:[%s3 + $0xaa8] sm:$0xff]
    %v775 = vld [vmem:[%s3 + $0xab0] sm:$0xff]
    %v776 = vld [vmem:[%s3 + $0xab8] sm:$0xff]
    %v777 = vld [vmem:[%s3 + $0xac0] sm:$0xff]
    %v778 = vld [vmem:[%s3 + $0xac8] sm:$0xff]
    %v779 = vld [vmem:[%s3 + $0xad0] sm:$0xff]
    %v780 = vld [vmem:[%s3 + $0xad8] sm:$0xff]
    %v781 = vld [vmem:[%s3 + $0xae0] sm:$0xff]
    %v782 = vld [vmem:[%s3 + $0xae8] sm:$0xff]
    %v783 = vld [vmem:[%s3 + $0xaf0] sm:$0xff]
    %v784 = vld [vmem:[%s3 + $0xaf8] sm:$0xff]
    %v785 = vld [vmem:[%s3 + $0xb00] sm:$0xff]
    %v786 = vld [vmem:[%s3 + $0xb08] sm:$0xff]
    %v787 = vld [vmem:[%s3 + $0xb10] sm:$0xff]
    %v788 = vld [vmem:[%s3 + $0xb18] sm:$0xff]
    %v789 = vld [vmem:[%s3 + $0xb20] sm:$0xff]
    %v790 = vld [vmem:[%s3 + $0xb28] sm:$0xff]
    %v791 = vld [vmem:[%s3 + $0xb30] sm:$0xff]
    %v792 = vld [vmem:[%s3 + $0xb38] sm:$0xff]
    %v793 = vld [vmem:[%s3 + $0xb40] sm:$0xff]
    %v794 = vld [vmem:[%s3 + $0xb48] sm:$0xff]
    %v795 = vld [vmem:[%s3 + $0xb50] sm:$0xff]
    %v796 = vld [vmem:[%s3 + $0xb58] sm:$0xff]
    %v797 = vld [vmem:[%s3 + $0xb60] sm:$0xff]
    %v798 = vld [vmem:[%s3 + $0xb68] sm:$0xff]
    %v799 = vld [vmem:[%s3 + $0xb70] sm:$0xff]
    %v800 = vld [vmem:[%s3 + $0xb78] sm:$0xff]
    %v801 = vld [vmem:[%s3 + $0xb80] sm:$0xff]
    %v802 = vld [vmem:[%s3 + $0xb88] sm:$0xff]
    %v803 = vld [vmem:[%s3 + $0xb90] sm:$0xff]
    %v804 = vld [vmem:[%s3 + $0xb98] sm:$0xff]
    %v805 = vld [vmem:[%s3 + $0xba0] sm:$0xff]
    %v806 = vld [vmem:[%s3 + $0xba8] sm:$0xff]
    %v807 = vld [vmem:[%s3 + $0xbb0] sm:$0xff]
    %v808 = vld [vmem:[%s3 + $0xbb8] sm:$0xff]
    %v809 = vld [vmem:[%s3 + $0xbc0] sm:$0xff]
    %v810 = vld [vmem:[%s3 + $0xbc8] sm:$0xff]
    %v811 = vld [vmem:[%s3 + $0xbd0] sm:$0xff]
    %v812 = vld [vmem:[%s3 + $0xbd8] sm:$0xff]
    %v813 = vld [vmem:[%s3 + $0xbe0] sm:$0xff]
    %v814 = vld [vmem:[%s3 + $0xbe8] sm:$0xff]
    %v815 = vld [vmem:[%s3 + $0xbf0] sm:$0xff]
    %v816 = vld [vmem:[%s3 + $0xbf8] sm:$0xff]
    %v817 = vld [vmem:[%s3 + $0xc00] sm:$0xff]
    %v818 = vld [vmem:[%s3 + $0xc08] sm:$0xff]
    %v819 = vld [vmem:[%s3 + $0xc10] sm:$0xff]
    %v820 = vld [vmem:[%s3 + $0xc18] sm:$0xff]
    %v821 = vld [vmem:[%s3 + $0xc20] sm:$0xff]
    %v822 = vld [vmem:[%s3 + $0xc28] sm:$0xff]
    %v823 = vld [vmem:[%s4] sm:$0xff]
    %v824 = vld [vmem:[%s4 + $0x8] sm:$0xff]
    %v825 = vld [vmem:[%s4 + $0x10] sm:$0xff]
    %v826 = vld [vmem:[%s4 + $0x18] sm:$0xff]
    %v827 = vld [vmem:[%s4 + $0x20] sm:$0xff]
    %v828 = vld [vmem:[%s4 + $0x28] sm:$0xff]
    %v829 = vld [vmem:[%s4 + $0x30] sm:$0xf]
    %v837 = vlaneseq
    %v838 = vshrl.u32 %v837, 7
    %v839 = vsub.s32 0, %v838
    %v840 = vrot.slane %v823, %v839
    %v841 = vlaneseq
    %v842 = vshrl.u32 %v841, 7
    %v843 = vsub.s32 1, %v842
    %v844 = vrot.slane %v823, %v843
    %v845 = vlaneseq
    %v846 = vshrl.u32 %v845, 7
    %v847 = vsub.s32 2, %v846
    %v848 = vrot.slane %v823, %v847
    %v849 = vlaneseq
    %v850 = vshrl.u32 %v849, 7
    %v851 = vsub.s32 3, %v850
    %v852 = vrot.slane %v823, %v851
    %v853 = vlaneseq
    %v854 = vshrl.u32 %v853, 7
    %v855 = vsub.s32 4, %v854
    %v856 = vrot.slane %v823, %v855
    %v857 = vlaneseq
    %v858 = vshrl.u32 %v857, 7
    %v859 = vsub.s32 5, %v858
    %v860 = vrot.slane %v823, %v859
    %v861 = vlaneseq
    %v862 = vshrl.u32 %v861, 7
    %v863 = vsub.s32 6, %v862
    %v864 = vrot.slane %v823, %v863
    %v865 = vlaneseq
    %v866 = vshrl.u32 %v865, 7
    %v867 = vsub.s32 7, %v866
    %v868 = vrot.slane %v823, %v867
    %v869 = vlaneseq
    %v870 = vshrl.u32 %v869, 7
    %v871 = vsub.s32 0, %v870
    %v872 = vrot.slane %v824, %v871
    %v873 = vlaneseq
    %v874 = vshrl.u32 %v873, 7
    %v875 = vsub.s32 1, %v874
    %v876 = vrot.slane %v824, %v875
    %v877 = vlaneseq
    %v878 = vshrl.u32 %v877, 7
    %v879 = vsub.s32 2, %v878
    %v880 = vrot.slane %v824, %v879
    %v881 = vlaneseq
    %v882 = vshrl.u32 %v881, 7
    %v883 = vsub.s32 3, %v882
    %v884 = vrot.slane %v824, %v883
    %v885 = vlaneseq
    %v886 = vshrl.u32 %v885, 7
    %v887 = vsub.s32 4, %v886
    %v888 = vrot.slane %v824, %v887
    %v889 = vlaneseq
    %v890 = vshrl.u32 %v889, 7
    %v891 = vsub.s32 5, %v890
    %v892 = vrot.slane %v824, %v891
    %v893 = vlaneseq
    %v894 = vshrl.u32 %v893, 7
    %v895 = vsub.s32 6, %v894
    %v896 = vrot.slane %v824, %v895
    %v897 = vlaneseq
    %v898 = vshrl.u32 %v897, 7
    %v899 = vsub.s32 7, %v898
    %v900 = vrot.slane %v824, %v899
    %v901 = vlaneseq
    %v902 = vshrl.u32 %v901, 7
    %v903 = vsub.s32 0, %v902
    %v904 = vrot.slane %v825, %v903
    %v905 = vlaneseq
    %v906 = vshrl.u32 %v905, 7
    %v907 = vsub.s32 1, %v906
    %v908 = vrot.slane %v825, %v907
    %v909 = vlaneseq
    %v910 = vshrl.u32 %v909, 7
    %v911 = vsub.s32 2, %v910
    %v912 = vrot.slane %v825, %v911
    %v913 = vlaneseq
    %v914 = vshrl.u32 %v913, 7
    %v915 = vsub.s32 3, %v914
    %v916 = vrot.slane %v825, %v915
    %v917 = vlaneseq
    %v918 = vshrl.u32 %v917, 7
    %v919 = vsub.s32 4, %v918
    %v920 = vrot.slane %v825, %v919
    %v921 = vlaneseq
    %v922 = vshrl.u32 %v921, 7
    %v923 = vsub.s32 5, %v922
    %v924 = vrot.slane %v825, %v923
    %v925 = vlaneseq
    %v926 = vshrl.u32 %v925, 7
    %v927 = vsub.s32 6, %v926
    %v928 = vrot.slane %v825, %v927
    %v929 = vlaneseq
    %v930 = vshrl.u32 %v929, 7
    %v931 = vsub.s32 7, %v930
    %v932 = vrot.slane %v825, %v931
    %v933 = vlaneseq
    %v934 = vshrl.u32 %v933, 7
    %v935 = vsub.s32 0, %v934
    %v936 = vrot.slane %v826, %v935
    %v937 = vlaneseq
    %v938 = vshrl.u32 %v937, 7
    %v939 = vsub.s32 1, %v938
    %v940 = vrot.slane %v826, %v939
    %v941 = vlaneseq
    %v942 = vshrl.u32 %v941, 7
    %v943 = vsub.s32 2, %v942
    %v944 = vrot.slane %v826, %v943
    %v945 = vlaneseq
    %v946 = vshrl.u32 %v945, 7
    %v947 = vsub.s32 3, %v946
    %v948 = vrot.slane %v826, %v947
    %v949 = vlaneseq
    %v950 = vshrl.u32 %v949, 7
    %v951 = vsub.s32 4, %v950
    %v952 = vrot.slane %v826, %v951
    %v953 = vlaneseq
    %v954 = vshrl.u32 %v953, 7
    %v955 = vsub.s32 5, %v954
    %v956 = vrot.slane %v826, %v955
    %v957 = vlaneseq
    %v958 = vshrl.u32 %v957, 7
    %v959 = vsub.s32 6, %v958
    %v960 = vrot.slane %v826, %v959
    %v961 = vlaneseq
    %v962 = vshrl.u32 %v961, 7
    %v963 = vsub.s32 7, %v962
    %v964 = vrot.slane %v826, %v963
    %v965 = vlaneseq
    %v966 = vshrl.u32 %v965, 7
    %v967 = vsub.s32 0, %v966
    %v968 = vrot.slane %v827, %v967
    %v969 = vlaneseq
    %v970 = vshrl.u32 %v969, 7
    %v971 = vsub.s32 1, %v970
    %v972 = vrot.slane %v827, %v971
    %v973 = vlaneseq
    %v974 = vshrl.u32 %v973, 7
    %v975 = vsub.s32 2, %v974
    %v976 = vrot.slane %v827, %v975
    %v977 = vlaneseq
    %v978 = vshrl.u32 %v977, 7
    %v979 = vsub.s32 3, %v978
    %v980 = vrot.slane %v827, %v979
    %v981 = vlaneseq
    %v982 = vshrl.u32 %v981, 7
    %v983 = vsub.s32 4, %v982
    %v984 = vrot.slane %v827, %v983
    %v985 = vlaneseq
    %v986 = vshrl.u32 %v985, 7
    %v987 = vsub.s32 5, %v986
    %v988 = vrot.slane %v827, %v987
    %v989 = vlaneseq
    %v990 = vshrl.u32 %v989, 7
    %v991 = vsub.s32 6, %v990
    %v992 = vrot.slane %v827, %v991
    %v993 = vlaneseq
    %v994 = vshrl.u32 %v993, 7
    %v995 = vsub.s32 7, %v994
    %v996 = vrot.slane %v827, %v995
    %v997 = vlaneseq
    %v998 = vshrl.u32 %v997, 7
    %v999 = vsub.s32 0, %v998
    %v1000 = vrot.slane %v828, %v999
    %v1001 = vlaneseq
    %v1002 = vshrl.u32 %v1001, 7
    %v1003 = vsub.s32 1, %v1002
    %v1004 = vrot.slane %v828, %v1003
    %v1005 = vlaneseq
    %v1006 = vshrl.u32 %v1005, 7
    %v1007 = vsub.s32 2, %v1006
    %v1008 = vrot.slane %v828, %v1007
    %v1009 = vlaneseq
    %v1010 = vshrl.u32 %v1009, 7
    %v1011 = vsub.s32 3, %v1010
    %v1012 = vrot.slane %v828, %v1011
    %v1013 = vlaneseq
    %v1014 = vshrl.u32 %v1013, 7
    %v1015 = vsub.s32 4, %v1014
    %v1016 = vrot.slane %v828, %v1015
    %v1017 = vlaneseq
    %v1018 = vshrl.u32 %v1017, 7
    %v1019 = vsub.s32 5, %v1018
    %v1020 = vrot.slane %v828, %v1019
    %v1021 = vlaneseq
    %v1022 = vshrl.u32 %v1021, 7
    %v1023 = vsub.s32 6, %v1022
    %v1024 = vrot.slane %v828, %v1023
    %v1025 = vlaneseq
    %v1026 = vshrl.u32 %v1025, 7
    %v1027 = vsub.s32 7, %v1026
    %v1028 = vrot.slane %v828, %v1027
    %v1029 = vlaneseq
    %v1030 = vshrl.u32 %v1029, 7
    %v1031 = vsub.s32 0, %v1030
    %v1032 = vrot.slane %v829, %v1031
    %v1033 = vlaneseq
    %v1034 = vshrl.u32 %v1033, 7
    %v1035 = vsub.s32 1, %v1034
    %v1036 = vrot.slane %v829, %v1035
    %v1037 = vlaneseq
    %v1038 = vshrl.u32 %v1037, 7
    %v1039 = vsub.s32 2, %v1038
    %v1040 = vrot.slane %v829, %v1039
    %v1041 = vlaneseq
    %v1042 = vshrl.u32 %v1041, 7
    %v1043 = vsub.s32 3, %v1042
    %v1044 = vrot.slane %v829, %v1043
    %v1487 = vunpack.c.l.b16 %v433
    %v1488 = vunpack.c.h.b16 %v433
    %v1489 = vunpack.c.l.b16 %v434
    %v1490 = vunpack.c.h.b16 %v434
    %v1491 = vunpack.c.l.b16 %v435
    %v1492 = vunpack.c.h.b16 %v435
    %v1493 = vunpack.c.l.b16 %v436
    %v1494 = vunpack.c.h.b16 %v436
    %v1495 = vunpack.c.l.b16 %v437
    %v1496 = vunpack.c.h.b16 %v437
    %v1497 = vunpack.c.l.b16 %v438
    %v1498 = vunpack.c.h.b16 %v438
    %v1499 = vunpack.c.l.b16 %v439
    %v1500 = vunpack.c.h.b16 %v439
    %v1501 = vunpack.c.l.b16 %v440
    %v1502 = vunpack.c.h.b16 %v440
    %v1503 = vunpack.c.l.b16 %v441
    %v1504 = vunpack.c.h.b16 %v441
    %v1505 = vunpack.c.l.b16 %v442
    %v1506 = vunpack.c.h.b16 %v442
    %v1507 = vunpack.c.l.b16 %v443
    %v1508 = vunpack.c.h.b16 %v443
    %v1509 = vunpack.c.l.b16 %v444
    %v1510 = vunpack.c.h.b16 %v444
    %v1511 = vunpack.c.l.b16 %v445
    %v1512 = vunpack.c.h.b16 %v445
    %v1513 = vunpack.c.l.b16 %v446
    %v1514 = vunpack.c.h.b16 %v446
    %v1515 = vunpack.c.l.b16 %v447
    %v1516 = vunpack.c.h.b16 %v447
    %v1517 = vunpack.c.l.b16 %v448
    %v1518 = vunpack.c.h.b16 %v448
    %v1519 = vunpack.c.l.b16 %v449
    %v1520 = vunpack.c.h.b16 %v449
    %v1521 = vunpack.c.l.b16 %v450
    %v1522 = vunpack.c.h.b16 %v450
    %v1523 = vunpack.c.l.b16 %v451
    %v1524 = vunpack.c.h.b16 %v451
    %v1525 = vunpack.c.l.b16 %v452
    %v1526 = vunpack.c.h.b16 %v452
    %v1527 = vunpack.c.l.b16 %v453
    %v1528 = vunpack.c.h.b16 %v453
    %v1529 = vunpack.c.l.b16 %v454
    %v1530 = vunpack.c.h.b16 %v454
    %v1531 = vunpack.c.l.b16 %v455
    %v1532 = vunpack.c.h.b16 %v455
    %v1533 = vunpack.c.l.b16 %v456
    %v1534 = vunpack.c.h.b16 %v456
    %v1535 = vunpack.c.l.b16 %v457
    %v1536 = vunpack.c.h.b16 %v457
    %v1537 = vunpack.c.l.b16 %v458
    %v1538 = vunpack.c.h.b16 %v458
    %v1539 = vunpack.c.l.b16 %v459
    %v1540 = vunpack.c.h.b16 %v459
    %v1541 = vunpack.c.l.b16 %v460
    %v1542 = vunpack.c.h.b16 %v460
    %v1543 = vunpack.c.l.b16 %v461
    %v1544 = vunpack.c.h.b16 %v461
    %v1545 = vunpack.c.l.b16 %v462
    %v1546 = vunpack.c.h.b16 %v462
    %v1547 = vunpack.c.l.b16 %v463
    %v1548 = vunpack.c.h.b16 %v463
    %v1549 = vunpack.c.l.b16 %v464
    %v1550 = vunpack.c.h.b16 %v464
    %v1551 = vunpack.c.l.b16 %v465
    %v1552 = vunpack.c.h.b16 %v465
    %v1553 = vunpack.c.l.b16 %v466
    %v1554 = vunpack.c.h.b16 %v466
    %v1555 = vunpack.c.l.b16 %v467
    %v1556 = vunpack.c.h.b16 %v467
    %v1557 = vunpack.c.l.b16 %v468
    %v1558 = vunpack.c.h.b16 %v468
    %v1559 = vunpack.c.l.b16 %v469
    %v1560 = vunpack.c.h.b16 %v469
    %v1561 = vunpack.c.l.b16 %v470
    %v1562 = vunpack.c.h.b16 %v470
    %v1563 = vunpack.c.l.b16 %v471
    %v1564 = vunpack.c.h.b16 %v471
    %v1565 = vunpack.c.l.b16 %v472
    %v1566 = vunpack.c.h.b16 %v472
    %v1567 = vunpack.c.l.b16 %v473
    %v1568 = vunpack.c.h.b16 %v473
    %v1569 = vunpack.c.l.b16 %v474
    %v1570 = vunpack.c.h.b16 %v474
    %v1571 = vunpack.c.l.b16 %v475
    %v1572 = vunpack.c.h.b16 %v475
    %v1573 = vunpack.c.l.b16 %v476
    %v1574 = vunpack.c.h.b16 %v476
    %v1575 = vunpack.c.l.b16 %v477
    %v1576 = vunpack.c.h.b16 %v477
    %v1577 = vunpack.c.l.b16 %v478
    %v1578 = vunpack.c.h.b16 %v478
    %v1579 = vunpack.c.l.b16 %v479
    %v1580 = vunpack.c.h.b16 %v479
    %v1581 = vunpack.c.l.b16 %v480
    %v1582 = vunpack.c.h.b16 %v480
    %v1583 = vunpack.c.l.b16 %v481
    %v1584 = vunpack.c.h.b16 %v481
    %v1585 = vunpack.c.l.b16 %v482
    %v1586 = vunpack.c.h.b16 %v482
    %v1587 = vunpack.c.l.b16 %v483
    %v1588 = vunpack.c.h.b16 %v483
    %v1589 = vunpack.c.l.b16 %v484
    %v1590 = vunpack.c.h.b16 %v484
    %v1591 = vunpack.c.l.b16 %v485
    %v1592 = vunpack.c.h.b16 %v485
    %v1593 = vunpack.c.l.b16 %v486
    %v1594 = vunpack.c.h.b16 %v486
    %v1595 = vunpack.c.l.b16 %v487
    %v1596 = vunpack.c.h.b16 %v487
    %v1597 = vunpack.c.l.b16 %v488
    %v1598 = vunpack.c.h.b16 %v488
    %v1599 = vunpack.c.l.b16 %v489
    %v1600 = vunpack.c.h.b16 %v489
    %v1601 = vunpack.c.l.b16 %v490
    %v1602 = vunpack.c.h.b16 %v490
    %v1603 = vunpack.c.l.b16 %v491
    %v1604 = vunpack.c.h.b16 %v491
    %v1605 = vunpack.c.l.b16 %v492
    %v1606 = vunpack.c.h.b16 %v492
    %v1607 = vunpack.c.l.b16 %v493
    %v1608 = vunpack.c.h.b16 %v493
    %v1609 = vunpack.c.l.b16 %v494
    %v1610 = vunpack.c.h.b16 %v494
    %v1611 = vunpack.c.l.b16 %v495
    %v1612 = vunpack.c.h.b16 %v495
    %v1613 = vunpack.c.l.b16 %v496
    %v1614 = vunpack.c.h.b16 %v496
    %v1615 = vunpack.c.l.b16 %v497
    %v1616 = vunpack.c.h.b16 %v497
    %v1617 = vunpack.c.l.b16 %v498
    %v1618 = vunpack.c.h.b16 %v498
    %v1619 = vunpack.c.l.b16 %v499
    %v1620 = vunpack.c.h.b16 %v499
    %v1621 = vunpack.c.l.b16 %v500
    %v1622 = vunpack.c.h.b16 %v500
    %v1623 = vunpack.c.l.b16 %v501
    %v1624 = vunpack.c.h.b16 %v501
    %v1625 = vunpack.c.l.b16 %v502
    %v1626 = vunpack.c.h.b16 %v502
    %v1627 = vunpack.c.l.b16 %v503
    %v1628 = vunpack.c.h.b16 %v503
    %v1629 = vunpack.c.l.b16 %v504
    %v1630 = vunpack.c.h.b16 %v504
    %v1631 = vunpack.c.l.b16 %v505
    %v1632 = vunpack.c.h.b16 %v505
    %v1633 = vunpack.c.l.b16 %v506
    %v1634 = vunpack.c.h.b16 %v506
    %v1635 = vunpack.c.l.b16 %v507
    %v1636 = vunpack.c.h.b16 %v507
    %v1637 = vunpack.c.l.b16 %v508
    %v1638 = vunpack.c.h.b16 %v508
    %v1639 = vunpack.c.l.b16 %v509
    %v1640 = vunpack.c.h.b16 %v509
    %v1641 = vunpack.c.l.b16 %v510
    %v1642 = vunpack.c.h.b16 %v510
    %v1643 = vunpack.c.l.b16 %v511
    %v1644 = vunpack.c.h.b16 %v511
    %v1645 = vunpack.c.l.b16 %v512
    %v1646 = vunpack.c.h.b16 %v512
    %v1647 = vunpack.c.l.b16 %v513
    %v1648 = vunpack.c.h.b16 %v513
    %v1649 = vunpack.c.l.b16 %v514
    %v1650 = vunpack.c.h.b16 %v514
    %v1651 = vunpack.c.l.b16 %v515
    %v1652 = vunpack.c.h.b16 %v515
    %v1653 = vunpack.c.l.b16 %v516
    %v1654 = vunpack.c.h.b16 %v516
    %v1655 = vunpack.c.l.b16 %v517
    %v1656 = vunpack.c.h.b16 %v517
    %v1657 = vunpack.c.l.b16 %v518
    %v1658 = vunpack.c.h.b16 %v518
    %v1659 = vunpack.c.l.b16 %v519
    %v1660 = vunpack.c.h.b16 %v519
    %v1661 = vunpack.c.l.b16 %v520
    %v1662 = vunpack.c.h.b16 %v520
    %v1663 = vunpack.c.l.b16 %v521
    %v1664 = vunpack.c.h.b16 %v521
    %v1665 = vunpack.c.l.b16 %v522
    %v1666 = vunpack.c.h.b16 %v522
    %v1667 = vunpack.c.l.b16 %v523
    %v1668 = vunpack.c.h.b16 %v523
    %v1669 = vunpack.c.l.b16 %v524
    %v1670 = vunpack.c.h.b16 %v524
    %v1671 = vunpack.c.l.b16 %v525
    %v1672 = vunpack.c.h.b16 %v525
    %v1673 = vunpack.c.l.b16 %v526
    %v1674 = vunpack.c.h.b16 %v526
    %v1675 = vunpack.c.l.b16 %v527
    %v1676 = vunpack.c.h.b16 %v527
    %v1677 = vunpack.c.l.b16 %v528
    %v1678 = vunpack.c.h.b16 %v528
    %v1679 = vunpack.c.l.b16 %v529
    %v1680 = vunpack.c.h.b16 %v529
    %v1681 = vunpack.c.l.b16 %v530
    %v1682 = vunpack.c.h.b16 %v530
    %v1683 = vunpack.c.l.b16 %v531
    %v1684 = vunpack.c.h.b16 %v531
    %v1685 = vunpack.c.l.b16 %v532
    %v1686 = vunpack.c.h.b16 %v532
    %v1687 = vunpack.c.l.b16 %v533
    %v1688 = vunpack.c.h.b16 %v533
    %v1689 = vunpack.c.l.b16 %v534
    %v1690 = vunpack.c.h.b16 %v534
    %v1691 = vunpack.c.l.b16 %v535
    %v1692 = vunpack.c.h.b16 %v535
    %v1693 = vunpack.c.l.b16 %v536
    %v1694 = vunpack.c.h.b16 %v536
    %v1695 = vunpack.c.l.b16 %v537
    %v1696 = vunpack.c.h.b16 %v537
    %v1697 = vunpack.c.l.b16 %v538
    %v1698 = vunpack.c.h.b16 %v538
    %v1699 = vunpack.c.l.b16 %v539
    %v1700 = vunpack.c.h.b16 %v539
    %v1701 = vunpack.c.l.b16 %v540
    %v1702 = vunpack.c.h.b16 %v540
    %v1703 = vunpack.c.l.b16 %v541
    %v1704 = vunpack.c.h.b16 %v541
    %v1705 = vunpack.c.l.b16 %v542
    %v1706 = vunpack.c.h.b16 %v542
    %v1707 = vunpack.c.l.b16 %v543
    %v1708 = vunpack.c.h.b16 %v543
    %v1709 = vunpack.c.l.b16 %v544
    %v1710 = vunpack.c.h.b16 %v544
    %v1711 = vunpack.c.l.b16 %v545
    %v1712 = vunpack.c.h.b16 %v545
    %v1713 = vunpack.c.l.b16 %v546
    %v1714 = vunpack.c.h.b16 %v546
    %v1715 = vunpack.c.l.b16 %v547
    %v1716 = vunpack.c.h.b16 %v547
    %v1717 = vunpack.c.l.b16 %v548
    %v1718 = vunpack.c.h.b16 %v548
    %v1719 = vunpack.c.l.b16 %v549
    %v1720 = vunpack.c.h.b16 %v549
    %v1721 = vunpack.c.l.b16 %v550
    %v1722 = vunpack.c.h.b16 %v550
    %v1723 = vunpack.c.l.b16 %v551
    %v1724 = vunpack.c.h.b16 %v551
    %v1725 = vunpack.c.l.b16 %v552
    %v1726 = vunpack.c.h.b16 %v552
    %v1727 = vunpack.c.l.b16 %v553
    %v1728 = vunpack.c.h.b16 %v553
    %v1729 = vunpack.c.l.b16 %v554
    %v1730 = vunpack.c.h.b16 %v554
    %v1731 = vunpack.c.l.b16 %v555
    %v1732 = vunpack.c.h.b16 %v555
    %v1733 = vunpack.c.l.b16 %v556
    %v1734 = vunpack.c.h.b16 %v556
    %v1735 = vunpack.c.l.b16 %v557
    %v1736 = vunpack.c.h.b16 %v557
    %v1737 = vunpack.c.l.b16 %v558
    %v1738 = vunpack.c.h.b16 %v558
    %v1739 = vunpack.c.l.b16 %v559
    %v1740 = vunpack.c.h.b16 %v559
    %v1741 = vunpack.c.l.b16 %v560
    %v1742 = vunpack.c.h.b16 %v560
    %v1743 = vunpack.c.l.b16 %v561
    %v1744 = vunpack.c.h.b16 %v561
    %v1745 = vunpack.c.l.b16 %v562
    %v1746 = vunpack.c.h.b16 %v562
    %v1747 = vunpack.c.l.b16 %v563
    %v1748 = vunpack.c.h.b16 %v563
    %v1749 = vunpack.c.l.b16 %v564
    %v1750 = vunpack.c.h.b16 %v564
    %v1751 = vunpack.c.l.b16 %v565
    %v1752 = vunpack.c.h.b16 %v565
    %v1753 = vunpack.c.l.b16 %v566
    %v1754 = vunpack.c.h.b16 %v566
    %v1755 = vunpack.c.l.b16 %v567
    %v1756 = vunpack.c.h.b16 %v567
    %v1757 = vunpack.c.l.b16 %v568
    %v1758 = vunpack.c.h.b16 %v568
    %v1759 = vunpack.c.l.b16 %v569
    %v1760 = vunpack.c.h.b16 %v569
    %v1761 = vunpack.c.l.b16 %v570
    %v1762 = vunpack.c.h.b16 %v570
    %v1763 = vunpack.c.l.b16 %v571
    %v1764 = vunpack.c.h.b16 %v571
    %v1765 = vunpack.c.l.b16 %v572
    %v1766 = vunpack.c.h.b16 %v572
    %v1767 = vunpack.c.l.b16 %v573
    %v1768 = vunpack.c.h.b16 %v573
    %v1769 = vunpack.c.l.b16 %v574
    %v1770 = vunpack.c.h.b16 %v574
    %v1771 = vunpack.c.l.b16 %v575
    %v1772 = vunpack.c.h.b16 %v575
    %v1773 = vunpack.c.l.b16 %v576
    %v1774 = vunpack.c.h.b16 %v576
    %v1775 = vunpack.c.l.b16 %v577
    %v1776 = vunpack.c.h.b16 %v577
    %v1777 = vunpack.c.l.b16 %v578
    %v1778 = vunpack.c.h.b16 %v578
    %v1779 = vunpack.c.l.b16 %v579
    %v1780 = vunpack.c.h.b16 %v579
    %v1781 = vunpack.c.l.b16 %v580
    %v1782 = vunpack.c.h.b16 %v580
    %v1783 = vunpack.c.l.b16 %v581
    %v1784 = vunpack.c.h.b16 %v581
    %v1785 = vunpack.c.l.b16 %v582
    %v1786 = vunpack.c.h.b16 %v582
    %v1787 = vunpack.c.l.b16 %v583
    %v1788 = vunpack.c.h.b16 %v583
    %v1789 = vunpack.c.l.b16 %v584
    %v1790 = vunpack.c.h.b16 %v584
    %v1791 = vunpack.c.l.b16 %v585
    %v1792 = vunpack.c.h.b16 %v585
    %v1793 = vunpack.c.l.b16 %v586
    %v1794 = vunpack.c.h.b16 %v586
    %v1795 = vunpack.c.l.b16 %v587
    %v1796 = vunpack.c.h.b16 %v587
    %v1797 = vunpack.c.l.b16 %v588
    %v1798 = vunpack.c.h.b16 %v588
    %v1799 = vunpack.c.l.b16 %v589
    %v1800 = vunpack.c.h.b16 %v589
    %v1801 = vunpack.c.l.b16 %v590
    %v1802 = vunpack.c.h.b16 %v590
    %v1803 = vunpack.c.l.b16 %v591
    %v1804 = vunpack.c.h.b16 %v591
    %v1805 = vunpack.c.l.b16 %v592
    %v1806 = vunpack.c.h.b16 %v592
    %v1807 = vunpack.c.l.b16 %v593
    %v1808 = vunpack.c.h.b16 %v593
    %v1809 = vunpack.c.l.b16 %v594
    %v1810 = vunpack.c.h.b16 %v594
    %v1811 = vunpack.c.l.b16 %v595
    %v1812 = vunpack.c.h.b16 %v595
    %v1813 = vunpack.c.l.b16 %v596
    %v1814 = vunpack.c.h.b16 %v596
    %v1815 = vunpack.c.l.b16 %v597
    %v1816 = vunpack.c.h.b16 %v597
    %v1817 = vunpack.c.l.b16 %v598
    %v1818 = vunpack.c.h.b16 %v598
    %v1819 = vunpack.c.l.b16 %v599
    %v1820 = vunpack.c.h.b16 %v599
    %v1821 = vunpack.c.l.b16 %v600
    %v1822 = vunpack.c.h.b16 %v600
    %v1823 = vunpack.c.l.b16 %v601
    %v1824 = vunpack.c.h.b16 %v601
    %v1825 = vunpack.c.l.b16 %v602
    %v1826 = vunpack.c.h.b16 %v602
    %v1827 = vunpack.c.l.b16 %v603
    %v1828 = vunpack.c.h.b16 %v603
    %v1829 = vunpack.c.l.b16 %v604
    %v1830 = vunpack.c.h.b16 %v604
    %v1831 = vunpack.c.l.b16 %v605
    %v1832 = vunpack.c.h.b16 %v605
    %v1833 = vunpack.c.l.b16 %v606
    %v1834 = vunpack.c.h.b16 %v606
    %v1835 = vunpack.c.l.b16 %v607
    %v1836 = vunpack.c.h.b16 %v607
    %v1837 = vunpack.c.l.b16 %v608
    %v1838 = vunpack.c.h.b16 %v608
    %v1839 = vunpack.c.l.b16 %v609
    %v1840 = vunpack.c.h.b16 %v609
    %v1841 = vunpack.c.l.b16 %v610
    %v1842 = vunpack.c.h.b16 %v610
    %v1843 = vunpack.c.l.b16 %v611
    %v1844 = vunpack.c.h.b16 %v611
    %v1845 = vunpack.c.l.b16 %v612
    %v1846 = vunpack.c.h.b16 %v612
    %v1847 = vunpack.c.l.b16 %v613
    %v1848 = vunpack.c.h.b16 %v613
    %v1849 = vunpack.c.l.b16 %v614
    %v1850 = vunpack.c.h.b16 %v614
    %v1851 = vunpack.c.l.b16 %v615
    %v1852 = vunpack.c.h.b16 %v615
    %v1853 = vunpack.c.l.b16 %v616
    %v1854 = vunpack.c.h.b16 %v616
    %v1855 = vunpack.c.l.b16 %v617
    %v1856 = vunpack.c.h.b16 %v617
    %v1857 = vunpack.c.l.b16 %v618
    %v1858 = vunpack.c.h.b16 %v618
    %v1859 = vunpack.c.l.b16 %v619
    %v1860 = vunpack.c.h.b16 %v619
    %v1861 = vunpack.c.l.b16 %v620
    %v1862 = vunpack.c.h.b16 %v620
    %v1863 = vunpack.c.l.b16 %v621
    %v1864 = vunpack.c.h.b16 %v621
    %v1865 = vunpack.c.l.b16 %v622
    %v1866 = vunpack.c.h.b16 %v622
    %v1867 = vunpack.c.l.b16 %v623
    %v1868 = vunpack.c.h.b16 %v623
    %v1869 = vunpack.c.l.b16 %v624
    %v1870 = vunpack.c.h.b16 %v624
    %v1871 = vunpack.c.l.b16 %v625
    %v1872 = vunpack.c.h.b16 %v625
    %v1873 = vunpack.c.l.b16 %v626
    %v1874 = vunpack.c.h.b16 %v626
    %v1875 = vunpack.c.l.b16 %v627
    %v1876 = vunpack.c.h.b16 %v627
    %v1877 = vunpack.c.l.b16 %v628
    %v1878 = vunpack.c.h.b16 %v628
    %v1879 = vunpack.c.l.b16 %v629
    %v1880 = vunpack.c.h.b16 %v629
    %v1881 = vunpack.c.l.b16 %v630
    %v1882 = vunpack.c.h.b16 %v630
    %v1883 = vunpack.c.l.b16 %v631
    %v1884 = vunpack.c.h.b16 %v631
    %v1885 = vunpack.c.l.b16 %v632
    %v1886 = vunpack.c.h.b16 %v632
    %v1887 = vunpack.c.l.b16 %v633
    %v1888 = vunpack.c.h.b16 %v633
    %v1889 = vunpack.c.l.b16 %v634
    %v1890 = vunpack.c.h.b16 %v634
    %v1891 = vunpack.c.l.b16 %v635
    %v1892 = vunpack.c.h.b16 %v635
    %v1893 = vunpack.c.l.b16 %v636
    %v1894 = vunpack.c.h.b16 %v636
    %v1895 = vunpack.c.l.b16 %v637
    %v1896 = vunpack.c.h.b16 %v637
    %v1897 = vunpack.c.l.b16 %v638
    %v1898 = vunpack.c.h.b16 %v638
    %v1899 = vunpack.c.l.b16 %v639
    %v1900 = vunpack.c.h.b16 %v639
    %v1901 = vunpack.c.l.b16 %v640
    %v1902 = vunpack.c.h.b16 %v640
    %v1903 = vunpack.c.l.b16 %v641
    %v1904 = vunpack.c.h.b16 %v641
    %v1905 = vunpack.c.l.b16 %v642
    %v1906 = vunpack.c.h.b16 %v642
    %v1907 = vunpack.c.l.b16 %v643
    %v1908 = vunpack.c.h.b16 %v643
    %v1909 = vunpack.c.l.b16 %v644
    %v1910 = vunpack.c.h.b16 %v644
    %v1911 = vunpack.c.l.b16 %v645
    %v1912 = vunpack.c.h.b16 %v645
    %v1913 = vunpack.c.l.b16 %v646
    %v1914 = vunpack.c.h.b16 %v646
    %v1915 = vunpack.c.l.b16 %v647
    %v1916 = vunpack.c.h.b16 %v647
    %v1917 = vunpack.c.l.b16 %v648
    %v1918 = vunpack.c.h.b16 %v648
    %v1919 = vunpack.c.l.b16 %v649
    %v1920 = vunpack.c.h.b16 %v649
    %v1921 = vunpack.c.l.b16 %v650
    %v1922 = vunpack.c.h.b16 %v650
    %v1923 = vunpack.c.l.b16 %v651
    %v1924 = vunpack.c.h.b16 %v651
    %v1925 = vunpack.c.l.b16 %v652
    %v1926 = vunpack.c.h.b16 %v652
    %v1927 = vunpack.c.l.b16 %v653
    %v1928 = vunpack.c.h.b16 %v653
    %v1929 = vunpack.c.l.b16 %v654
    %v1930 = vunpack.c.h.b16 %v654
    %v1931 = vunpack.c.l.b16 %v655
    %v1932 = vunpack.c.h.b16 %v655
    %v1933 = vunpack.c.l.b16 %v656
    %v1934 = vunpack.c.h.b16 %v656
    %v1935 = vunpack.c.l.b16 %v657
    %v1936 = vunpack.c.h.b16 %v657
    %v1937 = vunpack.c.l.b16 %v658
    %v1938 = vunpack.c.h.b16 %v658
    %v1939 = vunpack.c.l.b16 %v659
    %v1940 = vunpack.c.h.b16 %v659
    %v1941 = vunpack.c.l.b16 %v660
    %v1942 = vunpack.c.h.b16 %v660
    %v1943 = vunpack.c.l.b16 %v661
    %v1944 = vunpack.c.h.b16 %v661
    %v1945 = vunpack.c.l.b16 %v662
    %v1946 = vunpack.c.h.b16 %v662
    %v1947 = vunpack.c.l.b16 %v663
    %v1948 = vunpack.c.h.b16 %v663
    %v1949 = vunpack.c.l.b16 %v664
    %v1950 = vunpack.c.h.b16 %v664
    %v1951 = vunpack.c.l.b16 %v665
    %v1952 = vunpack.c.h.b16 %v665
    %v1953 = vunpack.c.l.b16 %v666
    %v1954 = vunpack.c.h.b16 %v666
    %v1955 = vunpack.c.l.b16 %v667
    %v1956 = vunpack.c.h.b16 %v667
    %v1957 = vunpack.c.l.b16 %v668
    %v1958 = vunpack.c.h.b16 %v668
    %v1959 = vunpack.c.l.b16 %v669
    %v1960 = vunpack.c.h.b16 %v669
    %v1961 = vunpack.c.l.b16 %v670
    %v1962 = vunpack.c.h.b16 %v670
    %v1963 = vunpack.c.l.b16 %v671
    %v1964 = vunpack.c.h.b16 %v671
    %v1965 = vunpack.c.l.b16 %v672
    %v1966 = vunpack.c.h.b16 %v672
    %v1967 = vunpack.c.l.b16 %v673
    %v1968 = vunpack.c.h.b16 %v673
    %v1969 = vunpack.c.l.b16 %v674
    %v1970 = vunpack.c.h.b16 %v674
    %v1971 = vunpack.c.l.b16 %v675
    %v1972 = vunpack.c.h.b16 %v675
    %v1973 = vunpack.c.l.b16 %v676
    %v1974 = vunpack.c.h.b16 %v676
    %v1975 = vunpack.c.l.b16 %v677
    %v1976 = vunpack.c.h.b16 %v677
    %v1977 = vunpack.c.l.b16 %v678
    %v1978 = vunpack.c.h.b16 %v678
    %v1979 = vunpack.c.l.b16 %v679
    %v1980 = vunpack.c.h.b16 %v679
    %v1981 = vunpack.c.l.b16 %v680
    %v1982 = vunpack.c.h.b16 %v680
    %v1983 = vunpack.c.l.b16 %v681
    %v1984 = vunpack.c.h.b16 %v681
    %v1985 = vunpack.c.l.b16 %v682
    %v1986 = vunpack.c.h.b16 %v682
    %v1987 = vunpack.c.l.b16 %v683
    %v1988 = vunpack.c.h.b16 %v683
    %v1989 = vunpack.c.l.b16 %v684
    %v1990 = vunpack.c.h.b16 %v684
    %v1991 = vunpack.c.l.b16 %v685
    %v1992 = vunpack.c.h.b16 %v685
    %v1993 = vunpack.c.l.b16 %v686
    %v1994 = vunpack.c.h.b16 %v686
    %v1995 = vunpack.c.l.b16 %v687
    %v1996 = vunpack.c.h.b16 %v687
    %v1997 = vunpack.c.l.b16 %v688
    %v1998 = vunpack.c.h.b16 %v688
    %v1999 = vunpack.c.l.b16 %v689
    %v2000 = vunpack.c.h.b16 %v689
    %v2001 = vunpack.c.l.b16 %v690
    %v2002 = vunpack.c.h.b16 %v690
    %v2003 = vunpack.c.l.b16 %v691
    %v2004 = vunpack.c.h.b16 %v691
    %v2005 = vunpack.c.l.b16 %v692
    %v2006 = vunpack.c.h.b16 %v692
    %v2007 = vunpack.c.l.b16 %v693
    %v2008 = vunpack.c.h.b16 %v693
    %v2009 = vunpack.c.l.b16 %v694
    %v2010 = vunpack.c.h.b16 %v694
    %v2011 = vunpack.c.l.b16 %v695
    %v2012 = vunpack.c.h.b16 %v695
    %v2013 = vunpack.c.l.b16 %v696
    %v2014 = vunpack.c.h.b16 %v696
    %v2015 = vunpack.c.l.b16 %v697
    %v2016 = vunpack.c.h.b16 %v697
    %v2017 = vunpack.c.l.b16 %v698
    %v2018 = vunpack.c.h.b16 %v698
    %v2019 = vunpack.c.l.b16 %v699
    %v2020 = vunpack.c.h.b16 %v699
    %v2021 = vunpack.c.l.b16 %v700
    %v2022 = vunpack.c.h.b16 %v700
    %v2023 = vunpack.c.l.b16 %v701
    %v2024 = vunpack.c.h.b16 %v701
    %v2025 = vunpack.c.l.b16 %v702
    %v2026 = vunpack.c.h.b16 %v702
    %v2027 = vunpack.c.l.b16 %v703
    %v2028 = vunpack.c.h.b16 %v703
    %v2029 = vunpack.c.l.b16 %v704
    %v2030 = vunpack.c.h.b16 %v704
    %v2031 = vunpack.c.l.b16 %v705
    %v2032 = vunpack.c.h.b16 %v705
    %v2033 = vunpack.c.l.b16 %v706
    %v2034 = vunpack.c.h.b16 %v706
    %v2035 = vunpack.c.l.b16 %v707
    %v2036 = vunpack.c.h.b16 %v707
    %v2037 = vunpack.c.l.b16 %v708
    %v2038 = vunpack.c.h.b16 %v708
    %v2039 = vunpack.c.l.b16 %v709
    %v2040 = vunpack.c.h.b16 %v709
    %v2041 = vunpack.c.l.b16 %v710
    %v2042 = vunpack.c.h.b16 %v710
    %v2043 = vunpack.c.l.b16 %v711
    %v2044 = vunpack.c.h.b16 %v711
    %v2045 = vunpack.c.l.b16 %v712
    %v2046 = vunpack.c.h.b16 %v712
    %v2047 = vunpack.c.l.b16 %v713
    %v2048 = vunpack.c.h.b16 %v713
    %v2049 = vunpack.c.l.b16 %v714
    %v2050 = vunpack.c.h.b16 %v714
    %v2051 = vunpack.c.l.b16 %v715
    %v2052 = vunpack.c.h.b16 %v715
    %v2053 = vunpack.c.l.b16 %v716
    %v2054 = vunpack.c.h.b16 %v716
    %v2055 = vunpack.c.l.b16 %v717
    %v2056 = vunpack.c.h.b16 %v717
    %v2057 = vunpack.c.l.b16 %v718
    %v2058 = vunpack.c.h.b16 %v718
    %v2059 = vunpack.c.l.b16 %v719
    %v2060 = vunpack.c.h.b16 %v719
    %v2061 = vunpack.c.l.b16 %v720
    %v2062 = vunpack.c.h.b16 %v720
    %v2063 = vunpack.c.l.b16 %v721
    %v2064 = vunpack.c.h.b16 %v721
    %v2065 = vunpack.c.l.b16 %v722
    %v2066 = vunpack.c.h.b16 %v722
    %v2067 = vunpack.c.l.b16 %v723
    %v2068 = vunpack.c.h.b16 %v723
    %v2069 = vunpack.c.l.b16 %v724
    %v2070 = vunpack.c.h.b16 %v724
    %v2071 = vunpack.c.l.b16 %v725
    %v2072 = vunpack.c.h.b16 %v725
    %v2073 = vunpack.c.l.b16 %v726
    %v2074 = vunpack.c.h.b16 %v726
    %v2075 = vunpack.c.l.b16 %v727
    %v2076 = vunpack.c.h.b16 %v727
    %v2077 = vunpack.c.l.b16 %v728
    %v2078 = vunpack.c.h.b16 %v728
    %v2079 = vunpack.c.l.b16 %v729
    %v2080 = vunpack.c.h.b16 %v729
    %v2081 = vunpack.c.l.b16 %v730
    %v2082 = vunpack.c.h.b16 %v730
    %v2083 = vunpack.c.l.b16 %v731
    %v2084 = vunpack.c.h.b16 %v731
    %v2085 = vunpack.c.l.b16 %v732
    %v2086 = vunpack.c.h.b16 %v732
    %v2087 = vunpack.c.l.b16 %v733
    %v2088 = vunpack.c.h.b16 %v733
    %v2089 = vunpack.c.l.b16 %v734
    %v2090 = vunpack.c.h.b16 %v734
    %v2091 = vunpack.c.l.b16 %v735
    %v2092 = vunpack.c.h.b16 %v735
    %v2093 = vunpack.c.l.b16 %v736
    %v2094 = vunpack.c.h.b16 %v736
    %v2095 = vunpack.c.l.b16 %v737
    %v2096 = vunpack.c.h.b16 %v737
    %v2097 = vunpack.c.l.b16 %v738
    %v2098 = vunpack.c.h.b16 %v738
    %v2099 = vunpack.c.l.b16 %v739
    %v2100 = vunpack.c.h.b16 %v739
    %v2101 = vunpack.c.l.b16 %v740
    %v2102 = vunpack.c.h.b16 %v740
    %v2103 = vunpack.c.l.b16 %v741
    %v2104 = vunpack.c.h.b16 %v741
    %v2105 = vunpack.c.l.b16 %v742
    %v2106 = vunpack.c.h.b16 %v742
    %v2107 = vunpack.c.l.b16 %v743
    %v2108 = vunpack.c.h.b16 %v743
    %v2109 = vunpack.c.l.b16 %v744
    %v2110 = vunpack.c.h.b16 %v744
    %v2111 = vunpack.c.l.b16 %v745
    %v2112 = vunpack.c.h.b16 %v745
    %v2113 = vunpack.c.l.b16 %v746
    %v2114 = vunpack.c.h.b16 %v746
    %v2115 = vunpack.c.l.b16 %v747
    %v2116 = vunpack.c.h.b16 %v747
    %v2117 = vunpack.c.l.b16 %v748
    %v2118 = vunpack.c.h.b16 %v748
    %v2119 = vunpack.c.l.b16 %v749
    %v2120 = vunpack.c.h.b16 %v749
    %v2121 = vunpack.c.l.b16 %v750
    %v2122 = vunpack.c.h.b16 %v750
    %v2123 = vunpack.c.l.b16 %v751
    %v2124 = vunpack.c.h.b16 %v751
    %v2125 = vunpack.c.l.b16 %v752
    %v2126 = vunpack.c.h.b16 %v752
    %v2127 = vunpack.c.l.b16 %v753
    %v2128 = vunpack.c.h.b16 %v753
    %v2129 = vunpack.c.l.b16 %v754
    %v2130 = vunpack.c.h.b16 %v754
    %v2131 = vunpack.c.l.b16 %v755
    %v2132 = vunpack.c.h.b16 %v755
    %v2133 = vunpack.c.l.b16 %v756
    %v2134 = vunpack.c.h.b16 %v756
    %v2135 = vunpack.c.l.b16 %v757
    %v2136 = vunpack.c.h.b16 %v757
    %v2137 = vunpack.c.l.b16 %v758
    %v2138 = vunpack.c.h.b16 %v758
    %v2139 = vunpack.c.l.b16 %v759
    %v2140 = vunpack.c.h.b16 %v759
    %v2141 = vunpack.c.l.b16 %v760
    %v2142 = vunpack.c.h.b16 %v760
    %v2143 = vunpack.c.l.b16 %v761
    %v2144 = vunpack.c.h.b16 %v761
    %v2145 = vunpack.c.l.b16 %v762
    %v2146 = vunpack.c.h.b16 %v762
    %v2147 = vunpack.c.l.b16 %v763
    %v2148 = vunpack.c.h.b16 %v763
    %v2149 = vunpack.c.l.b16 %v764
    %v2150 = vunpack.c.h.b16 %v764
    %v2151 = vunpack.c.l.b16 %v765
    %v2152 = vunpack.c.h.b16 %v765
    %v2153 = vunpack.c.l.b16 %v766
    %v2154 = vunpack.c.h.b16 %v766
    %v2155 = vunpack.c.l.b16 %v767
    %v2156 = vunpack.c.h.b16 %v767
    %v2157 = vunpack.c.l.b16 %v768
    %v2158 = vunpack.c.h.b16 %v768
    %v2159 = vunpack.c.l.b16 %v769
    %v2160 = vunpack.c.h.b16 %v769
    %v2161 = vunpack.c.l.b16 %v770
    %v2162 = vunpack.c.h.b16 %v770
    %v2163 = vunpack.c.l.b16 %v771
    %v2164 = vunpack.c.h.b16 %v771
    %v2165 = vunpack.c.l.b16 %v772
    %v2166 = vunpack.c.h.b16 %v772
    %v2167 = vunpack.c.l.b16 %v773
    %v2168 = vunpack.c.h.b16 %v773
    %v2169 = vunpack.c.l.b16 %v774
    %v2170 = vunpack.c.h.b16 %v774
    %v2171 = vunpack.c.l.b16 %v775
    %v2172 = vunpack.c.h.b16 %v775
    %v2173 = vunpack.c.l.b16 %v776
    %v2174 = vunpack.c.h.b16 %v776
    %v2175 = vunpack.c.l.b16 %v777
    %v2176 = vunpack.c.h.b16 %v777
    %v2177 = vunpack.c.l.b16 %v778
    %v2178 = vunpack.c.h.b16 %v778
    %v2179 = vunpack.c.l.b16 %v779
    %v2180 = vunpack.c.h.b16 %v779
    %v2181 = vunpack.c.l.b16 %v780
    %v2182 = vunpack.c.h.b16 %v780
    %v2183 = vunpack.c.l.b16 %v781
    %v2184 = vunpack.c.h.b16 %v781
    %v2185 = vunpack.c.l.b16 %v782
    %v2186 = vunpack.c.h.b16 %v782
    %v2187 = vunpack.c.l.b16 %v783
    %v2188 = vunpack.c.h.b16 %v783
    %v2189 = vunpack.c.l.b16 %v784
    %v2190 = vunpack.c.h.b16 %v784
    %v2191 = vunpack.c.l.b16 %v785
    %v2192 = vunpack.c.h.b16 %v785
    %v2193 = vunpack.c.l.b16 %v786
    %v2194 = vunpack.c.h.b16 %v786
    %v2195 = vunpack.c.l.b16 %v787
    %v2196 = vunpack.c.h.b16 %v787
    %v2197 = vunpack.c.l.b16 %v788
    %v2198 = vunpack.c.h.b16 %v788
    %v2199 = vunpack.c.l.b16 %v789
    %v2200 = vunpack.c.h.b16 %v789
    %v2201 = vunpack.c.l.b16 %v790
    %v2202 = vunpack.c.h.b16 %v790
    %v2203 = vunpack.c.l.b16 %v791
    %v2204 = vunpack.c.h.b16 %v791
    %v2205 = vunpack.c.l.b16 %v792
    %v2206 = vunpack.c.h.b16 %v792
    %v2207 = vunpack.c.l.b16 %v793
    %v2208 = vunpack.c.h.b16 %v793
    %v2209 = vunpack.c.l.b16 %v794
    %v2210 = vunpack.c.h.b16 %v794
    %v2211 = vunpack.c.l.b16 %v795
    %v2212 = vunpack.c.h.b16 %v795
    %v2213 = vunpack.c.l.b16 %v796
    %v2214 = vunpack.c.h.b16 %v796
    %v2215 = vunpack.c.l.b16 %v797
    %v2216 = vunpack.c.h.b16 %v797
    %v2217 = vunpack.c.l.b16 %v798
    %v2218 = vunpack.c.h.b16 %v798
    %v2219 = vunpack.c.l.b16 %v799
    %v2220 = vunpack.c.h.b16 %v799
    %v2221 = vunpack.c.l.b16 %v800
    %v2222 = vunpack.c.h.b16 %v800
    %v2223 = vunpack.c.l.b16 %v801
    %v2224 = vunpack.c.h.b16 %v801
    %v2225 = vunpack.c.l.b16 %v802
    %v2226 = vunpack.c.h.b16 %v802
    %v2227 = vunpack.c.l.b16 %v803
    %v2228 = vunpack.c.h.b16 %v803
    %v2229 = vunpack.c.l.b16 %v804
    %v2230 = vunpack.c.h.b16 %v804
    %v2231 = vunpack.c.l.b16 %v805
    %v2232 = vunpack.c.h.b16 %v805
    %v2233 = vunpack.c.l.b16 %v806
    %v2234 = vunpack.c.h.b16 %v806
    %v2235 = vunpack.c.l.b16 %v807
    %v2236 = vunpack.c.h.b16 %v807
    %v2237 = vunpack.c.l.b16 %v808
    %v2238 = vunpack.c.h.b16 %v808
    %v2239 = vunpack.c.l.b16 %v809
    %v2240 = vunpack.c.h.b16 %v809
    %v2241 = vunpack.c.l.b16 %v810
    %v2242 = vunpack.c.h.b16 %v810
    %v2243 = vunpack.c.l.b16 %v811
    %v2244 = vunpack.c.h.b16 %v811
    %v2245 = vunpack.c.l.b16 %v812
    %v2246 = vunpack.c.h.b16 %v812
    %v2247 = vunpack.c.l.b16 %v813
    %v2248 = vunpack.c.h.b16 %v813
    %v2249 = vunpack.c.l.b16 %v814
    %v2250 = vunpack.c.h.b16 %v814
    %v2251 = vunpack.c.l.b16 %v815
    %v2252 = vunpack.c.h.b16 %v815
    %v2253 = vunpack.c.l.b16 %v816
    %v2254 = vunpack.c.h.b16 %v816
    %v2255 = vunpack.c.l.b16 %v817
    %v2256 = vunpack.c.h.b16 %v817
    %v2257 = vunpack.c.l.b16 %v818
    %v2258 = vunpack.c.h.b16 %v818
    %v2259 = vunpack.c.l.b16 %v819
    %v2260 = vunpack.c.h.b16 %v819
    %v2261 = vunpack.c.l.b16 %v820
    %v2262 = vunpack.c.h.b16 %v820
    %v2263 = vunpack.c.l.b16 %v821
    %v2264 = vunpack.c.h.b16 %v821
    %v2265 = vunpack.c.l.b16 %v822
    %v2266 = vunpack.c.h.b16 %v822
    %v2267 = vpack.c.b16 %v1539, %v1487
    %v2268 = vpack.c.b16 %v1540, %v1488
    %v2269 = vpack.c.b16 %v1541, %v1489
    %v2270 = vpack.c.b16 %v1542, %v1490
    %v2271 = vpack.c.b16 %v1543, %v1491
    %v2272 = vpack.c.b16 %v1544, %v1492
    %v2273 = vpack.c.b16 %v1545, %v1493
    %v2274 = vpack.c.b16 %v1546, %v1494
    %v2275 = vpack.c.b16 %v1547, %v1495
    %v2276 = vpack.c.b16 %v1548, %v1496
    %v2277 = vpack.c.b16 %v1549, %v1497
    %v2278 = vpack.c.b16 %v1550, %v1498
    %v2279 = vpack.c.b16 %v1551, %v1499
    %v2280 = vpack.c.b16 %v1552, %v1500
    %v2281 = vpack.c.b16 %v1553, %v1501
    %v2282 = vpack.c.b16 %v1554, %v1502
    %v2283 = vpack.c.b16 %v1555, %v1503
    %v2284 = vpack.c.b16 %v1556, %v1504
    %v2285 = vpack.c.b16 %v1557, %v1505
    %v2286 = vpack.c.b16 %v1558, %v1506
    %v2287 = vpack.c.b16 %v1559, %v1507
    %v2288 = vpack.c.b16 %v1560, %v1508
    %v2289 = vpack.c.b16 %v1561, %v1509
    %v2290 = vpack.c.b16 %v1562, %v1510
    %v2291 = vpack.c.b16 %v1563, %v1511
    %v2292 = vpack.c.b16 %v1564, %v1512
    %v2293 = vpack.c.b16 %v1565, %v1513
    %v2294 = vpack.c.b16 %v1566, %v1514
    %v2295 = vpack.c.b16 %v1567, %v1515
    %v2296 = vpack.c.b16 %v1568, %v1516
    %v2297 = vpack.c.b16 %v1569, %v1517
    %v2298 = vpack.c.b16 %v1570, %v1518
    %v2299 = vpack.c.b16 %v1571, %v1519
    %v2300 = vpack.c.b16 %v1572, %v1520
    %v2301 = vpack.c.b16 %v1573, %v1521
    %v2302 = vpack.c.b16 %v1574, %v1522
    %v2303 = vpack.c.b16 %v1575, %v1523
    %v2304 = vpack.c.b16 %v1576, %v1524
    %v2305 = vpack.c.b16 %v1577, %v1525
    %v2306 = vpack.c.b16 %v1578, %v1526
    %v2307 = vpack.c.b16 %v1579, %v1527
    %v2308 = vpack.c.b16 %v1580, %v1528
    %v2309 = vpack.c.b16 %v1581, %v1529
    %v2310 = vpack.c.b16 %v1582, %v1530
    %v2311 = vpack.c.b16 %v1583, %v1531
    %v2312 = vpack.c.b16 %v1584, %v1532
    %v2313 = vpack.c.b16 %v1585, %v1533
    %v2314 = vpack.c.b16 %v1586, %v1534
    %v2315 = vpack.c.b16 %v1587, %v1535
    %v2316 = vpack.c.b16 %v1588, %v1536
    %v2317 = vpack.c.b16 %v1589, %v1537
    %v2318 = vpack.c.b16 %v1590, %v1538
    %v2319 = vpack.c.b16 %v1643, %v1591
    %v2320 = vpack.c.b16 %v1644, %v1592
    %v2321 = vpack.c.b16 %v1645, %v1593
    %v2322 = vpack.c.b16 %v1646, %v1594
    %v2323 = vpack.c.b16 %v1647, %v1595
    %v2324 = vpack.c.b16 %v1648, %v1596
    %v2325 = vpack.c.b16 %v1649, %v1597
    %v2326 = vpack.c.b16 %v1650, %v1598
    %v2327 = vpack.c.b16 %v1651, %v1599
    %v2328 = vpack.c.b16 %v1652, %v1600
    %v2329 = vpack.c.b16 %v1653, %v1601
    %v2330 = vpack.c.b16 %v1654, %v1602
    %v2331 = vpack.c.b16 %v1655, %v1603
    %v2332 = vpack.c.b16 %v1656, %v1604
    %v2333 = vpack.c.b16 %v1657, %v1605
    %v2334 = vpack.c.b16 %v1658, %v1606
    %v2335 = vpack.c.b16 %v1659, %v1607
    %v2336 = vpack.c.b16 %v1660, %v1608
    %v2337 = vpack.c.b16 %v1661, %v1609
    %v2338 = vpack.c.b16 %v1662, %v1610
    %v2339 = vpack.c.b16 %v1663, %v1611
    %v2340 = vpack.c.b16 %v1664, %v1612
    %v2341 = vpack.c.b16 %v1665, %v1613
    %v2342 = vpack.c.b16 %v1666, %v1614
    %v2343 = vpack.c.b16 %v1667, %v1615
    %v2344 = vpack.c.b16 %v1668, %v1616
    %v2345 = vpack.c.b16 %v1669, %v1617
    %v2346 = vpack.c.b16 %v1670, %v1618
    %v2347 = vpack.c.b16 %v1671, %v1619
    %v2348 = vpack.c.b16 %v1672, %v1620
    %v2349 = vpack.c.b16 %v1673, %v1621
    %v2350 = vpack.c.b16 %v1674, %v1622
    %v2351 = vpack.c.b16 %v1675, %v1623
    %v2352 = vpack.c.b16 %v1676, %v1624
    %v2353 = vpack.c.b16 %v1677, %v1625
    %v2354 = vpack.c.b16 %v1678, %v1626
    %v2355 = vpack.c.b16 %v1679, %v1627
    %v2356 = vpack.c.b16 %v1680, %v1628
    %v2357 = vpack.c.b16 %v1681, %v1629
    %v2358 = vpack.c.b16 %v1682, %v1630
    %v2359 = vpack.c.b16 %v1683, %v1631
    %v2360 = vpack.c.b16 %v1684, %v1632
    %v2361 = vpack.c.b16 %v1685, %v1633
    %v2362 = vpack.c.b16 %v1686, %v1634
    %v2363 = vpack.c.b16 %v1687, %v1635
    %v2364 = vpack.c.b16 %v1688, %v1636
    %v2365 = vpack.c.b16 %v1689, %v1637
    %v2366 = vpack.c.b16 %v1690, %v1638
    %v2367 = vpack.c.b16 %v1691, %v1639
    %v2368 = vpack.c.b16 %v1692, %v1640
    %v2369 = vpack.c.b16 %v1693, %v1641
    %v2370 = vpack.c.b16 %v1694, %v1642
    %v2371 = vpack.c.b16 %v1747, %v1695
    %v2372 = vpack.c.b16 %v1748, %v1696
    %v2373 = vpack.c.b16 %v1749, %v1697
    %v2374 = vpack.c.b16 %v1750, %v1698
    %v2375 = vpack.c.b16 %v1751, %v1699
    %v2376 = vpack.c.b16 %v1752, %v1700
    %v2377 = vpack.c.b16 %v1753, %v1701
    %v2378 = vpack.c.b16 %v1754, %v1702
    %v2379 = vpack.c.b16 %v1755, %v1703
    %v2380 = vpack.c.b16 %v1756, %v1704
    %v2381 = vpack.c.b16 %v1757, %v1705
    %v2382 = vpack.c.b16 %v1758, %v1706
    %v2383 = vpack.c.b16 %v1759, %v1707
    %v2384 = vpack.c.b16 %v1760, %v1708
    %v2385 = vpack.c.b16 %v1761, %v1709
    %v2386 = vpack.c.b16 %v1762, %v1710
    %v2387 = vpack.c.b16 %v1763, %v1711
    %v2388 = vpack.c.b16 %v1764, %v1712
    %v2389 = vpack.c.b16 %v1765, %v1713
    %v2390 = vpack.c.b16 %v1766, %v1714
    %v2391 = vpack.c.b16 %v1767, %v1715
    %v2392 = vpack.c.b16 %v1768, %v1716
    %v2393 = vpack.c.b16 %v1769, %v1717
    %v2394 = vpack.c.b16 %v1770, %v1718
    %v2395 = vpack.c.b16 %v1771, %v1719
    %v2396 = vpack.c.b16 %v1772, %v1720
    %v2397 = vpack.c.b16 %v1773, %v1721
    %v2398 = vpack.c.b16 %v1774, %v1722
    %v2399 = vpack.c.b16 %v1775, %v1723
    %v2400 = vpack.c.b16 %v1776, %v1724
    %v2401 = vpack.c.b16 %v1777, %v1725
    %v2402 = vpack.c.b16 %v1778, %v1726
    %v2403 = vpack.c.b16 %v1779, %v1727
    %v2404 = vpack.c.b16 %v1780, %v1728
    %v2405 = vpack.c.b16 %v1781, %v1729
    %v2406 = vpack.c.b16 %v1782, %v1730
    %v2407 = vpack.c.b16 %v1783, %v1731
    %v2408 = vpack.c.b16 %v1784, %v1732
    %v2409 = vpack.c.b16 %v1785, %v1733
    %v2410 = vpack.c.b16 %v1786, %v1734
    %v2411 = vpack.c.b16 %v1787, %v1735
    %v2412 = vpack.c.b16 %v1788, %v1736
    %v2413 = vpack.c.b16 %v1789, %v1737
    %v2414 = vpack.c.b16 %v1790, %v1738
    %v2415 = vpack.c.b16 %v1791, %v1739
    %v2416 = vpack.c.b16 %v1792, %v1740
    %v2417 = vpack.c.b16 %v1793, %v1741
    %v2418 = vpack.c.b16 %v1794, %v1742
    %v2419 = vpack.c.b16 %v1795, %v1743
    %v2420 = vpack.c.b16 %v1796, %v1744
    %v2421 = vpack.c.b16 %v1797, %v1745
    %v2422 = vpack.c.b16 %v1798, %v1746
    %v2423 = vpack.c.b16 %v1851, %v1799
    %v2424 = vpack.c.b16 %v1852, %v1800
    %v2425 = vpack.c.b16 %v1853, %v1801
    %v2426 = vpack.c.b16 %v1854, %v1802
    %v2427 = vpack.c.b16 %v1855, %v1803
    %v2428 = vpack.c.b16 %v1856, %v1804
    %v2429 = vpack.c.b16 %v1857, %v1805
    %v2430 = vpack.c.b16 %v1858, %v1806
    %v2431 = vpack.c.b16 %v1859, %v1807
    %v2432 = vpack.c.b16 %v1860, %v1808
    %v2433 = vpack.c.b16 %v1861, %v1809
    %v2434 = vpack.c.b16 %v1862, %v1810
    %v2435 = vpack.c.b16 %v1863, %v1811
    %v2436 = vpack.c.b16 %v1864, %v1812
    %v2437 = vpack.c.b16 %v1865, %v1813
    %v2438 = vpack.c.b16 %v1866, %v1814
    %v2439 = vpack.c.b16 %v1867, %v1815
    %v2440 = vpack.c.b16 %v1868, %v1816
    %v2441 = vpack.c.b16 %v1869, %v1817
    %v2442 = vpack.c.b16 %v1870, %v1818
    %v2443 = vpack.c.b16 %v1871, %v1819
    %v2444 = vpack.c.b16 %v1872, %v1820
    %v2445 = vpack.c.b16 %v1873, %v1821
    %v2446 = vpack.c.b16 %v1874, %v1822
    %v2447 = vpack.c.b16 %v1875, %v1823
    %v2448 = vpack.c.b16 %v1876, %v1824
    %v2449 = vpack.c.b16 %v1877, %v1825
    %v2450 = vpack.c.b16 %v1878, %v1826
    %v2451 = vpack.c.b16 %v1879, %v1827
    %v2452 = vpack.c.b16 %v1880, %v1828
    %v2453 = vpack.c.b16 %v1881, %v1829
    %v2454 = vpack.c.b16 %v1882, %v1830
    %v2455 = vpack.c.b16 %v1883, %v1831
    %v2456 = vpack.c.b16 %v1884, %v1832
    %v2457 = vpack.c.b16 %v1885, %v1833
    %v2458 = vpack.c.b16 %v1886, %v1834
    %v2459 = vpack.c.b16 %v1887, %v1835
    %v2460 = vpack.c.b16 %v1888, %v1836
    %v2461 = vpack.c.b16 %v1889, %v1837
    %v2462 = vpack.c.b16 %v1890, %v1838
    %v2463 = vpack.c.b16 %v1891, %v1839
    %v2464 = vpack.c.b16 %v1892, %v1840
    %v2465 = vpack.c.b16 %v1893, %v1841
    %v2466 = vpack.c.b16 %v1894, %v1842
    %v2467 = vpack.c.b16 %v1895, %v1843
    %v2468 = vpack.c.b16 %v1896, %v1844
    %v2469 = vpack.c.b16 %v1897, %v1845
    %v2470 = vpack.c.b16 %v1898, %v1846
    %v2471 = vpack.c.b16 %v1899, %v1847
    %v2472 = vpack.c.b16 %v1900, %v1848
    %v2473 = vpack.c.b16 %v1901, %v1849
    %v2474 = vpack.c.b16 %v1902, %v1850
    %v2475 = vpack.c.b16 %v1955, %v1903
    %v2476 = vpack.c.b16 %v1956, %v1904
    %v2477 = vpack.c.b16 %v1957, %v1905
    %v2478 = vpack.c.b16 %v1958, %v1906
    %v2479 = vpack.c.b16 %v1959, %v1907
    %v2480 = vpack.c.b16 %v1960, %v1908
    %v2481 = vpack.c.b16 %v1961, %v1909
    %v2482 = vpack.c.b16 %v1962, %v1910
    %v2483 = vpack.c.b16 %v1963, %v1911
    %v2484 = vpack.c.b16 %v1964, %v1912
    %v2485 = vpack.c.b16 %v1965, %v1913
    %v2486 = vpack.c.b16 %v1966, %v1914
    %v2487 = vpack.c.b16 %v1967, %v1915
    %v2488 = vpack.c.b16 %v1968, %v1916
    %v2489 = vpack.c.b16 %v1969, %v1917
    %v2490 = vpack.c.b16 %v1970, %v1918
    %v2491 = vpack.c.b16 %v1971, %v1919
    %v2492 = vpack.c.b16 %v1972, %v1920
    %v2493 = vpack.c.b16 %v1973, %v1921
    %v2494 = vpack.c.b16 %v1974, %v1922
    %v2495 = vpack.c.b16 %v1975, %v1923
    %v2496 = vpack.c.b16 %v1976, %v1924
    %v2497 = vpack.c.b16 %v1977, %v1925
    %v2498 = vpack.c.b16 %v1978, %v1926
    %v2499 = vpack.c.b16 %v1979, %v1927
    %v2500 = vpack.c.b16 %v1980, %v1928
    %v2501 = vpack.c.b16 %v1981, %v1929
    %v2502 = vpack.c.b16 %v1982, %v1930
    %v2503 = vpack.c.b16 %v1983, %v1931
    %v2504 = vpack.c.b16 %v1984, %v1932
    %v2505 = vpack.c.b16 %v1985, %v1933
    %v2506 = vpack.c.b16 %v1986, %v1934
    %v2507 = vpack.c.b16 %v1987, %v1935
    %v2508 = vpack.c.b16 %v1988, %v1936
    %v2509 = vpack.c.b16 %v1989, %v1937
    %v2510 = vpack.c.b16 %v1990, %v1938
    %v2511 = vpack.c.b16 %v1991, %v1939
    %v2512 = vpack.c.b16 %v1992, %v1940
    %v2513 = vpack.c.b16 %v1993, %v1941
    %v2514 = vpack.c.b16 %v1994, %v1942
    %v2515 = vpack.c.b16 %v1995, %v1943
    %v2516 = vpack.c.b16 %v1996, %v1944
    %v2517 = vpack.c.b16 %v1997, %v1945
    %v2518 = vpack.c.b16 %v1998, %v1946
    %v2519 = vpack.c.b16 %v1999, %v1947
    %v2520 = vpack.c.b16 %v2000, %v1948
    %v2521 = vpack.c.b16 %v2001, %v1949
    %v2522 = vpack.c.b16 %v2002, %v1950
    %v2523 = vpack.c.b16 %v2003, %v1951
    %v2524 = vpack.c.b16 %v2004, %v1952
    %v2525 = vpack.c.b16 %v2005, %v1953
    %v2526 = vpack.c.b16 %v2006, %v1954
    %v2527 = vpack.c.b16 %v2059, %v2007
    %v2528 = vpack.c.b16 %v2060, %v2008
    %v2529 = vpack.c.b16 %v2061, %v2009
    %v2530 = vpack.c.b16 %v2062, %v2010
    %v2531 = vpack.c.b16 %v2063, %v2011
    %v2532 = vpack.c.b16 %v2064, %v2012
    %v2533 = vpack.c.b16 %v2065, %v2013
    %v2534 = vpack.c.b16 %v2066, %v2014
    %v2535 = vpack.c.b16 %v2067, %v2015
    %v2536 = vpack.c.b16 %v2068, %v2016
    %v2537 = vpack.c.b16 %v2069, %v2017
    %v2538 = vpack.c.b16 %v2070, %v2018
    %v2539 = vpack.c.b16 %v2071, %v2019
    %v2540 = vpack.c.b16 %v2072, %v2020
    %v2541 = vpack.c.b16 %v2073, %v2021
    %v2542 = vpack.c.b16 %v2074, %v2022
    %v2543 = vpack.c.b16 %v2075, %v2023
    %v2544 = vpack.c.b16 %v2076, %v2024
    %v2545 = vpack.c.b16 %v2077, %v2025
    %v2546 = vpack.c.b16 %v2078, %v2026
    %v2547 = vpack.c.b16 %v2079, %v2027
    %v2548 = vpack.c.b16 %v2080, %v2028
    %v2549 = vpack.c.b16 %v2081, %v2029
    %v2550 = vpack.c.b16 %v2082, %v2030
    %v2551 = vpack.c.b16 %v2083, %v2031
    %v2552 = vpack.c.b16 %v2084, %v2032
    %v2553 = vpack.c.b16 %v2085, %v2033
    %v2554 = vpack.c.b16 %v2086, %v2034
    %v2555 = vpack.c.b16 %v2087, %v2035
    %v2556 = vpack.c.b16 %v2088, %v2036
    %v2557 = vpack.c.b16 %v2089, %v2037
    %v2558 = vpack.c.b16 %v2090, %v2038
    %v2559 = vpack.c.b16 %v2091, %v2039
    %v2560 = vpack.c.b16 %v2092, %v2040
    %v2561 = vpack.c.b16 %v2093, %v2041
    %v2562 = vpack.c.b16 %v2094, %v2042
    %v2563 = vpack.c.b16 %v2095, %v2043
    %v2564 = vpack.c.b16 %v2096, %v2044
    %v2565 = vpack.c.b16 %v2097, %v2045
    %v2566 = vpack.c.b16 %v2098, %v2046
    %v2567 = vpack.c.b16 %v2099, %v2047
    %v2568 = vpack.c.b16 %v2100, %v2048
    %v2569 = vpack.c.b16 %v2101, %v2049
    %v2570 = vpack.c.b16 %v2102, %v2050
    %v2571 = vpack.c.b16 %v2103, %v2051
    %v2572 = vpack.c.b16 %v2104, %v2052
    %v2573 = vpack.c.b16 %v2105, %v2053
    %v2574 = vpack.c.b16 %v2106, %v2054
    %v2575 = vpack.c.b16 %v2107, %v2055
    %v2576 = vpack.c.b16 %v2108, %v2056
    %v2577 = vpack.c.b16 %v2109, %v2057
    %v2578 = vpack.c.b16 %v2110, %v2058
    %v2579 = vpack.c.b16 %v2163, %v2111
    %v2580 = vpack.c.b16 %v2164, %v2112
    %v2581 = vpack.c.b16 %v2165, %v2113
    %v2582 = vpack.c.b16 %v2166, %v2114
    %v2583 = vpack.c.b16 %v2167, %v2115
    %v2584 = vpack.c.b16 %v2168, %v2116
    %v2585 = vpack.c.b16 %v2169, %v2117
    %v2586 = vpack.c.b16 %v2170, %v2118
    %v2587 = vpack.c.b16 %v2171, %v2119
    %v2588 = vpack.c.b16 %v2172, %v2120
    %v2589 = vpack.c.b16 %v2173, %v2121
    %v2590 = vpack.c.b16 %v2174, %v2122
    %v2591 = vpack.c.b16 %v2175, %v2123
    %v2592 = vpack.c.b16 %v2176, %v2124
    %v2593 = vpack.c.b16 %v2177, %v2125
    %v2594 = vpack.c.b16 %v2178, %v2126
    %v2595 = vpack.c.b16 %v2179, %v2127
    %v2596 = vpack.c.b16 %v2180, %v2128
    %v2597 = vpack.c.b16 %v2181, %v2129
    %v2598 = vpack.c.b16 %v2182, %v2130
    %v2599 = vpack.c.b16 %v2183, %v2131
    %v2600 = vpack.c.b16 %v2184, %v2132
    %v2601 = vpack.c.b16 %v2185, %v2133
    %v2602 = vpack.c.b16 %v2186, %v2134
    %v2603 = vpack.c.b16 %v2187, %v2135
    %v2604 = vpack.c.b16 %v2188, %v2136
    %v2605 = vpack.c.b16 %v2189, %v2137
    %v2606 = vpack.c.b16 %v2190, %v2138
    %v2607 = vpack.c.b16 %v2191, %v2139
    %v2608 = vpack.c.b16 %v2192, %v2140
    %v2609 = vpack.c.b16 %v2193, %v2141
    %v2610 = vpack.c.b16 %v2194, %v2142
    %v2611 = vpack.c.b16 %v2195, %v2143
    %v2612 = vpack.c.b16 %v2196, %v2144
    %v2613 = vpack.c.b16 %v2197, %v2145
    %v2614 = vpack.c.b16 %v2198, %v2146
    %v2615 = vpack.c.b16 %v2199, %v2147
    %v2616 = vpack.c.b16 %v2200, %v2148
    %v2617 = vpack.c.b16 %v2201, %v2149
    %v2618 = vpack.c.b16 %v2202, %v2150
    %v2619 = vpack.c.b16 %v2203, %v2151
    %v2620 = vpack.c.b16 %v2204, %v2152
    %v2621 = vpack.c.b16 %v2205, %v2153
    %v2622 = vpack.c.b16 %v2206, %v2154
    %v2623 = vpack.c.b16 %v2207, %v2155
    %v2624 = vpack.c.b16 %v2208, %v2156
    %v2625 = vpack.c.b16 %v2209, %v2157
    %v2626 = vpack.c.b16 %v2210, %v2158
    %v2627 = vpack.c.b16 %v2211, %v2159
    %v2628 = vpack.c.b16 %v2212, %v2160
    %v2629 = vpack.c.b16 %v2213, %v2161
    %v2630 = vpack.c.b16 %v2214, %v2162
    %v2631 = vpack.c.b16 %v2215, %v2215
    %v2632 = vpack.c.b16 %v2216, %v2216
    %v2633 = vpack.c.b16 %v2217, %v2217
    %v2634 = vpack.c.b16 %v2218, %v2218
    %v2635 = vpack.c.b16 %v2219, %v2219
    %v2636 = vpack.c.b16 %v2220, %v2220
    %v2637 = vpack.c.b16 %v2221, %v2221
    %v2638 = vpack.c.b16 %v2222, %v2222
    %v2639 = vpack.c.b16 %v2223, %v2223
    %v2640 = vpack.c.b16 %v2224, %v2224
    %v2641 = vpack.c.b16 %v2225, %v2225
    %v2642 = vpack.c.b16 %v2226, %v2226
    %v2643 = vpack.c.b16 %v2227, %v2227
    %v2644 = vpack.c.b16 %v2228, %v2228
    %v2645 = vpack.c.b16 %v2229, %v2229
    %v2646 = vpack.c.b16 %v2230, %v2230
    %v2647 = vpack.c.b16 %v2231, %v2231
    %v2648 = vpack.c.b16 %v2232, %v2232
    %v2649 = vpack.c.b16 %v2233, %v2233
    %v2650 = vpack.c.b16 %v2234, %v2234
    %v2651 = vpack.c.b16 %v2235, %v2235
    %v2652 = vpack.c.b16 %v2236, %v2236
    %v2653 = vpack.c.b16 %v2237, %v2237
    %v2654 = vpack.c.b16 %v2238, %v2238
    %v2655 = vpack.c.b16 %v2239, %v2239
    %v2656 = vpack.c.b16 %v2240, %v2240
    %v2657 = vpack.c.b16 %v2241, %v2241
    %v2658 = vpack.c.b16 %v2242, %v2242
    %v2659 = vpack.c.b16 %v2243, %v2243
    %v2660 = vpack.c.b16 %v2244, %v2244
    %v2661 = vpack.c.b16 %v2245, %v2245
    %v2662 = vpack.c.b16 %v2246, %v2246
    %v2663 = vpack.c.b16 %v2247, %v2247
    %v2664 = vpack.c.b16 %v2248, %v2248
    %v2665 = vpack.c.b16 %v2249, %v2249
    %v2666 = vpack.c.b16 %v2250, %v2250
    %v2667 = vpack.c.b16 %v2251, %v2251
    %v2668 = vpack.c.b16 %v2252, %v2252
    %v2669 = vpack.c.b16 %v2253, %v2253
    %v2670 = vpack.c.b16 %v2254, %v2254
    %v2671 = vpack.c.b16 %v2255, %v2255
    %v2672 = vpack.c.b16 %v2256, %v2256
    %v2673 = vpack.c.b16 %v2257, %v2257
    %v2674 = vpack.c.b16 %v2258, %v2258
    %v2675 = vpack.c.b16 %v2259, %v2259
    %v2676 = vpack.c.b16 %v2260, %v2260
    %v2677 = vpack.c.b16 %v2261, %v2261
    %v2678 = vpack.c.b16 %v2262, %v2262
    %v2679 = vpack.c.b16 %v2263, %v2263
    %v2680 = vpack.c.b16 %v2264, %v2264
    %v2681 = vpack.c.b16 %v2265, %v2265
    %v2682 = vpack.c.b16 %v2266, %v2266
    %vm3047 = vcmask 982016
    %v3049 = vsel %vm3047, %v431, 0
    %v3052 = vsel %vm3047, %v432, 0
    %vm3054 = vcmask 1043456
    %v3056 = vsel %vm3054, %v2631, 0
    %v3059 = vsel %vm3054, %v2632, 0
    %v3062 = vsel %vm3054, %v2633, 0
    %v3065 = vsel %vm3054, %v2634, 0
    %v3068 = vsel %vm3054, %v2635, 0
    %v3071 = vsel %vm3054, %v2636, 0
    %v3074 = vsel %vm3054, %v2637, 0
    %v3077 = vsel %vm3054, %v2638, 0
    %v3080 = vsel %vm3054, %v2639, 0
    %v3083 = vsel %vm3054, %v2640, 0
    %v3086 = vsel %vm3054, %v2641, 0
    %v3089 = vsel %vm3054, %v2642, 0
    %v3092 = vsel %vm3054, %v2643, 0
    %v3095 = vsel %vm3054, %v2644, 0
    %v3098 = vsel %vm3054, %v2645, 0
    %v3101 = vsel %vm3054, %v2646, 0
    %v3104 = vsel %vm3054, %v2647, 0
    %v3107 = vsel %vm3054, %v2648, 0
    %v3110 = vsel %vm3054, %v2649, 0
    %v3113 = vsel %vm3054, %v2650, 0
    %v3116 = vsel %vm3054, %v2651, 0
    %v3119 = vsel %vm3054, %v2652, 0
    %v3122 = vsel %vm3054, %v2653, 0
    %v3125 = vsel %vm3054, %v2654, 0
    %v3128 = vsel %vm3054, %v2655, 0
    %v3131 = vsel %vm3054, %v2656, 0
    %v3134 = vsel %vm3054, %v2657, 0
    %v3137 = vsel %vm3054, %v2658, 0
    %v3140 = vsel %vm3054, %v2659, 0
    %v3143 = vsel %vm3054, %v2660, 0
    %v3146 = vsel %vm3054, %v2661, 0
    %v3149 = vsel %vm3054, %v2662, 0
    %v3152 = vsel %vm3054, %v2663, 0
    %v3155 = vsel %vm3054, %v2664, 0
    %v3158 = vsel %vm3054, %v2665, 0
    %v3161 = vsel %vm3054, %v2666, 0
    %v3164 = vsel %vm3054, %v2667, 0
    %v3167 = vsel %vm3054, %v2668, 0
    %v3170 = vsel %vm3054, %v2669, 0
    %v3173 = vsel %vm3054, %v2670, 0
    %v3176 = vsel %vm3054, %v2671, 0
    %v3179 = vsel %vm3054, %v2672, 0
    %v3182 = vsel %vm3054, %v2673, 0
    %v3185 = vsel %vm3054, %v2674, 0
    %v3188 = vsel %vm3054, %v2675, 0
    %v3191 = vsel %vm3054, %v2676, 0
    %v3194 = vsel %vm3054, %v2677, 0
    %v3197 = vsel %vm3054, %v2678, 0
    %v3200 = vsel %vm3054, %v2679, 0
    %v3203 = vsel %vm3054, %v2680, 0
    %v3206 = vsel %vm3054, %v2681, 0
    %v3209 = vsel %vm3054, %v2682, 0
    %3211 = vmatprep.subr.bf16.mxu0 %v2268
    %3212 = vmatpush1.bf16.msra.mxu0 %v2267
    %3213 = vmatprep.subr.bf16.mxu0 %v2320
    %3214 = vmatpush1.bf16.msra.mxu0 %v2319
    %3215 = vmatprep.subr.bf16.mxu0 %v2372
    %3216 = vmatpush1.bf16.msra.mxu0 %v2371
    %3217 = vmatprep.subr.bf16.mxu0 %v2424
    %3218 = vmatpush1.bf16.msra.mxu0 %v2423
    %3219 = vmatprep.subr.bf16.mxu0 %v2476
    %3220 = vmatpush1.bf16.msra.mxu0 %v2475
    %3221 = vmatprep.subr.bf16.mxu0 %v2528
    %3222 = vmatpush1.bf16.msra.mxu0 %v2527
    %3223 = vmatprep.subr.bf16.mxu0 %v2580
    %3224 = vmatpush1.bf16.msra.mxu0 %v2579
    %3225 = vmatprep.subr.bf16.mxu0 %v3059
    %3226 = vmatpush1.bf16.msra.mxu0 %v3056
    %3227 = vmatprep.subr.bf16.mxu0 0
    %3228 = vmatpush1.bf16.msra.mxu0 0
    %3229 = vmatprep.subr.bf16.mxu0 0
    %3230 = vmatpush1.bf16.msra.mxu0 0
    %3231 = vmatprep.subr.bf16.mxu0 0
    %3232 = vmatpush1.bf16.msra.mxu0 0
    %3233 = vmatprep.subr.bf16.mxu0 0
    %3234 = vmatpush1.bf16.msra.mxu0 0
    %3235 = vmatprep.subr.bf16.mxu0 0
    %3236 = vmatpush1.bf16.msra.mxu0 0
    %3237 = vmatprep.subr.bf16.mxu0 0
    %3238 = vmatpush1.bf16.msra.mxu0 0
    %3239 = vmatprep.subr.bf16.mxu0 0
    %3240 = vmatpush1.bf16.msra.mxu0 0
    %3241 = vmatprep.subr.bf16.mxu0 0
    %3242 = vmatpush1.bf16.msra.mxu0 0
    %3243 = vmatprep.mubr.bf16.mxu0 0
    %3244 = vmatmul.mubr.bf16.gmra.mrb[0].mxu0 %v3049
    %v3245 = vpop.f32.mrb[0].mxu0
    %v3246 = vadd.f32 %v840, %v3245
    %v3247 = vpop.f32.mrb[0].mxu0
    %v3248 = vadd.f32 %v844, %v3247
    %v3249 = vpop.f32.mrb[0].mxu0
    %v3250 = vadd.f32 %v840, %v3249
    %v3251 = vpop.f32.mrb[0].mxu0
    %v3252 = vadd.f32 %v844, %v3251
    %3253 = vmatprep.mubr.bf16.mxu0 0
    %3254 = vmatmul.mubr.bf16.gmra.mrb[0].mxu0 %v3052
    %v3255 = vpop.f32.mrb[0].mxu0
    %v3256 = vadd.f32 %v840, %v3255
    %v3257 = vpop.f32.mrb[0].mxu0
    %v3258 = vadd.f32 %v844, %v3257
    %v3259 = vpop.f32.mrb[0].mxu0
    %v3260 = vadd.f32 %v840, %v3259
    %v3261 = vpop.f32.mrb[0].mxu0
    %v3262 = vadd.f32 %v844, %v3261
    %3263 = vdwg.mxu0
    %3264 = vmatprep.subr.bf16.mxu0 %v2270
    %3265 = vmatpush1.bf16.msra.mxu0 %v2269
    %3266 = vmatprep.subr.bf16.mxu0 %v2322
    %3267 = vmatpush1.bf16.msra.mxu0 %v2321
    %3268 = vmatprep.subr.bf16.mxu0 %v2374
    %3269 = vmatpush1.bf16.msra.mxu0 %v2373
    %3270 = vmatprep.subr.bf16.mxu0 %v2426
    %3271 = vmatpush1.bf16.msra.mxu0 %v2425
    %3272 = vmatprep.subr.bf16.mxu0 %v2478
    %3273 = vmatpush1.bf16.msra.mxu0 %v2477
    %3274 = vmatprep.subr.bf16.mxu0 %v2530
    %3275 = vmatpush1.bf16.msra.mxu0 %v2529
    %3276 = vmatprep.subr.bf16.mxu0 %v2582
    %3277 = vmatpush1.bf16.msra.mxu0 %v2581
    %3278 = vmatprep.subr.bf16.mxu0 %v3065
    %3279 = vmatpush1.bf16.msra.mxu0 %v3062
    %3280 = vmatprep.subr.bf16.mxu0 0
    %3281 = vmatpush1.bf16.msra.mxu0 0
    %3282 = vmatprep.subr.bf16.mxu0 0
    %3283 = vmatpush1.bf16.msra.mxu0 0
    %3284 = vmatprep.subr.bf16.mxu0 0
    %3285 = vmatpush1.bf16.msra.mxu0 0
    %3286 = vmatprep.subr.bf16.mxu0 0
    %3287 = vmatpush1.bf16.msra.mxu0 0
    %3288 = vmatprep.subr.bf16.mxu0 0
    %3289 = vmatpush1.bf16.msra.mxu0 0
    %3290 = vmatprep.subr.bf16.mxu0 0
    %3291 = vmatpush1.bf16.msra.mxu0 0
    %3292 = vmatprep.subr.bf16.mxu0 0
    %3293 = vmatpush1.bf16.msra.mxu0 0
    %3294 = vmatprep.subr.bf16.mxu0 0
    %3295 = vmatpush1.bf16.msra.mxu0 0
    %3296 = vmatprep.mubr.bf16.mxu0 0
    %3297 = vmatmul.mubr.bf16.gmra.mrb[0].mxu0 %v3049
    %v3298 = vpop.f32.mrb[0].mxu0
    %v3299 = vadd.f32 %v848, %v3298
    %v3300 = vpop.f32.mrb[0].mxu0
    %v3301 = vadd.f32 %v852, %v3300
    %v3302 = vpop.f32.mrb[0].mxu0
    %v3303 = vadd.f32 %v848, %v3302
    %v3304 = vpop.f32.mrb[0].mxu0
    %v3305 = vadd.f32 %v852, %v3304
    %3306 = vmatprep.mubr.bf16.mxu0 0
    %3307 = vmatmul.mubr.bf16.gmra.mrb[0].mxu0 %v3052
    %v3308 = vpop.f32.mrb[0].mxu0
    %v3309 = vadd.f32 %v848, %v3308
    %v3310 = vpop.f32.mrb[0].mxu0
    %v3311 = vadd.f32 %v852, %v3310
    %v3312 = vpop.f32.mrb[0].mxu0
    %v3313 = vadd.f32 %v848, %v3312
    %v3314 = vpop.f32.mrb[0].mxu0
    %v3315 = vadd.f32 %v852, %v3314
    %3316 = vdwg.mxu0
    %3317 = vmatprep.subr.bf16.mxu0 %v2272
    %3318 = vmatpush1.bf16.msra.mxu0 %v2271
    %3319 = vmatprep.subr.bf16.mxu0 %v2324
    %3320 = vmatpush1.bf16.msra.mxu0 %v2323
    %3321 = vmatprep.subr.bf16.mxu0 %v2376
    %3322 = vmatpush1.bf16.msra.mxu0 %v2375
    %3323 = vmatprep.subr.bf16.mxu0 %v2428
    %3324 = vmatpush1.bf16.msra.mxu0 %v2427
    %3325 = vmatprep.subr.bf16.mxu0 %v2480
    %3326 = vmatpush1.bf16.msra.mxu0 %v2479
    %3327 = vmatprep.subr.bf16.mxu0 %v2532
    %3328 = vmatpush1.bf16.msra.mxu0 %v2531
    %3329 = vmatprep.subr.bf16.mxu0 %v2584
    %3330 = vmatpush1.bf16.msra.mxu0 %v2583
    %3331 = vmatprep.subr.bf16.mxu0 %v3071
    %3332 = vmatpush1.bf16.msra.mxu0 %v3068
    %3333 = vmatprep.subr.bf16.mxu0 0
    %3334 = vmatpush1.bf16.msra.mxu0 0
    %3335 = vmatprep.subr.bf16.mxu0 0
    %3336 = vmatpush1.bf16.msra.mxu0 0
    %3337 = vmatprep.subr.bf16.mxu0 0
    %3338 = vmatpush1.bf16.msra.mxu0 0
    %3339 = vmatprep.subr.bf16.mxu0 0
    %3340 = vmatpush1.bf16.msra.mxu0 0
    %3341 = vmatprep.subr.bf16.mxu0 0
    %3342 = vmatpush1.bf16.msra.mxu0 0
    %3343 = vmatprep.subr.bf16.mxu0 0
    %3344 = vmatpush1.bf16.msra.mxu0 0
    %3345 = vmatprep.subr.bf16.mxu0 0
    %3346 = vmatpush1.bf16.msra.mxu0 0
    %3347 = vmatprep.subr.bf16.mxu0 0
    %3348 = vmatpush1.bf16.msra.mxu0 0
    %3349 = vmatprep.mubr.bf16.mxu0 0
    %3350 = vmatmul.mubr.bf16.gmra.mrb[0].mxu0 %v3049
    %v3351 = vpop.f32.mrb[0].mxu0
    %v3352 = vadd.f32 %v856, %v3351
    %v3353 = vpop.f32.mrb[0].mxu0
    %v3354 = vadd.f32 %v860, %v3353
    %v3355 = vpop.f32.mrb[0].mxu0
    %v3356 = vadd.f32 %v856, %v3355
    %v3357 = vpop.f32.mrb[0].mxu0
    %v3358 = vadd.f32 %v860, %v3357
    %3359 = vmatprep.mubr.bf16.mxu0 0
    %3360 = vmatmul.mubr.bf16.gmra.mrb[0].mxu0 %v3052
    %v3361 = vpop.f32.mrb[0].mxu0
    %v3362 = vadd.f32 %v856, %v3361
    %v3363 = vpop.f32.mrb[0].mxu0
    %v3364 = vadd.f32 %v860, %v3363
    %v3365 = vpop.f32.mrb[0].mxu0
    %v3366 = vadd.f32 %v856, %v3365
    %v3367 = vpop.f32.mrb[0].mxu0
    %v3368 = vadd.f32 %v860, %v3367
    %3369 = vdwg.mxu0
    %3370 = vmatprep.subr.bf16.mxu0 %v2274
    %3371 = vmatpush1.bf16.msra.mxu0 %v2273
    %3372 = vmatprep.subr.bf16.mxu0 %v2326
    %3373 = vmatpush1.bf16.msra.mxu0 %v2325
    %3374 = vmatprep.subr.bf16.mxu0 %v2378
    %3375 = vmatpush1.bf16.msra.mxu0 %v2377
    %3376 = vmatprep.subr.bf16.mxu0 %v2430
    %3377 = vmatpush1.bf16.msra.mxu0 %v2429
    %3378 = vmatprep.subr.bf16.mxu0 %v2482
    %3379 = vmatpush1.bf16.msra.mxu0 %v2481
    %3380 = vmatprep.subr.bf16.mxu0 %v2534
    %3381 = vmatpush1.bf16.msra.mxu0 %v2533
    %3382 = vmatprep.subr.bf16.mxu0 %v2586
    %3383 = vmatpush1.bf16.msra.mxu0 %v2585
    %3384 = vmatprep.subr.bf16.mxu0 %v3077
    %3385 = vmatpush1.bf16.msra.mxu0 %v3074
    %3386 = vmatprep.subr.bf16.mxu0 0
    %3387 = vmatpush1.bf16.msra.mxu0 0
    %3388 = vmatprep.subr.bf16.mxu0 0
    %3389 = vmatpush1.bf16.msra.mxu0 0
    %3390 = vmatprep.subr.bf16.mxu0 0
    %3391 = vmatpush1.bf16.msra.mxu0 0
    %3392 = vmatprep.subr.bf16.mxu0 0
    %3393 = vmatpush1.bf16.msra.mxu0 0
    %3394 = vmatprep.subr.bf16.mxu0 0
    %3395 = vmatpush1.bf16.msra.mxu0 0
    %3396 = vmatprep.subr.bf16.mxu0 0
    %3397 = vmatpush1.bf16.msra.mxu0 0
    %3398 = vmatprep.subr.bf16.mxu0 0
    %3399 = vmatpush1.bf16.msra.mxu0 0
    %3400 = vmatprep.subr.bf16.mxu0 0
    %3401 = vmatpush1.bf16.msra.mxu0 0
    %3402 = vmatprep.mubr.bf16.mxu0 0
    %3403 = vmatmul.mubr.bf16.gmra.mrb[0].mxu0 %v3049
    %v3404 = vpop.f32.mrb[0].mxu0
    %v3405 = vadd.f32 %v864, %v3404
    %v3406 = vpop.f32.mrb[0].mxu0
    %v3407 = vadd.f32 %v868, %v3406
    %v3408 = vpop.f32.mrb[0].mxu0
    %v3409 = vadd.f32 %v864, %v3408
    %v3410 = vpop.f32.mrb[0].mxu0
    %v3411 = vadd.f32 %v868, %v3410
    %3412 = vmatprep.mubr.bf16.mxu0 0
    %3413 = vmatmul.mubr.bf16.gmra.mrb[0].mxu0 %v3052
    %v3414 = vpop.f32.mrb[0].mxu0
    %v3415 = vadd.f32 %v864, %v3414
    %v3416 = vpop.f32.mrb[0].mxu0
    %v3417 = vadd.f32 %v868, %v3416
    %v3418 = vpop.f32.mrb[0].mxu0
    %v3419 = vadd.f32 %v864, %v3418
    %v3420 = vpop.f32.mrb[0].mxu0
    %v3421 = vadd.f32 %v868, %v3420
    %3422 = vdwg.mxu0
    %3423 = vmatprep.subr.bf16.mxu0 %v2276
    %3424 = vmatpush1.bf16.msra.mxu0 %v2275
    %3425 = vmatprep.subr.bf16.mxu0 %v2328
    %3426 = vmatpush1.bf16.msra.mxu0 %v2327
    %3427 = vmatprep.subr.bf16.mxu0 %v2380
    %3428 = vmatpush1.bf16.msra.mxu0 %v2379
    %3429 = vmatprep.subr.bf16.mxu0 %v2432
    %3430 = vmatpush1.bf16.msra.mxu0 %v2431
    %3431 = vmatprep.subr.bf16.mxu0 %v2484
    %3432 = vmatpush1.bf16.msra.mxu0 %v2483
    %3433 = vmatprep.subr.bf16.mxu0 %v2536
    %3434 = vmatpush1.bf16.msra.mxu0 %v2535
    %3435 = vmatprep.subr.bf16.mxu0 %v2588
    %3436 = vmatpush1.bf16.msra.mxu0 %v2587
    %3437 = vmatprep.subr.bf16.mxu0 %v3083
    %3438 = vmatpush1.bf16.msra.mxu0 %v3080
    %3439 = vmatprep.subr.bf16.mxu0 0
    %3440 = vmatpush1.bf16.msra.mxu0 0
    %3441 = vmatprep.subr.bf16.mxu0 0
    %3442 = vmatpush1.bf16.msra.mxu0 0
    %3443 = vmatprep.subr.bf16.mxu0 0
    %3444 = vmatpush1.bf16.msra.mxu0 0
    %3445 = vmatprep.subr.bf16.mxu0 0
    %3446 = vmatpush1.bf16.msra.mxu0 0
    %3447 = vmatprep.subr.bf16.mxu0 0
    %3448 = vmatpush1.bf16.msra.mxu0 0
    %3449 = vmatprep.subr.bf16.mxu0 0
    %3450 = vmatpush1.bf16.msra.mxu0 0
    %3451 = vmatprep.subr.bf16.mxu0 0
    %3452 = vmatpush1.bf16.msra.mxu0 0
    %3453 = vmatprep.subr.bf16.mxu0 0
    %3454 = vmatpush1.bf16.msra.mxu0 0
    %3455 = vmatprep.mubr.bf16.mxu0 0
    %3456 = vmatmul.mubr.bf16.gmra.mrb[0].mxu0 %v3049
    %v3457 = vpop.f32.mrb[0].mxu0
    %v3458 = vadd.f32 %v872, %v3457
    %v3459 = vpop.f32.mrb[0].mxu0
    %v3460 = vadd.f32 %v876, %v3459
    %v3461 = vpop.f32.mrb[0].mxu0
    %v3462 = vadd.f32 %v872, %v3461
    %v3463 = vpop.f32.mrb[0].mxu0
    %v3464 = vadd.f32 %v876, %v3463
    %3465 = vmatprep.mubr.bf16.mxu0 0
    %3466 = vmatmul.mubr.bf16.gmra.mrb[0].mxu0 %v3052
    %v3467 = vpop.f32.mrb[0].mxu0
    %v3468 = vadd.f32 %v872, %v3467
    %v3469 = vpop.f32.mrb[0].mxu0
    %v3470 = vadd.f32 %v876, %v3469
    %v3471 = vpop.f32.mrb[0].mxu0
    %v3472 = vadd.f32 %v872, %v3471
    %v3473 = vpop.f32.mrb[0].mxu0
    %v3474 = vadd.f32 %v876, %v3473
    %3475 = vdwg.mxu0
    %3476 = vmatprep.subr.bf16.mxu0 %v2278
    %3477 = vmatpush1.bf16.msra.mxu0 %v2277
    %3478 = vmatprep.subr.bf16.mxu0 %v2330
    %3479 = vmatpush1.bf16.msra.mxu0 %v2329
    %3480 = vmatprep.subr.bf16.mxu0 %v2382
    %3481 = vmatpush1.bf16.msra.mxu0 %v2381
    %3482 = vmatprep.subr.bf16.mxu0 %v2434
    %3483 = vmatpush1.bf16.msra.mxu0 %v2433
    %3484 = vmatprep.subr.bf16.mxu0 %v2486
    %3485 = vmatpush1.bf16.msra.mxu0 %v2485
    %3486 = vmatprep.subr.bf16.mxu0 %v2538
    %3487 = vmatpush1.bf16.msra.mxu0 %v2537
    %3488 = vmatprep.subr.bf16.mxu0 %v2590
    %3489 = vmatpush1.bf16.msra.mxu0 %v2589
    %3490 = vmatprep.subr.bf16.mxu0 %v3089
    %3491 = vmatpush1.bf16.msra.mxu0 %v3086
    %3492 = vmatprep.subr.bf16.mxu0 0
    %3493 = vmatpush1.bf16.msra.mxu0 0
    %3494 = vmatprep.subr.bf16.mxu0 0
    %3495 = vmatpush1.bf16.msra.mxu0 0
    %3496 = vmatprep.subr.bf16.mxu0 0
    %3497 = vmatpush1.bf16.msra.mxu0 0
    %3498 = vmatprep.subr.bf16.mxu0 0
    %3499 = vmatpush1.bf16.msra.mxu0 0
    %3500 = vmatprep.subr.bf16.mxu0 0
    %3501 = vmatpush1.bf16.msra.mxu0 0
    %3502 = vmatprep.subr.bf16.mxu0 0
    %3503 = vmatpush1.bf16.msra.mxu0 0
    %3504 = vmatprep.subr.bf16.mxu0 0
    %3505 = vmatpush1.bf16.msra.mxu0 0
    %3506 = vmatprep.subr.bf16.mxu0 0
    %3507 = vmatpush1.bf16.msra.mxu0 0
    %3508 = vmatprep.mubr.bf16.mxu0 0
    %3509 = vmatmul.mubr.bf16.gmra.mrb[0].mxu0 %v3049
    %v3510 = vpop.f32.mrb[0].mxu0
    %v3511 = vadd.f32 %v880, %v3510
    %v3512 = vpop.f32.mrb[0].mxu0
    %v3513 = vadd.f32 %v884, %v3512
    %v3514 = vpop.f32.mrb[0].mxu0
    %v3515 = vadd.f32 %v880, %v3514
    %v3516 = vpop.f32.mrb[0].mxu0
    %v3517 = vadd.f32 %v884, %v3516
    %3518 = vmatprep.mubr.bf16.mxu0 0
    %3519 = vmatmul.mubr.bf16.gmra.mrb[0].mxu0 %v3052
    %v3520 = vpop.f32.mrb[0].mxu0
    %v3521 = vadd.f32 %v880, %v3520
    %v3522 = vpop.f32.mrb[0].mxu0
    %v3523 = vadd.f32 %v884, %v3522
    %v3524 = vpop.f32.mrb[0].mxu0
    %v3525 = vadd.f32 %v880, %v3524
    %v3526 = vpop.f32.mrb[0].mxu0
    %v3527 = vadd.f32 %v884, %v3526
    %3528 = vdwg.mxu0
    %3529 = vmatprep.subr.bf16.mxu0 %v2280
    %3530 = vmatpush1.bf16.msra.mxu0 %v2279
    %3531 = vmatprep.subr.bf16.mxu0 %v2332
    %3532 = vmatpush1.bf16.msra.mxu0 %v2331
    %3533 = vmatprep.subr.bf16.mxu0 %v2384
    %3534 = vmatpush1.bf16.msra.mxu0 %v2383
    %3535 = vmatprep.subr.bf16.mxu0 %v2436
    %3536 = vmatpush1.bf16.msra.mxu0 %v2435
    %3537 = vmatprep.subr.bf16.mxu0 %v2488
    %3538 = vmatpush1.bf16.msra.mxu0 %v2487
    %3539 = vmatprep.subr.bf16.mxu0 %v2540
    %3540 = vmatpush1.bf16.msra.mxu0 %v2539
    %3541 = vmatprep.subr.bf16.mxu0 %v2592
    %3542 = vmatpush1.bf16.msra.mxu0 %v2591
    %3543 = vmatprep.subr.bf16.mxu0 %v3095
    %3544 = vmatpush1.bf16.msra.mxu0 %v3092
    %3545 = vmatprep.subr.bf16.mxu0 0
    %3546 = vmatpush1.bf16.msra.mxu0 0
    %3547 = vmatprep.subr.bf16.mxu0 0
    %3548 = vmatpush1.bf16.msra.mxu0 0
    %3549 = vmatprep.subr.bf16.mxu0 0
    %3550 = vmatpush1.bf16.msra.mxu0 0
    %3551 = vmatprep.subr.bf16.mxu0 0
    %3552 = vmatpush1.bf16.msra.mxu0 0
    %3553 = vmatprep.subr.bf16.mxu0 0
    %3554 = vmatpush1.bf16.msra.mxu0 0
    %3555 = vmatprep.subr.bf16.mxu0 0
    %3556 = vmatpush1.bf16.msra.mxu0 0
    %3557 = vmatprep.subr.bf16.mxu0 0
    %3558 = vmatpush1.bf16.msra.mxu0 0
    %3559 = vmatprep.subr.bf16.mxu0 0
    %3560 = vmatpush1.bf16.msra.mxu0 0
    %3561 = vmatprep.mubr.bf16.mxu0 0
    %3562 = vmatmul.mubr.bf16.gmra.mrb[0].mxu0 %v3049
    %v3563 = vpop.f32.mrb[0].mxu0
    %v3564 = vadd.f32 %v888, %v3563
    %v3565 = vpop.f32.mrb[0].mxu0
    %v3566 = vadd.f32 %v892, %v3565
    %v3567 = vpop.f32.mrb[0].mxu0
    %v3568 = vadd.f32 %v888, %v3567
    %v3569 = vpop.f32.mrb[0].mxu0
    %v3570 = vadd.f32 %v892, %v3569
    %3571 = vmatprep.mubr.bf16.mxu0 0
    %3572 = vmatmul.mubr.bf16.gmra.mrb[0].mxu0 %v3052
    %v3573 = vpop.f32.mrb[0].mxu0
    %v3574 = vadd.f32 %v888, %v3573
    %v3575 = vpop.f32.mrb[0].mxu0
    %v3576 = vadd.f32 %v892, %v3575
    %v3577 = vpop.f32.mrb[0].mxu0
    %v3578 = vadd.f32 %v888, %v3577
    %v3579 = vpop.f32.mrb[0].mxu0
    %v3580 = vadd.f32 %v892, %v3579
    %3581 = vdwg.mxu0
    %3582 = vmatprep.subr.bf16.mxu0 %v2282
    %3583 = vmatpush1.bf16.msra.mxu0 %v2281
    %3584 = vmatprep.subr.bf16.mxu0 %v2334
    %3585 = vmatpush1.bf16.msra.mxu0 %v2333
    %3586 = vmatprep.subr.bf16.mxu0 %v2386
    %3587 = vmatpush1.bf16.msra.mxu0 %v2385
    %3588 = vmatprep.subr.bf16.mxu0 %v2438
    %3589 = vmatpush1.bf16.msra.mxu0 %v2437
    %3590 = vmatprep.subr.bf16.mxu0 %v2490
    %3591 = vmatpush1.bf16.msra.mxu0 %v2489
    %3592 = vmatprep.subr.bf16.mxu0 %v2542
    %3593 = vmatpush1.bf16.msra.mxu0 %v2541
    %3594 = vmatprep.subr.bf16.mxu0 %v2594
    %3595 = vmatpush1.bf16.msra.mxu0 %v2593
    %3596 = vmatprep.subr.bf16.mxu0 %v3101
    %3597 = vmatpush1.bf16.msra.mxu0 %v3098
    %3598 = vmatprep.subr.bf16.mxu0 0
    %3599 = vmatpush1.bf16.msra.mxu0 0
    %3600 = vmatprep.subr.bf16.mxu0 0
    %3601 = vmatpush1.bf16.msra.mxu0 0
    %3602 = vmatprep.subr.bf16.mxu0 0
    %3603 = vmatpush1.bf16.msra.mxu0 0
    %3604 = vmatprep.subr.bf16.mxu0 0
    %3605 = vmatpush1.bf16.msra.mxu0 0
    %3606 = vmatprep.subr.bf16.mxu0 0
    %3607 = vmatpush1.bf16.msra.mxu0 0
    %3608 = vmatprep.subr.bf16.mxu0 0
    %3609 = vmatpush1.bf16.msra.mxu0 0
    %3610 = vmatprep.subr.bf16.mxu0 0
    %3611 = vmatpush1.bf16.msra.mxu0 0
    %3612 = vmatprep.subr.bf16.mxu0 0
    %3613 = vmatpush1.bf16.msra.mxu0 0
    %3614 = vmatprep.mubr.bf16.mxu0 0
    %3615 = vmatmul.mubr.bf16.gmra.mrb[0].mxu0 %v3049
    %v3616 = vpop.f32.mrb[0].mxu0
    %v3617 = vadd.f32 %v896, %v3616
    %v3618 = vpop.f32.mrb[0].mxu0
    %v3619 = vadd.f32 %v900, %v3618
    %v3620 = vpop.f32.mrb[0].mxu0
    %v3621 = vadd.f32 %v896, %v3620
    %v3622 = vpop.f32.mrb[0].mxu0
    %v3623 = vadd.f32 %v900, %v3622
    %3624 = vmatprep.mubr.bf16.mxu0 0
    %3625 = vmatmul.mubr.bf16.gmra.mrb[0].mxu0 %v3052
    %v3626 = vpop.f32.mrb[0].mxu0
    %v3627 = vadd.f32 %v896, %v3626
    %v3628 = vpop.f32.mrb[0].mxu0
    %v3629 = vadd.f32 %v900, %v3628
    %v3630 = vpop.f32.mrb[0].mxu0
    %v3631 = vadd.f32 %v896, %v3630
    %v3632 = vpop.f32.mrb[0].mxu0
    %v3633 = vadd.f32 %v900, %v3632
    %3634 = vdwg.mxu0
    %3635 = vmatprep.subr.bf16.mxu0 %v2284
    %3636 = vmatpush1.bf16.msra.mxu0 %v2283
    %3637 = vmatprep.subr.bf16.mxu0 %v2336
    %3638 = vmatpush1.bf16.msra.mxu0 %v2335
    %3639 = vmatprep.subr.bf16.mxu0 %v2388
    %3640 = vmatpush1.bf16.msra.mxu0 %v2387
    %3641 = vmatprep.subr.bf16.mxu0 %v2440
    %3642 = vmatpush1.bf16.msra.mxu0 %v2439
    %3643 = vmatprep.subr.bf16.mxu0 %v2492
    %3644 = vmatpush1.bf16.msra.mxu0 %v2491
    %3645 = vmatprep.subr.bf16.mxu0 %v2544
    %3646 = vmatpush1.bf16.msra.mxu0 %v2543
    %3647 = vmatprep.subr.bf16.mxu0 %v2596
    %3648 = vmatpush1.bf16.msra.mxu0 %v2595
    %3649 = vmatprep.subr.bf16.mxu0 %v3107
    %3650 = vmatpush1.bf16.msra.mxu0 %v3104
    %3651 = vmatprep.subr.bf16.mxu0 0
    %3652 = vmatpush1.bf16.msra.mxu0 0
    %3653 = vmatprep.subr.bf16.mxu0 0
    %3654 = vmatpush1.bf16.msra.mxu0 0
    %3655 = vmatprep.subr.bf16.mxu0 0
    %3656 = vmatpush1.bf16.msra.mxu0 0
    %3657 = vmatprep.subr.bf16.mxu0 0
    %3658 = vmatpush1.bf16.msra.mxu0 0
    %3659 = vmatprep.subr.bf16.mxu0 0
    %3660 = vmatpush1.bf16.msra.mxu0 0
    %3661 = vmatprep.subr.bf16.mxu0 0
    %3662 = vmatpush1.bf16.msra.mxu0 0
    %3663 = vmatprep.subr.bf16.mxu0 0
    %3664 = vmatpush1.bf16.msra.mxu0 0
    %3665 = vmatprep.subr.bf16.mxu0 0
    %3666 = vmatpush1.bf16.msra.mxu0 0
    %3667 = vmatprep.mubr.bf16.mxu0 0
    %3668 = vmatmul.mubr.bf16.gmra.mrb[0].mxu0 %v3049
    %v3669 = vpop.f32.mrb[0].mxu0
    %v3670 = vadd.f32 %v904, %v3669
    %v3671 = vpop.f32.mrb[0].mxu0
    %v3672 = vadd.f32 %v908, %v3671
    %v3673 = vpop.f32.mrb[0].mxu0
    %v3674 = vadd.f32 %v904, %v3673
    %v3675 = vpop.f32.mrb[0].mxu0
    %v3676 = vadd.f32 %v908, %v3675
    %3677 = vmatprep.mubr.bf16.mxu0 0
    %3678 = vmatmul.mubr.bf16.gmra.mrb[0].mxu0 %v3052
    %v3679 = vpop.f32.mrb[0].mxu0
    %v3680 = vadd.f32 %v904, %v3679
    %v3681 = vpop.f32.mrb[0].mxu0
    %v3682 = vadd.f32 %v908, %v3681
    %v3683 = vpop.f32.mrb[0].mxu0
    %v3684 = vadd.f32 %v904, %v3683
    %v3685 = vpop.f32.mrb[0].mxu0
    %v3686 = vadd.f32 %v908, %v3685
    %3687 = vdwg.mxu0
    %3688 = vmatprep.subr.bf16.mxu0 %v2286
    %3689 = vmatpush1.bf16.msra.mxu0 %v2285
    %3690 = vmatprep.subr.bf16.mxu0 %v2338
    %3691 = vmatpush1.bf16.msra.mxu0 %v2337
    %3692 = vmatprep.subr.bf16.mxu0 %v2390
    %3693 = vmatpush1.bf16.msra.mxu0 %v2389
    %3694 = vmatprep.subr.bf16.mxu0 %v2442
    %3695 = vmatpush1.bf16.msra.mxu0 %v2441
    %3696 = vmatprep.subr.bf16.mxu0 %v2494
    %3697 = vmatpush1.bf16.msra.mxu0 %v2493
    %3698 = vmatprep.subr.bf16.mxu0 %v2546
    %3699 = vmatpush1.bf16.msra.mxu0 %v2545
    %3700 = vmatprep.subr.bf16.mxu0 %v2598
    %3701 = vmatpush1.bf16.msra.mxu0 %v2597
    %3702 = vmatprep.subr.bf16.mxu0 %v3113
    %3703 = vmatpush1.bf16.msra.mxu0 %v3110
    %3704 = vmatprep.subr.bf16.mxu0 0
    %3705 = vmatpush1.bf16.msra.mxu0 0
    %3706 = vmatprep.subr.bf16.mxu0 0
    %3707 = vmatpush1.bf16.msra.mxu0 0
    %3708 = vmatprep.subr.bf16.mxu0 0
    %3709 = vmatpush1.bf16.msra.mxu0 0
    %3710 = vmatprep.subr.bf16.mxu0 0
    %3711 = vmatpush1.bf16.msra.mxu0 0
    %3712 = vmatprep.subr.bf16.mxu0 0
    %3713 = vmatpush1.bf16.msra.mxu0 0
    %3714 = vmatprep.subr.bf16.mxu0 0
    %3715 = vmatpush1.bf16.msra.mxu0 0
    %3716 = vmatprep.subr.bf16.mxu0 0
    %3717 = vmatpush1.bf16.msra.mxu0 0
    %3718 = vmatprep.subr.bf16.mxu0 0
    %3719 = vmatpush1.bf16.msra.mxu0 0
    %3720 = vmatprep.mubr.bf16.mxu0 0
    %3721 = vmatmul.mubr.bf16.gmra.mrb[0].mxu0 %v3049
    %v3722 = vpop.f32.mrb[0].mxu0
    %v3723 = vadd.f32 %v912, %v3722
    %v3724 = vpop.f32.mrb[0].mxu0
    %v3725 = vadd.f32 %v916, %v3724
    %v3726 = vpop.f32.mrb[0].mxu0
    %v3727 = vadd.f32 %v912, %v3726
    %v3728 = vpop.f32.mrb[0].mxu0
    %v3729 = vadd.f32 %v916, %v3728
    %3730 = vmatprep.mubr.bf16.mxu0 0
    %3731 = vmatmul.mubr.bf16.gmra.mrb[0].mxu0 %v3052
    %v3732 = vpop.f32.mrb[0].mxu0
    %v3733 = vadd.f32 %v912, %v3732
    %v3734 = vpop.f32.mrb[0].mxu0
    %v3735 = vadd.f32 %v916, %v3734
    %v3736 = vpop.f32.mrb[0].mxu0
    %v3737 = vadd.f32 %v912, %v3736
    %v3738 = vpop.f32.mrb[0].mxu0
    %v3739 = vadd.f32 %v916, %v3738
    %3740 = vdwg.mxu0
    %3741 = vmatprep.subr.bf16.mxu0 %v2288
    %3742 = vmatpush1.bf16.msra.mxu0 %v2287
    %3743 = vmatprep.subr.bf16.mxu0 %v2340
    %3744 = vmatpush1.bf16.msra.mxu0 %v2339
    %3745 = vmatprep.subr.bf16.mxu0 %v2392
    %3746 = vmatpush1.bf16.msra.mxu0 %v2391
    %3747 = vmatprep.subr.bf16.mxu0 %v2444
    %3748 = vmatpush1.bf16.msra.mxu0 %v2443
    %3749 = vmatprep.subr.bf16.mxu0 %v2496
    %3750 = vmatpush1.bf16.msra.mxu0 %v2495
    %3751 = vmatprep.subr.bf16.mxu0 %v2548
    %3752 = vmatpush1.bf16.msra.mxu0 %v2547
    %3753 = vmatprep.subr.bf16.mxu0 %v2600
    %3754 = vmatpush1.bf16.msra.mxu0 %v2599
    %3755 = vmatprep.subr.bf16.mxu0 %v3119
    %3756 = vmatpush1.bf16.msra.mxu0 %v3116
    %3757 = vmatprep.subr.bf16.mxu0 0
    %3758 = vmatpush1.bf16.msra.mxu0 0
    %3759 = vmatprep.subr.bf16.mxu0 0
    %3760 = vmatpush1.bf16.msra.mxu0 0
    %3761 = vmatprep.subr.bf16.mxu0 0
    %3762 = vmatpush1.bf16.msra.mxu0 0
    %3763 = vmatprep.subr.bf16.mxu0 0
    %3764 = vmatpush1.bf16.msra.mxu0 0
    %3765 = vmatprep.subr.bf16.mxu0 0
    %3766 = vmatpush1.bf16.msra.mxu0 0
    %3767 = vmatprep.subr.bf16.mxu0 0
    %3768 = vmatpush1.bf16.msra.mxu0 0
    %3769 = vmatprep.subr.bf16.mxu0 0
    %3770 = vmatpush1.bf16.msra.mxu0 0
    %3771 = vmatprep.subr.bf16.mxu0 0
    %3772 = vmatpush1.bf16.msra.mxu0 0
    %3773 = vmatprep.mubr.bf16.mxu0 0
    %3774 = vmatmul.mubr.bf16.gmra.mrb[0].mxu0 %v3049
    %v3775 = vpop.f32.mrb[0].mxu0
    %v3776 = vadd.f32 %v920, %v3775
    %v3777 = vpop.f32.mrb[0].mxu0
    %v3778 = vadd.f32 %v924, %v3777
    %v3779 = vpop.f32.mrb[0].mxu0
    %v3780 = vadd.f32 %v920, %v3779
    %v3781 = vpop.f32.mrb[0].mxu0
    %v3782 = vadd.f32 %v924, %v3781
    %3783 = vmatprep.mubr.bf16.mxu0 0
    %3784 = vmatmul.mubr.bf16.gmra.mrb[0].mxu0 %v3052
    %v3785 = vpop.f32.mrb[0].mxu0
    %v3786 = vadd.f32 %v920, %v3785
    %v3787 = vpop.f32.mrb[0].mxu0
    %v3788 = vadd.f32 %v924, %v3787
    %v3789 = vpop.f32.mrb[0].mxu0
    %v3790 = vadd.f32 %v920, %v3789
    %v3791 = vpop.f32.mrb[0].mxu0
    %v3792 = vadd.f32 %v924, %v3791
    %3793 = vdwg.mxu0
    %3794 = vmatprep.subr.bf16.mxu0 %v2290
    %3795 = vmatpush1.bf16.msra.mxu0 %v2289
    %3796 = vmatprep.subr.bf16.mxu0 %v2342
    %3797 = vmatpush1.bf16.msra.mxu0 %v2341
    %3798 = vmatprep.subr.bf16.mxu0 %v2394
    %3799 = vmatpush1.bf16.msra.mxu0 %v2393
    %3800 = vmatprep.subr.bf16.mxu0 %v2446
    %3801 = vmatpush1.bf16.msra.mxu0 %v2445
    %3802 = vmatprep.subr.bf16.mxu0 %v2498
    %3803 = vmatpush1.bf16.msra.mxu0 %v2497
    %3804 = vmatprep.subr.bf16.mxu0 %v2550
    %3805 = vmatpush1.bf16.msra.mxu0 %v2549
    %3806 = vmatprep.subr.bf16.mxu0 %v2602
    %3807 = vmatpush1.bf16.msra.mxu0 %v2601
    %3808 = vmatprep.subr.bf16.mxu0 %v3125
    %3809 = vmatpush1.bf16.msra.mxu0 %v3122
    %3810 = vmatprep.subr.bf16.mxu0 0
    %3811 = vmatpush1.bf16.msra.mxu0 0
    %3812 = vmatprep.subr.bf16.mxu0 0
    %3813 = vmatpush1.bf16.msra.mxu0 0
    %3814 = vmatprep.subr.bf16.mxu0 0
    %3815 = vmatpush1.bf16.msra.mxu0 0
    %3816 = vmatprep.subr.bf16.mxu0 0
    %3817 = vmatpush1.bf16.msra.mxu0 0
    %3818 = vmatprep.subr.bf16.mxu0 0
    %3819 = vmatpush1.bf16.msra.mxu0 0
    %3820 = vmatprep.subr.bf16.mxu0 0
    %3821 = vmatpush1.bf16.msra.mxu0 0
    %3822 = vmatprep.subr.bf16.mxu0 0
    %3823 = vmatpush1.bf16.msra.mxu0 0
    %3824 = vmatprep.subr.bf16.mxu0 0
    %3825 = vmatpush1.bf16.msra.mxu0 0
    %3826 = vmatprep.mubr.bf16.mxu0 0
    %3827 = vmatmul.mubr.bf16.gmra.mrb[0].mxu0 %v3049
    %v3828 = vpop.f32.mrb[0].mxu0
    %v3829 = vadd.f32 %v928, %v3828
    %v3830 = vpop.f32.mrb[0].mxu0
    %v3831 = vadd.f32 %v932, %v3830
    %v3832 = vpop.f32.mrb[0].mxu0
    %v3833 = vadd.f32 %v928, %v3832
    %v3834 = vpop.f32.mrb[0].mxu0
    %v3835 = vadd.f32 %v932, %v3834
    %3836 = vmatprep.mubr.bf16.mxu0 0
    %3837 = vmatmul.mubr.bf16.gmra.mrb[0].mxu0 %v3052
    %v3838 = vpop.f32.mrb[0].mxu0
    %v3839 = vadd.f32 %v928, %v3838
    %v3840 = vpop.f32.mrb[0].mxu0
    %v3841 = vadd.f32 %v932, %v3840
    %v3842 = vpop.f32.mrb[0].mxu0
    %v3843 = vadd.f32 %v928, %v3842
    %v3844 = vpop.f32.mrb[0].mxu0
    %v3845 = vadd.f32 %v932, %v3844
    %3846 = vdwg.mxu0
    %3847 = vmatprep.subr.bf16.mxu0 %v2292
    %3848 = vmatpush1.bf16.msra.mxu0 %v2291
    %3849 = vmatprep.subr.bf16.mxu0 %v2344
    %3850 = vmatpush1.bf16.msra.mxu0 %v2343
    %3851 = vmatprep.subr.bf16.mxu0 %v2396
    %3852 = vmatpush1.bf16.msra.mxu0 %v2395
    %3853 = vmatprep.subr.bf16.mxu0 %v2448
    %3854 = vmatpush1.bf16.msra.mxu0 %v2447
    %3855 = vmatprep.subr.bf16.mxu0 %v2500
    %3856 = vmatpush1.bf16.msra.mxu0 %v2499
    %3857 = vmatprep.subr.bf16.mxu0 %v2552
    %3858 = vmatpush1.bf16.msra.mxu0 %v2551
    %3859 = vmatprep.subr.bf16.mxu0 %v2604
    %3860 = vmatpush1.bf16.msra.mxu0 %v2603
    %3861 = vmatprep.subr.bf16.mxu0 %v3131
    %3862 = vmatpush1.bf16.msra.mxu0 %v3128
    %3863 = vmatprep.subr.bf16.mxu0 0
    %3864 = vmatpush1.bf16.msra.mxu0 0
    %3865 = vmatprep.subr.bf16.mxu0 0
    %3866 = vmatpush1.bf16.msra.mxu0 0
    %3867 = vmatprep.subr.bf16.mxu0 0
    %3868 = vmatpush1.bf16.msra.mxu0 0
    %3869 = vmatprep.subr.bf16.mxu0 0
    %3870 = vmatpush1.bf16.msra.mxu0 0
    %3871 = vmatprep.subr.bf16.mxu0 0
    %3872 = vmatpush1.bf16.msra.mxu0 0
    %3873 = vmatprep.subr.bf16.mxu0 0
    %3874 = vmatpush1.bf16.msra.mxu0 0
    %3875 = vmatprep.subr.bf16.mxu0 0
    %3876 = vmatpush1.bf16.msra.mxu0 0
    %3877 = vmatprep.subr.bf16.mxu0 0
    %3878 = vmatpush1.bf16.msra.mxu0 0
    %3879 = vmatprep.mubr.bf16.mxu0 0
    %3880 = vmatmul.mubr.bf16.gmra.mrb[0].mxu0 %v3049
    %v3881 = vpop.f32.mrb[0].mxu0
    %v3882 = vadd.f32 %v936, %v3881
    %v3883 = vpop.f32.mrb[0].mxu0
    %v3884 = vadd.f32 %v940, %v3883
    %v3885 = vpop.f32.mrb[0].mxu0
    %v3886 = vadd.f32 %v936, %v3885
    %v3887 = vpop.f32.mrb[0].mxu0
    %v3888 = vadd.f32 %v940, %v3887
    %3889 = vmatprep.mubr.bf16.mxu0 0
    %3890 = vmatmul.mubr.bf16.gmra.mrb[0].mxu0 %v3052
    %v3891 = vpop.f32.mrb[0].mxu0
    %v3892 = vadd.f32 %v936, %v3891
    %v3893 = vpop.f32.mrb[0].mxu0
    %v3894 = vadd.f32 %v940, %v3893
    %v3895 = vpop.f32.mrb[0].mxu0
    %v3896 = vadd.f32 %v936, %v3895
    %v3897 = vpop.f32.mrb[0].mxu0
    %v3898 = vadd.f32 %v940, %v3897
    %3899 = vdwg.mxu0
    %3900 = vmatprep.subr.bf16.mxu0 %v2294
    %3901 = vmatpush1.bf16.msra.mxu0 %v2293
    %3902 = vmatprep.subr.bf16.mxu0 %v2346
    %3903 = vmatpush1.bf16.msra.mxu0 %v2345
    %3904 = vmatprep.subr.bf16.mxu0 %v2398
    %3905 = vmatpush1.bf16.msra.mxu0 %v2397
    %3906 = vmatprep.subr.bf16.mxu0 %v2450
    %3907 = vmatpush1.bf16.msra.mxu0 %v2449
    %3908 = vmatprep.subr.bf16.mxu0 %v2502
    %3909 = vmatpush1.bf16.msra.mxu0 %v2501
    %3910 = vmatprep.subr.bf16.mxu0 %v2554
    %3911 = vmatpush1.bf16.msra.mxu0 %v2553
    %3912 = vmatprep.subr.bf16.mxu0 %v2606
    %3913 = vmatpush1.bf16.msra.mxu0 %v2605
    %3914 = vmatprep.subr.bf16.mxu0 %v3137
    %3915 = vmatpush1.bf16.msra.mxu0 %v3134
    %3916 = vmatprep.subr.bf16.mxu0 0
    %3917 = vmatpush1.bf16.msra.mxu0 0
    %3918 = vmatprep.subr.bf16.mxu0 0
    %3919 = vmatpush1.bf16.msra.mxu0 0
    %3920 = vmatprep.subr.bf16.mxu0 0
    %3921 = vmatpush1.bf16.msra.mxu0 0
    %3922 = vmatprep.subr.bf16.mxu0 0
    %3923 = vmatpush1.bf16.msra.mxu0 0
    %3924 = vmatprep.subr.bf16.mxu0 0
    %3925 = vmatpush1.bf16.msra.mxu0 0
    %3926 = vmatprep.subr.bf16.mxu0 0
    %3927 = vmatpush1.bf16.msra.mxu0 0
    %3928 = vmatprep.subr.bf16.mxu0 0
    %3929 = vmatpush1.bf16.msra.mxu0 0
    %3930 = vmatprep.subr.bf16.mxu0 0
    %3931 = vmatpush1.bf16.msra.mxu0 0
    %3932 = vmatprep.mubr.bf16.mxu0 0
    %3933 = vmatmul.mubr.bf16.gmra.mrb[0].mxu0 %v3049
    %v3934 = vpop.f32.mrb[0].mxu0
    %v3935 = vadd.f32 %v944, %v3934
    %v3936 = vpop.f32.mrb[0].mxu0
    %v3937 = vadd.f32 %v948, %v3936
    %v3938 = vpop.f32.mrb[0].mxu0
    %v3939 = vadd.f32 %v944, %v3938
    %v3940 = vpop.f32.mrb[0].mxu0
    %v3941 = vadd.f32 %v948, %v3940
    %3942 = vmatprep.mubr.bf16.mxu0 0
    %3943 = vmatmul.mubr.bf16.gmra.mrb[0].mxu0 %v3052
    %v3944 = vpop.f32.mrb[0].mxu0
    %v3945 = vadd.f32 %v944, %v3944
    %v3946 = vpop.f32.mrb[0].mxu0
    %v3947 = vadd.f32 %v948, %v3946
    %v3948 = vpop.f32.mrb[0].mxu0
    %v3949 = vadd.f32 %v944, %v3948
    %v3950 = vpop.f32.mrb[0].mxu0
    %v3951 = vadd.f32 %v948, %v3950
    %3952 = vdwg.mxu0
    %3953 = vmatprep.subr.bf16.mxu0 %v2296
    %3954 = vmatpush1.bf16.msra.mxu0 %v2295
    %3955 = vmatprep.subr.bf16.mxu0 %v2348
    %3956 = vmatpush1.bf16.msra.mxu0 %v2347
    %3957 = vmatprep.subr.bf16.mxu0 %v2400
    %3958 = vmatpush1.bf16.msra.mxu0 %v2399
    %3959 = vmatprep.subr.bf16.mxu0 %v2452
    %3960 = vmatpush1.bf16.msra.mxu0 %v2451
    %3961 = vmatprep.subr.bf16.mxu0 %v2504
    %3962 = vmatpush1.bf16.msra.mxu0 %v2503
    %3963 = vmatprep.subr.bf16.mxu0 %v2556
    %3964 = vmatpush1.bf16.msra.mxu0 %v2555
    %3965 = vmatprep.subr.bf16.mxu0 %v2608
    %3966 = vmatpush1.bf16.msra.mxu0 %v2607
    %3967 = vmatprep.subr.bf16.mxu0 %v3143
    %3968 = vmatpush1.bf16.msra.mxu0 %v3140
    %3969 = vmatprep.subr.bf16.mxu0 0
    %3970 = vmatpush1.bf16.msra.mxu0 0
    %3971 = vmatprep.subr.bf16.mxu0 0
    %3972 = vmatpush1.bf16.msra.mxu0 0
    %3973 = vmatprep.subr.bf16.mxu0 0
    %3974 = vmatpush1.bf16.msra.mxu0 0
    %3975 = vmatprep.subr.bf16.mxu0 0
    %3976 = vmatpush1.bf16.msra.mxu0 0
    %3977 = vmatprep.subr.bf16.mxu0 0
    %3978 = vmatpush1.bf16.msra.mxu0 0
    %3979 = vmatprep.subr.bf16.mxu0 0
    %3980 = vmatpush1.bf16.msra.mxu0 0
    %3981 = vmatprep.subr.bf16.mxu0 0
    %3982 = vmatpush1.bf16.msra.mxu0 0
    %3983 = vmatprep.subr.bf16.mxu0 0
    %3984 = vmatpush1.bf16.msra.mxu0 0
    %3985 = vmatprep.mubr.bf16.mxu0 0
    %3986 = vmatmul.mubr.bf16.gmra.mrb[0].mxu0 %v3049
    %v3987 = vpop.f32.mrb[0].mxu0
    %v3988 = vadd.f32 %v952, %v3987
    %v3989 = vpop.f32.mrb[0].mxu0
    %v3990 = vadd.f32 %v956, %v3989
    %v3991 = vpop.f32.mrb[0].mxu0
    %v3992 = vadd.f32 %v952, %v3991
    %v3993 = vpop.f32.mrb[0].mxu0
    %v3994 = vadd.f32 %v956, %v3993
    %3995 = vmatprep.mubr.bf16.mxu0 0
    %3996 = vmatmul.mubr.bf16.gmra.mrb[0].mxu0 %v3052
    %v3997 = vpop.f32.mrb[0].mxu0
    %v3998 = vadd.f32 %v952, %v3997
    %v3999 = vpop.f32.mrb[0].mxu0
    %v4000 = vadd.f32 %v956, %v3999
    %v4001 = vpop.f32.mrb[0].mxu0
    %v4002 = vadd.f32 %v952, %v4001
    %v4003 = vpop.f32.mrb[0].mxu0
    %v4004 = vadd.f32 %v956, %v4003
    %4005 = vdwg.mxu0
    %4006 = vmatprep.subr.bf16.mxu0 %v2298
    %4007 = vmatpush1.bf16.msra.mxu0 %v2297
    %4008 = vmatprep.subr.bf16.mxu0 %v2350
    %4009 = vmatpush1.bf16.msra.mxu0 %v2349
    %4010 = vmatprep.subr.bf16.mxu0 %v2402
    %4011 = vmatpush1.bf16.msra.mxu0 %v2401
    %4012 = vmatprep.subr.bf16.mxu0 %v2454
    %4013 = vmatpush1.bf16.msra.mxu0 %v2453
    %4014 = vmatprep.subr.bf16.mxu0 %v2506
    %4015 = vmatpush1.bf16.msra.mxu0 %v2505
    %4016 = vmatprep.subr.bf16.mxu0 %v2558
    %4017 = vmatpush1.bf16.msra.mxu0 %v2557
    %4018 = vmatprep.subr.bf16.mxu0 %v2610
    %4019 = vmatpush1.bf16.msra.mxu0 %v2609
    %4020 = vmatprep.subr.bf16.mxu0 %v3149
    %4021 = vmatpush1.bf16.msra.mxu0 %v3146
    %4022 = vmatprep.subr.bf16.mxu0 0
    %4023 = vmatpush1.bf16.msra.mxu0 0
    %4024 = vmatprep.subr.bf16.mxu0 0
    %4025 = vmatpush1.bf16.msra.mxu0 0
    %4026 = vmatprep.subr.bf16.mxu0 0
    %4027 = vmatpush1.bf16.msra.mxu0 0
    %4028 = vmatprep.subr.bf16.mxu0 0
    %4029 = vmatpush1.bf16.msra.mxu0 0
    %4030 = vmatprep.subr.bf16.mxu0 0
    %4031 = vmatpush1.bf16.msra.mxu0 0
    %4032 = vmatprep.subr.bf16.mxu0 0
    %4033 = vmatpush1.bf16.msra.mxu0 0
    %4034 = vmatprep.subr.bf16.mxu0 0
    %4035 = vmatpush1.bf16.msra.mxu0 0
    %4036 = vmatprep.subr.bf16.mxu0 0
    %4037 = vmatpush1.bf16.msra.mxu0 0
    %4038 = vmatprep.mubr.bf16.mxu0 0
    %4039 = vmatmul.mubr.bf16.gmra.mrb[0].mxu0 %v3049
    %v4040 = vpop.f32.mrb[0].mxu0
    %v4041 = vadd.f32 %v960, %v4040
    %v4042 = vpop.f32.mrb[0].mxu0
    %v4043 = vadd.f32 %v964, %v4042
    %v4044 = vpop.f32.mrb[0].mxu0
    %v4045 = vadd.f32 %v960, %v4044
    %v4046 = vpop.f32.mrb[0].mxu0
    %v4047 = vadd.f32 %v964, %v4046
    %4048 = vmatprep.mubr.bf16.mxu0 0
    %4049 = vmatmul.mubr.bf16.gmra.mrb[0].mxu0 %v3052
    %v4050 = vpop.f32.mrb[0].mxu0
    %v4051 = vadd.f32 %v960, %v4050
    %v4052 = vpop.f32.mrb[0].mxu0
    %v4053 = vadd.f32 %v964, %v4052
    %v4054 = vpop.f32.mrb[0].mxu0
    %v4055 = vadd.f32 %v960, %v4054
    %v4056 = vpop.f32.mrb[0].mxu0
    %v4057 = vadd.f32 %v964, %v4056
    %4058 = vdwg.mxu0
    %4059 = vmatprep.subr.bf16.mxu0 %v2300
    %4060 = vmatpush1.bf16.msra.mxu0 %v2299
    %4061 = vmatprep.subr.bf16.mxu0 %v2352
    %4062 = vmatpush1.bf16.msra.mxu0 %v2351
    %4063 = vmatprep.subr.bf16.mxu0 %v2404
    %4064 = vmatpush1.bf16.msra.mxu0 %v2403
    %4065 = vmatprep.subr.bf16.mxu0 %v2456
    %4066 = vmatpush1.bf16.msra.mxu0 %v2455
    %4067 = vmatprep.subr.bf16.mxu0 %v2508
    %4068 = vmatpush1.bf16.msra.mxu0 %v2507
    %4069 = vmatprep.subr.bf16.mxu0 %v2560
    %4070 = vmatpush1.bf16.msra.mxu0 %v2559
    %4071 = vmatprep.subr.bf16.mxu0 %v2612
    %4072 = vmatpush1.bf16.msra.mxu0 %v2611
    %4073 = vmatprep.subr.bf16.mxu0 %v3155
    %4074 = vmatpush1.bf16.msra.mxu0 %v3152
    %4075 = vmatprep.subr.bf16.mxu0 0
    %4076 = vmatpush1.bf16.msra.mxu0 0
    %4077 = vmatprep.subr.bf16.mxu0 0
    %4078 = vmatpush1.bf16.msra.mxu0 0
    %4079 = vmatprep.subr.bf16.mxu0 0
    %4080 = vmatpush1.bf16.msra.mxu0 0
    %4081 = vmatprep.subr.bf16.mxu0 0
    %4082 = vmatpush1.bf16.msra.mxu0 0
    %4083 = vmatprep.subr.bf16.mxu0 0
    %4084 = vmatpush1.bf16.msra.mxu0 0
    %4085 = vmatprep.subr.bf16.mxu0 0
    %4086 = vmatpush1.bf16.msra.mxu0 0
    %4087 = vmatprep.subr.bf16.mxu0 0
    %4088 = vmatpush1.bf16.msra.mxu0 0
    %4089 = vmatprep.subr.bf16.mxu0 0
    %4090 = vmatpush1.bf16.msra.mxu0 0
    %4091 = vmatprep.mubr.bf16.mxu0 0
    %4092 = vmatmul.mubr.bf16.gmra.mrb[0].mxu0 %v3049
    %v4093 = vpop.f32.mrb[0].mxu0
    %v4094 = vadd.f32 %v968, %v4093
    %v4095 = vpop.f32.mrb[0].mxu0
    %v4096 = vadd.f32 %v972, %v4095
    %v4097 = vpop.f32.mrb[0].mxu0
    %v4098 = vadd.f32 %v968, %v4097
    %v4099 = vpop.f32.mrb[0].mxu0
    %v4100 = vadd.f32 %v972, %v4099
    %4101 = vmatprep.mubr.bf16.mxu0 0
    %4102 = vmatmul.mubr.bf16.gmra.mrb[0].mxu0 %v3052
    %v4103 = vpop.f32.mrb[0].mxu0
    %v4104 = vadd.f32 %v968, %v4103
    %v4105 = vpop.f32.mrb[0].mxu0
    %v4106 = vadd.f32 %v972, %v4105
    %v4107 = vpop.f32.mrb[0].mxu0
    %v4108 = vadd.f32 %v968, %v4107
    %v4109 = vpop.f32.mrb[0].mxu0
    %v4110 = vadd.f32 %v972, %v4109
    %4111 = vdwg.mxu0
    %4112 = vmatprep.subr.bf16.mxu0 %v2302
    %4113 = vmatpush1.bf16.msra.mxu0 %v2301
    %4114 = vmatprep.subr.bf16.mxu0 %v2354
    %4115 = vmatpush1.bf16.msra.mxu0 %v2353
    %4116 = vmatprep.subr.bf16.mxu0 %v2406
    %4117 = vmatpush1.bf16.msra.mxu0 %v2405
    %4118 = vmatprep.subr.bf16.mxu0 %v2458
    %4119 = vmatpush1.bf16.msra.mxu0 %v2457
    %4120 = vmatprep.subr.bf16.mxu0 %v2510
    %4121 = vmatpush1.bf16.msra.mxu0 %v2509
    %4122 = vmatprep.subr.bf16.mxu0 %v2562
    %4123 = vmatpush1.bf16.msra.mxu0 %v2561
    %4124 = vmatprep.subr.bf16.mxu0 %v2614
    %4125 = vmatpush1.bf16.msra.mxu0 %v2613
    %4126 = vmatprep.subr.bf16.mxu0 %v3161
    %4127 = vmatpush1.bf16.msra.mxu0 %v3158
    %4128 = vmatprep.subr.bf16.mxu0 0
    %4129 = vmatpush1.bf16.msra.mxu0 0
    %4130 = vmatprep.subr.bf16.mxu0 0
    %4131 = vmatpush1.bf16.msra.mxu0 0
    %4132 = vmatprep.subr.bf16.mxu0 0
    %4133 = vmatpush1.bf16.msra.mxu0 0
    %4134 = vmatprep.subr.bf16.mxu0 0
    %4135 = vmatpush1.bf16.msra.mxu0 0
    %4136 = vmatprep.subr.bf16.mxu0 0
    %4137 = vmatpush1.bf16.msra.mxu0 0
    %4138 = vmatprep.subr.bf16.mxu0 0
    %4139 = vmatpush1.bf16.msra.mxu0 0
    %4140 = vmatprep.subr.bf16.mxu0 0
    %4141 = vmatpush1.bf16.msra.mxu0 0
    %4142 = vmatprep.subr.bf16.mxu0 0
    %4143 = vmatpush1.bf16.msra.mxu0 0
    %4144 = vmatprep.mubr.bf16.mxu0 0
    %4145 = vmatmul.mubr.bf16.gmra.mrb[0].mxu0 %v3049
    %v4146 = vpop.f32.mrb[0].mxu0
    %v4147 = vadd.f32 %v976, %v4146
    %v4148 = vpop.f32.mrb[0].mxu0
    %v4149 = vadd.f32 %v980, %v4148
    %v4150 = vpop.f32.mrb[0].mxu0
    %v4151 = vadd.f32 %v976, %v4150
    %v4152 = vpop.f32.mrb[0].mxu0
    %v4153 = vadd.f32 %v980, %v4152
    %4154 = vmatprep.mubr.bf16.mxu0 0
    %4155 = vmatmul.mubr.bf16.gmra.mrb[0].mxu0 %v3052
    %v4156 = vpop.f32.mrb[0].mxu0
    %v4157 = vadd.f32 %v976, %v4156
    %v4158 = vpop.f32.mrb[0].mxu0
    %v4159 = vadd.f32 %v980, %v4158
    %v4160 = vpop.f32.mrb[0].mxu0
    %v4161 = vadd.f32 %v976, %v4160
    %v4162 = vpop.f32.mrb[0].mxu0
    %v4163 = vadd.f32 %v980, %v4162
    %4164 = vdwg.mxu0
    %4165 = vmatprep.subr.bf16.mxu0 %v2304
    %4166 = vmatpush1.bf16.msra.mxu0 %v2303
    %4167 = vmatprep.subr.bf16.mxu0 %v2356
    %4168 = vmatpush1.bf16.msra.mxu0 %v2355
    %4169 = vmatprep.subr.bf16.mxu0 %v2408
    %4170 = vmatpush1.bf16.msra.mxu0 %v2407
    %4171 = vmatprep.subr.bf16.mxu0 %v2460
    %4172 = vmatpush1.bf16.msra.mxu0 %v2459
    %4173 = vmatprep.subr.bf16.mxu0 %v2512
    %4174 = vmatpush1.bf16.msra.mxu0 %v2511
    %4175 = vmatprep.subr.bf16.mxu0 %v2564
    %4176 = vmatpush1.bf16.msra.mxu0 %v2563
    %4177 = vmatprep.subr.bf16.mxu0 %v2616
    %4178 = vmatpush1.bf16.msra.mxu0 %v2615
    %4179 = vmatprep.subr.bf16.mxu0 %v3167
    %4180 = vmatpush1.bf16.msra.mxu0 %v3164
    %4181 = vmatprep.subr.bf16.mxu0 0
    %4182 = vmatpush1.bf16.msra.mxu0 0
    %4183 = vmatprep.subr.bf16.mxu0 0
    %4184 = vmatpush1.bf16.msra.mxu0 0
    %4185 = vmatprep.subr.bf16.mxu0 0
    %4186 = vmatpush1.bf16.msra.mxu0 0
    %4187 = vmatprep.subr.bf16.mxu0 0
    %4188 = vmatpush1.bf16.msra.mxu0 0
    %4189 = vmatprep.subr.bf16.mxu0 0
    %4190 = vmatpush1.bf16.msra.mxu0 0
    %4191 = vmatprep.subr.bf16.mxu0 0
    %4192 = vmatpush1.bf16.msra.mxu0 0
    %4193 = vmatprep.subr.bf16.mxu0 0
    %4194 = vmatpush1.bf16.msra.mxu0 0
    %4195 = vmatprep.subr.bf16.mxu0 0
    %4196 = vmatpush1.bf16.msra.mxu0 0
    %4197 = vmatprep.mubr.bf16.mxu0 0
    %4198 = vmatmul.mubr.bf16.gmra.mrb[0].mxu0 %v3049
    %v4199 = vpop.f32.mrb[0].mxu0
    %v4200 = vadd.f32 %v984, %v4199
    %v4201 = vpop.f32.mrb[0].mxu0
    %v4202 = vadd.f32 %v988, %v4201
    %v4203 = vpop.f32.mrb[0].mxu0
    %v4204 = vadd.f32 %v984, %v4203
    %v4205 = vpop.f32.mrb[0].mxu0
    %v4206 = vadd.f32 %v988, %v4205
    %4207 = vmatprep.mubr.bf16.mxu0 0
    %4208 = vmatmul.mubr.bf16.gmra.mrb[0].mxu0 %v3052
    %v4209 = vpop.f32.mrb[0].mxu0
    %v4210 = vadd.f32 %v984, %v4209
    %v4211 = vpop.f32.mrb[0].mxu0
    %v4212 = vadd.f32 %v988, %v4211
    %v4213 = vpop.f32.mrb[0].mxu0
    %v4214 = vadd.f32 %v984, %v4213
    %v4215 = vpop.f32.mrb[0].mxu0
    %v4216 = vadd.f32 %v988, %v4215
    %4217 = vdwg.mxu0
    %4218 = vmatprep.subr.bf16.mxu0 %v2306
    %4219 = vmatpush1.bf16.msra.mxu0 %v2305
    %4220 = vmatprep.subr.bf16.mxu0 %v2358
    %4221 = vmatpush1.bf16.msra.mxu0 %v2357
    %4222 = vmatprep.subr.bf16.mxu0 %v2410
    %4223 = vmatpush1.bf16.msra.mxu0 %v2409
    %4224 = vmatprep.subr.bf16.mxu0 %v2462
    %4225 = vmatpush1.bf16.msra.mxu0 %v2461
    %4226 = vmatprep.subr.bf16.mxu0 %v2514
    %4227 = vmatpush1.bf16.msra.mxu0 %v2513
    %4228 = vmatprep.subr.bf16.mxu0 %v2566
    %4229 = vmatpush1.bf16.msra.mxu0 %v2565
    %4230 = vmatprep.subr.bf16.mxu0 %v2618
    %4231 = vmatpush1.bf16.msra.mxu0 %v2617
    %4232 = vmatprep.subr.bf16.mxu0 %v3173
    %4233 = vmatpush1.bf16.msra.mxu0 %v3170
    %4234 = vmatprep.subr.bf16.mxu0 0
    %4235 = vmatpush1.bf16.msra.mxu0 0
    %4236 = vmatprep.subr.bf16.mxu0 0
    %4237 = vmatpush1.bf16.msra.mxu0 0
    %4238 = vmatprep.subr.bf16.mxu0 0
    %4239 = vmatpush1.bf16.msra.mxu0 0
    %4240 = vmatprep.subr.bf16.mxu0 0
    %4241 = vmatpush1.bf16.msra.mxu0 0
    %4242 = vmatprep.subr.bf16.mxu0 0
    %4243 = vmatpush1.bf16.msra.mxu0 0
    %4244 = vmatprep.subr.bf16.mxu0 0
    %4245 = vmatpush1.bf16.msra.mxu0 0
    %4246 = vmatprep.subr.bf16.mxu0 0
    %4247 = vmatpush1.bf16.msra.mxu0 0
    %4248 = vmatprep.subr.bf16.mxu0 0
    %4249 = vmatpush1.bf16.msra.mxu0 0
    %4250 = vmatprep.mubr.bf16.mxu0 0
    %4251 = vmatmul.mubr.bf16.gmra.mrb[0].mxu0 %v3049
    %v4252 = vpop.f32.mrb[0].mxu0
    %v4253 = vadd.f32 %v992, %v4252
    %v4254 = vpop.f32.mrb[0].mxu0
    %v4255 = vadd.f32 %v996, %v4254
    %v4256 = vpop.f32.mrb[0].mxu0
    %v4257 = vadd.f32 %v992, %v4256
    %v4258 = vpop.f32.mrb[0].mxu0
    %v4259 = vadd.f32 %v996, %v4258
    %4260 = vmatprep.mubr.bf16.mxu0 0
    %4261 = vmatmul.mubr.bf16.gmra.mrb[0].mxu0 %v3052
    %v4262 = vpop.f32.mrb[0].mxu0
    %v4263 = vadd.f32 %v992, %v4262
    %v4264 = vpop.f32.mrb[0].mxu0
    %v4265 = vadd.f32 %v996, %v4264
    %v4266 = vpop.f32.mrb[0].mxu0
    %v4267 = vadd.f32 %v992, %v4266
    %v4268 = vpop.f32.mrb[0].mxu0
    %v4269 = vadd.f32 %v996, %v4268
    %4270 = vdwg.mxu0
    %4271 = vmatprep.subr.bf16.mxu0 %v2308
    %4272 = vmatpush1.bf16.msra.mxu0 %v2307
    %4273 = vmatprep.subr.bf16.mxu0 %v2360
    %4274 = vmatpush1.bf16.msra.mxu0 %v2359
    %4275 = vmatprep.subr.bf16.mxu0 %v2412
    %4276 = vmatpush1.bf16.msra.mxu0 %v2411
    %4277 = vmatprep.subr.bf16.mxu0 %v2464
    %4278 = vmatpush1.bf16.msra.mxu0 %v2463
    %4279 = vmatprep.subr.bf16.mxu0 %v2516
    %4280 = vmatpush1.bf16.msra.mxu0 %v2515
    %4281 = vmatprep.subr.bf16.mxu0 %v2568
    %4282 = vmatpush1.bf16.msra.mxu0 %v2567
    %4283 = vmatprep.subr.bf16.mxu0 %v2620
    %4284 = vmatpush1.bf16.msra.mxu0 %v2619
    %4285 = vmatprep.subr.bf16.mxu0 %v3179
    %4286 = vmatpush1.bf16.msra.mxu0 %v3176
    %4287 = vmatprep.subr.bf16.mxu0 0
    %4288 = vmatpush1.bf16.msra.mxu0 0
    %4289 = vmatprep.subr.bf16.mxu0 0
    %4290 = vmatpush1.bf16.msra.mxu0 0
    %4291 = vmatprep.subr.bf16.mxu0 0
    %4292 = vmatpush1.bf16.msra.mxu0 0
    %4293 = vmatprep.subr.bf16.mxu0 0
    %4294 = vmatpush1.bf16.msra.mxu0 0
    %4295 = vmatprep.subr.bf16.mxu0 0
    %4296 = vmatpush1.bf16.msra.mxu0 0
    %4297 = vmatprep.subr.bf16.mxu0 0
    %4298 = vmatpush1.bf16.msra.mxu0 0
    %4299 = vmatprep.subr.bf16.mxu0 0
    %4300 = vmatpush1.bf16.msra.mxu0 0
    %4301 = vmatprep.subr.bf16.mxu0 0
    %4302 = vmatpush1.bf16.msra.mxu0 0
    %4303 = vmatprep.mubr.bf16.mxu0 0
    %4304 = vmatmul.mubr.bf16.gmra.mrb[0].mxu0 %v3049
    %v4305 = vpop.f32.mrb[0].mxu0
    %v4306 = vadd.f32 %v1000, %v4305
    %v4307 = vpop.f32.mrb[0].mxu0
    %v4308 = vadd.f32 %v1004, %v4307
    %v4309 = vpop.f32.mrb[0].mxu0
    %v4310 = vadd.f32 %v1000, %v4309
    %v4311 = vpop.f32.mrb[0].mxu0
    %v4312 = vadd.f32 %v1004, %v4311
    %4313 = vmatprep.mubr.bf16.mxu0 0
    %4314 = vmatmul.mubr.bf16.gmra.mrb[0].mxu0 %v3052
    %v4315 = vpop.f32.mrb[0].mxu0
    %v4316 = vadd.f32 %v1000, %v4315
    %v4317 = vpop.f32.mrb[0].mxu0
    %v4318 = vadd.f32 %v1004, %v4317
    %v4319 = vpop.f32.mrb[0].mxu0
    %v4320 = vadd.f32 %v1000, %v4319
    %v4321 = vpop.f32.mrb[0].mxu0
    %v4322 = vadd.f32 %v1004, %v4321
    %4323 = vdwg.mxu0
    %4324 = vmatprep.subr.bf16.mxu0 %v2310
    %4325 = vmatpush1.bf16.msra.mxu0 %v2309
    %4326 = vmatprep.subr.bf16.mxu0 %v2362
    %4327 = vmatpush1.bf16.msra.mxu0 %v2361
    %4328 = vmatprep.subr.bf16.mxu0 %v2414
    %4329 = vmatpush1.bf16.msra.mxu0 %v2413
    %4330 = vmatprep.subr.bf16.mxu0 %v2466
    %4331 = vmatpush1.bf16.msra.mxu0 %v2465
    %4332 = vmatprep.subr.bf16.mxu0 %v2518
    %4333 = vmatpush1.bf16.msra.mxu0 %v2517
    %4334 = vmatprep.subr.bf16.mxu0 %v2570
    %4335 = vmatpush1.bf16.msra.mxu0 %v2569
    %4336 = vmatprep.subr.bf16.mxu0 %v2622
    %4337 = vmatpush1.bf16.msra.mxu0 %v2621
    %4338 = vmatprep.subr.bf16.mxu0 %v3185
    %4339 = vmatpush1.bf16.msra.mxu0 %v3182
    %4340 = vmatprep.subr.bf16.mxu0 0
    %4341 = vmatpush1.bf16.msra.mxu0 0
    %4342 = vmatprep.subr.bf16.mxu0 0
    %4343 = vmatpush1.bf16.msra.mxu0 0
    %4344 = vmatprep.subr.bf16.mxu0 0
    %4345 = vmatpush1.bf16.msra.mxu0 0
    %4346 = vmatprep.subr.bf16.mxu0 0
    %4347 = vmatpush1.bf16.msra.mxu0 0
    %4348 = vmatprep.subr.bf16.mxu0 0
    %4349 = vmatpush1.bf16.msra.mxu0 0
    %4350 = vmatprep.subr.bf16.mxu0 0
    %4351 = vmatpush1.bf16.msra.mxu0 0
    %4352 = vmatprep.subr.bf16.mxu0 0
    %4353 = vmatpush1.bf16.msra.mxu0 0
    %4354 = vmatprep.subr.bf16.mxu0 0
    %4355 = vmatpush1.bf16.msra.mxu0 0
    %4356 = vmatprep.mubr.bf16.mxu0 0
    %4357 = vmatmul.mubr.bf16.gmra.mrb[0].mxu0 %v3049
    %v4358 = vpop.f32.mrb[0].mxu0
    %v4359 = vadd.f32 %v1008, %v4358
    %v4360 = vpop.f32.mrb[0].mxu0
    %v4361 = vadd.f32 %v1012, %v4360
    %v4362 = vpop.f32.mrb[0].mxu0
    %v4363 = vadd.f32 %v1008, %v4362
    %v4364 = vpop.f32.mrb[0].mxu0
    %v4365 = vadd.f32 %v1012, %v4364
    %4366 = vmatprep.mubr.bf16.mxu0 0
    %4367 = vmatmul.mubr.bf16.gmra.mrb[0].mxu0 %v3052
    %v4368 = vpop.f32.mrb[0].mxu0
    %v4369 = vadd.f32 %v1008, %v4368
    %v4370 = vpop.f32.mrb[0].mxu0
    %v4371 = vadd.f32 %v1012, %v4370
    %v4372 = vpop.f32.mrb[0].mxu0
    %v4373 = vadd.f32 %v1008, %v4372
    %v4374 = vpop.f32.mrb[0].mxu0
    %v4375 = vadd.f32 %v1012, %v4374
    %4376 = vdwg.mxu0
    %4377 = vmatprep.subr.bf16.mxu0 %v2312
    %4378 = vmatpush1.bf16.msra.mxu0 %v2311
    %4379 = vmatprep.subr.bf16.mxu0 %v2364
    %4380 = vmatpush1.bf16.msra.mxu0 %v2363
    %4381 = vmatprep.subr.bf16.mxu0 %v2416
    %4382 = vmatpush1.bf16.msra.mxu0 %v2415
    %4383 = vmatprep.subr.bf16.mxu0 %v2468
    %4384 = vmatpush1.bf16.msra.mxu0 %v2467
    %4385 = vmatprep.subr.bf16.mxu0 %v2520
    %4386 = vmatpush1.bf16.msra.mxu0 %v2519
    %4387 = vmatprep.subr.bf16.mxu0 %v2572
    %4388 = vmatpush1.bf16.msra.mxu0 %v2571
    %4389 = vmatprep.subr.bf16.mxu0 %v2624
    %4390 = vmatpush1.bf16.msra.mxu0 %v2623
    %4391 = vmatprep.subr.bf16.mxu0 %v3191
    %4392 = vmatpush1.bf16.msra.mxu0 %v3188
    %4393 = vmatprep.subr.bf16.mxu0 0
    %4394 = vmatpush1.bf16.msra.mxu0 0
    %4395 = vmatprep.subr.bf16.mxu0 0
    %4396 = vmatpush1.bf16.msra.mxu0 0
    %4397 = vmatprep.subr.bf16.mxu0 0
    %4398 = vmatpush1.bf16.msra.mxu0 0
    %4399 = vmatprep.subr.bf16.mxu0 0
    %4400 = vmatpush1.bf16.msra.mxu0 0
    %4401 = vmatprep.subr.bf16.mxu0 0
    %4402 = vmatpush1.bf16.msra.mxu0 0
    %4403 = vmatprep.subr.bf16.mxu0 0
    %4404 = vmatpush1.bf16.msra.mxu0 0
    %4405 = vmatprep.subr.bf16.mxu0 0
    %4406 = vmatpush1.bf16.msra.mxu0 0
    %4407 = vmatprep.subr.bf16.mxu0 0
    %4408 = vmatpush1.bf16.msra.mxu0 0
    %4409 = vmatprep.mubr.bf16.mxu0 0
    %4410 = vmatmul.mubr.bf16.gmra.mrb[0].mxu0 %v3049
    %v4411 = vpop.f32.mrb[0].mxu0
    %v4412 = vadd.f32 %v1016, %v4411
    %v4413 = vpop.f32.mrb[0].mxu0
    %v4414 = vadd.f32 %v1020, %v4413
    %v4415 = vpop.f32.mrb[0].mxu0
    %v4416 = vadd.f32 %v1016, %v4415
    %v4417 = vpop.f32.mrb[0].mxu0
    %v4418 = vadd.f32 %v1020, %v4417
    %4419 = vmatprep.mubr.bf16.mxu0 0
    %4420 = vmatmul.mubr.bf16.gmra.mrb[0].mxu0 %v3052
    %v4421 = vpop.f32.mrb[0].mxu0
    %v4422 = vadd.f32 %v1016, %v4421
    %v4423 = vpop.f32.mrb[0].mxu0
    %v4424 = vadd.f32 %v1020, %v4423
    %v4425 = vpop.f32.mrb[0].mxu0
    %v4426 = vadd.f32 %v1016, %v4425
    %v4427 = vpop.f32.mrb[0].mxu0
    %v4428 = vadd.f32 %v1020, %v4427
    %4429 = vdwg.mxu0
    %4430 = vmatprep.subr.bf16.mxu0 %v2314
    %4431 = vmatpush1.bf16.msra.mxu0 %v2313
    %4432 = vmatprep.subr.bf16.mxu0 %v2366
    %4433 = vmatpush1.bf16.msra.mxu0 %v2365
    %4434 = vmatprep.subr.bf16.mxu0 %v2418
    %4435 = vmatpush1.bf16.msra.mxu0 %v2417
    %4436 = vmatprep.subr.bf16.mxu0 %v2470
    %4437 = vmatpush1.bf16.msra.mxu0 %v2469
    %4438 = vmatprep.subr.bf16.mxu0 %v2522
    %4439 = vmatpush1.bf16.msra.mxu0 %v2521
    %4440 = vmatprep.subr.bf16.mxu0 %v2574
    %4441 = vmatpush1.bf16.msra.mxu0 %v2573
    %4442 = vmatprep.subr.bf16.mxu0 %v2626
    %4443 = vmatpush1.bf16.msra.mxu0 %v2625
    %4444 = vmatprep.subr.bf16.mxu0 %v3197
    %4445 = vmatpush1.bf16.msra.mxu0 %v3194
    %4446 = vmatprep.subr.bf16.mxu0 0
    %4447 = vmatpush1.bf16.msra.mxu0 0
    %4448 = vmatprep.subr.bf16.mxu0 0
    %4449 = vmatpush1.bf16.msra.mxu0 0
    %4450 = vmatprep.subr.bf16.mxu0 0
    %4451 = vmatpush1.bf16.msra.mxu0 0
    %4452 = vmatprep.subr.bf16.mxu0 0
    %4453 = vmatpush1.bf16.msra.mxu0 0
    %4454 = vmatprep.subr.bf16.mxu0 0
    %4455 = vmatpush1.bf16.msra.mxu0 0
    %4456 = vmatprep.subr.bf16.mxu0 0
    %4457 = vmatpush1.bf16.msra.mxu0 0
    %4458 = vmatprep.subr.bf16.mxu0 0
    %4459 = vmatpush1.bf16.msra.mxu0 0
    %4460 = vmatprep.subr.bf16.mxu0 0
    %4461 = vmatpush1.bf16.msra.mxu0 0
    %4462 = vmatprep.mubr.bf16.mxu0 0
    %4463 = vmatmul.mubr.bf16.gmra.mrb[0].mxu0 %v3049
    %v4464 = vpop.f32.mrb[0].mxu0
    %v4465 = vadd.f32 %v1024, %v4464
    %v4466 = vpop.f32.mrb[0].mxu0
    %v4467 = vadd.f32 %v1028, %v4466
    %v4468 = vpop.f32.mrb[0].mxu0
    %v4469 = vadd.f32 %v1024, %v4468
    %v4470 = vpop.f32.mrb[0].mxu0
    %v4471 = vadd.f32 %v1028, %v4470
    %4472 = vmatprep.mubr.bf16.mxu0 0
    %4473 = vmatmul.mubr.bf16.gmra.mrb[0].mxu0 %v3052
    %v4474 = vpop.f32.mrb[0].mxu0
    %v4475 = vadd.f32 %v1024, %v4474
    %v4476 = vpop.f32.mrb[0].mxu0
    %v4477 = vadd.f32 %v1028, %v4476
    %v4478 = vpop.f32.mrb[0].mxu0
    %v4479 = vadd.f32 %v1024, %v4478
    %v4480 = vpop.f32.mrb[0].mxu0
    %v4481 = vadd.f32 %v1028, %v4480
    %4482 = vdwg.mxu0
    %4483 = vmatprep.subr.bf16.mxu0 %v2316
    %4484 = vmatpush1.bf16.msra.mxu0 %v2315
    %4485 = vmatprep.subr.bf16.mxu0 %v2368
    %4486 = vmatpush1.bf16.msra.mxu0 %v2367
    %4487 = vmatprep.subr.bf16.mxu0 %v2420
    %4488 = vmatpush1.bf16.msra.mxu0 %v2419
    %4489 = vmatprep.subr.bf16.mxu0 %v2472
    %4490 = vmatpush1.bf16.msra.mxu0 %v2471
    %4491 = vmatprep.subr.bf16.mxu0 %v2524
    %4492 = vmatpush1.bf16.msra.mxu0 %v2523
    %4493 = vmatprep.subr.bf16.mxu0 %v2576
    %4494 = vmatpush1.bf16.msra.mxu0 %v2575
    %4495 = vmatprep.subr.bf16.mxu0 %v2628
    %4496 = vmatpush1.bf16.msra.mxu0 %v2627
    %4497 = vmatprep.subr.bf16.mxu0 %v3203
    %4498 = vmatpush1.bf16.msra.mxu0 %v3200
    %4499 = vmatprep.subr.bf16.mxu0 0
    %4500 = vmatpush1.bf16.msra.mxu0 0
    %4501 = vmatprep.subr.bf16.mxu0 0
    %4502 = vmatpush1.bf16.msra.mxu0 0
    %4503 = vmatprep.subr.bf16.mxu0 0
    %4504 = vmatpush1.bf16.msra.mxu0 0
    %4505 = vmatprep.subr.bf16.mxu0 0
    %4506 = vmatpush1.bf16.msra.mxu0 0
    %4507 = vmatprep.subr.bf16.mxu0 0
    %4508 = vmatpush1.bf16.msra.mxu0 0
    %4509 = vmatprep.subr.bf16.mxu0 0
    %4510 = vmatpush1.bf16.msra.mxu0 0
    %4511 = vmatprep.subr.bf16.mxu0 0
    %4512 = vmatpush1.bf16.msra.mxu0 0
    %4513 = vmatprep.subr.bf16.mxu0 0
    %4514 = vmatpush1.bf16.msra.mxu0 0
    %4515 = vmatprep.mubr.bf16.mxu0 0
    %4516 = vmatmul.mubr.bf16.gmra.mrb[0].mxu0 %v3049
    %v4517 = vpop.f32.mrb[0].mxu0
    %v4518 = vadd.f32 %v1032, %v4517
    %v4519 = vpop.f32.mrb[0].mxu0
    %v4520 = vadd.f32 %v1036, %v4519
    %v4521 = vpop.f32.mrb[0].mxu0
    %v4522 = vadd.f32 %v1032, %v4521
    %v4523 = vpop.f32.mrb[0].mxu0
    %v4524 = vadd.f32 %v1036, %v4523
    %4525 = vmatprep.mubr.bf16.mxu0 0
    %4526 = vmatmul.mubr.bf16.gmra.mrb[0].mxu0 %v3052
    %v4527 = vpop.f32.mrb[0].mxu0
    %v4528 = vadd.f32 %v1032, %v4527
    %v4529 = vpop.f32.mrb[0].mxu0
    %v4530 = vadd.f32 %v1036, %v4529
    %v4531 = vpop.f32.mrb[0].mxu0
    %v4532 = vadd.f32 %v1032, %v4531
    %v4533 = vpop.f32.mrb[0].mxu0
    %v4534 = vadd.f32 %v1036, %v4533
    %4535 = vdwg.mxu0
    %4536 = vmatprep.subr.bf16.mxu0 %v2318
    %4537 = vmatpush1.bf16.msra.mxu0 %v2317
    %4538 = vmatprep.subr.bf16.mxu0 %v2370
    %4539 = vmatpush1.bf16.msra.mxu0 %v2369
    %4540 = vmatprep.subr.bf16.mxu0 %v2422
    %4541 = vmatpush1.bf16.msra.mxu0 %v2421
    %4542 = vmatprep.subr.bf16.mxu0 %v2474
    %4543 = vmatpush1.bf16.msra.mxu0 %v2473
    %4544 = vmatprep.subr.bf16.mxu0 %v2526
    %4545 = vmatpush1.bf16.msra.mxu0 %v2525
    %4546 = vmatprep.subr.bf16.mxu0 %v2578
    %4547 = vmatpush1.bf16.msra.mxu0 %v2577
    %4548 = vmatprep.subr.bf16.mxu0 %v2630
    %4549 = vmatpush1.bf16.msra.mxu0 %v2629
    %4550 = vmatprep.subr.bf16.mxu0 %v3209
    %4551 = vmatpush1.bf16.msra.mxu0 %v3206
    %4552 = vmatprep.subr.bf16.mxu0 0
    %4553 = vmatpush1.bf16.msra.mxu0 0
    %4554 = vmatprep.subr.bf16.mxu0 0
    %4555 = vmatpush1.bf16.msra.mxu0 0
    %4556 = vmatprep.subr.bf16.mxu0 0
    %4557 = vmatpush1.bf16.msra.mxu0 0
    %4558 = vmatprep.subr.bf16.mxu0 0
    %4559 = vmatpush1.bf16.msra.mxu0 0
    %4560 = vmatprep.subr.bf16.mxu0 0
    %4561 = vmatpush1.bf16.msra.mxu0 0
    %4562 = vmatprep.subr.bf16.mxu0 0
    %4563 = vmatpush1.bf16.msra.mxu0 0
    %4564 = vmatprep.subr.bf16.mxu0 0
    %4565 = vmatpush1.bf16.msra.mxu0 0
    %4566 = vmatprep.subr.bf16.mxu0 0
    %4567 = vmatpush1.bf16.msra.mxu0 0
    %4568 = vmatprep.mubr.bf16.mxu0 0
    %4569 = vmatmul.mubr.bf16.gmra.mrb[0].mxu0 %v3049
    %v4570 = vpop.f32.mrb[0].mxu0
    %v4571 = vadd.f32 %v1040, %v4570
    %v4572 = vpop.f32.mrb[0].mxu0
    %v4573 = vadd.f32 %v1044, %v4572
    %v4574 = vpop.f32.mrb[0].mxu0
    %v4575 = vadd.f32 %v1040, %v4574
    %v4576 = vpop.f32.mrb[0].mxu0
    %v4577 = vadd.f32 %v1044, %v4576
    %4578 = vmatprep.mubr.bf16.mxu0 0
    %4579 = vmatmul.mubr.bf16.gmra.mrb[0].mxu0 %v3052
    %v4580 = vpop.f32.mrb[0].mxu0
    %v4581 = vadd.f32 %v1040, %v4580
    %v4582 = vpop.f32.mrb[0].mxu0
    %v4583 = vadd.f32 %v1044, %v4582
    %v4584 = vpop.f32.mrb[0].mxu0
    %v4585 = vadd.f32 %v1040, %v4584
    %v4586 = vpop.f32.mrb[0].mxu0
    %v4587 = vadd.f32 %v1044, %v4586
    %4588 = vdwg.mxu0
    %v4589 = vmax.f32 %v3246, %v3248
    %v4590 = vmax.f32 %v4589, %v3299
    %v4591 = vmax.f32 %v4590, %v3301
    %v4592 = vmax.f32 %v4591, %v3352
    %v4593 = vmax.f32 %v4592, %v3354
    %v4594 = vmax.f32 %v4593, %v3405
    %v4595 = vmax.f32 %v4594, %v3407
    %v4596 = vmax.f32 %v4595, %v3458
    %v4597 = vmax.f32 %v4596, %v3460
    %v4598 = vmax.f32 %v4597, %v3511
    %v4599 = vmax.f32 %v4598, %v3513
    %v4600 = vmax.f32 %v4599, %v3564
    %v4601 = vmax.f32 %v4600, %v3566
    %v4602 = vmax.f32 %v4601, %v3617
    %v4603 = vmax.f32 %v4602, %v3619
    %v4604 = vmax.f32 %v4603, %v3670
    %v4605 = vmax.f32 %v4604, %v3672
    %v4606 = vmax.f32 %v4605, %v3723
    %v4607 = vmax.f32 %v4606, %v3725
    %v4608 = vmax.f32 %v4607, %v3776
    %v4609 = vmax.f32 %v4608, %v3778
    %v4610 = vmax.f32 %v4609, %v3829
    %v4611 = vmax.f32 %v4610, %v3831
    %v4612 = vmax.f32 %v4611, %v3882
    %v4613 = vmax.f32 %v4612, %v3884
    %v4614 = vmax.f32 %v4613, %v3935
    %v4615 = vmax.f32 %v4614, %v3937
    %v4616 = vmax.f32 %v4615, %v3988
    %v4617 = vmax.f32 %v4616, %v3990
    %v4618 = vmax.f32 %v4617, %v4041
    %v4619 = vmax.f32 %v4618, %v4043
    %v4620 = vmax.f32 %v4619, %v4094
    %v4621 = vmax.f32 %v4620, %v4096
    %v4622 = vmax.f32 %v4621, %v4147
    %v4623 = vmax.f32 %v4622, %v4149
    %v4624 = vmax.f32 %v4623, %v4200
    %v4625 = vmax.f32 %v4624, %v4202
    %v4626 = vmax.f32 %v4625, %v4253
    %v4627 = vmax.f32 %v4626, %v4255
    %v4628 = vmax.f32 %v4627, %v4306
    %v4629 = vmax.f32 %v4628, %v4308
    %v4630 = vmax.f32 %v4629, %v4359
    %v4631 = vmax.f32 %v4630, %v4361
    %v4632 = vmax.f32 %v4631, %v4412
    %v4633 = vmax.f32 %v4632, %v4414
    %v4634 = vmax.f32 %v4633, %v4465
    %v4635 = vmax.f32 %v4634, %v4467
    %v4636 = vmax.f32 %v4635, %v4518
    %v4637 = vmax.f32 %v4636, %v4520
    %v4638 = vmax.f32 %v4637, %v4571
    %v4639 = vmax.f32 %v4638, %v4573
    %4640 = vmax.xlane.f32.xlu0 %v4639
    %v4641 = vpop.xlane.xlu0 %4640
    %v4642 = vmax.f32 %v3250, %v3252
    %v4643 = vmax.f32 %v4642, %v3303
    %v4644 = vmax.f32 %v4643, %v3305
    %v4645 = vmax.f32 %v4644, %v3356
    %v4646 = vmax.f32 %v4645, %v3358
    %v4647 = vmax.f32 %v4646, %v3409
    %v4648 = vmax.f32 %v4647, %v3411
    %v4649 = vmax.f32 %v4648, %v3462
    %v4650 = vmax.f32 %v4649, %v3464
    %v4651 = vmax.f32 %v4650, %v3515
    %v4652 = vmax.f32 %v4651, %v3517
    %v4653 = vmax.f32 %v4652, %v3568
    %v4654 = vmax.f32 %v4653, %v3570
    %v4655 = vmax.f32 %v4654, %v3621
    %v4656 = vmax.f32 %v4655, %v3623
    %v4657 = vmax.f32 %v4656, %v3674
    %v4658 = vmax.f32 %v4657, %v3676
    %v4659 = vmax.f32 %v4658, %v3727
    %v4660 = vmax.f32 %v4659, %v3729
    %v4661 = vmax.f32 %v4660, %v3780
    %v4662 = vmax.f32 %v4661, %v3782
    %v4663 = vmax.f32 %v4662, %v3833
    %v4664 = vmax.f32 %v4663, %v3835
    %v4665 = vmax.f32 %v4664, %v3886
    %v4666 = vmax.f32 %v4665, %v3888
    %v4667 = vmax.f32 %v4666, %v3939
    %v4668 = vmax.f32 %v4667, %v3941
    %v4669 = vmax.f32 %v4668, %v3992
    %v4670 = vmax.f32 %v4669, %v3994
    %v4671 = vmax.f32 %v4670, %v4045
    %v4672 = vmax.f32 %v4671, %v4047
    %v4673 = vmax.f32 %v4672, %v4098
    %v4674 = vmax.f32 %v4673, %v4100
    %v4675 = vmax.f32 %v4674, %v4151
    %v4676 = vmax.f32 %v4675, %v4153
    %v4677 = vmax.f32 %v4676, %v4204
    %v4678 = vmax.f32 %v4677, %v4206
    %v4679 = vmax.f32 %v4678, %v4257
    %v4680 = vmax.f32 %v4679, %v4259
    %v4681 = vmax.f32 %v4680, %v4310
    %v4682 = vmax.f32 %v4681, %v4312
    %v4683 = vmax.f32 %v4682, %v4363
    %v4684 = vmax.f32 %v4683, %v4365
    %v4685 = vmax.f32 %v4684, %v4416
    %v4686 = vmax.f32 %v4685, %v4418
    %v4687 = vmax.f32 %v4686, %v4469
    %v4688 = vmax.f32 %v4687, %v4471
    %v4689 = vmax.f32 %v4688, %v4522
    %v4690 = vmax.f32 %v4689, %v4524
    %v4691 = vmax.f32 %v4690, %v4575
    %v4692 = vmax.f32 %v4691, %v4577
    %4693 = vmax.xlane.f32.xlu0 %v4692
    %v4694 = vpop.xlane.xlu0 %4693
    %v4695 = vmax.f32 %v3256, %v3258
    %v4696 = vmax.f32 %v4695, %v3309
    %v4697 = vmax.f32 %v4696, %v3311
    %v4698 = vmax.f32 %v4697, %v3362
    %v4699 = vmax.f32 %v4698, %v3364
    %v4700 = vmax.f32 %v4699, %v3415
    %v4701 = vmax.f32 %v4700, %v3417
    %v4702 = vmax.f32 %v4701, %v3468
    %v4703 = vmax.f32 %v4702, %v3470
    %v4704 = vmax.f32 %v4703, %v3521
    %v4705 = vmax.f32 %v4704, %v3523
    %v4706 = vmax.f32 %v4705, %v3574
    %v4707 = vmax.f32 %v4706, %v3576
    %v4708 = vmax.f32 %v4707, %v3627
    %v4709 = vmax.f32 %v4708, %v3629
    %v4710 = vmax.f32 %v4709, %v3680
    %v4711 = vmax.f32 %v4710, %v3682
    %v4712 = vmax.f32 %v4711, %v3733
    %v4713 = vmax.f32 %v4712, %v3735
    %v4714 = vmax.f32 %v4713, %v3786
    %v4715 = vmax.f32 %v4714, %v3788
    %v4716 = vmax.f32 %v4715, %v3839
    %v4717 = vmax.f32 %v4716, %v3841
    %v4718 = vmax.f32 %v4717, %v3892
    %v4719 = vmax.f32 %v4718, %v3894
    %v4720 = vmax.f32 %v4719, %v3945
    %v4721 = vmax.f32 %v4720, %v3947
    %v4722 = vmax.f32 %v4721, %v3998
    %v4723 = vmax.f32 %v4722, %v4000
    %v4724 = vmax.f32 %v4723, %v4051
    %v4725 = vmax.f32 %v4724, %v4053
    %v4726 = vmax.f32 %v4725, %v4104
    %v4727 = vmax.f32 %v4726, %v4106
    %v4728 = vmax.f32 %v4727, %v4157
    %v4729 = vmax.f32 %v4728, %v4159
    %v4730 = vmax.f32 %v4729, %v4210
    %v4731 = vmax.f32 %v4730, %v4212
    %v4732 = vmax.f32 %v4731, %v4263
    %v4733 = vmax.f32 %v4732, %v4265
    %v4734 = vmax.f32 %v4733, %v4316
    %v4735 = vmax.f32 %v4734, %v4318
    %v4736 = vmax.f32 %v4735, %v4369
    %v4737 = vmax.f32 %v4736, %v4371
    %v4738 = vmax.f32 %v4737, %v4422
    %v4739 = vmax.f32 %v4738, %v4424
    %v4740 = vmax.f32 %v4739, %v4475
    %v4741 = vmax.f32 %v4740, %v4477
    %v4742 = vmax.f32 %v4741, %v4528
    %v4743 = vmax.f32 %v4742, %v4530
    %v4744 = vmax.f32 %v4743, %v4581
    %v4745 = vmax.f32 %v4744, %v4583
    %4746 = vmax.xlane.f32.xlu0 %v4745
    %v4747 = vpop.xlane.xlu0 %4746
    %v4748 = vmax.f32 %v3260, %v3262
    %v4749 = vmax.f32 %v4748, %v3313
    %v4750 = vmax.f32 %v4749, %v3315
    %v4751 = vmax.f32 %v4750, %v3366
    %v4752 = vmax.f32 %v4751, %v3368
    %v4753 = vmax.f32 %v4752, %v3419
    %v4754 = vmax.f32 %v4753, %v3421
    %v4755 = vmax.f32 %v4754, %v3472
    %v4756 = vmax.f32 %v4755, %v3474
    %v4757 = vmax.f32 %v4756, %v3525
    %v4758 = vmax.f32 %v4757, %v3527
    %v4759 = vmax.f32 %v4758, %v3578
    %v4760 = vmax.f32 %v4759, %v3580
    %v4761 = vmax.f32 %v4760, %v3631
    %v4762 = vmax.f32 %v4761, %v3633
    %v4763 = vmax.f32 %v4762, %v3684
    %v4764 = vmax.f32 %v4763, %v3686
    %v4765 = vmax.f32 %v4764, %v3737
    %v4766 = vmax.f32 %v4765, %v3739
    %v4767 = vmax.f32 %v4766, %v3790
    %v4768 = vmax.f32 %v4767, %v3792
    %v4769 = vmax.f32 %v4768, %v3843
    %v4770 = vmax.f32 %v4769, %v3845
    %v4771 = vmax.f32 %v4770, %v3896
    %v4772 = vmax.f32 %v4771, %v3898
    %v4773 = vmax.f32 %v4772, %v3949
    %v4774 = vmax.f32 %v4773, %v3951
    %v4775 = vmax.f32 %v4774, %v4002
    %v4776 = vmax.f32 %v4775, %v4004
    %v4777 = vmax.f32 %v4776, %v4055
    %v4778 = vmax.f32 %v4777, %v4057
    %v4779 = vmax.f32 %v4778, %v4108
    %v4780 = vmax.f32 %v4779, %v4110
    %v4781 = vmax.f32 %v4780, %v4161
    %v4782 = vmax.f32 %v4781, %v4163
    %v4783 = vmax.f32 %v4782, %v4214
    %v4784 = vmax.f32 %v4783, %v4216
    %v4785 = vmax.f32 %v4784, %v4267
    %v4786 = vmax.f32 %v4785, %v4269
    %v4787 = vmax.f32 %v4786, %v4320
    %v4788 = vmax.f32 %v4787, %v4322
    %v4789 = vmax.f32 %v4788, %v4373
    %v4790 = vmax.f32 %v4789, %v4375
    %v4791 = vmax.f32 %v4790, %v4426
    %v4792 = vmax.f32 %v4791, %v4428
    %v4793 = vmax.f32 %v4792, %v4479
    %v4794 = vmax.f32 %v4793, %v4481
    %v4795 = vmax.f32 %v4794, %v4532
    %v4796 = vmax.f32 %v4795, %v4534
    %v4797 = vmax.f32 %v4796, %v4585
    %v4798 = vmax.f32 %v4797, %v4587
    %4799 = vmax.xlane.f32.xlu0 %v4798
    %v4800 = vpop.xlane.xlu0 %4799
    %v4801 = vsub.f32 %v3246, %v4641
    %v4802 = vsub.f32 %v3248, %v4641
    %v4803 = vsub.f32 %v3299, %v4641
    %v4804 = vsub.f32 %v3301, %v4641
    %v4805 = vsub.f32 %v3352, %v4641
    %v4806 = vsub.f32 %v3354, %v4641
    %v4807 = vsub.f32 %v3405, %v4641
    %v4808 = vsub.f32 %v3407, %v4641
    %v4809 = vsub.f32 %v3458, %v4641
    %v4810 = vsub.f32 %v3460, %v4641
    %v4811 = vsub.f32 %v3511, %v4641
    %v4812 = vsub.f32 %v3513, %v4641
    %v4813 = vsub.f32 %v3564, %v4641
    %v4814 = vsub.f32 %v3566, %v4641
    %v4815 = vsub.f32 %v3617, %v4641
    %v4816 = vsub.f32 %v3619, %v4641
    %v4817 = vsub.f32 %v3670, %v4641
    %v4818 = vsub.f32 %v3672, %v4641
    %v4819 = vsub.f32 %v3723, %v4641
    %v4820 = vsub.f32 %v3725, %v4641
    %v4821 = vsub.f32 %v3776, %v4641
    %v4822 = vsub.f32 %v3778, %v4641
    %v4823 = vsub.f32 %v3829, %v4641
    %v4824 = vsub.f32 %v3831, %v4641
    %v4825 = vsub.f32 %v3882, %v4641
    %v4826 = vsub.f32 %v3884, %v4641
    %v4827 = vsub.f32 %v3935, %v4641
    %v4828 = vsub.f32 %v3937, %v4641
    %v4829 = vsub.f32 %v3988, %v4641
    %v4830 = vsub.f32 %v3990, %v4641
    %v4831 = vsub.f32 %v4041, %v4641
    %v4832 = vsub.f32 %v4043, %v4641
    %v4833 = vsub.f32 %v4094, %v4641
    %v4834 = vsub.f32 %v4096, %v4641
    %v4835 = vsub.f32 %v4147, %v4641
    %v4836 = vsub.f32 %v4149, %v4641
    %v4837 = vsub.f32 %v4200, %v4641
    %v4838 = vsub.f32 %v4202, %v4641
    %v4839 = vsub.f32 %v4253, %v4641
    %v4840 = vsub.f32 %v4255, %v4641
    %v4841 = vsub.f32 %v4306, %v4641
    %v4842 = vsub.f32 %v4308, %v4641
    %v4843 = vsub.f32 %v4359, %v4641
    %v4844 = vsub.f32 %v4361, %v4641
    %v4845 = vsub.f32 %v4412, %v4641
    %v4846 = vsub.f32 %v4414, %v4641
    %v4847 = vsub.f32 %v4465, %v4641
    %v4848 = vsub.f32 %v4467, %v4641
    %v4849 = vsub.f32 %v4518, %v4641
    %v4850 = vsub.f32 %v4520, %v4641
    %v4851 = vsub.f32 %v4571, %v4641
    %v4852 = vsub.f32 %v4573, %v4641
    %v4853 = vsub.f32 %v3250, %v4694
    %v4854 = vsub.f32 %v3252, %v4694
    %v4855 = vsub.f32 %v3303, %v4694
    %v4856 = vsub.f32 %v3305, %v4694
    %v4857 = vsub.f32 %v3356, %v4694
    %v4858 = vsub.f32 %v3358, %v4694
    %v4859 = vsub.f32 %v3409, %v4694
    %v4860 = vsub.f32 %v3411, %v4694
    %v4861 = vsub.f32 %v3462, %v4694
    %v4862 = vsub.f32 %v3464, %v4694
    %v4863 = vsub.f32 %v3515, %v4694
    %v4864 = vsub.f32 %v3517, %v4694
    %v4865 = vsub.f32 %v3568, %v4694
    %v4866 = vsub.f32 %v3570, %v4694
    %v4867 = vsub.f32 %v3621, %v4694
    %v4868 = vsub.f32 %v3623, %v4694
    %v4869 = vsub.f32 %v3674, %v4694
    %v4870 = vsub.f32 %v3676, %v4694
    %v4871 = vsub.f32 %v3727, %v4694
    %v4872 = vsub.f32 %v3729, %v4694
    %v4873 = vsub.f32 %v3780, %v4694
    %v4874 = vsub.f32 %v3782, %v4694
    %v4875 = vsub.f32 %v3833, %v4694
    %v4876 = vsub.f32 %v3835, %v4694
    %v4877 = vsub.f32 %v3886, %v4694
    %v4878 = vsub.f32 %v3888, %v4694
    %v4879 = vsub.f32 %v3939, %v4694
    %v4880 = vsub.f32 %v3941, %v4694
    %v4881 = vsub.f32 %v3992, %v4694
    %v4882 = vsub.f32 %v3994, %v4694
    %v4883 = vsub.f32 %v4045, %v4694
    %v4884 = vsub.f32 %v4047, %v4694
    %v4885 = vsub.f32 %v4098, %v4694
    %v4886 = vsub.f32 %v4100, %v4694
    %v4887 = vsub.f32 %v4151, %v4694
    %v4888 = vsub.f32 %v4153, %v4694
    %v4889 = vsub.f32 %v4204, %v4694
    %v4890 = vsub.f32 %v4206, %v4694
    %v4891 = vsub.f32 %v4257, %v4694
    %v4892 = vsub.f32 %v4259, %v4694
    %v4893 = vsub.f32 %v4310, %v4694
    %v4894 = vsub.f32 %v4312, %v4694
    %v4895 = vsub.f32 %v4363, %v4694
    %v4896 = vsub.f32 %v4365, %v4694
    %v4897 = vsub.f32 %v4416, %v4694
    %v4898 = vsub.f32 %v4418, %v4694
    %v4899 = vsub.f32 %v4469, %v4694
    %v4900 = vsub.f32 %v4471, %v4694
    %v4901 = vsub.f32 %v4522, %v4694
    %v4902 = vsub.f32 %v4524, %v4694
    %v4903 = vsub.f32 %v4575, %v4694
    %v4904 = vsub.f32 %v4577, %v4694
    %v4905 = vsub.f32 %v3256, %v4747
    %v4906 = vsub.f32 %v3258, %v4747
    %v4907 = vsub.f32 %v3309, %v4747
    %v4908 = vsub.f32 %v3311, %v4747
    %v4909 = vsub.f32 %v3362, %v4747
    %v4910 = vsub.f32 %v3364, %v4747
    %v4911 = vsub.f32 %v3415, %v4747
    %v4912 = vsub.f32 %v3417, %v4747
    %v4913 = vsub.f32 %v3468, %v4747
    %v4914 = vsub.f32 %v3470, %v4747
    %v4915 = vsub.f32 %v3521, %v4747
    %v4916 = vsub.f32 %v3523, %v4747
    %v4917 = vsub.f32 %v3574, %v4747
    %v4918 = vsub.f32 %v3576, %v4747
    %v4919 = vsub.f32 %v3627, %v4747
    %v4920 = vsub.f32 %v3629, %v4747
    %v4921 = vsub.f32 %v3680, %v4747
    %v4922 = vsub.f32 %v3682, %v4747
    %v4923 = vsub.f32 %v3733, %v4747
    %v4924 = vsub.f32 %v3735, %v4747
    %v4925 = vsub.f32 %v3786, %v4747
    %v4926 = vsub.f32 %v3788, %v4747
    %v4927 = vsub.f32 %v3839, %v4747
    %v4928 = vsub.f32 %v3841, %v4747
    %v4929 = vsub.f32 %v3892, %v4747
    %v4930 = vsub.f32 %v3894, %v4747
    %v4931 = vsub.f32 %v3945, %v4747
    %v4932 = vsub.f32 %v3947, %v4747
    %v4933 = vsub.f32 %v3998, %v4747
    %v4934 = vsub.f32 %v4000, %v4747
    %v4935 = vsub.f32 %v4051, %v4747
    %v4936 = vsub.f32 %v4053, %v4747
    %v4937 = vsub.f32 %v4104, %v4747
    %v4938 = vsub.f32 %v4106, %v4747
    %v4939 = vsub.f32 %v4157, %v4747
    %v4940 = vsub.f32 %v4159, %v4747
    %v4941 = vsub.f32 %v4210, %v4747
    %v4942 = vsub.f32 %v4212, %v4747
    %v4943 = vsub.f32 %v4263, %v4747
    %v4944 = vsub.f32 %v4265, %v4747
    %v4945 = vsub.f32 %v4316, %v4747
    %v4946 = vsub.f32 %v4318, %v4747
    %v4947 = vsub.f32 %v4369, %v4747
    %v4948 = vsub.f32 %v4371, %v4747
    %v4949 = vsub.f32 %v4422, %v4747
    %v4950 = vsub.f32 %v4424, %v4747
    %v4951 = vsub.f32 %v4475, %v4747
    %v4952 = vsub.f32 %v4477, %v4747
    %v4953 = vsub.f32 %v4528, %v4747
    %v4954 = vsub.f32 %v4530, %v4747
    %v4955 = vsub.f32 %v4581, %v4747
    %v4956 = vsub.f32 %v4583, %v4747
    %v4957 = vsub.f32 %v3260, %v4800
    %v4958 = vsub.f32 %v3262, %v4800
    %v4959 = vsub.f32 %v3313, %v4800
    %v4960 = vsub.f32 %v3315, %v4800
    %v4961 = vsub.f32 %v3366, %v4800
    %v4962 = vsub.f32 %v3368, %v4800
    %v4963 = vsub.f32 %v3419, %v4800
    %v4964 = vsub.f32 %v3421, %v4800
    %v4965 = vsub.f32 %v3472, %v4800
    %v4966 = vsub.f32 %v3474, %v4800
    %v4967 = vsub.f32 %v3525, %v4800
    %v4968 = vsub.f32 %v3527, %v4800
    %v4969 = vsub.f32 %v3578, %v4800
    %v4970 = vsub.f32 %v3580, %v4800
    %v4971 = vsub.f32 %v3631, %v4800
    %v4972 = vsub.f32 %v3633, %v4800
    %v4973 = vsub.f32 %v3684, %v4800
    %v4974 = vsub.f32 %v3686, %v4800
    %v4975 = vsub.f32 %v3737, %v4800
    %v4976 = vsub.f32 %v3739, %v4800
    %v4977 = vsub.f32 %v3790, %v4800
    %v4978 = vsub.f32 %v3792, %v4800
    %v4979 = vsub.f32 %v3843, %v4800
    %v4980 = vsub.f32 %v3845, %v4800
    %v4981 = vsub.f32 %v3896, %v4800
    %v4982 = vsub.f32 %v3898, %v4800
    %v4983 = vsub.f32 %v3949, %v4800
    %v4984 = vsub.f32 %v3951, %v4800
    %v4985 = vsub.f32 %v4002, %v4800
    %v4986 = vsub.f32 %v4004, %v4800
    %v4987 = vsub.f32 %v4055, %v4800
    %v4988 = vsub.f32 %v4057, %v4800
    %v4989 = vsub.f32 %v4108, %v4800
    %v4990 = vsub.f32 %v4110, %v4800
    %v4991 = vsub.f32 %v4161, %v4800
    %v4992 = vsub.f32 %v4163, %v4800
    %v4993 = vsub.f32 %v4214, %v4800
    %v4994 = vsub.f32 %v4216, %v4800
    %v4995 = vsub.f32 %v4267, %v4800
    %v4996 = vsub.f32 %v4269, %v4800
    %v4997 = vsub.f32 %v4320, %v4800
    %v4998 = vsub.f32 %v4322, %v4800
    %v4999 = vsub.f32 %v4373, %v4800
    %v5000 = vsub.f32 %v4375, %v4800
    %v5001 = vsub.f32 %v4426, %v4800
    %v5002 = vsub.f32 %v4428, %v4800
    %v5003 = vsub.f32 %v4479, %v4800
    %v5004 = vsub.f32 %v4481, %v4800
    %v5005 = vsub.f32 %v4532, %v4800
    %v5006 = vsub.f32 %v4534, %v4800
    %v5007 = vsub.f32 %v4585, %v4800
    %v5008 = vsub.f32 %v4587, %v4800
    %v5009 = vmul.f32 %v4801, 1.442695
    %v5010 = vpow.pop %v5009
    %v5011 = vmul.f32 %v4802, 1.442695
    %v5012 = vpow.pop %v5011
    %v5013 = vmul.f32 %v4803, 1.442695
    %v5014 = vpow.pop %v5013
    %v5015 = vmul.f32 %v4804, 1.442695
    %v5016 = vpow.pop %v5015
    %v5017 = vmul.f32 %v4805, 1.442695
    %v5018 = vpow.pop %v5017
    %v5019 = vmul.f32 %v4806, 1.442695
    %v5020 = vpow.pop %v5019
    %v5021 = vmul.f32 %v4807, 1.442695
    %v5022 = vpow.pop %v5021
    %v5023 = vmul.f32 %v4808, 1.442695
    %v5024 = vpow.pop %v5023
    %v5025 = vmul.f32 %v4809, 1.442695
    %v5026 = vpow.pop %v5025
    %v5027 = vmul.f32 %v4810, 1.442695
    %v5028 = vpow.pop %v5027
    %v5029 = vmul.f32 %v4811, 1.442695
    %v5030 = vpow.pop %v5029
    %v5031 = vmul.f32 %v4812, 1.442695
    %v5032 = vpow.pop %v5031
    %v5033 = vmul.f32 %v4813, 1.442695
    %v5034 = vpow.pop %v5033
    %v5035 = vmul.f32 %v4814, 1.442695
    %v5036 = vpow.pop %v5035
    %v5037 = vmul.f32 %v4815, 1.442695
    %v5038 = vpow.pop %v5037
    %v5039 = vmul.f32 %v4816, 1.442695
    %v5040 = vpow.pop %v5039
    %v5041 = vmul.f32 %v4817, 1.442695
    %v5042 = vpow.pop %v5041
    %v5043 = vmul.f32 %v4818, 1.442695
    %v5044 = vpow.pop %v5043
    %v5045 = vmul.f32 %v4819, 1.442695
    %v5046 = vpow.pop %v5045
    %v5047 = vmul.f32 %v4820, 1.442695
    %v5048 = vpow.pop %v5047
    %v5049 = vmul.f32 %v4821, 1.442695
    %v5050 = vpow.pop %v5049
    %v5051 = vmul.f32 %v4822, 1.442695
    %v5052 = vpow.pop %v5051
    %v5053 = vmul.f32 %v4823, 1.442695
    %v5054 = vpow.pop %v5053
    %v5055 = vmul.f32 %v4824, 1.442695
    %v5056 = vpow.pop %v5055
    %v5057 = vmul.f32 %v4825, 1.442695
    %v5058 = vpow.pop %v5057
    %v5059 = vmul.f32 %v4826, 1.442695
    %v5060 = vpow.pop %v5059
    %v5061 = vmul.f32 %v4827, 1.442695
    %v5062 = vpow.pop %v5061
    %v5063 = vmul.f32 %v4828, 1.442695
    %v5064 = vpow.pop %v5063
    %v5065 = vmul.f32 %v4829, 1.442695
    %v5066 = vpow.pop %v5065
    %v5067 = vmul.f32 %v4830, 1.442695
    %v5068 = vpow.pop %v5067
    %v5069 = vmul.f32 %v4831, 1.442695
    %v5070 = vpow.pop %v5069
    %v5071 = vmul.f32 %v4832, 1.442695
    %v5072 = vpow.pop %v5071
    %v5073 = vmul.f32 %v4833, 1.442695
    %v5074 = vpow.pop %v5073
    %v5075 = vmul.f32 %v4834, 1.442695
    %v5076 = vpow.pop %v5075
    %v5077 = vmul.f32 %v4835, 1.442695
    %v5078 = vpow.pop %v5077
    %v5079 = vmul.f32 %v4836, 1.442695
    %v5080 = vpow.pop %v5079
    %v5081 = vmul.f32 %v4837, 1.442695
    %v5082 = vpow.pop %v5081
    %v5083 = vmul.f32 %v4838, 1.442695
    %v5084 = vpow.pop %v5083
    %v5085 = vmul.f32 %v4839, 1.442695
    %v5086 = vpow.pop %v5085
    %v5087 = vmul.f32 %v4840, 1.442695
    %v5088 = vpow.pop %v5087
    %v5089 = vmul.f32 %v4841, 1.442695
    %v5090 = vpow.pop %v5089
    %v5091 = vmul.f32 %v4842, 1.442695
    %v5092 = vpow.pop %v5091
    %v5093 = vmul.f32 %v4843, 1.442695
    %v5094 = vpow.pop %v5093
    %v5095 = vmul.f32 %v4844, 1.442695
    %v5096 = vpow.pop %v5095
    %v5097 = vmul.f32 %v4845, 1.442695
    %v5098 = vpow.pop %v5097
    %v5099 = vmul.f32 %v4846, 1.442695
    %v5100 = vpow.pop %v5099
    %v5101 = vmul.f32 %v4847, 1.442695
    %v5102 = vpow.pop %v5101
    %v5103 = vmul.f32 %v4848, 1.442695
    %v5104 = vpow.pop %v5103
    %v5105 = vmul.f32 %v4849, 1.442695
    %v5106 = vpow.pop %v5105
    %v5107 = vmul.f32 %v4850, 1.442695
    %v5108 = vpow.pop %v5107
    %v5109 = vmul.f32 %v4851, 1.442695
    %v5110 = vpow.pop %v5109
    %v5111 = vmul.f32 %v4852, 1.442695
    %v5112 = vpow.pop %v5111
    %v5113 = vmul.f32 %v4853, 1.442695
    %v5114 = vpow.pop %v5113
    %v5115 = vmul.f32 %v4854, 1.442695
    %v5116 = vpow.pop %v5115
    %v5117 = vmul.f32 %v4855, 1.442695
    %v5118 = vpow.pop %v5117
    %v5119 = vmul.f32 %v4856, 1.442695
    %v5120 = vpow.pop %v5119
    %v5121 = vmul.f32 %v4857, 1.442695
    %v5122 = vpow.pop %v5121
    %v5123 = vmul.f32 %v4858, 1.442695
    %v5124 = vpow.pop %v5123
    %v5125 = vmul.f32 %v4859, 1.442695
    %v5126 = vpow.pop %v5125
    %v5127 = vmul.f32 %v4860, 1.442695
    %v5128 = vpow.pop %v5127
    %v5129 = vmul.f32 %v4861, 1.442695
    %v5130 = vpow.pop %v5129
    %v5131 = vmul.f32 %v4862, 1.442695
    %v5132 = vpow.pop %v5131
    %v5133 = vmul.f32 %v4863, 1.442695
    %v5134 = vpow.pop %v5133
    %v5135 = vmul.f32 %v4864, 1.442695
    %v5136 = vpow.pop %v5135
    %v5137 = vmul.f32 %v4865, 1.442695
    %v5138 = vpow.pop %v5137
    %v5139 = vmul.f32 %v4866, 1.442695
    %v5140 = vpow.pop %v5139
    %v5141 = vmul.f32 %v4867, 1.442695
    %v5142 = vpow.pop %v5141
    %v5143 = vmul.f32 %v4868, 1.442695
    %v5144 = vpow.pop %v5143
    %v5145 = vmul.f32 %v4869, 1.442695
    %v5146 = vpow.pop %v5145
    %v5147 = vmul.f32 %v4870, 1.442695
    %v5148 = vpow.pop %v5147
    %v5149 = vmul.f32 %v4871, 1.442695
    %v5150 = vpow.pop %v5149
    %v5151 = vmul.f32 %v4872, 1.442695
    %v5152 = vpow.pop %v5151
    %v5153 = vmul.f32 %v4873, 1.442695
    %v5154 = vpow.pop %v5153
    %v5155 = vmul.f32 %v4874, 1.442695
    %v5156 = vpow.pop %v5155
    %v5157 = vmul.f32 %v4875, 1.442695
    %v5158 = vpow.pop %v5157
    %v5159 = vmul.f32 %v4876, 1.442695
    %v5160 = vpow.pop %v5159
    %v5161 = vmul.f32 %v4877, 1.442695
    %v5162 = vpow.pop %v5161
    %v5163 = vmul.f32 %v4878, 1.442695
    %v5164 = vpow.pop %v5163
    %v5165 = vmul.f32 %v4879, 1.442695
    %v5166 = vpow.pop %v5165
    %v5167 = vmul.f32 %v4880, 1.442695
    %v5168 = vpow.pop %v5167
    %v5169 = vmul.f32 %v4881, 1.442695
    %v5170 = vpow.pop %v5169
    %v5171 = vmul.f32 %v4882, 1.442695
    %v5172 = vpow.pop %v5171
    %v5173 = vmul.f32 %v4883, 1.442695
    %v5174 = vpow.pop %v5173
    %v5175 = vmul.f32 %v4884, 1.442695
    %v5176 = vpow.pop %v5175
    %v5177 = vmul.f32 %v4885, 1.442695
    %v5178 = vpow.pop %v5177
    %v5179 = vmul.f32 %v4886, 1.442695
    %v5180 = vpow.pop %v5179
    %v5181 = vmul.f32 %v4887, 1.442695
    %v5182 = vpow.pop %v5181
    %v5183 = vmul.f32 %v4888, 1.442695
    %v5184 = vpow.pop %v5183
    %v5185 = vmul.f32 %v4889, 1.442695
    %v5186 = vpow.pop %v5185
    %v5187 = vmul.f32 %v4890, 1.442695
    %v5188 = vpow.pop %v5187
    %v5189 = vmul.f32 %v4891, 1.442695
    %v5190 = vpow.pop %v5189
    %v5191 = vmul.f32 %v4892, 1.442695
    %v5192 = vpow.pop %v5191
    %v5193 = vmul.f32 %v4893, 1.442695
    %v5194 = vpow.pop %v5193
    %v5195 = vmul.f32 %v4894, 1.442695
    %v5196 = vpow.pop %v5195
    %v5197 = vmul.f32 %v4895, 1.442695
    %v5198 = vpow.pop %v5197
    %v5199 = vmul.f32 %v4896, 1.442695
    %v5200 = vpow.pop %v5199
    %v5201 = vmul.f32 %v4897, 1.442695
    %v5202 = vpow.pop %v5201
    %v5203 = vmul.f32 %v4898, 1.442695
    %v5204 = vpow.pop %v5203
    %v5205 = vmul.f32 %v4899, 1.442695
    %v5206 = vpow.pop %v5205
    %v5207 = vmul.f32 %v4900, 1.442695
    %v5208 = vpow.pop %v5207
    %v5209 = vmul.f32 %v4901, 1.442695
    %v5210 = vpow.pop %v5209
    %v5211 = vmul.f32 %v4902, 1.442695
    %v5212 = vpow.pop %v5211
    %v5213 = vmul.f32 %v4903, 1.442695
    %v5214 = vpow.pop %v5213
    %v5215 = vmul.f32 %v4904, 1.442695
    %v5216 = vpow.pop %v5215
    %v5217 = vmul.f32 %v4905, 1.442695
    %v5218 = vpow.pop %v5217
    %v5219 = vmul.f32 %v4906, 1.442695
    %v5220 = vpow.pop %v5219
    %v5221 = vmul.f32 %v4907, 1.442695
    %v5222 = vpow.pop %v5221
    %v5223 = vmul.f32 %v4908, 1.442695
    %v5224 = vpow.pop %v5223
    %v5225 = vmul.f32 %v4909, 1.442695
    %v5226 = vpow.pop %v5225
    %v5227 = vmul.f32 %v4910, 1.442695
    %v5228 = vpow.pop %v5227
    %v5229 = vmul.f32 %v4911, 1.442695
    %v5230 = vpow.pop %v5229
    %v5231 = vmul.f32 %v4912, 1.442695
    %v5232 = vpow.pop %v5231
    %v5233 = vmul.f32 %v4913, 1.442695
    %v5234 = vpow.pop %v5233
    %v5235 = vmul.f32 %v4914, 1.442695
    %v5236 = vpow.pop %v5235
    %v5237 = vmul.f32 %v4915, 1.442695
    %v5238 = vpow.pop %v5237
    %v5239 = vmul.f32 %v4916, 1.442695
    %v5240 = vpow.pop %v5239
    %v5241 = vmul.f32 %v4917, 1.442695
    %v5242 = vpow.pop %v5241
    %v5243 = vmul.f32 %v4918, 1.442695
    %v5244 = vpow.pop %v5243
    %v5245 = vmul.f32 %v4919, 1.442695
    %v5246 = vpow.pop %v5245
    %v5247 = vmul.f32 %v4920, 1.442695
    %v5248 = vpow.pop %v5247
    %v5249 = vmul.f32 %v4921, 1.442695
    %v5250 = vpow.pop %v5249
    %v5251 = vmul.f32 %v4922, 1.442695
    %v5252 = vpow.pop %v5251
    %v5253 = vmul.f32 %v4923, 1.442695
    %v5254 = vpow.pop %v5253
    %v5255 = vmul.f32 %v4924, 1.442695
    %v5256 = vpow.pop %v5255
    %v5257 = vmul.f32 %v4925, 1.442695
    %v5258 = vpow.pop %v5257
    %v5259 = vmul.f32 %v4926, 1.442695
    %v5260 = vpow.pop %v5259
    %v5261 = vmul.f32 %v4927, 1.442695
    %v5262 = vpow.pop %v5261
    %v5263 = vmul.f32 %v4928, 1.442695
    %v5264 = vpow.pop %v5263
    %v5265 = vmul.f32 %v4929, 1.442695
    %v5266 = vpow.pop %v5265
    %v5267 = vmul.f32 %v4930, 1.442695
    %v5268 = vpow.pop %v5267
    %v5269 = vmul.f32 %v4931, 1.442695
    %v5270 = vpow.pop %v5269
    %v5271 = vmul.f32 %v4932, 1.442695
    %v5272 = vpow.pop %v5271
    %v5273 = vmul.f32 %v4933, 1.442695
    %v5274 = vpow.pop %v5273
    %v5275 = vmul.f32 %v4934, 1.442695
    %v5276 = vpow.pop %v5275
    %v5277 = vmul.f32 %v4935, 1.442695
    %v5278 = vpow.pop %v5277
    %v5279 = vmul.f32 %v4936, 1.442695
    %v5280 = vpow.pop %v5279
    %v5281 = vmul.f32 %v4937, 1.442695
    %v5282 = vpow.pop %v5281
    %v5283 = vmul.f32 %v4938, 1.442695
    %v5284 = vpow.pop %v5283
    %v5285 = vmul.f32 %v4939, 1.442695
    %v5286 = vpow.pop %v5285
    %v5287 = vmul.f32 %v4940, 1.442695
    %v5288 = vpow.pop %v5287
    %v5289 = vmul.f32 %v4941, 1.442695
    %v5290 = vpow.pop %v5289
    %v5291 = vmul.f32 %v4942, 1.442695
    %v5292 = vpow.pop %v5291
    %v5293 = vmul.f32 %v4943, 1.442695
    %v5294 = vpow.pop %v5293
    %v5295 = vmul.f32 %v4944, 1.442695
    %v5296 = vpow.pop %v5295
    %v5297 = vmul.f32 %v4945, 1.442695
    %v5298 = vpow.pop %v5297
    %v5299 = vmul.f32 %v4946, 1.442695
    %v5300 = vpow.pop %v5299
    %v5301 = vmul.f32 %v4947, 1.442695
    %v5302 = vpow.pop %v5301
    %v5303 = vmul.f32 %v4948, 1.442695
    %v5304 = vpow.pop %v5303
    %v5305 = vmul.f32 %v4949, 1.442695
    %v5306 = vpow.pop %v5305
    %v5307 = vmul.f32 %v4950, 1.442695
    %v5308 = vpow.pop %v5307
    %v5309 = vmul.f32 %v4951, 1.442695
    %v5310 = vpow.pop %v5309
    %v5311 = vmul.f32 %v4952, 1.442695
    %v5312 = vpow.pop %v5311
    %v5313 = vmul.f32 %v4953, 1.442695
    %v5314 = vpow.pop %v5313
    %v5315 = vmul.f32 %v4954, 1.442695
    %v5316 = vpow.pop %v5315
    %v5317 = vmul.f32 %v4955, 1.442695
    %v5318 = vpow.pop %v5317
    %v5319 = vmul.f32 %v4956, 1.442695
    %v5320 = vpow.pop %v5319
    %v5321 = vmul.f32 %v4957, 1.442695
    %v5322 = vpow.pop %v5321
    %v5323 = vmul.f32 %v4958, 1.442695
    %v5324 = vpow.pop %v5323
    %v5325 = vmul.f32 %v4959, 1.442695
    %v5326 = vpow.pop %v5325
    %v5327 = vmul.f32 %v4960, 1.442695
    %v5328 = vpow.pop %v5327
    %v5329 = vmul.f32 %v4961, 1.442695
    %v5330 = vpow.pop %v5329
    %v5331 = vmul.f32 %v4962, 1.442695
    %v5332 = vpow.pop %v5331
    %v5333 = vmul.f32 %v4963, 1.442695
    %v5334 = vpow.pop %v5333
    %v5335 = vmul.f32 %v4964, 1.442695
    %v5336 = vpow.pop %v5335
    %v5337 = vmul.f32 %v4965, 1.442695
    %v5338 = vpow.pop %v5337
    %v5339 = vmul.f32 %v4966, 1.442695
    %v5340 = vpow.pop %v5339
    %v5341 = vmul.f32 %v4967, 1.442695
    %v5342 = vpow.pop %v5341
    %v5343 = vmul.f32 %v4968, 1.442695
    %v5344 = vpow.pop %v5343
    %v5345 = vmul.f32 %v4969, 1.442695
    %v5346 = vpow.pop %v5345
    %v5347 = vmul.f32 %v4970, 1.442695
    %v5348 = vpow.pop %v5347
    %v5349 = vmul.f32 %v4971, 1.442695
    %v5350 = vpow.pop %v5349
    %v5351 = vmul.f32 %v4972, 1.442695
    %v5352 = vpow.pop %v5351
    %v5353 = vmul.f32 %v4973, 1.442695
    %v5354 = vpow.pop %v5353
    %v5355 = vmul.f32 %v4974, 1.442695
    %v5356 = vpow.pop %v5355
    %v5357 = vmul.f32 %v4975, 1.442695
    %v5358 = vpow.pop %v5357
    %v5359 = vmul.f32 %v4976, 1.442695
    %v5360 = vpow.pop %v5359
    %v5361 = vmul.f32 %v4977, 1.442695
    %v5362 = vpow.pop %v5361
    %v5363 = vmul.f32 %v4978, 1.442695
    %v5364 = vpow.pop %v5363
    %v5365 = vmul.f32 %v4979, 1.442695
    %v5366 = vpow.pop %v5365
    %v5367 = vmul.f32 %v4980, 1.442695
    %v5368 = vpow.pop %v5367
    %v5369 = vmul.f32 %v4981, 1.442695
    %v5370 = vpow.pop %v5369
    %v5371 = vmul.f32 %v4982, 1.442695
    %v5372 = vpow.pop %v5371
    %v5373 = vmul.f32 %v4983, 1.442695
    %v5374 = vpow.pop %v5373
    %v5375 = vmul.f32 %v4984, 1.442695
    %v5376 = vpow.pop %v5375
    %v5377 = vmul.f32 %v4985, 1.442695
    %v5378 = vpow.pop %v5377
    %v5379 = vmul.f32 %v4986, 1.442695
    %v5380 = vpow.pop %v5379
    %v5381 = vmul.f32 %v4987, 1.442695
    %v5382 = vpow.pop %v5381
    %v5383 = vmul.f32 %v4988, 1.442695
    %v5384 = vpow.pop %v5383
    %v5385 = vmul.f32 %v4989, 1.442695
    %v5386 = vpow.pop %v5385
    %v5387 = vmul.f32 %v4990, 1.442695
    %v5388 = vpow.pop %v5387
    %v5389 = vmul.f32 %v4991, 1.442695
    %v5390 = vpow.pop %v5389
    %v5391 = vmul.f32 %v4992, 1.442695
    %v5392 = vpow.pop %v5391
    %v5393 = vmul.f32 %v4993, 1.442695
    %v5394 = vpow.pop %v5393
    %v5395 = vmul.f32 %v4994, 1.442695
    %v5396 = vpow.pop %v5395
    %v5397 = vmul.f32 %v4995, 1.442695
    %v5398 = vpow.pop %v5397
    %v5399 = vmul.f32 %v4996, 1.442695
    %v5400 = vpow.pop %v5399
    %v5401 = vmul.f32 %v4997, 1.442695
    %v5402 = vpow.pop %v5401
    %v5403 = vmul.f32 %v4998, 1.442695
    %v5404 = vpow.pop %v5403
    %v5405 = vmul.f32 %v4999, 1.442695
    %v5406 = vpow.pop %v5405
    %v5407 = vmul.f32 %v5000, 1.442695
    %v5408 = vpow.pop %v5407
    %v5409 = vmul.f32 %v5001, 1.442695
    %v5410 = vpow.pop %v5409
    %v5411 = vmul.f32 %v5002, 1.442695
    %v5412 = vpow.pop %v5411
    %v5413 = vmul.f32 %v5003, 1.442695
    %v5414 = vpow.pop %v5413
    %v5415 = vmul.f32 %v5004, 1.442695
    %v5416 = vpow.pop %v5415
    %v5417 = vmul.f32 %v5005, 1.442695
    %v5418 = vpow.pop %v5417
    %v5419 = vmul.f32 %v5006, 1.442695
    %v5420 = vpow.pop %v5419
    %v5421 = vmul.f32 %v5007, 1.442695
    %v5422 = vpow.pop %v5421
    %v5423 = vmul.f32 %v5008, 1.442695
    %v5424 = vpow.pop %v5423
    %v5425 = vadd.f32 %v5010, %v5012
    %v5426 = vadd.f32 %v5425, %v5014
    %v5427 = vadd.f32 %v5426, %v5016
    %v5428 = vadd.f32 %v5427, %v5018
    %v5429 = vadd.f32 %v5428, %v5020
    %v5430 = vadd.f32 %v5429, %v5022
    %v5431 = vadd.f32 %v5430, %v5024
    %v5432 = vadd.f32 %v5431, %v5026
    %v5433 = vadd.f32 %v5432, %v5028
    %v5434 = vadd.f32 %v5433, %v5030
    %v5435 = vadd.f32 %v5434, %v5032
    %v5436 = vadd.f32 %v5435, %v5034
    %v5437 = vadd.f32 %v5436, %v5036
    %v5438 = vadd.f32 %v5437, %v5038
    %v5439 = vadd.f32 %v5438, %v5040
    %v5440 = vadd.f32 %v5439, %v5042
    %v5441 = vadd.f32 %v5440, %v5044
    %v5442 = vadd.f32 %v5441, %v5046
    %v5443 = vadd.f32 %v5442, %v5048
    %v5444 = vadd.f32 %v5443, %v5050
    %v5445 = vadd.f32 %v5444, %v5052
    %v5446 = vadd.f32 %v5445, %v5054
    %v5447 = vadd.f32 %v5446, %v5056
    %v5448 = vadd.f32 %v5447, %v5058
    %v5449 = vadd.f32 %v5448, %v5060
    %v5450 = vadd.f32 %v5449, %v5062
    %v5451 = vadd.f32 %v5450, %v5064
    %v5452 = vadd.f32 %v5451, %v5066
    %v5453 = vadd.f32 %v5452, %v5068
    %v5454 = vadd.f32 %v5453, %v5070
    %v5455 = vadd.f32 %v5454, %v5072
    %v5456 = vadd.f32 %v5455, %v5074
    %v5457 = vadd.f32 %v5456, %v5076
    %v5458 = vadd.f32 %v5457, %v5078
    %v5459 = vadd.f32 %v5458, %v5080
    %v5460 = vadd.f32 %v5459, %v5082
    %v5461 = vadd.f32 %v5460, %v5084
    %v5462 = vadd.f32 %v5461, %v5086
    %v5463 = vadd.f32 %v5462, %v5088
    %v5464 = vadd.f32 %v5463, %v5090
    %v5465 = vadd.f32 %v5464, %v5092
    %v5466 = vadd.f32 %v5465, %v5094
    %v5467 = vadd.f32 %v5466, %v5096
    %v5468 = vadd.f32 %v5467, %v5098
    %v5469 = vadd.f32 %v5468, %v5100
    %v5470 = vadd.f32 %v5469, %v5102
    %v5471 = vadd.f32 %v5470, %v5104
    %v5472 = vadd.f32 %v5471, %v5106
    %v5473 = vadd.f32 %v5472, %v5108
    %v5474 = vadd.f32 %v5473, %v5110
    %v5475 = vadd.f32 %v5474, %v5112
    %5476 = vadd.xlane.f32.xlu0 %v5475
    %v5477 = vpop.xlane.xlu0 %5476
    %v5478 = vadd.f32 %v5114, %v5116
    %v5479 = vadd.f32 %v5478, %v5118
    %v5480 = vadd.f32 %v5479, %v5120
    %v5481 = vadd.f32 %v5480, %v5122
    %v5482 = vadd.f32 %v5481, %v5124
    %v5483 = vadd.f32 %v5482, %v5126
    %v5484 = vadd.f32 %v5483, %v5128
    %v5485 = vadd.f32 %v5484, %v5130
    %v5486 = vadd.f32 %v5485, %v5132
    %v5487 = vadd.f32 %v5486, %v5134
    %v5488 = vadd.f32 %v5487, %v5136
    %v5489 = vadd.f32 %v5488, %v5138
    %v5490 = vadd.f32 %v5489, %v5140
    %v5491 = vadd.f32 %v5490, %v5142
    %v5492 = vadd.f32 %v5491, %v5144
    %v5493 = vadd.f32 %v5492, %v5146
    %v5494 = vadd.f32 %v5493, %v5148
    %v5495 = vadd.f32 %v5494, %v5150
    %v5496 = vadd.f32 %v5495, %v5152
    %v5497 = vadd.f32 %v5496, %v5154
    %v5498 = vadd.f32 %v5497, %v5156
    %v5499 = vadd.f32 %v5498, %v5158
    %v5500 = vadd.f32 %v5499, %v5160
    %v5501 = vadd.f32 %v5500, %v5162
    %v5502 = vadd.f32 %v5501, %v5164
    %v5503 = vadd.f32 %v5502, %v5166
    %v5504 = vadd.f32 %v5503, %v5168
    %v5505 = vadd.f32 %v5504, %v5170
    %v5506 = vadd.f32 %v5505, %v5172
    %v5507 = vadd.f32 %v5506, %v5174
    %v5508 = vadd.f32 %v5507, %v5176
    %v5509 = vadd.f32 %v5508, %v5178
    %v5510 = vadd.f32 %v5509, %v5180
    %v5511 = vadd.f32 %v5510, %v5182
    %v5512 = vadd.f32 %v5511, %v5184
    %v5513 = vadd.f32 %v5512, %v5186
    %v5514 = vadd.f32 %v5513, %v5188
    %v5515 = vadd.f32 %v5514, %v5190
    %v5516 = vadd.f32 %v5515, %v5192
    %v5517 = vadd.f32 %v5516, %v5194
    %v5518 = vadd.f32 %v5517, %v5196
    %v5519 = vadd.f32 %v5518, %v5198
    %v5520 = vadd.f32 %v5519, %v5200
    %v5521 = vadd.f32 %v5520, %v5202
    %v5522 = vadd.f32 %v5521, %v5204
    %v5523 = vadd.f32 %v5522, %v5206
    %v5524 = vadd.f32 %v5523, %v5208
    %v5525 = vadd.f32 %v5524, %v5210
    %v5526 = vadd.f32 %v5525, %v5212
    %v5527 = vadd.f32 %v5526, %v5214
    %v5528 = vadd.f32 %v5527, %v5216
    %5529 = vadd.xlane.f32.xlu0 %v5528
    %v5530 = vpop.xlane.xlu0 %5529
    %v5531 = vadd.f32 %v5218, %v5220
    %v5532 = vadd.f32 %v5531, %v5222
    %v5533 = vadd.f32 %v5532, %v5224
    %v5534 = vadd.f32 %v5533, %v5226
    %v5535 = vadd.f32 %v5534, %v5228
    %v5536 = vadd.f32 %v5535, %v5230
    %v5537 = vadd.f32 %v5536, %v5232
    %v5538 = vadd.f32 %v5537, %v5234
    %v5539 = vadd.f32 %v5538, %v5236
    %v5540 = vadd.f32 %v5539, %v5238
    %v5541 = vadd.f32 %v5540, %v5240
    %v5542 = vadd.f32 %v5541, %v5242
    %v5543 = vadd.f32 %v5542, %v5244
    %v5544 = vadd.f32 %v5543, %v5246
    %v5545 = vadd.f32 %v5544, %v5248
    %v5546 = vadd.f32 %v5545, %v5250
    %v5547 = vadd.f32 %v5546, %v5252
    %v5548 = vadd.f32 %v5547, %v5254
    %v5549 = vadd.f32 %v5548, %v5256
    %v5550 = vadd.f32 %v5549, %v5258
    %v5551 = vadd.f32 %v5550, %v5260
    %v5552 = vadd.f32 %v5551, %v5262
    %v5553 = vadd.f32 %v5552, %v5264
    %v5554 = vadd.f32 %v5553, %v5266
    %v5555 = vadd.f32 %v5554, %v5268
    %v5556 = vadd.f32 %v5555, %v5270
    %v5557 = vadd.f32 %v5556, %v5272
    %v5558 = vadd.f32 %v5557, %v5274
    %v5559 = vadd.f32 %v5558, %v5276
    %v5560 = vadd.f32 %v5559, %v5278
    %v5561 = vadd.f32 %v5560, %v5280
    %v5562 = vadd.f32 %v5561, %v5282
    %v5563 = vadd.f32 %v5562, %v5284
    %v5564 = vadd.f32 %v5563, %v5286
    %v5565 = vadd.f32 %v5564, %v5288
    %v5566 = vadd.f32 %v5565, %v5290
    %v5567 = vadd.f32 %v5566, %v5292
    %v5568 = vadd.f32 %v5567, %v5294
    %v5569 = vadd.f32 %v5568, %v5296
    %v5570 = vadd.f32 %v5569, %v5298
    %v5571 = vadd.f32 %v5570, %v5300
    %v5572 = vadd.f32 %v5571, %v5302
    %v5573 = vadd.f32 %v5572, %v5304
    %v5574 = vadd.f32 %v5573, %v5306
    %v5575 = vadd.f32 %v5574, %v5308
    %v5576 = vadd.f32 %v5575, %v5310
    %v5577 = vadd.f32 %v5576, %v5312
    %v5578 = vadd.f32 %v5577, %v5314
    %v5579 = vadd.f32 %v5578, %v5316
    %v5580 = vadd.f32 %v5579, %v5318
    %v5581 = vadd.f32 %v5580, %v5320
    %5582 = vadd.xlane.f32.xlu0 %v5581
    %v5583 = vpop.xlane.xlu0 %5582
    %v5584 = vadd.f32 %v5322, %v5324
    %v5585 = vadd.f32 %v5584, %v5326
    %v5586 = vadd.f32 %v5585, %v5328
    %v5587 = vadd.f32 %v5586, %v5330
    %v5588 = vadd.f32 %v5587, %v5332
    %v5589 = vadd.f32 %v5588, %v5334
    %v5590 = vadd.f32 %v5589, %v5336
    %v5591 = vadd.f32 %v5590, %v5338
    %v5592 = vadd.f32 %v5591, %v5340
    %v5593 = vadd.f32 %v5592, %v5342
    %v5594 = vadd.f32 %v5593, %v5344
    %v5595 = vadd.f32 %v5594, %v5346
    %v5596 = vadd.f32 %v5595, %v5348
    %v5597 = vadd.f32 %v5596, %v5350
    %v5598 = vadd.f32 %v5597, %v5352
    %v5599 = vadd.f32 %v5598, %v5354
    %v5600 = vadd.f32 %v5599, %v5356
    %v5601 = vadd.f32 %v5600, %v5358
    %v5602 = vadd.f32 %v5601, %v5360
    %v5603 = vadd.f32 %v5602, %v5362
    %v5604 = vadd.f32 %v5603, %v5364
    %v5605 = vadd.f32 %v5604, %v5366
    %v5606 = vadd.f32 %v5605, %v5368
    %v5607 = vadd.f32 %v5606, %v5370
    %v5608 = vadd.f32 %v5607, %v5372
    %v5609 = vadd.f32 %v5608, %v5374
    %v5610 = vadd.f32 %v5609, %v5376
    %v5611 = vadd.f32 %v5610, %v5378
    %v5612 = vadd.f32 %v5611, %v5380
    %v5613 = vadd.f32 %v5612, %v5382
    %v5614 = vadd.f32 %v5613, %v5384
    %v5615 = vadd.f32 %v5614, %v5386
    %v5616 = vadd.f32 %v5615, %v5388
    %v5617 = vadd.f32 %v5616, %v5390
    %v5618 = vadd.f32 %v5617, %v5392
    %v5619 = vadd.f32 %v5618, %v5394
    %v5620 = vadd.f32 %v5619, %v5396
    %v5621 = vadd.f32 %v5620, %v5398
    %v5622 = vadd.f32 %v5621, %v5400
    %v5623 = vadd.f32 %v5622, %v5402
    %v5624 = vadd.f32 %v5623, %v5404
    %v5625 = vadd.f32 %v5624, %v5406
    %v5626 = vadd.f32 %v5625, %v5408
    %v5627 = vadd.f32 %v5626, %v5410
    %v5628 = vadd.f32 %v5627, %v5412
    %v5629 = vadd.f32 %v5628, %v5414
    %v5630 = vadd.f32 %v5629, %v5416
    %v5631 = vadd.f32 %v5630, %v5418
    %v5632 = vadd.f32 %v5631, %v5420
    %v5633 = vadd.f32 %v5632, %v5422
    %v5634 = vadd.f32 %v5633, %v5424
    %5635 = vadd.xlane.f32.xlu0 %v5634
    %v5636 = vpop.xlane.xlu0 %5635
    %v5637 = vrcp.pop %v5477
    %v5638 = vrcp.pop %v5530
    %v5639 = vrcp.pop %v5583
    %v5640 = vrcp.pop %v5636
    %v5641 = vmul.f32 %v5010, %v5637
    %v5642 = vmul.f32 %v5012, %v5637
    %v5643 = vmul.f32 %v5014, %v5637
    %v5644 = vmul.f32 %v5016, %v5637
    %v5645 = vmul.f32 %v5018, %v5637
    %v5646 = vmul.f32 %v5020, %v5637
    %v5647 = vmul.f32 %v5022, %v5637
    %v5648 = vmul.f32 %v5024, %v5637
    %v5649 = vmul.f32 %v5026, %v5637
    %v5650 = vmul.f32 %v5028, %v5637
    %v5651 = vmul.f32 %v5030, %v5637
    %v5652 = vmul.f32 %v5032, %v5637
    %v5653 = vmul.f32 %v5034, %v5637
    %v5654 = vmul.f32 %v5036, %v5637
    %v5655 = vmul.f32 %v5038, %v5637
    %v5656 = vmul.f32 %v5040, %v5637
    %v5657 = vmul.f32 %v5042, %v5637
    %v5658 = vmul.f32 %v5044, %v5637
    %v5659 = vmul.f32 %v5046, %v5637
    %v5660 = vmul.f32 %v5048, %v5637
    %v5661 = vmul.f32 %v5050, %v5637
    %v5662 = vmul.f32 %v5052, %v5637
    %v5663 = vmul.f32 %v5054, %v5637
    %v5664 = vmul.f32 %v5056, %v5637
    %v5665 = vmul.f32 %v5058, %v5637
    %v5666 = vmul.f32 %v5060, %v5637
    %v5667 = vmul.f32 %v5062, %v5637
    %v5668 = vmul.f32 %v5064, %v5637
    %v5669 = vmul.f32 %v5066, %v5637
    %v5670 = vmul.f32 %v5068, %v5637
    %v5671 = vmul.f32 %v5070, %v5637
    %v5672 = vmul.f32 %v5072, %v5637
    %v5673 = vmul.f32 %v5074, %v5637
    %v5674 = vmul.f32 %v5076, %v5637
    %v5675 = vmul.f32 %v5078, %v5637
    %v5676 = vmul.f32 %v5080, %v5637
    %v5677 = vmul.f32 %v5082, %v5637
    %v5678 = vmul.f32 %v5084, %v5637
    %v5679 = vmul.f32 %v5086, %v5637
    %v5680 = vmul.f32 %v5088, %v5637
    %v5681 = vmul.f32 %v5090, %v5637
    %v5682 = vmul.f32 %v5092, %v5637
    %v5683 = vmul.f32 %v5094, %v5637
    %v5684 = vmul.f32 %v5096, %v5637
    %v5685 = vmul.f32 %v5098, %v5637
    %v5686 = vmul.f32 %v5100, %v5637
    %v5687 = vmul.f32 %v5102, %v5637
    %v5688 = vmul.f32 %v5104, %v5637
    %v5689 = vmul.f32 %v5106, %v5637
    %v5690 = vmul.f32 %v5108, %v5637
    %v5691 = vmul.f32 %v5110, %v5637
    %v5692 = vmul.f32 %v5112, %v5637
    %v5693 = vmul.f32 %v5114, %v5638
    %v5694 = vmul.f32 %v5116, %v5638
    %v5695 = vmul.f32 %v5118, %v5638
    %v5696 = vmul.f32 %v5120, %v5638
    %v5697 = vmul.f32 %v5122, %v5638
    %v5698 = vmul.f32 %v5124, %v5638
    %v5699 = vmul.f32 %v5126, %v5638
    %v5700 = vmul.f32 %v5128, %v5638
    %v5701 = vmul.f32 %v5130, %v5638
    %v5702 = vmul.f32 %v5132, %v5638
    %v5703 = vmul.f32 %v5134, %v5638
    %v5704 = vmul.f32 %v5136, %v5638
    %v5705 = vmul.f32 %v5138, %v5638
    %v5706 = vmul.f32 %v5140, %v5638
    %v5707 = vmul.f32 %v5142, %v5638
    %v5708 = vmul.f32 %v5144, %v5638
    %v5709 = vmul.f32 %v5146, %v5638
    %v5710 = vmul.f32 %v5148, %v5638
    %v5711 = vmul.f32 %v5150, %v5638
    %v5712 = vmul.f32 %v5152, %v5638
    %v5713 = vmul.f32 %v5154, %v5638
    %v5714 = vmul.f32 %v5156, %v5638
    %v5715 = vmul.f32 %v5158, %v5638
    %v5716 = vmul.f32 %v5160, %v5638
    %v5717 = vmul.f32 %v5162, %v5638
    %v5718 = vmul.f32 %v5164, %v5638
    %v5719 = vmul.f32 %v5166, %v5638
    %v5720 = vmul.f32 %v5168, %v5638
    %v5721 = vmul.f32 %v5170, %v5638
    %v5722 = vmul.f32 %v5172, %v5638
    %v5723 = vmul.f32 %v5174, %v5638
    %v5724 = vmul.f32 %v5176, %v5638
    %v5725 = vmul.f32 %v5178, %v5638
    %v5726 = vmul.f32 %v5180, %v5638
    %v5727 = vmul.f32 %v5182, %v5638
    %v5728 = vmul.f32 %v5184, %v5638
    %v5729 = vmul.f32 %v5186, %v5638
    %v5730 = vmul.f32 %v5188, %v5638
    %v5731 = vmul.f32 %v5190, %v5638
    %v5732 = vmul.f32 %v5192, %v5638
    %v5733 = vmul.f32 %v5194, %v5638
    %v5734 = vmul.f32 %v5196, %v5638
    %v5735 = vmul.f32 %v5198, %v5638
    %v5736 = vmul.f32 %v5200, %v5638
    %v5737 = vmul.f32 %v5202, %v5638
    %v5738 = vmul.f32 %v5204, %v5638
    %v5739 = vmul.f32 %v5206, %v5638
    %v5740 = vmul.f32 %v5208, %v5638
    %v5741 = vmul.f32 %v5210, %v5638
    %v5742 = vmul.f32 %v5212, %v5638
    %v5743 = vmul.f32 %v5214, %v5638
    %v5744 = vmul.f32 %v5216, %v5638
    %v5745 = vmul.f32 %v5218, %v5639
    %v5746 = vmul.f32 %v5220, %v5639
    %v5747 = vmul.f32 %v5222, %v5639
    %v5748 = vmul.f32 %v5224, %v5639
    %v5749 = vmul.f32 %v5226, %v5639
    %v5750 = vmul.f32 %v5228, %v5639
    %v5751 = vmul.f32 %v5230, %v5639
    %v5752 = vmul.f32 %v5232, %v5639
    %v5753 = vmul.f32 %v5234, %v5639
    %v5754 = vmul.f32 %v5236, %v5639
    %v5755 = vmul.f32 %v5238, %v5639
    %v5756 = vmul.f32 %v5240, %v5639
    %v5757 = vmul.f32 %v5242, %v5639
    %v5758 = vmul.f32 %v5244, %v5639
    %v5759 = vmul.f32 %v5246, %v5639
    %v5760 = vmul.f32 %v5248, %v5639
    %v5761 = vmul.f32 %v5250, %v5639
    %v5762 = vmul.f32 %v5252, %v5639
    %v5763 = vmul.f32 %v5254, %v5639
    %v5764 = vmul.f32 %v5256, %v5639
    %v5765 = vmul.f32 %v5258, %v5639
    %v5766 = vmul.f32 %v5260, %v5639
    %v5767 = vmul.f32 %v5262, %v5639
    %v5768 = vmul.f32 %v5264, %v5639
    %v5769 = vmul.f32 %v5266, %v5639
    %v5770 = vmul.f32 %v5268, %v5639
    %v5771 = vmul.f32 %v5270, %v5639
    %v5772 = vmul.f32 %v5272, %v5639
    %v5773 = vmul.f32 %v5274, %v5639
    %v5774 = vmul.f32 %v5276, %v5639
    %v5775 = vmul.f32 %v5278, %v5639
    %v5776 = vmul.f32 %v5280, %v5639
    %v5777 = vmul.f32 %v5282, %v5639
    %v5778 = vmul.f32 %v5284, %v5639
    %v5779 = vmul.f32 %v5286, %v5639
    %v5780 = vmul.f32 %v5288, %v5639
    %v5781 = vmul.f32 %v5290, %v5639
    %v5782 = vmul.f32 %v5292, %v5639
    %v5783 = vmul.f32 %v5294, %v5639
    %v5784 = vmul.f32 %v5296, %v5639
    %v5785 = vmul.f32 %v5298, %v5639
    %v5786 = vmul.f32 %v5300, %v5639
    %v5787 = vmul.f32 %v5302, %v5639
    %v5788 = vmul.f32 %v5304, %v5639
    %v5789 = vmul.f32 %v5306, %v5639
    %v5790 = vmul.f32 %v5308, %v5639
    %v5791 = vmul.f32 %v5310, %v5639
    %v5792 = vmul.f32 %v5312, %v5639
    %v5793 = vmul.f32 %v5314, %v5639
    %v5794 = vmul.f32 %v5316, %v5639
    %v5795 = vmul.f32 %v5318, %v5639
    %v5796 = vmul.f32 %v5320, %v5639
    %v5797 = vmul.f32 %v5322, %v5640
    %v5798 = vmul.f32 %v5324, %v5640
    %v5799 = vmul.f32 %v5326, %v5640
    %v5800 = vmul.f32 %v5328, %v5640
    %v5801 = vmul.f32 %v5330, %v5640
    %v5802 = vmul.f32 %v5332, %v5640
    %v5803 = vmul.f32 %v5334, %v5640
    %v5804 = vmul.f32 %v5336, %v5640
    %v5805 = vmul.f32 %v5338, %v5640
    %v5806 = vmul.f32 %v5340, %v5640
    %v5807 = vmul.f32 %v5342, %v5640
    %v5808 = vmul.f32 %v5344, %v5640
    %v5809 = vmul.f32 %v5346, %v5640
    %v5810 = vmul.f32 %v5348, %v5640
    %v5811 = vmul.f32 %v5350, %v5640
    %v5812 = vmul.f32 %v5352, %v5640
    %v5813 = vmul.f32 %v5354, %v5640
    %v5814 = vmul.f32 %v5356, %v5640
    %v5815 = vmul.f32 %v5358, %v5640
    %v5816 = vmul.f32 %v5360, %v5640
    %v5817 = vmul.f32 %v5362, %v5640
    %v5818 = vmul.f32 %v5364, %v5640
    %v5819 = vmul.f32 %v5366, %v5640
    %v5820 = vmul.f32 %v5368, %v5640
    %v5821 = vmul.f32 %v5370, %v5640
    %v5822 = vmul.f32 %v5372, %v5640
    %v5823 = vmul.f32 %v5374, %v5640
    %v5824 = vmul.f32 %v5376, %v5640
    %v5825 = vmul.f32 %v5378, %v5640
    %v5826 = vmul.f32 %v5380, %v5640
    %v5827 = vmul.f32 %v5382, %v5640
    %v5828 = vmul.f32 %v5384, %v5640
    %v5829 = vmul.f32 %v5386, %v5640
    %v5830 = vmul.f32 %v5388, %v5640
    %v5831 = vmul.f32 %v5390, %v5640
    %v5832 = vmul.f32 %v5392, %v5640
    %v5833 = vmul.f32 %v5394, %v5640
    %v5834 = vmul.f32 %v5396, %v5640
    %v5835 = vmul.f32 %v5398, %v5640
    %v5836 = vmul.f32 %v5400, %v5640
    %v5837 = vmul.f32 %v5402, %v5640
    %v5838 = vmul.f32 %v5404, %v5640
    %v5839 = vmul.f32 %v5406, %v5640
    %v5840 = vmul.f32 %v5408, %v5640
    %v5841 = vmul.f32 %v5410, %v5640
    %v5842 = vmul.f32 %v5412, %v5640
    %v5843 = vmul.f32 %v5414, %v5640
    %v5844 = vmul.f32 %v5416, %v5640
    %v5845 = vmul.f32 %v5418, %v5640
    %v5846 = vmul.f32 %v5420, %v5640
    %v5847 = vmul.f32 %v5422, %v5640
    %v5848 = vmul.f32 %v5424, %v5640
    %5849 = vst [vmem:[#allocation2] sm:$0xff] %v5641
    %5850 = vst [vmem:[#allocation2 + $0x8] sm:$0xff] %v5642
    %5851 = vst [vmem:[#allocation2 + $0x10] sm:$0xff] %v5643
    %5852 = vst [vmem:[#allocation2 + $0x18] sm:$0xff] %v5644
    %5853 = vst [vmem:[#allocation2 + $0x20] sm:$0xff] %v5645
    %5854 = vst [vmem:[#allocation2 + $0x28] sm:$0xff] %v5646
    %5855 = vst [vmem:[#allocation2 + $0x30] sm:$0xff] %v5647
    %5856 = vst [vmem:[#allocation2 + $0x38] sm:$0xff] %v5648
    %5857 = vst [vmem:[#allocation2 + $0x40] sm:$0xff] %v5649
    %5858 = vst [vmem:[#allocation2 + $0x48] sm:$0xff] %v5650
    %5859 = vst [vmem:[#allocation2 + $0x50] sm:$0xff] %v5651
    %5860 = vst [vmem:[#allocation2 + $0x58] sm:$0xff] %v5652
    %5861 = vst [vmem:[#allocation2 + $0x60] sm:$0xff] %v5653
    %5862 = vst [vmem:[#allocation2 + $0x68] sm:$0xff] %v5654
    %5863 = vst [vmem:[#allocation2 + $0x70] sm:$0xff] %v5655
    %5864 = vst [vmem:[#allocation2 + $0x78] sm:$0xff] %v5656
    %5865 = vst [vmem:[#allocation2 + $0x80] sm:$0xff] %v5657
    %5866 = vst [vmem:[#allocation2 + $0x88] sm:$0xff] %v5658
    %5867 = vst [vmem:[#allocation2 + $0x90] sm:$0xff] %v5659
    %5868 = vst [vmem:[#allocation2 + $0x98] sm:$0xff] %v5660
    %5869 = vst [vmem:[#allocation2 + $0xa0] sm:$0xff] %v5661
    %5870 = vst [vmem:[#allocation2 + $0xa8] sm:$0xff] %v5662
    %5871 = vst [vmem:[#allocation2 + $0xb0] sm:$0xff] %v5663
    %5872 = vst [vmem:[#allocation2 + $0xb8] sm:$0xff] %v5664
    %5873 = vst [vmem:[#allocation2 + $0xc0] sm:$0xff] %v5665
    %5874 = vst [vmem:[#allocation2 + $0xc8] sm:$0xff] %v5666
    %5875 = vst [vmem:[#allocation2 + $0xd0] sm:$0xff] %v5667
    %5876 = vst [vmem:[#allocation2 + $0xd8] sm:$0xff] %v5668
    %5877 = vst [vmem:[#allocation2 + $0xe0] sm:$0xff] %v5669
    %5878 = vst [vmem:[#allocation2 + $0xe8] sm:$0xff] %v5670
    %5879 = vst [vmem:[#allocation2 + $0xf0] sm:$0xff] %v5671
    %5880 = vst [vmem:[#allocation2 + $0xf8] sm:$0xff] %v5672
    %5881 = vst [vmem:[#allocation2 + $0x100] sm:$0xff] %v5673
    %5882 = vst [vmem:[#allocation2 + $0x108] sm:$0xff] %v5674
    %5883 = vst [vmem:[#allocation2 + $0x110] sm:$0xff] %v5675
    %5884 = vst [vmem:[#allocation2 + $0x118] sm:$0xff] %v5676
    %5885 = vst [vmem:[#allocation2 + $0x120] sm:$0xff] %v5677
    %5886 = vst [vmem:[#allocation2 + $0x128] sm:$0xff] %v5678
    %5887 = vst [vmem:[#allocation2 + $0x130] sm:$0xff] %v5679
    %5888 = vst [vmem:[#allocation2 + $0x138] sm:$0xff] %v5680
    %5889 = vst [vmem:[#allocation2 + $0x140] sm:$0xff] %v5681
    %5890 = vst [vmem:[#allocation2 + $0x148] sm:$0xff] %v5682
    %5891 = vst [vmem:[#allocation2 + $0x150] sm:$0xff] %v5683
    %5892 = vst [vmem:[#allocation2 + $0x158] sm:$0xff] %v5684
    %5893 = vst [vmem:[#allocation2 + $0x160] sm:$0xff] %v5685
    %5894 = vst [vmem:[#allocation2 + $0x168] sm:$0xff] %v5686
    %5895 = vst [vmem:[#allocation2 + $0x170] sm:$0xff] %v5687
    %5896 = vst [vmem:[#allocation2 + $0x178] sm:$0xff] %v5688
    %5897 = vst [vmem:[#allocation2 + $0x180] sm:$0xff] %v5689
    %5898 = vst [vmem:[#allocation2 + $0x188] sm:$0xff] %v5690
    %5899 = vst [vmem:[#allocation2 + $0x190] sm:$0xff] %v5691
    %5900 = vst [vmem:[#allocation2 + $0x198] sm:$0xff] %v5692
    %5901 = vst [vmem:[#allocation2 + $0x1a0] sm:$0xff] %v5693
    %5902 = vst [vmem:[#allocation2 + $0x1a8] sm:$0xff] %v5694
    %5903 = vst [vmem:[#allocation2 + $0x1b0] sm:$0xff] %v5695
    %5904 = vst [vmem:[#allocation2 + $0x1b8] sm:$0xff] %v5696
    %5905 = vst [vmem:[#allocation2 + $0x1c0] sm:$0xff] %v5697
    %5906 = vst [vmem:[#allocation2 + $0x1c8] sm:$0xff] %v5698
    %5907 = vst [vmem:[#allocation2 + $0x1d0] sm:$0xff] %v5699
    %5908 = vst [vmem:[#allocation2 + $0x1d8] sm:$0xff] %v5700
    %5909 = vst [vmem:[#allocation2 + $0x1e0] sm:$0xff] %v5701
    %5910 = vst [vmem:[#allocation2 + $0x1e8] sm:$0xff] %v5702
    %5911 = vst [vmem:[#allocation2 + $0x1f0] sm:$0xff] %v5703
    %5912 = vst [vmem:[#allocation2 + $0x1f8] sm:$0xff] %v5704
    %5913 = vst [vmem:[#allocation2 + $0x200] sm:$0xff] %v5705
    %5914 = vst [vmem:[#allocation2 + $0x208] sm:$0xff] %v5706
    %5915 = vst [vmem:[#allocation2 + $0x210] sm:$0xff] %v5707
    %5916 = vst [vmem:[#allocation2 + $0x218] sm:$0xff] %v5708
    %5917 = vst [vmem:[#allocation2 + $0x220] sm:$0xff] %v5709
    %5918 = vst [vmem:[#allocation2 + $0x228] sm:$0xff] %v5710
    %5919 = vst [vmem:[#allocation2 + $0x230] sm:$0xff] %v5711
    %5920 = vst [vmem:[#allocation2 + $0x238] sm:$0xff] %v5712
    %5921 = vst [vmem:[#allocation2 + $0x240] sm:$0xff] %v5713
    %5922 = vst [vmem:[#allocation2 + $0x248] sm:$0xff] %v5714
    %5923 = vst [vmem:[#allocation2 + $0x250] sm:$0xff] %v5715
    %5924 = vst [vmem:[#allocation2 + $0x258] sm:$0xff] %v5716
    %5925 = vst [vmem:[#allocation2 + $0x260] sm:$0xff] %v5717
    %5926 = vst [vmem:[#allocation2 + $0x268] sm:$0xff] %v5718
    %5927 = vst [vmem:[#allocation2 + $0x270] sm:$0xff] %v5719
    %5928 = vst [vmem:[#allocation2 + $0x278] sm:$0xff] %v5720
    %5929 = vst [vmem:[#allocation2 + $0x280] sm:$0xff] %v5721
    %5930 = vst [vmem:[#allocation2 + $0x288] sm:$0xff] %v5722
    %5931 = vst [vmem:[#allocation2 + $0x290] sm:$0xff] %v5723
    %5932 = vst [vmem:[#allocation2 + $0x298] sm:$0xff] %v5724
    %5933 = vst [vmem:[#allocation2 + $0x2a0] sm:$0xff] %v5725
    %5934 = vst [vmem:[#allocation2 + $0x2a8] sm:$0xff] %v5726
    %5935 = vst [vmem:[#allocation2 + $0x2b0] sm:$0xff] %v5727
    %5936 = vst [vmem:[#allocation2 + $0x2b8] sm:$0xff] %v5728
    %5937 = vst [vmem:[#allocation2 + $0x2c0] sm:$0xff] %v5729
    %5938 = vst [vmem:[#allocation2 + $0x2c8] sm:$0xff] %v5730
    %5939 = vst [vmem:[#allocation2 + $0x2d0] sm:$0xff] %v5731
    %5940 = vst [vmem:[#allocation2 + $0x2d8] sm:$0xff] %v5732
    %5941 = vst [vmem:[#allocation2 + $0x2e0] sm:$0xff] %v5733
    %5942 = vst [vmem:[#allocation2 + $0x2e8] sm:$0xff] %v5734
    %5943 = vst [vmem:[#allocation2 + $0x2f0] sm:$0xff] %v5735
    %5944 = vst [vmem:[#allocation2 + $0x2f8] sm:$0xff] %v5736
    %5945 = vst [vmem:[#allocation2 + $0x300] sm:$0xff] %v5737
    %5946 = vst [vmem:[#allocation2 + $0x308] sm:$0xff] %v5738
    %5947 = vst [vmem:[#allocation2 + $0x310] sm:$0xff] %v5739
    %5948 = vst [vmem:[#allocation2 + $0x318] sm:$0xff] %v5740
    %5949 = vst [vmem:[#allocation2 + $0x320] sm:$0xff] %v5741
    %5950 = vst [vmem:[#allocation2 + $0x328] sm:$0xff] %v5742
    %5951 = vst [vmem:[#allocation2 + $0x330] sm:$0xff] %v5743
    %5952 = vst [vmem:[#allocation2 + $0x338] sm:$0xff] %v5744
    %5953 = vst [vmem:[#allocation2 + $0x340] sm:$0xff] %v5745
    %5954 = vst [vmem:[#allocation2 + $0x348] sm:$0xff] %v5746
    %5955 = vst [vmem:[#allocation2 + $0x350] sm:$0xff] %v5747
    %5956 = vst [vmem:[#allocation2 + $0x358] sm:$0xff] %v5748
    %5957 = vst [vmem:[#allocation2 + $0x360] sm:$0xff] %v5749
    %5958 = vst [vmem:[#allocation2 + $0x368] sm:$0xff] %v5750
    %5959 = vst [vmem:[#allocation2 + $0x370] sm:$0xff] %v5751
    %5960 = vst [vmem:[#allocation2 + $0x378] sm:$0xff] %v5752
    %5961 = vst [vmem:[#allocation2 + $0x380] sm:$0xff] %v5753
    %5962 = vst [vmem:[#allocation2 + $0x388] sm:$0xff] %v5754
    %5963 = vst [vmem:[#allocation2 + $0x390] sm:$0xff] %v5755
    %5964 = vst [vmem:[#allocation2 + $0x398] sm:$0xff] %v5756
    %5965 = vst [vmem:[#allocation2 + $0x3a0] sm:$0xff] %v5757
    %5966 = vst [vmem:[#allocation2 + $0x3a8] sm:$0xff] %v5758
    %5967 = vst [vmem:[#allocation2 + $0x3b0] sm:$0xff] %v5759
    %5968 = vst [vmem:[#allocation2 + $0x3b8] sm:$0xff] %v5760
    %5969 = vst [vmem:[#allocation2 + $0x3c0] sm:$0xff] %v5761
    %5970 = vst [vmem:[#allocation2 + $0x3c8] sm:$0xff] %v5762
    %5971 = vst [vmem:[#allocation2 + $0x3d0] sm:$0xff] %v5763
    %5972 = vst [vmem:[#allocation2 + $0x3d8] sm:$0xff] %v5764
    %5973 = vst [vmem:[#allocation2 + $0x3e0] sm:$0xff] %v5765
    %5974 = vst [vmem:[#allocation2 + $0x3e8] sm:$0xff] %v5766
    %5975 = vst [vmem:[#allocation2 + $0x3f0] sm:$0xff] %v5767
    %5976 = vst [vmem:[#allocation2 + $0x3f8] sm:$0xff] %v5768
    %5977 = vst [vmem:[#allocation2 + $0x400] sm:$0xff] %v5769
    %5978 = vst [vmem:[#allocation2 + $0x408] sm:$0xff] %v5770
    %5979 = vst [vmem:[#allocation2 + $0x410] sm:$0xff] %v5771
    %5980 = vst [vmem:[#allocation2 + $0x418] sm:$0xff] %v5772
    %5981 = vst [vmem:[#allocation2 + $0x420] sm:$0xff] %v5773
    %5982 = vst [vmem:[#allocation2 + $0x428] sm:$0xff] %v5774
    %5983 = vst [vmem:[#allocation2 + $0x430] sm:$0xff] %v5775
    %5984 = vst [vmem:[#allocation2 + $0x438] sm:$0xff] %v5776
    %5985 = vst [vmem:[#allocation2 + $0x440] sm:$0xff] %v5777
    %5986 = vst [vmem:[#allocation2 + $0x448] sm:$0xff] %v5778
    %5987 = vst [vmem:[#allocation2 + $0x450] sm:$0xff] %v5779
    %5988 = vst [vmem:[#allocation2 + $0x458] sm:$0xff] %v5780
    %5989 = vst [vmem:[#allocation2 + $0x460] sm:$0xff] %v5781
    %5990 = vst [vmem:[#allocation2 + $0x468] sm:$0xff] %v5782
    %5991 = vst [vmem:[#allocation2 + $0x470] sm:$0xff] %v5783
    %5992 = vst [vmem:[#allocation2 + $0x478] sm:$0xff] %v5784
    %5993 = vst [vmem:[#allocation2 + $0x480] sm:$0xff] %v5785
    %5994 = vst [vmem:[#allocation2 + $0x488] sm:$0xff] %v5786
    %5995 = vst [vmem:[#allocation2 + $0x490] sm:$0xff] %v5787
    %5996 = vst [vmem:[#allocation2 + $0x498] sm:$0xff] %v5788
    %5997 = vst [vmem:[#allocation2 + $0x4a0] sm:$0xff] %v5789
    %5998 = vst [vmem:[#allocation2 + $0x4a8] sm:$0xff] %v5790
    %5999 = vst [vmem:[#allocation2 + $0x4b0] sm:$0xff] %v5791
    %6000 = vst [vmem:[#allocation2 + $0x4b8] sm:$0xff] %v5792
    %6001 = vst [vmem:[#allocation2 + $0x4c0] sm:$0xff] %v5793
    %6002 = vst [vmem:[#allocation2 + $0x4c8] sm:$0xff] %v5794
    %6003 = vst [vmem:[#allocation2 + $0x4d0] sm:$0xff] %v5795
    %6004 = vst [vmem:[#allocation2 + $0x4d8] sm:$0xff] %v5796
    %6005 = vst [vmem:[#allocation2 + $0x4e0] sm:$0xff] %v5797
    %6006 = vst [vmem:[#allocation2 + $0x4e8] sm:$0xff] %v5798
    %6007 = vst [vmem:[#allocation2 + $0x4f0] sm:$0xff] %v5799
    %6008 = vst [vmem:[#allocation2 + $0x4f8] sm:$0xff] %v5800
    %6009 = vst [vmem:[#allocation2 + $0x500] sm:$0xff] %v5801
    %6010 = vst [vmem:[#allocation2 + $0x508] sm:$0xff] %v5802
    %6011 = vst [vmem:[#allocation2 + $0x510] sm:$0xff] %v5803
    %6012 = vst [vmem:[#allocation2 + $0x518] sm:$0xff] %v5804
    %6013 = vst [vmem:[#allocation2 + $0x520] sm:$0xff] %v5805
    %6014 = vst [vmem:[#allocation2 + $0x528] sm:$0xff] %v5806
    %6015 = vst [vmem:[#allocation2 + $0x530] sm:$0xff] %v5807
    %6016 = vst [vmem:[#allocation2 + $0x538] sm:$0xff] %v5808
    %6017 = vst [vmem:[#allocation2 + $0x540] sm:$0xff] %v5809
    %6018 = vst [vmem:[#allocation2 + $0x548] sm:$0xff] %v5810
    %6019 = vst [vmem:[#allocation2 + $0x550] sm:$0xff] %v5811
    %6020 = vst [vmem:[#allocation2 + $0x558] sm:$0xff] %v5812
    %6021 = vst [vmem:[#allocation2 + $0x560] sm:$0xff] %v5813
    %6022 = vst [vmem:[#allocation2 + $0x568] sm:$0xff] %v5814
    %6023 = vst [vmem:[#allocation2 + $0x570] sm:$0xff] %v5815
    %6024 = vst [vmem:[#allocation2 + $0x578] sm:$0xff] %v5816
    %6025 = vst [vmem:[#allocation2 + $0x580] sm:$0xff] %v5817
    %6026 = vst [vmem:[#allocation2 + $0x588] sm:$0xff] %v5818
    %6027 = vst [vmem:[#allocation2 + $0x590] sm:$0xff] %v5819
    %6028 = vst [vmem:[#allocation2 + $0x598] sm:$0xff] %v5820
    %6029 = vst [vmem:[#allocation2 + $0x5a0] sm:$0xff] %v5821
    %6030 = vst [vmem:[#allocation2 + $0x5a8] sm:$0xff] %v5822
    %6031 = vst [vmem:[#allocation2 + $0x5b0] sm:$0xff] %v5823
    %6032 = vst [vmem:[#allocation2 + $0x5b8] sm:$0xff] %v5824
    %6033 = vst [vmem:[#allocation2 + $0x5c0] sm:$0xff] %v5825
    %6034 = vst [vmem:[#allocation2 + $0x5c8] sm:$0xff] %v5826
    %6035 = vst [vmem:[#allocation2 + $0x5d0] sm:$0xff] %v5827
    %6036 = vst [vmem:[#allocation2 + $0x5d8] sm:$0xff] %v5828
    %6037 = vst [vmem:[#allocation2 + $0x5e0] sm:$0xff] %v5829
    %6038 = vst [vmem:[#allocation2 + $0x5e8] sm:$0xff] %v5830
    %6039 = vst [vmem:[#allocation2 + $0x5f0] sm:$0xff] %v5831
    %6040 = vst [vmem:[#allocation2 + $0x5f8] sm:$0xff] %v5832
    %6041 = vst [vmem:[#allocation2 + $0x600] sm:$0xff] %v5833
    %6042 = vst [vmem:[#allocation2 + $0x608] sm:$0xff] %v5834
    %6043 = vst [vmem:[#allocation2 + $0x610] sm:$0xff] %v5835
    %6044 = vst [vmem:[#allocation2 + $0x618] sm:$0xff] %v5836
    %6045 = vst [vmem:[#allocation2 + $0x620] sm:$0xff] %v5837
    %6046 = vst [vmem:[#allocation2 + $0x628] sm:$0xff] %v5838
    %6047 = vst [vmem:[#allocation2 + $0x630] sm:$0xff] %v5839
    %6048 = vst [vmem:[#allocation2 + $0x638] sm:$0xff] %v5840
    %6049 = vst [vmem:[#allocation2 + $0x640] sm:$0xff] %v5841
    %6050 = vst [vmem:[#allocation2 + $0x648] sm:$0xff] %v5842
    %6051 = vst [vmem:[#allocation2 + $0x650] sm:$0xff] %v5843
    %6052 = vst [vmem:[#allocation2 + $0x658] sm:$0xff] %v5844
    %6053 = vst [vmem:[#allocation2 + $0x660] sm:$0xff] %v5845
    %6054 = vst [vmem:[#allocation2 + $0x668] sm:$0xff] %v5846
    %6055 = vst [vmem:[#allocation2 + $0x670] sm:$0xff] %v5847
    %6056 = vst [vmem:[#allocation2 + $0x678] sm:$0xff] %v5848
    // Predicated region
    $region22: #{forward.9} parent=1 // pred_check
      _
    $region23: #{forward.9} parent=1 // pred_check_branch
      %6058 = sbr.rel (0) target = $region25
    $region24: #{forward.9} parent=1 // pred_region
      %s6060 = ssub.s32 26624, 26624
      %6061 = vsyncadd [#allocation3], %s6060
      %s6062 = sshll.u32 [#allocation2], 4
      %s6063 = int_to_ptr.vmem [resolvable:$true] %s6062
      %6068 = dma.vmem_to_hbm [thread:$0]  %s6063, 26624, %s5, [#allocation3], 6656, 6656, 416
    $region25: #{forward.9} parent=1 // pred_fallthru
      _
    // Predicated region
    $region26: #{forward.9} parent=1 // pred_check
      _
    $region27: #{forward.9} parent=1 // pred_check_branch
      %6070 = sbr.rel (0) target = $region29
    $region28: #{forward.9} parent=1 // pred_region
      %6071 = dma.done [#allocation3], 26624
    $region29: #{forward.9} parent=1 // pred_fallthru
      _
    %6072 = vsyncpa [#allocation3], 1

</llo_original>
